<compile_context>
chip_gen: v7x
topology: tpu7x:2x2x1
jax: 0.10.0
libtpu: 0.0.40
codegen_flags: <defaults>
</compile_context>

<pallas_src>
import functools

import numpy as np
import jax
import jax.numpy as jnp
from jax.experimental import pallas as pl
from jax.experimental.pallas import tpu as pltpu

CP = 128                            # lane-dense padded channel width
VMEM_LIMIT_BYTES = 32 * 1024 * 1024  # explicit scoped-VMEM limit (safe on v7x)


def _interior_mask(H, W):
    """(S, 1) f32 mask: 1.0 on valid (h, w) rows, 0.0 on the H/W halo rows."""
    H2, W2 = H + 2, W + 2
    m = np.zeros((H2, W2), np.float32)
    m[1:1 + H, 1:1 + W] = 1.0
    return jnp.asarray(m.reshape(H2 * W2, 1))


# ---------------------------------------------------------------------------
# Fused Conv3d(3x3x3, pad=1) + folded BatchNorm + (residual) + (ReLU) kernel
# ---------------------------------------------------------------------------
def _conv_bn_kernel(x_ref, w_ref, b_ref, m_ref, *rest, W2, relu, has_res):
    """Grid = (B, D, 3); axis 2 (kd) is the depth-tap reduction axis.

    x_ref : (1, 1, S, Cin)  bf16  padded slab at depth (d + kd), S=(H+2)*(W+2)
    w_ref : (27, Cin, Cout) bf16  BN-scale-folded weights, tap = kd*9 + kh*3 + kw
    b_ref : (1, Cout)       f32   folded BN bias
    m_ref : (S, 1)          f32   interior-row mask (zeros the H/W halo rows)
    rest  : [res (1,1,S,Cout) bf16,] out (1,1,S,Cout) bf16, acc (S,Cout) f32
    """
    if has_res:
        res_ref, o_ref, acc_ref = rest
    else:
        o_ref, acc_ref = rest

    kd = pl.program_id(2)

    @pl.when(kd == 0)
    def _init():
        acc_ref[...] = jnp.zeros_like(acc_ref)

    # Row r = h'*(W+2) + w' of the padded slab.  The tap (kh, kw) contribution
    # to output row r comes from input row r + (kh-1)*(W+2) + (kw-1); realise
    # the shift with an XLU sublane roll (wrap-around only pollutes halo rows,
    # which are zeroed by the mask in the epilogue).
    x = x_ref[0, 0].astype(jnp.float32)          # f32 for the sublane rolls
    S = x.shape[0]

    partial = None
    for kh in range(3):
        for kw in range(3):
            delta = (kh - 1) * W2 + (kw - 1)
            xs = x if delta == 0 else pltpu.roll(x, shift=(-delta) % S, axis=0)
            w_tap = w_ref[kd * 9 + kh * 3 + kw]  # (Cin, Cout), dyn. lead index
            contrib = jnp.dot(xs.astype(jnp.bfloat16), w_tap,
                              preferred_element_type=jnp.float32)
            partial = contrib if partial is None else partial + contrib
    acc_ref[...] += partial

    @pl.when(kd == pl.num_programs(2) - 1)
    def _finalize():
        out = acc_ref[...] + b_ref[...]                    # folded BN bias
        if has_res:
            out = out + res_ref[0, 0].astype(jnp.float32)  # fused residual add
        if relu:
            out = jnp.maximum(out, 0.0)
        out = out * m_ref[...]                             # keep halos exactly 0
        o_ref[0, 0] = out.astype(o_ref.dtype)


def conv3x3x3_bn_act(x_rows, w, bias, mask, H, W, residual=None, relu=True):
    """x_rows: (B, D, S, Cp) bf16 with zero H/W halo rows.  Same layout out."""
    B, D, S, Cin = x_rows.shape
    Cout = w.shape[-1]
    W2 = W + 2
    # Depth halo (zeros); the H/W halos are already part of the row layout.
    xpad = jnp.pad(x_rows, ((0, 0), (1, 1), (0, 0), (0, 0)))

    in_specs = [
        pl.BlockSpec((1, 1, S, Cin), lambda b, d, kd: (b, d + kd, 0, 0)),
        pl.BlockSpec((27, Cin, Cout), lambda b, d, kd: (0, 0, 0)),
        pl.BlockSpec((1, Cout), lambda b, d, kd: (0, 0)),
        pl.BlockSpec((S, 1), lambda b, d, kd: (0, 0)),
    ]
    args = [xpad, w, bias, mask]
    if residual is not None:
        in_specs.append(
            pl.BlockSpec((1, 1, S, Cout), lambda b, d, kd: (b, d, 0, 0)))
        args.append(residual)

    kernel = functools.partial(_conv_bn_kernel, W2=W2, relu=relu,
                               has_res=residual is not None)
    flops = 2 * B * D * 27 * S * Cin * Cout
    bytes_accessed = (2 * (xpad.size + w.size + B * D * S * Cout
                           + (0 if residual is None else residual.size))
                      + 4 * (bias.size + mask.size))

    return pl.pallas_call(
        kernel,
        out_shape=jax.ShapeDtypeStruct((B, D, S, Cout), jnp.bfloat16),
        grid=(B, D, 3),
        in_specs=in_specs,
        out_specs=pl.BlockSpec((1, 1, S, Cout), lambda b, d, kd: (b, d, 0, 0)),
        scratch_shapes=[pltpu.VMEM((S, Cout), jnp.float32)],
        compiler_params=pltpu.CompilerParams(
            dimension_semantics=("parallel", "parallel", "arbitrary"),
            vmem_limit_bytes=VMEM_LIMIT_BYTES),
        cost_estimate=pl.CostEstimate(flops=flops, transcendentals=0,
                                      bytes_accessed=bytes_accessed),
    )(*args)


# ---------------------------------------------------------------------------
# MaxPool3d(kernel=2, stride=2) on the lane-dense padded-row layout
# ---------------------------------------------------------------------------
def _maxpool_kernel(x_ref, o_ref, *, W2):
    x0 = x_ref[0, 0].astype(jnp.float32)
    x1 = x_ref[0, 1].astype(jnp.float32)
    S = x0.shape[0]
    y = jnp.maximum(x0, x1)                                      # depth pair
    y = jnp.maximum(y, pltpu.roll(y, shift=(-1) % S, axis=0))    # w pair
    y = jnp.maximum(y, pltpu.roll(y, shift=(-W2) % S, axis=0))   # h pair
    o_ref[0, 0] = y.astype(o_ref.dtype)


def maxpool_2x2x2(x_rows, H, W):
    """MaxPool3d(2, 2): (B, D, S, Cp) -> (B, D//2, H//2, W//2, Cp)."""
    B, D, S, C = x_rows.shape
    W2 = W + 2
    pooled = pl.pallas_call(
        functools.partial(_maxpool_kernel, W2=W2),
        out_shape=jax.ShapeDtypeStruct((B, D // 2, S, C), jnp.bfloat16),
        grid=(B, D // 2),
        in_specs=[pl.BlockSpec((1, 2, S, C), lambda b, j: (b, j, 0, 0))],
        out_specs=pl.BlockSpec((1, 1, S, C), lambda b, j: (b, j, 0, 0)),
        compiler_params=pltpu.CompilerParams(
            dimension_semantics=("parallel", "parallel"),
            vmem_limit_bytes=VMEM_LIMIT_BYTES),
        cost_estimate=pl.CostEstimate(
            flops=3 * B * (D // 2) * S * C, transcendentals=0,
            bytes_accessed=2 * (x_rows.size + B * (D // 2) * S * C)),
    )(x_rows)
    # The window max for output (ho, wo) sits at padded row (2ho+1)*W2+(2wo+1).
    pooled = pooled.reshape(B, D // 2, H + 2, W + 2, C)
    return pooled[:, :, 1:1 + H:2, 1:1 + W:2, :]


# ---------------------------------------------------------------------------
# Fused Linear (lane-dense, 128-padded output)
# ---------------------------------------------------------------------------
def _linear_kernel(x_ref, w_ref, b_ref, o_ref):
    acc = jnp.dot(x_ref[...], w_ref[...], preferred_element_type=jnp.float32)
    o_ref[...] = acc + b_ref[...]


def linear(x, w, bias):
    """x: (M, Kp) bf16, w: (Kp, Np) bf16 (Np lane-padded), bias: (1, Np) f32."""
    M, K = x.shape
    N = w.shape[1]
    # M = batch is tiny here, so a single lane-dense block suffices; tile the M
    # axis (grid over row blocks) if the batch ever grows.
    return pl.pallas_call(
        _linear_kernel,
        out_shape=jax.ShapeDtypeStruct((M, N), jnp.float32),
        grid=(1,),
        in_specs=[pl.BlockSpec((M, K), lambda i: (0, 0)),
                  pl.BlockSpec((K, N), lambda i: (0, 0)),
                  pl.BlockSpec((1, N), lambda i: (0, 0))],
        out_specs=pl.BlockSpec((M, N), lambda i: (0, 0)),
        compiler_params=pltpu.CompilerParams(
            dimension_semantics=("arbitrary",),
            vmem_limit_bytes=VMEM_LIMIT_BYTES),
        cost_estimate=pl.CostEstimate(
            flops=2 * M * K * N, transcendentals=0,
            bytes_accessed=2 * (x.size + w.size) + 4 * (bias.size + M * N)),
    )(x, w, bias)


# ---------------------------------------------------------------------------
# Parameters (deterministic synthetic init) with Conv+BN folding (eval mode)
# ---------------------------------------------------------------------------
def init_conv_bn(key, cin, cout, eps=1e-5):
    kw_, kb, kg, kbt, km, kv = jax.random.split(key, 6)
    w = jax.random.normal(kw_, (cout, cin, 3, 3, 3), jnp.float32) * 0.1
    b = jax.random.normal(kb, (cout,), jnp.float32) * 0.1
    gamma = jax.random.uniform(kg, (cout,), jnp.float32, 0.5, 1.5)
    beta = jax.random.normal(kbt, (cout,), jnp.float32) * 0.1
    rmean = jax.random.normal(km, (cout,), jnp.float32) * 0.1
    rvar = jax.random.uniform(kv, (cout,), jnp.float32, 0.5, 1.5)
    scale = gamma / jnp.sqrt(rvar + eps)          # eval-mode BN
    bias = beta + (b - rmean) * scale
    # Fold the BN scale into the conv weight so the kernel epilogue is '+bias'.
    w = w * scale[:, None, None, None, None]
    # (Cout, Cin, kd, kh, kw) -> (kd, kh, kw, Cin, Cout), zero-pad channels.
    w = jnp.transpose(w, (2, 3, 4, 1, 0))
    w_pad = jnp.zeros((3, 3, 3, CP, CP), jnp.float32)
    w_pad = w_pad.at[:, :, :, :cin, :cout].set(w)
    b_pad = jnp.zeros((CP,), jnp.float32).at[:cout].set(bias)
    return {"w": w_pad.reshape(27, CP, CP).astype(jnp.bfloat16),
            "b": b_pad.reshape(1, CP)}


def init_params(key, in_channel, hidden, num_classes):
    ks = jax.random.split(key, 12)
    params = {"stem": init_conv_bn(ks[0], in_channel, hidden[0])}

    def block_params(k0, k1, ksc, cin, cout):
        p = {"c1": init_conv_bn(k0, cin, cout),
             "c2": init_conv_bn(k1, cout, cout)}
        if cin != cout:
            p["sc"] = init_conv_bn(ksc, cin, cout)
        return p

    params["res1"] = block_params(ks[1], ks[2], ks[3], hidden[0], hidden[1])
    params["res2"] = block_params(ks[4], ks[5], ks[6], hidden[1], hidden[2])
    params["res3"] = block_params(ks[7], ks[8], ks[9], hidden[2], hidden[3])

    fan_in = hidden[3] * 3 * 3 * 3
    k_pad = pl.cdiv(fan_in, 128) * 128            # 432 -> 512 (aligned K)
    fc_w = jax.random.normal(ks[10], (num_classes, fan_in), jnp.float32) * 0.05
    fc_b = jax.random.normal(ks[11], (num_classes,), jnp.float32) * 0.05
    w_pad = jnp.zeros((k_pad, 128), jnp.float32)
    w_pad = w_pad.at[:fan_in, :num_classes].set(fc_w.T)
    b_pad = jnp.zeros((1, 128), jnp.float32).at[0, :num_classes].set(fc_b)
    params["fc"] = {"w": w_pad.astype(jnp.bfloat16), "b": b_pad,
                    "c_act": hidden[3], "num_classes": num_classes}
    return params


# ---------------------------------------------------------------------------
# Model forward
# ---------------------------------------------------------------------------
def small_resnet_forward(x_ncdhw, params):
    B, C, D, H, W = x_ncdhw.shape
    mask = _interior_mask(H, W)

    # NCDHW -> channels-last rows layout: lane-pad channels to CP, add H/W halo
    # rows, flatten each depth slab to S = (H+2)*(W+2) rows.
    x = jnp.transpose(x_ncdhw, (0, 2, 3, 4, 1))
    x = jnp.pad(x, ((0, 0), (0, 0), (1, 1), (1, 1), (0, CP - C)))
    x = x.reshape(B, D, (H + 2) * (W + 2), CP).astype(jnp.bfloat16)

    def conv(x_rows, p, residual=None, relu=True):
        return conv3x3x3_bn_act(x_rows, p["w"], p["b"], mask, H, W,
                                residual=residual, relu=relu)

    def basic_block(x_rows, p):
        out = conv(x_rows, p["c1"], relu=True)        # relu(bn1(conv1(x)))
        if "sc" in p:
            sc = conv(x_rows, p["sc"], relu=False)    # conv+bn shortcut
        else:
            sc = x_rows                               # identity shortcut
        # relu(bn2(conv2(out)) + shortcut) — residual add fused in the kernel
        return conv(out, p["c2"], residual=sc, relu=True)

    out = conv(x, params["stem"], relu=True)
    out = basic_block(out, params["res1"])
    out = basic_block(out, params["res2"])
    out = basic_block(out, params["res3"])

    pooled = maxpool_2x2x2(out, H, W)                 # (B, D/2, H/2, W/2, CP)

    fc = params["fc"]
    c_act = fc["c_act"]
    # Match PyTorch out.view(B, -1) on NCDHW: flatten in (C, D, H, W) order.
    feats = jnp.transpose(pooled[..., :c_act], (0, 4, 1, 2, 3)).reshape(B, -1)
    k_pad = fc["w"].shape[0]
    feats = jnp.pad(feats, ((0, 0), (0, k_pad - feats.shape[1])))
    logits = linear(feats.astype(jnp.bfloat16), fc["w"], fc["b"])
    return logits[:, :fc["num_classes"]]


# ---------------------------------------------------------------------------
if __name__ == "__main__":
    key = jax.random.PRNGKey(0)
    k_param, k_x = jax.random.split(key)

    B, in_channel = 2, 4
    hidden = [8, 8, 16, 16]        # res2 exercises the conv shortcut (8 -> 16)
    num_classes = 10
    spatial = 6                    # MaxPool3d(2,2): 6 -> 3, matching fc=C*3*3*3

    params = init_params(k_param, in_channel, hidden, num_classes)
    x = jax.random.normal(k_x, (B, in_channel, spatial, spatial, spatial),
                          jnp.float32)

    fwd = jax.jit(lambda xx: small_resnet_forward(xx, params))
    logits = jax.block_until_ready(fwd(x))

    assert logits.shape == (B, num_classes), logits.shape
    assert bool(jnp.all(jnp.isfinite(logits)))
    print("KERNEL_OK")
</pallas_src>

<mosaic_0001>
module attributes {stable_mosaic.version = 11 : i64} {
  func.func @_conv_bn_kernel(%arg0: i32, %arg1: i32, %arg2: i32, %arg3: memref<1x1x64x128xbf16, #tpu.memory_space<vmem>>, %arg4: memref<27x128x128xbf16, #tpu.memory_space<vmem>>, %arg5: memref<1x128xf32, #tpu.memory_space<vmem>>, %arg6: memref<64x1xf32, #tpu.memory_space<vmem>>, %arg7: memref<1x1x64x128xbf16, #tpu.memory_space<vmem>>, %arg8: memref<1x1x64x128xbf16, #tpu.memory_space<vmem>>, %arg9: memref<64x128xf32, #tpu.memory_space<vmem>>) attributes {dimension_semantics = [#tpu.dimension_semantics<parallel>, #tpu.dimension_semantics<parallel>, #tpu.dimension_semantics<arbitrary>], iteration_bounds = array<i64: 2, 6, 3>, scalar_prefetch = 0 : i64, scratch_operands = 1 : i64, tpu.core_type = #tpu.core_type<tc>, window_params = [{transform_indices = @transform_0, window_bounds = array<i64: 1, 1, 64, 128>}, {pipeline_mode = #tpu.pipeline_mode<synchronous>, transform_indices = @transform_1, window_bounds = array<i64: 27, 128, 128>}, {pipeline_mode = #tpu.pipeline_mode<synchronous>, transform_indices = @transform_2, window_bounds = array<i64: 1, 128>}, {pipeline_mode = #tpu.pipeline_mode<synchronous>, transform_indices = @transform_3, window_bounds = array<i64: 64, 1>}, {transform_indices = @transform_4, window_bounds = array<i64: 1, 1, 64, 128>}, {transform_indices = @transform_5, window_bounds = array<i64: 1, 1, 64, 128>}]} {
    %c0_i32 = arith.constant 0 : i32
    %0 = arith.cmpi eq, %arg2, %c0_i32 : i32
    %1 = arith.extui %0 : i1 to i32
    %c0_i32_0 = arith.constant 0 : i32
    %2 = arith.cmpi ne, %1, %c0_i32_0 : i32
    scf.if %2 {
      %cst_60 = arith.constant 0.000000e+00 : f32
      %100 = vector.broadcast %cst_60 : f32 to vector<64x128xf32>
      %c0_61 = arith.constant 0 : index
      %c0_62 = arith.constant 0 : index
      %101 = vector.load %arg9[%c0_61, %c0_62] : memref<64x128xf32, #tpu.memory_space<vmem>>, vector<64x128xf32>
      tpu.vector_store %arg9[%c0_61, %c0_62], %100 {strides = array<i32>} : memref<64x128xf32, #tpu.memory_space<vmem>>, vector<64x128xf32>,
    } else {
    }
    %c0 = arith.constant 0 : index
    %c0_1 = arith.constant 0 : index
    %c0_2 = arith.constant 0 : index
    %c0_3 = arith.constant 0 : index
    %3 = vector.load %arg3[%c0, %c0_1, %c0_2, %c0_3] : memref<1x1x64x128xbf16, #tpu.memory_space<vmem>>, vector<1x1x64x128xbf16>
    %4 = vector.shape_cast %3 : vector<1x1x64x128xbf16> to vector<64x128xbf16>
    %5 = arith.extf %4 : vector<64x128xbf16> to vector<64x128xf32>
    %c9_i32 = arith.constant 9 : i32
    %6 = tpu.dynamic_rotate %5 by %c9_i32 dim 0 : vector<64x128xf32>, i32 -> vector<64x128xf32>
    %c9_i32_4 = arith.constant 9 : i32
    %7 = arith.muli %arg2, %c9_i32_4 : i32
    %c0_i32_5 = arith.constant 0 : i32
    %8 = arith.addi %7, %c0_i32_5 : i32
    %c0_i32_6 = arith.constant 0 : i32
    %9 = arith.addi %8, %c0_i32_6 : i32
    %10 = arith.index_cast %9 : i32 to index
    %c0_7 = arith.constant 0 : index
    %c0_8 = arith.constant 0 : index
    %11 = vector.load %arg4[%10, %c0_7, %c0_8] : memref<27x128x128xbf16, #tpu.memory_space<vmem>>, vector<1x128x128xbf16>
    %12 = vector.shape_cast %11 : vector<1x128x128xbf16> to vector<128x128xbf16>
    %13 = arith.truncf %6 : vector<64x128xf32> to vector<64x128xbf16>
    %cst = arith.constant dense<0.000000e+00> : vector<64x128xf32>
    %14 = tpu.matmul %13, %12, %cst {dimension_numbers = #tpu.dot_dimension_numbers<[1], [0], [0], [1], [0, 0, 1, 1], [], []>} : vector<64x128xbf16>, vector<128x128xbf16>, vector<64x128xf32> -> vector<64x128xf32>
    %c8_i32 = arith.constant 8 : i32
    %15 = tpu.dynamic_rotate %5 by %c8_i32 dim 0 : vector<64x128xf32>, i32 -> vector<64x128xf32>
    %c9_i32_9 = arith.constant 9 : i32
    %16 = arith.muli %arg2, %c9_i32_9 : i32
    %c0_i32_10 = arith.constant 0 : i32
    %17 = arith.addi %16, %c0_i32_10 : i32
    %c1_i32 = arith.constant 1 : i32
    %18 = arith.addi %17, %c1_i32 : i32
    %19 = arith.index_cast %18 : i32 to index
    %c0_11 = arith.constant 0 : index
    %c0_12 = arith.constant 0 : index
    %20 = vector.load %arg4[%19, %c0_11, %c0_12] : memref<27x128x128xbf16, #tpu.memory_space<vmem>>, vector<1x128x128xbf16>
    %21 = vector.shape_cast %20 : vector<1x128x128xbf16> to vector<128x128xbf16>
    %22 = arith.truncf %15 : vector<64x128xf32> to vector<64x128xbf16>
    %cst_13 = arith.constant dense<0.000000e+00> : vector<64x128xf32>
    %23 = tpu.matmul %22, %21, %cst_13 {dimension_numbers = #tpu.dot_dimension_numbers<[1], [0], [0], [1], [0, 0, 1, 1], [], []>} : vector<64x128xbf16>, vector<128x128xbf16>, vector<64x128xf32> -> vector<64x128xf32>
    %24 = arith.addf %14, %23 : vector<64x128xf32>
    %c7_i32 = arith.constant 7 : i32
    %25 = tpu.dynamic_rotate %5 by %c7_i32 dim 0 : vector<64x128xf32>, i32 -> vector<64x128xf32>
    %c9_i32_14 = arith.constant 9 : i32
    %26 = arith.muli %arg2, %c9_i32_14 : i32
    %c0_i32_15 = arith.constant 0 : i32
    %27 = arith.addi %26, %c0_i32_15 : i32
    %c2_i32 = arith.constant 2 : i32
    %28 = arith.addi %27, %c2_i32 : i32
    %29 = arith.index_cast %28 : i32 to index
    %c0_16 = arith.constant 0 : index
    %c0_17 = arith.constant 0 : index
    %30 = vector.load %arg4[%29, %c0_16, %c0_17] : memref<27x128x128xbf16, #tpu.memory_space<vmem>>, vector<1x128x128xbf16>
    %31 = vector.shape_cast %30 : vector<1x128x128xbf16> to vector<128x128xbf16>
    %32 = arith.truncf %25 : vector<64x128xf32> to vector<64x128xbf16>
    %cst_18 = arith.constant dense<0.000000e+00> : vector<64x128xf32>
    %33 = tpu.matmul %32, %31, %cst_18 {dimension_numbers = #tpu.dot_dimension_numbers<[1], [0], [0], [1], [0, 0, 1, 1], [], []>} : vector<64x128xbf16>, vector<128x128xbf16>, vector<64x128xf32> -> vector<64x128xf32>
    %34 = arith.addf %24, %33 : vector<64x128xf32>
    %c1_i32_19 = arith.constant 1 : i32
    %35 = tpu.dynamic_rotate %5 by %c1_i32_19 dim 0 : vector<64x128xf32>, i32 -> vector<64x128xf32>
    %c9_i32_20 = arith.constant 9 : i32
    %36 = arith.muli %arg2, %c9_i32_20 : i32
    %c3_i32 = arith.constant 3 : i32
    %37 = arith.addi %36, %c3_i32 : i32
    %c0_i32_21 = arith.constant 0 : i32
    %38 = arith.addi %37, %c0_i32_21 : i32
    %39 = arith.index_cast %38 : i32 to index
    %c0_22 = arith.constant 0 : index
    %c0_23 = arith.constant 0 : index
    %40 = vector.load %arg4[%39, %c0_22, %c0_23] : memref<27x128x128xbf16, #tpu.memory_space<vmem>>, vector<1x128x128xbf16>
    %41 = vector.shape_cast %40 : vector<1x128x128xbf16> to vector<128x128xbf16>
    %42 = arith.truncf %35 : vector<64x128xf32> to vector<64x128xbf16>
    %cst_24 = arith.constant dense<0.000000e+00> : vector<64x128xf32>
    %43 = tpu.matmul %42, %41, %cst_24 {dimension_numbers = #tpu.dot_dimension_numbers<[1], [0], [0], [1], [0, 0, 1, 1], [], []>} : vector<64x128xbf16>, vector<128x128xbf16>, vector<64x128xf32> -> vector<64x128xf32>
    %44 = arith.addf %34, %43 : vector<64x128xf32>
    %c9_i32_25 = arith.constant 9 : i32
    %45 = arith.muli %arg2, %c9_i32_25 : i32
    %c3_i32_26 = arith.constant 3 : i32
    %46 = arith.addi %45, %c3_i32_26 : i32
    %c1_i32_27 = arith.constant 1 : i32
    %47 = arith.addi %46, %c1_i32_27 : i32
    %48 = arith.index_cast %47 : i32 to index
    %c0_28 = arith.constant 0 : index
    %c0_29 = arith.constant 0 : index
    %49 = vector.load %arg4[%48, %c0_28, %c0_29] : memref<27x128x128xbf16, #tpu.memory_space<vmem>>, vector<1x128x128xbf16>
    %50 = vector.shape_cast %49 : vector<1x128x128xbf16> to vector<128x128xbf16>
    %51 = arith.truncf %5 : vector<64x128xf32> to vector<64x128xbf16>
    %cst_30 = arith.constant dense<0.000000e+00> : vector<64x128xf32>
    %52 = tpu.matmul %51, %50, %cst_30 {dimension_numbers = #tpu.dot_dimension_numbers<[1], [0], [0], [1], [0, 0, 1, 1], [], []>} : vector<64x128xbf16>, vector<128x128xbf16>, vector<64x128xf32> -> vector<64x128xf32>
    %53 = arith.addf %44, %52 : vector<64x128xf32>
    %c63_i32 = arith.constant 63 : i32
    %54 = tpu.dynamic_rotate %5 by %c63_i32 dim 0 : vector<64x128xf32>, i32 -> vector<64x128xf32>
    %c9_i32_31 = arith.constant 9 : i32
    %55 = arith.muli %arg2, %c9_i32_31 : i32
    %c3_i32_32 = arith.constant 3 : i32
    %56 = arith.addi %55, %c3_i32_32 : i32
    %c2_i32_33 = arith.constant 2 : i32
    %57 = arith.addi %56, %c2_i32_33 : i32
    %58 = arith.index_cast %57 : i32 to index
    %c0_34 = arith.constant 0 : index
    %c0_35 = arith.constant 0 : index
    %59 = vector.load %arg4[%58, %c0_34, %c0_35] : memref<27x128x128xbf16, #tpu.memory_space<vmem>>, vector<1x128x128xbf16>
    %60 = vector.shape_cast %59 : vector<1x128x128xbf16> to vector<128x128xbf16>
    %61 = arith.truncf %54 : vector<64x128xf32> to vector<64x128xbf16>
    %cst_36 = arith.constant dense<0.000000e+00> : vector<64x128xf32>
    %62 = tpu.matmul %61, %60, %cst_36 {dimension_numbers = #tpu.dot_dimension_numbers<[1], [0], [0], [1], [0, 0, 1, 1], [], []>} : vector<64x128xbf16>, vector<128x128xbf16>, vector<64x128xf32> -> vector<64x128xf32>
    %63 = arith.addf %53, %62 : vector<64x128xf32>
    %c57_i32 = arith.constant 57 : i32
    %64 = tpu.dynamic_rotate %5 by %c57_i32 dim 0 : vector<64x128xf32>, i32 -> vector<64x128xf32>
    %c9_i32_37 = arith.constant 9 : i32
    %65 = arith.muli %arg2, %c9_i32_37 : i32
    %c6_i32 = arith.constant 6 : i32
    %66 = arith.addi %65, %c6_i32 : i32
    %c0_i32_38 = arith.constant 0 : i32
    %67 = arith.addi %66, %c0_i32_38 : i32
    %68 = arith.index_cast %67 : i32 to index
    %c0_39 = arith.constant 0 : index
    %c0_40 = arith.constant 0 : index
    %69 = vector.load %arg4[%68, %c0_39, %c0_40] : memref<27x128x128xbf16, #tpu.memory_space<vmem>>, vector<1x128x128xbf16>
    %70 = vector.shape_cast %69 : vector<1x128x128xbf16> to vector<128x128xbf16>
    %71 = arith.truncf %64 : vector<64x128xf32> to vector<64x128xbf16>
    %cst_41 = arith.constant dense<0.000000e+00> : vector<64x128xf32>
    %72 = tpu.matmul %71, %70, %cst_41 {dimension_numbers = #tpu.dot_dimension_numbers<[1], [0], [0], [1], [0, 0, 1, 1], [], []>} : vector<64x128xbf16>, vector<128x128xbf16>, vector<64x128xf32> -> vector<64x128xf32>
    %73 = arith.addf %63, %72 : vector<64x128xf32>
    %c56_i32 = arith.constant 56 : i32
    %74 = tpu.dynamic_rotate %5 by %c56_i32 dim 0 : vector<64x128xf32>, i32 -> vector<64x128xf32>
    %c9_i32_42 = arith.constant 9 : i32
    %75 = arith.muli %arg2, %c9_i32_42 : i32
    %c6_i32_43 = arith.constant 6 : i32
    %76 = arith.addi %75, %c6_i32_43 : i32
    %c1_i32_44 = arith.constant 1 : i32
    %77 = arith.addi %76, %c1_i32_44 : i32
    %78 = arith.index_cast %77 : i32 to index
    %c0_45 = arith.constant 0 : index
    %c0_46 = arith.constant 0 : index
    %79 = vector.load %arg4[%78, %c0_45, %c0_46] : memref<27x128x128xbf16, #tpu.memory_space<vmem>>, vector<1x128x128xbf16>
    %80 = vector.shape_cast %79 : vector<1x128x128xbf16> to vector<128x128xbf16>
    %81 = arith.truncf %74 : vector<64x128xf32> to vector<64x128xbf16>
    %cst_47 = arith.constant dense<0.000000e+00> : vector<64x128xf32>
    %82 = tpu.matmul %81, %80, %cst_47 {dimension_numbers = #tpu.dot_dimension_numbers<[1], [0], [0], [1], [0, 0, 1, 1], [], []>} : vector<64x128xbf16>, vector<128x128xbf16>, vector<64x128xf32> -> vector<64x128xf32>
    %83 = arith.addf %73, %82 : vector<64x128xf32>
    %c55_i32 = arith.constant 55 : i32
    %84 = tpu.dynamic_rotate %5 by %c55_i32 dim 0 : vector<64x128xf32>, i32 -> vector<64x128xf32>
    %c9_i32_48 = arith.constant 9 : i32
    %85 = arith.muli %arg2, %c9_i32_48 : i32
    %c6_i32_49 = arith.constant 6 : i32
    %86 = arith.addi %85, %c6_i32_49 : i32
    %c2_i32_50 = arith.constant 2 : i32
    %87 = arith.addi %86, %c2_i32_50 : i32
    %88 = arith.index_cast %87 : i32 to index
    %c0_51 = arith.constant 0 : index
    %c0_52 = arith.constant 0 : index
    %89 = vector.load %arg4[%88, %c0_51, %c0_52] : memref<27x128x128xbf16, #tpu.memory_space<vmem>>, vector<1x128x128xbf16>
    %90 = vector.shape_cast %89 : vector<1x128x128xbf16> to vector<128x128xbf16>
    %91 = arith.truncf %84 : vector<64x128xf32> to vector<64x128xbf16>
    %cst_53 = arith.constant dense<0.000000e+00> : vector<64x128xf32>
    %92 = tpu.matmul %91, %90, %cst_53 {dimension_numbers = #tpu.dot_dimension_numbers<[1], [0], [0], [1], [0, 0, 1, 1], [], []>} : vector<64x128xbf16>, vector<128x128xbf16>, vector<64x128xf32> -> vector<64x128xf32>
    %93 = arith.addf %83, %92 : vector<64x128xf32>
    %c0_54 = arith.constant 0 : index
    %c0_55 = arith.constant 0 : index
    %94 = vector.load %arg9[%c0_54, %c0_55] : memref<64x128xf32, #tpu.memory_space<vmem>>, vector<64x128xf32>
    %95 = arith.addf %94, %93 : vector<64x128xf32>
    %c0_56 = arith.constant 0 : index
    %c0_57 = arith.constant 0 : index
    %96 = vector.load %arg9[%c0_56, %c0_57] : memref<64x128xf32, #tpu.memory_space<vmem>>, vector<64x128xf32>
    tpu.vector_store %arg9[%c0_56, %c0_57], %95 {strides = array<i32>} : memref<64x128xf32, #tpu.memory_space<vmem>>, vector<64x128xf32>,
    %c2_i32_58 = arith.constant 2 : i32
    %97 = arith.cmpi eq, %arg2, %c2_i32_58 : i32
    %98 = arith.extui %97 : i1 to i32
    %c0_i32_59 = arith.constant 0 : i32
    %99 = arith.cmpi ne, %98, %c0_i32_59 : i32
    scf.if %99 {
      %c0_60 = arith.constant 0 : index
      %c0_61 = arith.constant 0 : index
      %100 = vector.load %arg9[%c0_60, %c0_61] : memref<64x128xf32, #tpu.memory_space<vmem>>, vector<64x128xf32>
      %c0_62 = arith.constant 0 : index
      %c0_63 = arith.constant 0 : index
      %101 = vector.load %arg5[%c0_62, %c0_63] : memref<1x128xf32, #tpu.memory_space<vmem>>, vector<1x128xf32>
      %102 = vector.broadcast %101 : vector<1x128xf32> to vector<64x128xf32>
      %103 = arith.addf %100, %102 : vector<64x128xf32>
      %c0_64 = arith.constant 0 : index
      %c0_65 = arith.constant 0 : index
      %c0_66 = arith.constant 0 : index
      %c0_67 = arith.constant 0 : index
      %104 = vector.load %arg7[%c0_64, %c0_65, %c0_66, %c0_67] : memref<1x1x64x128xbf16, #tpu.memory_space<vmem>>, vector<1x1x64x128xbf16>
      %105 = vector.shape_cast %104 : vector<1x1x64x128xbf16> to vector<64x128xbf16>
      %106 = arith.extf %105 : vector<64x128xbf16> to vector<64x128xf32>
      %107 = arith.addf %103, %106 : vector<64x128xf32>
      %cst_68 = arith.constant 0.000000e+00 : f32
      %108 = vector.broadcast %cst_68 : f32 to vector<64x128xf32>
      %109 = arith.maximumf %107, %108 : vector<64x128xf32>
      %c0_69 = arith.constant 0 : index
      %c0_70 = arith.constant 0 : index
      %110 = vector.load %arg6[%c0_69, %c0_70] : memref<64x1xf32, #tpu.memory_space<vmem>>, vector<64x1xf32>
      %111 = vector.broadcast %110 : vector<64x1xf32> to vector<64x128xf32>
      %112 = arith.mulf %109, %111 : vector<64x128xf32>
      %113 = arith.truncf %112 : vector<64x128xf32> to vector<64x128xbf16>
      %c0_71 = arith.constant 0 : index
      %c0_72 = arith.constant 0 : index
      %c0_73 = arith.constant 0 : index
      %c0_74 = arith.constant 0 : index
      %114 = vector.load %arg8[%c0_71, %c0_72, %c0_73, %c0_74] : memref<1x1x64x128xbf16, #tpu.memory_space<vmem>>, vector<1x1x64x128xbf16>
      %115 = vector.shape_cast %114 : vector<1x1x64x128xbf16> to vector<64x128xbf16>
      %116 = vector.shape_cast %113 : vector<64x128xbf16> to vector<1x1x64x128xbf16>
      tpu.vector_store %arg8[%c0_71, %c0_72, %c0_73, %c0_74], %116 {strides = array<i32>} : memref<1x1x64x128xbf16, #tpu.memory_space<vmem>>, vector<1x1x64x128xbf16>,
    } else {
    }
    return
  }
  func.func @transform_0(%arg0: i32, %arg1: i32, %arg2: i32) -> (i32, i32, i32, i32) {
    %0 = arith.addi %arg1, %arg2 : i32
    %c0_i32 = arith.constant 0 : i32
    %c0_i32_0 = arith.constant 0 : i32
    %c0_i32_1 = arith.constant 0 : i32
    return %arg0, %0, %c0_i32, %c0_i32_0 : i32, i32, i32, i32
  }
  func.func @transform_1(%arg0: i32, %arg1: i32, %arg2: i32) -> (i32, i32, i32) {
    %c0_i32 = arith.constant 0 : i32
    %c0_i32_0 = arith.constant 0 : i32
    %c0_i32_1 = arith.constant 0 : i32
    %c0_i32_2 = arith.constant 0 : i32
    return %c0_i32, %c0_i32_0, %c0_i32_1 : i32, i32, i32
  }
  func.func @transform_2(%arg0: i32, %arg1: i32, %arg2: i32) -> (i32, i32) {
    %c0_i32 = arith.constant 0 : i32
    %c0_i32_0 = arith.constant 0 : i32
    %c0_i32_1 = arith.constant 0 : i32
    return %c0_i32, %c0_i32_0 : i32, i32
  }
  func.func @transform_3(%arg0: i32, %arg1: i32, %arg2: i32) -> (i32, i32) {
    %c0_i32 = arith.constant 0 : i32
    %c0_i32_0 = arith.constant 0 : i32
    %c0_i32_1 = arith.constant 0 : i32
    return %c0_i32, %c0_i32_0 : i32, i32
  }
  func.func @transform_4(%arg0: i32, %arg1: i32, %arg2: i32) -> (i32, i32, i32, i32) {
    %c0_i32 = arith.constant 0 : i32
    %c0_i32_0 = arith.constant 0 : i32
    %c0_i32_1 = arith.constant 0 : i32
    return %arg0, %arg1, %c0_i32, %c0_i32_0 : i32, i32, i32, i32
  }
  func.func @transform_5(%arg0: i32, %arg1: i32, %arg2: i32) -> (i32, i32, i32, i32) {
    %c0_i32 = arith.constant 0 : i32
    %c0_i32_0 = arith.constant 0 : i32
    %c0_i32_1 = arith.constant 0 : i32
    return %arg0, %arg1, %c0_i32, %c0_i32_0 : i32, i32, i32, i32
  }
}

module attributes {stable_mosaic.version = 11 : i64} {
  func.func @_conv_bn_kernel(%arg0: i32, %arg1: i32, %arg2: i32, %arg3: memref<1x1x64x128xbf16, #tpu.memory_space<vmem>>, %arg4: memref<27x128x128xbf16, #tpu.memory_space<vmem>>, %arg5: memref<1x128xf32, #tpu.memory_space<vmem>>, %arg6: memref<64x1xf32, #tpu.memory_space<vmem>>, %arg7: memref<1x1x64x128xbf16, #tpu.memory_space<vmem>>, %arg8: memref<64x128xf32, #tpu.memory_space<vmem>>) attributes {dimension_semantics = [#tpu.dimension_semantics<parallel>, #tpu.dimension_semantics<parallel>, #tpu.dimension_semantics<arbitrary>], iteration_bounds = array<i64: 2, 6, 3>, scalar_prefetch = 0 : i64, scratch_operands = 1 : i64, tpu.core_type = #tpu.core_type<tc>, window_params = [{transform_indices = @transform_0, window_bounds = array<i64: 1, 1, 64, 128>}, {pipeline_mode = #tpu.pipeline_mode<synchronous>, transform_indices = @transform_1, window_bounds = array<i64: 27, 128, 128>}, {pipeline_mode = #tpu.pipeline_mode<synchronous>, transform_indices = @transform_2, window_bounds = array<i64: 1, 128>}, {pipeline_mode = #tpu.pipeline_mode<synchronous>, transform_indices = @transform_3, window_bounds = array<i64: 64, 1>}, {transform_indices = @transform_4, window_bounds = array<i64: 1, 1, 64, 128>}]} {
    %c0_i32 = arith.constant 0 : i32
    %0 = arith.cmpi eq, %arg2, %c0_i32 : i32
    %1 = arith.extui %0 : i1 to i32
    %c0_i32_0 = arith.constant 0 : i32
    %2 = arith.cmpi ne, %1, %c0_i32_0 : i32
    scf.if %2 {
      %cst_60 = arith.constant 0.000000e+00 : f32
      %100 = vector.broadcast %cst_60 : f32 to vector<64x128xf32>
      %c0_61 = arith.constant 0 : index
      %c0_62 = arith.constant 0 : index
      %101 = vector.load %arg8[%c0_61, %c0_62] : memref<64x128xf32, #tpu.memory_space<vmem>>, vector<64x128xf32>
      tpu.vector_store %arg8[%c0_61, %c0_62], %100 {strides = array<i32>} : memref<64x128xf32, #tpu.memory_space<vmem>>, vector<64x128xf32>,
    } else {
    }
    %c0 = arith.constant 0 : index
    %c0_1 = arith.constant 0 : index
    %c0_2 = arith.constant 0 : index
    %c0_3 = arith.constant 0 : index
    %3 = vector.load %arg3[%c0, %c0_1, %c0_2, %c0_3] : memref<1x1x64x128xbf16, #tpu.memory_space<vmem>>, vector<1x1x64x128xbf16>
    %4 = vector.shape_cast %3 : vector<1x1x64x128xbf16> to vector<64x128xbf16>
    %5 = arith.extf %4 : vector<64x128xbf16> to vector<64x128xf32>
    %c9_i32 = arith.constant 9 : i32
    %6 = tpu.dynamic_rotate %5 by %c9_i32 dim 0 : vector<64x128xf32>, i32 -> vector<64x128xf32>
    %c9_i32_4 = arith.constant 9 : i32
    %7 = arith.muli %arg2, %c9_i32_4 : i32
    %c0_i32_5 = arith.constant 0 : i32
    %8 = arith.addi %7, %c0_i32_5 : i32
    %c0_i32_6 = arith.constant 0 : i32
    %9 = arith.addi %8, %c0_i32_6 : i32
    %10 = arith.index_cast %9 : i32 to index
    %c0_7 = arith.constant 0 : index
    %c0_8 = arith.constant 0 : index
    %11 = vector.load %arg4[%10, %c0_7, %c0_8] : memref<27x128x128xbf16, #tpu.memory_space<vmem>>, vector<1x128x128xbf16>
    %12 = vector.shape_cast %11 : vector<1x128x128xbf16> to vector<128x128xbf16>
    %13 = arith.truncf %6 : vector<64x128xf32> to vector<64x128xbf16>
    %cst = arith.constant dense<0.000000e+00> : vector<64x128xf32>
    %14 = tpu.matmul %13, %12, %cst {dimension_numbers = #tpu.dot_dimension_numbers<[1], [0], [0], [1], [0, 0, 1, 1], [], []>} : vector<64x128xbf16>, vector<128x128xbf16>, vector<64x128xf32> -> vector<64x128xf32>
    %c8_i32 = arith.constant 8 : i32
    %15 = tpu.dynamic_rotate %5 by %c8_i32 dim 0 : vector<64x128xf32>, i32 -> vector<64x128xf32>
    %c9_i32_9 = arith.constant 9 : i32
    %16 = arith.muli %arg2, %c9_i32_9 : i32
    %c0_i32_10 = arith.constant 0 : i32
    %17 = arith.addi %16, %c0_i32_10 : i32
    %c1_i32 = arith.constant 1 : i32
    %18 = arith.addi %17, %c1_i32 : i32
    %19 = arith.index_cast %18 : i32 to index
    %c0_11 = arith.constant 0 : index
    %c0_12 = arith.constant 0 : index
    %20 = vector.load %arg4[%19, %c0_11, %c0_12] : memref<27x128x128xbf16, #tpu.memory_space<vmem>>, vector<1x128x128xbf16>
    %21 = vector.shape_cast %20 : vector<1x128x128xbf16> to vector<128x128xbf16>
    %22 = arith.truncf %15 : vector<64x128xf32> to vector<64x128xbf16>
    %cst_13 = arith.constant dense<0.000000e+00> : vector<64x128xf32>
    %23 = tpu.matmul %22, %21, %cst_13 {dimension_numbers = #tpu.dot_dimension_numbers<[1], [0], [0], [1], [0, 0, 1, 1], [], []>} : vector<64x128xbf16>, vector<128x128xbf16>, vector<64x128xf32> -> vector<64x128xf32>
    %24 = arith.addf %14, %23 : vector<64x128xf32>
    %c7_i32 = arith.constant 7 : i32
    %25 = tpu.dynamic_rotate %5 by %c7_i32 dim 0 : vector<64x128xf32>, i32 -> vector<64x128xf32>
    %c9_i32_14 = arith.constant 9 : i32
    %26 = arith.muli %arg2, %c9_i32_14 : i32
    %c0_i32_15 = arith.constant 0 : i32
    %27 = arith.addi %26, %c0_i32_15 : i32
    %c2_i32 = arith.constant 2 : i32
    %28 = arith.addi %27, %c2_i32 : i32
    %29 = arith.index_cast %28 : i32 to index
    %c0_16 = arith.constant 0 : index
    %c0_17 = arith.constant 0 : index
    %30 = vector.load %arg4[%29, %c0_16, %c0_17] : memref<27x128x128xbf16, #tpu.memory_space<vmem>>, vector<1x128x128xbf16>
    %31 = vector.shape_cast %30 : vector<1x128x128xbf16> to vector<128x128xbf16>
    %32 = arith.truncf %25 : vector<64x128xf32> to vector<64x128xbf16>
    %cst_18 = arith.constant dense<0.000000e+00> : vector<64x128xf32>
    %33 = tpu.matmul %32, %31, %cst_18 {dimension_numbers = #tpu.dot_dimension_numbers<[1], [0], [0], [1], [0, 0, 1, 1], [], []>} : vector<64x128xbf16>, vector<128x128xbf16>, vector<64x128xf32> -> vector<64x128xf32>
    %34 = arith.addf %24, %33 : vector<64x128xf32>
    %c1_i32_19 = arith.constant 1 : i32
    %35 = tpu.dynamic_rotate %5 by %c1_i32_19 dim 0 : vector<64x128xf32>, i32 -> vector<64x128xf32>
    %c9_i32_20 = arith.constant 9 : i32
    %36 = arith.muli %arg2, %c9_i32_20 : i32
    %c3_i32 = arith.constant 3 : i32
    %37 = arith.addi %36, %c3_i32 : i32
    %c0_i32_21 = arith.constant 0 : i32
    %38 = arith.addi %37, %c0_i32_21 : i32
    %39 = arith.index_cast %38 : i32 to index
    %c0_22 = arith.constant 0 : index
    %c0_23 = arith.constant 0 : index
    %40 = vector.load %arg4[%39, %c0_22, %c0_23] : memref<27x128x128xbf16, #tpu.memory_space<vmem>>, vector<1x128x128xbf16>
    %41 = vector.shape_cast %40 : vector<1x128x128xbf16> to vector<128x128xbf16>
    %42 = arith.truncf %35 : vector<64x128xf32> to vector<64x128xbf16>
    %cst_24 = arith.constant dense<0.000000e+00> : vector<64x128xf32>
    %43 = tpu.matmul %42, %41, %cst_24 {dimension_numbers = #tpu.dot_dimension_numbers<[1], [0], [0], [1], [0, 0, 1, 1], [], []>} : vector<64x128xbf16>, vector<128x128xbf16>, vector<64x128xf32> -> vector<64x128xf32>
    %44 = arith.addf %34, %43 : vector<64x128xf32>
    %c9_i32_25 = arith.constant 9 : i32
    %45 = arith.muli %arg2, %c9_i32_25 : i32
    %c3_i32_26 = arith.constant 3 : i32
    %46 = arith.addi %45, %c3_i32_26 : i32
    %c1_i32_27 = arith.constant 1 : i32
    %47 = arith.addi %46, %c1_i32_27 : i32
    %48 = arith.index_cast %47 : i32 to index
    %c0_28 = arith.constant 0 : index
    %c0_29 = arith.constant 0 : index
    %49 = vector.load %arg4[%48, %c0_28, %c0_29] : memref<27x128x128xbf16, #tpu.memory_space<vmem>>, vector<1x128x128xbf16>
    %50 = vector.shape_cast %49 : vector<1x128x128xbf16> to vector<128x128xbf16>
    %51 = arith.truncf %5 : vector<64x128xf32> to vector<64x128xbf16>
    %cst_30 = arith.constant dense<0.000000e+00> : vector<64x128xf32>
    %52 = tpu.matmul %51, %50, %cst_30 {dimension_numbers = #tpu.dot_dimension_numbers<[1], [0], [0], [1], [0, 0, 1, 1], [], []>} : vector<64x128xbf16>, vector<128x128xbf16>, vector<64x128xf32> -> vector<64x128xf32>
    %53 = arith.addf %44, %52 : vector<64x128xf32>
    %c63_i32 = arith.constant 63 : i32
    %54 = tpu.dynamic_rotate %5 by %c63_i32 dim 0 : vector<64x128xf32>, i32 -> vector<64x128xf32>
    %c9_i32_31 = arith.constant 9 : i32
    %55 = arith.muli %arg2, %c9_i32_31 : i32
    %c3_i32_32 = arith.constant 3 : i32
    %56 = arith.addi %55, %c3_i32_32 : i32
    %c2_i32_33 = arith.constant 2 : i32
    %57 = arith.addi %56, %c2_i32_33 : i32
    %58 = arith.index_cast %57 : i32 to index
    %c0_34 = arith.constant 0 : index
    %c0_35 = arith.constant 0 : index
    %59 = vector.load %arg4[%58, %c0_34, %c0_35] : memref<27x128x128xbf16, #tpu.memory_space<vmem>>, vector<1x128x128xbf16>
    %60 = vector.shape_cast %59 : vector<1x128x128xbf16> to vector<128x128xbf16>
    %61 = arith.truncf %54 : vector<64x128xf32> to vector<64x128xbf16>
    %cst_36 = arith.constant dense<0.000000e+00> : vector<64x128xf32>
    %62 = tpu.matmul %61, %60, %cst_36 {dimension_numbers = #tpu.dot_dimension_numbers<[1], [0], [0], [1], [0, 0, 1, 1], [], []>} : vector<64x128xbf16>, vector<128x128xbf16>, vector<64x128xf32> -> vector<64x128xf32>
    %63 = arith.addf %53, %62 : vector<64x128xf32>
    %c57_i32 = arith.constant 57 : i32
    %64 = tpu.dynamic_rotate %5 by %c57_i32 dim 0 : vector<64x128xf32>, i32 -> vector<64x128xf32>
    %c9_i32_37 = arith.constant 9 : i32
    %65 = arith.muli %arg2, %c9_i32_37 : i32
    %c6_i32 = arith.constant 6 : i32
    %66 = arith.addi %65, %c6_i32 : i32
    %c0_i32_38 = arith.constant 0 : i32
    %67 = arith.addi %66, %c0_i32_38 : i32
    %68 = arith.index_cast %67 : i32 to index
    %c0_39 = arith.constant 0 : index
    %c0_40 = arith.constant 0 : index
    %69 = vector.load %arg4[%68, %c0_39, %c0_40] : memref<27x128x128xbf16, #tpu.memory_space<vmem>>, vector<1x128x128xbf16>
    %70 = vector.shape_cast %69 : vector<1x128x128xbf16> to vector<128x128xbf16>
    %71 = arith.truncf %64 : vector<64x128xf32> to vector<64x128xbf16>
    %cst_41 = arith.constant dense<0.000000e+00> : vector<64x128xf32>
    %72 = tpu.matmul %71, %70, %cst_41 {dimension_numbers = #tpu.dot_dimension_numbers<[1], [0], [0], [1], [0, 0, 1, 1], [], []>} : vector<64x128xbf16>, vector<128x128xbf16>, vector<64x128xf32> -> vector<64x128xf32>
    %73 = arith.addf %63, %72 : vector<64x128xf32>
    %c56_i32 = arith.constant 56 : i32
    %74 = tpu.dynamic_rotate %5 by %c56_i32 dim 0 : vector<64x128xf32>, i32 -> vector<64x128xf32>
    %c9_i32_42 = arith.constant 9 : i32
    %75 = arith.muli %arg2, %c9_i32_42 : i32
    %c6_i32_43 = arith.constant 6 : i32
    %76 = arith.addi %75, %c6_i32_43 : i32
    %c1_i32_44 = arith.constant 1 : i32
    %77 = arith.addi %76, %c1_i32_44 : i32
    %78 = arith.index_cast %77 : i32 to index
    %c0_45 = arith.constant 0 : index
    %c0_46 = arith.constant 0 : index
    %79 = vector.load %arg4[%78, %c0_45, %c0_46] : memref<27x128x128xbf16, #tpu.memory_space<vmem>>, vector<1x128x128xbf16>
    %80 = vector.shape_cast %79 : vector<1x128x128xbf16> to vector<128x128xbf16>
    %81 = arith.truncf %74 : vector<64x128xf32> to vector<64x128xbf16>
    %cst_47 = arith.constant dense<0.000000e+00> : vector<64x128xf32>
    %82 = tpu.matmul %81, %80, %cst_47 {dimension_numbers = #tpu.dot_dimension_numbers<[1], [0], [0], [1], [0, 0, 1, 1], [], []>} : vector<64x128xbf16>, vector<128x128xbf16>, vector<64x128xf32> -> vector<64x128xf32>
    %83 = arith.addf %73, %82 : vector<64x128xf32>
    %c55_i32 = arith.constant 55 : i32
    %84 = tpu.dynamic_rotate %5 by %c55_i32 dim 0 : vector<64x128xf32>, i32 -> vector<64x128xf32>
    %c9_i32_48 = arith.constant 9 : i32
    %85 = arith.muli %arg2, %c9_i32_48 : i32
    %c6_i32_49 = arith.constant 6 : i32
    %86 = arith.addi %85, %c6_i32_49 : i32
    %c2_i32_50 = arith.constant 2 : i32
    %87 = arith.addi %86, %c2_i32_50 : i32
    %88 = arith.index_cast %87 : i32 to index
    %c0_51 = arith.constant 0 : index
    %c0_52 = arith.constant 0 : index
    %89 = vector.load %arg4[%88, %c0_51, %c0_52] : memref<27x128x128xbf16, #tpu.memory_space<vmem>>, vector<1x128x128xbf16>
    %90 = vector.shape_cast %89 : vector<1x128x128xbf16> to vector<128x128xbf16>
    %91 = arith.truncf %84 : vector<64x128xf32> to vector<64x128xbf16>
    %cst_53 = arith.constant dense<0.000000e+00> : vector<64x128xf32>
    %92 = tpu.matmul %91, %90, %cst_53 {dimension_numbers = #tpu.dot_dimension_numbers<[1], [0], [0], [1], [0, 0, 1, 1], [], []>} : vector<64x128xbf16>, vector<128x128xbf16>, vector<64x128xf32> -> vector<64x128xf32>
    %93 = arith.addf %83, %92 : vector<64x128xf32>
    %c0_54 = arith.constant 0 : index
    %c0_55 = arith.constant 0 : index
    %94 = vector.load %arg8[%c0_54, %c0_55] : memref<64x128xf32, #tpu.memory_space<vmem>>, vector<64x128xf32>
    %95 = arith.addf %94, %93 : vector<64x128xf32>
    %c0_56 = arith.constant 0 : index
    %c0_57 = arith.constant 0 : index
    %96 = vector.load %arg8[%c0_56, %c0_57] : memref<64x128xf32, #tpu.memory_space<vmem>>, vector<64x128xf32>
    tpu.vector_store %arg8[%c0_56, %c0_57], %95 {strides = array<i32>} : memref<64x128xf32, #tpu.memory_space<vmem>>, vector<64x128xf32>,
    %c2_i32_58 = arith.constant 2 : i32
    %97 = arith.cmpi eq, %arg2, %c2_i32_58 : i32
    %98 = arith.extui %97 : i1 to i32
    %c0_i32_59 = arith.constant 0 : i32
    %99 = arith.cmpi ne, %98, %c0_i32_59 : i32
    scf.if %99 {
      %c0_60 = arith.constant 0 : index
      %c0_61 = arith.constant 0 : index
      %100 = vector.load %arg8[%c0_60, %c0_61] : memref<64x128xf32, #tpu.memory_space<vmem>>, vector<64x128xf32>
      %c0_62 = arith.constant 0 : index
      %c0_63 = arith.constant 0 : index
      %101 = vector.load %arg5[%c0_62, %c0_63] : memref<1x128xf32, #tpu.memory_space<vmem>>, vector<1x128xf32>
      %102 = vector.broadcast %101 : vector<1x128xf32> to vector<64x128xf32>
      %103 = arith.addf %100, %102 : vector<64x128xf32>
      %cst_64 = arith.constant 0.000000e+00 : f32
      %104 = vector.broadcast %cst_64 : f32 to vector<64x128xf32>
      %105 = arith.maximumf %103, %104 : vector<64x128xf32>
      %c0_65 = arith.constant 0 : index
      %c0_66 = arith.constant 0 : index
      %106 = vector.load %arg6[%c0_65, %c0_66] : memref<64x1xf32, #tpu.memory_space<vmem>>, vector<64x1xf32>
      %107 = vector.broadcast %106 : vector<64x1xf32> to vector<64x128xf32>
      %108 = arith.mulf %105, %107 : vector<64x128xf32>
      %109 = arith.truncf %108 : vector<64x128xf32> to vector<64x128xbf16>
      %c0_67 = arith.constant 0 : index
      %c0_68 = arith.constant 0 : index
      %c0_69 = arith.constant 0 : index
      %c0_70 = arith.constant 0 : index
      %110 = vector.load %arg7[%c0_67, %c0_68, %c0_69, %c0_70] : memref<1x1x64x128xbf16, #tpu.memory_space<vmem>>, vector<1x1x64x128xbf16>
      %111 = vector.shape_cast %110 : vector<1x1x64x128xbf16> to vector<64x128xbf16>
      %112 = vector.shape_cast %109 : vector<64x128xbf16> to vector<1x1x64x128xbf16>
      tpu.vector_store %arg7[%c0_67, %c0_68, %c0_69, %c0_70], %112 {strides = array<i32>} : memref<1x1x64x128xbf16, #tpu.memory_space<vmem>>, vector<1x1x64x128xbf16>,
    } else {
    }
    return
  }
  func.func @transform_0(%arg0: i32, %arg1: i32, %arg2: i32) -> (i32, i32, i32, i32) {
    %0 = arith.addi %arg1, %arg2 : i32
    %c0_i32 = arith.constant 0 : i32
    %c0_i32_0 = arith.constant 0 : i32
    %c0_i32_1 = arith.constant 0 : i32
    return %arg0, %0, %c0_i32, %c0_i32_0 : i32, i32, i32, i32
  }
  func.func @transform_1(%arg0: i32, %arg1: i32, %arg2: i32) -> (i32, i32, i32) {
    %c0_i32 = arith.constant 0 : i32
    %c0_i32_0 = arith.constant 0 : i32
    %c0_i32_1 = arith.constant 0 : i32
    %c0_i32_2 = arith.constant 0 : i32
    return %c0_i32, %c0_i32_0, %c0_i32_1 : i32, i32, i32
  }
  func.func @transform_2(%arg0: i32, %arg1: i32, %arg2: i32) -> (i32, i32) {
    %c0_i32 = arith.constant 0 : i32
    %c0_i32_0 = arith.constant 0 : i32
    %c0_i32_1 = arith.constant 0 : i32
    return %c0_i32, %c0_i32_0 : i32, i32
  }
  func.func @transform_3(%arg0: i32, %arg1: i32, %arg2: i32) -> (i32, i32) {
    %c0_i32 = arith.constant 0 : i32
    %c0_i32_0 = arith.constant 0 : i32
    %c0_i32_1 = arith.constant 0 : i32
    return %c0_i32, %c0_i32_0 : i32, i32
  }
  func.func @transform_4(%arg0: i32, %arg1: i32, %arg2: i32) -> (i32, i32, i32, i32) {
    %c0_i32 = arith.constant 0 : i32
    %c0_i32_0 = arith.constant 0 : i32
    %c0_i32_1 = arith.constant 0 : i32
    return %arg0, %arg1, %c0_i32, %c0_i32_0 : i32, i32, i32, i32
  }
}

module attributes {stable_mosaic.version = 11 : i64} {
  func.func @_conv_bn_kernel(%arg0: i32, %arg1: i32, %arg2: i32, %arg3: memref<1x1x64x128xbf16, #tpu.memory_space<vmem>>, %arg4: memref<27x128x128xbf16, #tpu.memory_space<vmem>>, %arg5: memref<1x128xf32, #tpu.memory_space<vmem>>, %arg6: memref<64x1xf32, #tpu.memory_space<vmem>>, %arg7: memref<1x1x64x128xbf16, #tpu.memory_space<vmem>>, %arg8: memref<64x128xf32, #tpu.memory_space<vmem>>) attributes {dimension_semantics = [#tpu.dimension_semantics<parallel>, #tpu.dimension_semantics<parallel>, #tpu.dimension_semantics<arbitrary>], iteration_bounds = array<i64: 2, 6, 3>, scalar_prefetch = 0 : i64, scratch_operands = 1 : i64, tpu.core_type = #tpu.core_type<tc>, window_params = [{transform_indices = @transform_0, window_bounds = array<i64: 1, 1, 64, 128>}, {pipeline_mode = #tpu.pipeline_mode<synchronous>, transform_indices = @transform_1, window_bounds = array<i64: 27, 128, 128>}, {pipeline_mode = #tpu.pipeline_mode<synchronous>, transform_indices = @transform_2, window_bounds = array<i64: 1, 128>}, {pipeline_mode = #tpu.pipeline_mode<synchronous>, transform_indices = @transform_3, window_bounds = array<i64: 64, 1>}, {transform_indices = @transform_4, window_bounds = array<i64: 1, 1, 64, 128>}]} {
    %c0_i32 = arith.constant 0 : i32
    %0 = arith.cmpi eq, %arg2, %c0_i32 : i32
    %1 = arith.extui %0 : i1 to i32
    %c0_i32_0 = arith.constant 0 : i32
    %2 = arith.cmpi ne, %1, %c0_i32_0 : i32
    scf.if %2 {
      %cst_60 = arith.constant 0.000000e+00 : f32
      %100 = vector.broadcast %cst_60 : f32 to vector<64x128xf32>
      %c0_61 = arith.constant 0 : index
      %c0_62 = arith.constant 0 : index
      %101 = vector.load %arg8[%c0_61, %c0_62] : memref<64x128xf32, #tpu.memory_space<vmem>>, vector<64x128xf32>
      tpu.vector_store %arg8[%c0_61, %c0_62], %100 {strides = array<i32>} : memref<64x128xf32, #tpu.memory_space<vmem>>, vector<64x128xf32>,
    } else {
    }
    %c0 = arith.constant 0 : index
    %c0_1 = arith.constant 0 : index
    %c0_2 = arith.constant 0 : index
    %c0_3 = arith.constant 0 : index
    %3 = vector.load %arg3[%c0, %c0_1, %c0_2, %c0_3] : memref<1x1x64x128xbf16, #tpu.memory_space<vmem>>, vector<1x1x64x128xbf16>
    %4 = vector.shape_cast %3 : vector<1x1x64x128xbf16> to vector<64x128xbf16>
    %5 = arith.extf %4 : vector<64x128xbf16> to vector<64x128xf32>
    %c9_i32 = arith.constant 9 : i32
    %6 = tpu.dynamic_rotate %5 by %c9_i32 dim 0 : vector<64x128xf32>, i32 -> vector<64x128xf32>
    %c9_i32_4 = arith.constant 9 : i32
    %7 = arith.muli %arg2, %c9_i32_4 : i32
    %c0_i32_5 = arith.constant 0 : i32
    %8 = arith.addi %7, %c0_i32_5 : i32
    %c0_i32_6 = arith.constant 0 : i32
    %9 = arith.addi %8, %c0_i32_6 : i32
    %10 = arith.index_cast %9 : i32 to index
    %c0_7 = arith.constant 0 : index
    %c0_8 = arith.constant 0 : index
    %11 = vector.load %arg4[%10, %c0_7, %c0_8] : memref<27x128x128xbf16, #tpu.memory_space<vmem>>, vector<1x128x128xbf16>
    %12 = vector.shape_cast %11 : vector<1x128x128xbf16> to vector<128x128xbf16>
    %13 = arith.truncf %6 : vector<64x128xf32> to vector<64x128xbf16>
    %cst = arith.constant dense<0.000000e+00> : vector<64x128xf32>
    %14 = tpu.matmul %13, %12, %cst {dimension_numbers = #tpu.dot_dimension_numbers<[1], [0], [0], [1], [0, 0, 1, 1], [], []>} : vector<64x128xbf16>, vector<128x128xbf16>, vector<64x128xf32> -> vector<64x128xf32>
    %c8_i32 = arith.constant 8 : i32
    %15 = tpu.dynamic_rotate %5 by %c8_i32 dim 0 : vector<64x128xf32>, i32 -> vector<64x128xf32>
    %c9_i32_9 = arith.constant 9 : i32
    %16 = arith.muli %arg2, %c9_i32_9 : i32
    %c0_i32_10 = arith.constant 0 : i32
    %17 = arith.addi %16, %c0_i32_10 : i32
    %c1_i32 = arith.constant 1 : i32
    %18 = arith.addi %17, %c1_i32 : i32
    %19 = arith.index_cast %18 : i32 to index
    %c0_11 = arith.constant 0 : index
    %c0_12 = arith.constant 0 : index
    %20 = vector.load %arg4[%19, %c0_11, %c0_12] : memref<27x128x128xbf16, #tpu.memory_space<vmem>>, vector<1x128x128xbf16>
    %21 = vector.shape_cast %20 : vector<1x128x128xbf16> to vector<128x128xbf16>
    %22 = arith.truncf %15 : vector<64x128xf32> to vector<64x128xbf16>
    %cst_13 = arith.constant dense<0.000000e+00> : vector<64x128xf32>
    %23 = tpu.matmul %22, %21, %cst_13 {dimension_numbers = #tpu.dot_dimension_numbers<[1], [0], [0], [1], [0, 0, 1, 1], [], []>} : vector<64x128xbf16>, vector<128x128xbf16>, vector<64x128xf32> -> vector<64x128xf32>
    %24 = arith.addf %14, %23 : vector<64x128xf32>
    %c7_i32 = arith.constant 7 : i32
    %25 = tpu.dynamic_rotate %5 by %c7_i32 dim 0 : vector<64x128xf32>, i32 -> vector<64x128xf32>
    %c9_i32_14 = arith.constant 9 : i32
    %26 = arith.muli %arg2, %c9_i32_14 : i32
    %c0_i32_15 = arith.constant 0 : i32
    %27 = arith.addi %26, %c0_i32_15 : i32
    %c2_i32 = arith.constant 2 : i32
    %28 = arith.addi %27, %c2_i32 : i32
    %29 = arith.index_cast %28 : i32 to index
    %c0_16 = arith.constant 0 : index
    %c0_17 = arith.constant 0 : index
    %30 = vector.load %arg4[%29, %c0_16, %c0_17] : memref<27x128x128xbf16, #tpu.memory_space<vmem>>, vector<1x128x128xbf16>
    %31 = vector.shape_cast %30 : vector<1x128x128xbf16> to vector<128x128xbf16>
    %32 = arith.truncf %25 : vector<64x128xf32> to vector<64x128xbf16>
    %cst_18 = arith.constant dense<0.000000e+00> : vector<64x128xf32>
    %33 = tpu.matmul %32, %31, %cst_18 {dimension_numbers = #tpu.dot_dimension_numbers<[1], [0], [0], [1], [0, 0, 1, 1], [], []>} : vector<64x128xbf16>, vector<128x128xbf16>, vector<64x128xf32> -> vector<64x128xf32>
    %34 = arith.addf %24, %33 : vector<64x128xf32>
    %c1_i32_19 = arith.constant 1 : i32
    %35 = tpu.dynamic_rotate %5 by %c1_i32_19 dim 0 : vector<64x128xf32>, i32 -> vector<64x128xf32>
    %c9_i32_20 = arith.constant 9 : i32
    %36 = arith.muli %arg2, %c9_i32_20 : i32
    %c3_i32 = arith.constant 3 : i32
    %37 = arith.addi %36, %c3_i32 : i32
    %c0_i32_21 = arith.constant 0 : i32
    %38 = arith.addi %37, %c0_i32_21 : i32
    %39 = arith.index_cast %38 : i32 to index
    %c0_22 = arith.constant 0 : index
    %c0_23 = arith.constant 0 : index
    %40 = vector.load %arg4[%39, %c0_22, %c0_23] : memref<27x128x128xbf16, #tpu.memory_space<vmem>>, vector<1x128x128xbf16>
    %41 = vector.shape_cast %40 : vector<1x128x128xbf16> to vector<128x128xbf16>
    %42 = arith.truncf %35 : vector<64x128xf32> to vector<64x128xbf16>
    %cst_24 = arith.constant dense<0.000000e+00> : vector<64x128xf32>
    %43 = tpu.matmul %42, %41, %cst_24 {dimension_numbers = #tpu.dot_dimension_numbers<[1], [0], [0], [1], [0, 0, 1, 1], [], []>} : vector<64x128xbf16>, vector<128x128xbf16>, vector<64x128xf32> -> vector<64x128xf32>
    %44 = arith.addf %34, %43 : vector<64x128xf32>
    %c9_i32_25 = arith.constant 9 : i32
    %45 = arith.muli %arg2, %c9_i32_25 : i32
    %c3_i32_26 = arith.constant 3 : i32
    %46 = arith.addi %45, %c3_i32_26 : i32
    %c1_i32_27 = arith.constant 1 : i32
    %47 = arith.addi %46, %c1_i32_27 : i32
    %48 = arith.index_cast %47 : i32 to index
    %c0_28 = arith.constant 0 : index
    %c0_29 = arith.constant 0 : index
    %49 = vector.load %arg4[%48, %c0_28, %c0_29] : memref<27x128x128xbf16, #tpu.memory_space<vmem>>, vector<1x128x128xbf16>
    %50 = vector.shape_cast %49 : vector<1x128x128xbf16> to vector<128x128xbf16>
    %51 = arith.truncf %5 : vector<64x128xf32> to vector<64x128xbf16>
    %cst_30 = arith.constant dense<0.000000e+00> : vector<64x128xf32>
    %52 = tpu.matmul %51, %50, %cst_30 {dimension_numbers = #tpu.dot_dimension_numbers<[1], [0], [0], [1], [0, 0, 1, 1], [], []>} : vector<64x128xbf16>, vector<128x128xbf16>, vector<64x128xf32> -> vector<64x128xf32>
    %53 = arith.addf %44, %52 : vector<64x128xf32>
    %c63_i32 = arith.constant 63 : i32
    %54 = tpu.dynamic_rotate %5 by %c63_i32 dim 0 : vector<64x128xf32>, i32 -> vector<64x128xf32>
    %c9_i32_31 = arith.constant 9 : i32
    %55 = arith.muli %arg2, %c9_i32_31 : i32
    %c3_i32_32 = arith.constant 3 : i32
    %56 = arith.addi %55, %c3_i32_32 : i32
    %c2_i32_33 = arith.constant 2 : i32
    %57 = arith.addi %56, %c2_i32_33 : i32
    %58 = arith.index_cast %57 : i32 to index
    %c0_34 = arith.constant 0 : index
    %c0_35 = arith.constant 0 : index
    %59 = vector.load %arg4[%58, %c0_34, %c0_35] : memref<27x128x128xbf16, #tpu.memory_space<vmem>>, vector<1x128x128xbf16>
    %60 = vector.shape_cast %59 : vector<1x128x128xbf16> to vector<128x128xbf16>
    %61 = arith.truncf %54 : vector<64x128xf32> to vector<64x128xbf16>
    %cst_36 = arith.constant dense<0.000000e+00> : vector<64x128xf32>
    %62 = tpu.matmul %61, %60, %cst_36 {dimension_numbers = #tpu.dot_dimension_numbers<[1], [0], [0], [1], [0, 0, 1, 1], [], []>} : vector<64x128xbf16>, vector<128x128xbf16>, vector<64x128xf32> -> vector<64x128xf32>
    %63 = arith.addf %53, %62 : vector<64x128xf32>
    %c57_i32 = arith.constant 57 : i32
    %64 = tpu.dynamic_rotate %5 by %c57_i32 dim 0 : vector<64x128xf32>, i32 -> vector<64x128xf32>
    %c9_i32_37 = arith.constant 9 : i32
    %65 = arith.muli %arg2, %c9_i32_37 : i32
    %c6_i32 = arith.constant 6 : i32
    %66 = arith.addi %65, %c6_i32 : i32
    %c0_i32_38 = arith.constant 0 : i32
    %67 = arith.addi %66, %c0_i32_38 : i32
    %68 = arith.index_cast %67 : i32 to index
    %c0_39 = arith.constant 0 : index
    %c0_40 = arith.constant 0 : index
    %69 = vector.load %arg4[%68, %c0_39, %c0_40] : memref<27x128x128xbf16, #tpu.memory_space<vmem>>, vector<1x128x128xbf16>
    %70 = vector.shape_cast %69 : vector<1x128x128xbf16> to vector<128x128xbf16>
    %71 = arith.truncf %64 : vector<64x128xf32> to vector<64x128xbf16>
    %cst_41 = arith.constant dense<0.000000e+00> : vector<64x128xf32>
    %72 = tpu.matmul %71, %70, %cst_41 {dimension_numbers = #tpu.dot_dimension_numbers<[1], [0], [0], [1], [0, 0, 1, 1], [], []>} : vector<64x128xbf16>, vector<128x128xbf16>, vector<64x128xf32> -> vector<64x128xf32>
    %73 = arith.addf %63, %72 : vector<64x128xf32>
    %c56_i32 = arith.constant 56 : i32
    %74 = tpu.dynamic_rotate %5 by %c56_i32 dim 0 : vector<64x128xf32>, i32 -> vector<64x128xf32>
    %c9_i32_42 = arith.constant 9 : i32
    %75 = arith.muli %arg2, %c9_i32_42 : i32
    %c6_i32_43 = arith.constant 6 : i32
    %76 = arith.addi %75, %c6_i32_43 : i32
    %c1_i32_44 = arith.constant 1 : i32
    %77 = arith.addi %76, %c1_i32_44 : i32
    %78 = arith.index_cast %77 : i32 to index
    %c0_45 = arith.constant 0 : index
    %c0_46 = arith.constant 0 : index
    %79 = vector.load %arg4[%78, %c0_45, %c0_46] : memref<27x128x128xbf16, #tpu.memory_space<vmem>>, vector<1x128x128xbf16>
    %80 = vector.shape_cast %79 : vector<1x128x128xbf16> to vector<128x128xbf16>
    %81 = arith.truncf %74 : vector<64x128xf32> to vector<64x128xbf16>
    %cst_47 = arith.constant dense<0.000000e+00> : vector<64x128xf32>
    %82 = tpu.matmul %81, %80, %cst_47 {dimension_numbers = #tpu.dot_dimension_numbers<[1], [0], [0], [1], [0, 0, 1, 1], [], []>} : vector<64x128xbf16>, vector<128x128xbf16>, vector<64x128xf32> -> vector<64x128xf32>
    %83 = arith.addf %73, %82 : vector<64x128xf32>
    %c55_i32 = arith.constant 55 : i32
    %84 = tpu.dynamic_rotate %5 by %c55_i32 dim 0 : vector<64x128xf32>, i32 -> vector<64x128xf32>
    %c9_i32_48 = arith.constant 9 : i32
    %85 = arith.muli %arg2, %c9_i32_48 : i32
    %c6_i32_49 = arith.constant 6 : i32
    %86 = arith.addi %85, %c6_i32_49 : i32
    %c2_i32_50 = arith.constant 2 : i32
    %87 = arith.addi %86, %c2_i32_50 : i32
    %88 = arith.index_cast %87 : i32 to index
    %c0_51 = arith.constant 0 : index
    %c0_52 = arith.constant 0 : index
    %89 = vector.load %arg4[%88, %c0_51, %c0_52] : memref<27x128x128xbf16, #tpu.memory_space<vmem>>, vector<1x128x128xbf16>
    %90 = vector.shape_cast %89 : vector<1x128x128xbf16> to vector<128x128xbf16>
    %91 = arith.truncf %84 : vector<64x128xf32> to vector<64x128xbf16>
    %cst_53 = arith.constant dense<0.000000e+00> : vector<64x128xf32>
    %92 = tpu.matmul %91, %90, %cst_53 {dimension_numbers = #tpu.dot_dimension_numbers<[1], [0], [0], [1], [0, 0, 1, 1], [], []>} : vector<64x128xbf16>, vector<128x128xbf16>, vector<64x128xf32> -> vector<64x128xf32>
    %93 = arith.addf %83, %92 : vector<64x128xf32>
    %c0_54 = arith.constant 0 : index
    %c0_55 = arith.constant 0 : index
    %94 = vector.load %arg8[%c0_54, %c0_55] : memref<64x128xf32, #tpu.memory_space<vmem>>, vector<64x128xf32>
    %95 = arith.addf %94, %93 : vector<64x128xf32>
    %c0_56 = arith.constant 0 : index
    %c0_57 = arith.constant 0 : index
    %96 = vector.load %arg8[%c0_56, %c0_57] : memref<64x128xf32, #tpu.memory_space<vmem>>, vector<64x128xf32>
    tpu.vector_store %arg8[%c0_56, %c0_57], %95 {strides = array<i32>} : memref<64x128xf32, #tpu.memory_space<vmem>>, vector<64x128xf32>,
    %c2_i32_58 = arith.constant 2 : i32
    %97 = arith.cmpi eq, %arg2, %c2_i32_58 : i32
    %98 = arith.extui %97 : i1 to i32
    %c0_i32_59 = arith.constant 0 : i32
    %99 = arith.cmpi ne, %98, %c0_i32_59 : i32
    scf.if %99 {
      %c0_60 = arith.constant 0 : index
      %c0_61 = arith.constant 0 : index
      %100 = vector.load %arg8[%c0_60, %c0_61] : memref<64x128xf32, #tpu.memory_space<vmem>>, vector<64x128xf32>
      %c0_62 = arith.constant 0 : index
      %c0_63 = arith.constant 0 : index
      %101 = vector.load %arg5[%c0_62, %c0_63] : memref<1x128xf32, #tpu.memory_space<vmem>>, vector<1x128xf32>
      %102 = vector.broadcast %101 : vector<1x128xf32> to vector<64x128xf32>
      %103 = arith.addf %100, %102 : vector<64x128xf32>
      %c0_64 = arith.constant 0 : index
      %c0_65 = arith.constant 0 : index
      %104 = vector.load %arg6[%c0_64, %c0_65] : memref<64x1xf32, #tpu.memory_space<vmem>>, vector<64x1xf32>
      %105 = vector.broadcast %104 : vector<64x1xf32> to vector<64x128xf32>
      %106 = arith.mulf %103, %105 : vector<64x128xf32>
      %107 = arith.truncf %106 : vector<64x128xf32> to vector<64x128xbf16>
      %c0_66 = arith.constant 0 : index
      %c0_67 = arith.constant 0 : index
      %c0_68 = arith.constant 0 : index
      %c0_69 = arith.constant 0 : index
      %108 = vector.load %arg7[%c0_66, %c0_67, %c0_68, %c0_69] : memref<1x1x64x128xbf16, #tpu.memory_space<vmem>>, vector<1x1x64x128xbf16>
      %109 = vector.shape_cast %108 : vector<1x1x64x128xbf16> to vector<64x128xbf16>
      %110 = vector.shape_cast %107 : vector<64x128xbf16> to vector<1x1x64x128xbf16>
      tpu.vector_store %arg7[%c0_66, %c0_67, %c0_68, %c0_69], %110 {strides = array<i32>} : memref<1x1x64x128xbf16, #tpu.memory_space<vmem>>, vector<1x1x64x128xbf16>,
    } else {
    }
    return
  }
  func.func @transform_0(%arg0: i32, %arg1: i32, %arg2: i32) -> (i32, i32, i32, i32) {
    %0 = arith.addi %arg1, %arg2 : i32
    %c0_i32 = arith.constant 0 : i32
    %c0_i32_0 = arith.constant 0 : i32
    %c0_i32_1 = arith.constant 0 : i32
    return %arg0, %0, %c0_i32, %c0_i32_0 : i32, i32, i32, i32
  }
  func.func @transform_1(%arg0: i32, %arg1: i32, %arg2: i32) -> (i32, i32, i32) {
    %c0_i32 = arith.constant 0 : i32
    %c0_i32_0 = arith.constant 0 : i32
    %c0_i32_1 = arith.constant 0 : i32
    %c0_i32_2 = arith.constant 0 : i32
    return %c0_i32, %c0_i32_0, %c0_i32_1 : i32, i32, i32
  }
  func.func @transform_2(%arg0: i32, %arg1: i32, %arg2: i32) -> (i32, i32) {
    %c0_i32 = arith.constant 0 : i32
    %c0_i32_0 = arith.constant 0 : i32
    %c0_i32_1 = arith.constant 0 : i32
    return %c0_i32, %c0_i32_0 : i32, i32
  }
  func.func @transform_3(%arg0: i32, %arg1: i32, %arg2: i32) -> (i32, i32) {
    %c0_i32 = arith.constant 0 : i32
    %c0_i32_0 = arith.constant 0 : i32
    %c0_i32_1 = arith.constant 0 : i32
    return %c0_i32, %c0_i32_0 : i32, i32
  }
  func.func @transform_4(%arg0: i32, %arg1: i32, %arg2: i32) -> (i32, i32, i32, i32) {
    %c0_i32 = arith.constant 0 : i32
    %c0_i32_0 = arith.constant 0 : i32
    %c0_i32_1 = arith.constant 0 : i32
    return %arg0, %arg1, %c0_i32, %c0_i32_0 : i32, i32, i32, i32
  }
}

module attributes {stable_mosaic.version = 11 : i64} {
  func.func @_maxpool_kernel(%arg0: i32, %arg1: i32, %arg2: memref<1x2x64x128xbf16, #tpu.memory_space<vmem>>, %arg3: memref<1x1x64x128xbf16, #tpu.memory_space<vmem>>) attributes {dimension_semantics = [#tpu.dimension_semantics<parallel>, #tpu.dimension_semantics<parallel>], iteration_bounds = array<i64: 2, 3>, scalar_prefetch = 0 : i64, scratch_operands = 0 : i64, tpu.core_type = #tpu.core_type<tc>, window_params = [{transform_indices = @transform_0, window_bounds = array<i64: 1, 2, 64, 128>}, {transform_indices = @transform_1, window_bounds = array<i64: 1, 1, 64, 128>}]} {
    %c0 = arith.constant 0 : index
    %c0_0 = arith.constant 0 : index
    %c0_1 = arith.constant 0 : index
    %c0_2 = arith.constant 0 : index
    %0 = vector.load %arg2[%c0, %c0_0, %c0_1, %c0_2] : memref<1x2x64x128xbf16, #tpu.memory_space<vmem>>, vector<1x1x64x128xbf16>
    %1 = vector.shape_cast %0 : vector<1x1x64x128xbf16> to vector<64x128xbf16>
    %2 = arith.extf %1 : vector<64x128xbf16> to vector<64x128xf32>
    %c0_3 = arith.constant 0 : index
    %c1 = arith.constant 1 : index
    %c0_4 = arith.constant 0 : index
    %c0_5 = arith.constant 0 : index
    %3 = vector.load %arg2[%c0_3, %c1, %c0_4, %c0_5] : memref<1x2x64x128xbf16, #tpu.memory_space<vmem>>, vector<1x1x64x128xbf16>
    %4 = vector.shape_cast %3 : vector<1x1x64x128xbf16> to vector<64x128xbf16>
    %5 = arith.extf %4 : vector<64x128xbf16> to vector<64x128xf32>
    %6 = arith.maximumf %2, %5 : vector<64x128xf32>
    %c63_i32 = arith.constant 63 : i32
    %7 = tpu.dynamic_rotate %6 by %c63_i32 dim 0 : vector<64x128xf32>, i32 -> vector<64x128xf32>
    %8 = arith.maximumf %6, %7 : vector<64x128xf32>
    %c56_i32 = arith.constant 56 : i32
    %9 = tpu.dynamic_rotate %8 by %c56_i32 dim 0 : vector<64x128xf32>, i32 -> vector<64x128xf32>
    %10 = arith.maximumf %8, %9 : vector<64x128xf32>
    %11 = arith.truncf %10 : vector<64x128xf32> to vector<64x128xbf16>
    %c0_6 = arith.constant 0 : index
    %c0_7 = arith.constant 0 : index
    %c0_8 = arith.constant 0 : index
    %c0_9 = arith.constant 0 : index
    %12 = vector.load %arg3[%c0_6, %c0_7, %c0_8, %c0_9] : memref<1x1x64x128xbf16, #tpu.memory_space<vmem>>, vector<1x1x64x128xbf16>
    %13 = vector.shape_cast %12 : vector<1x1x64x128xbf16> to vector<64x128xbf16>
    %14 = vector.shape_cast %11 : vector<64x128xbf16> to vector<1x1x64x128xbf16>
    tpu.vector_store %arg3[%c0_6, %c0_7, %c0_8, %c0_9], %14 {strides = array<i32>} : memref<1x1x64x128xbf16, #tpu.memory_space<vmem>>, vector<1x1x64x128xbf16>,
    return
  }
  func.func @transform_0(%arg0: i32, %arg1: i32) -> (i32, i32, i32, i32) {
    %c0_i32 = arith.constant 0 : i32
    %c0_i32_0 = arith.constant 0 : i32
    %c0_i32_1 = arith.constant 0 : i32
    return %arg0, %arg1, %c0_i32, %c0_i32_0 : i32, i32, i32, i32
  }
  func.func @transform_1(%arg0: i32, %arg1: i32) -> (i32, i32, i32, i32) {
    %c0_i32 = arith.constant 0 : i32
    %c0_i32_0 = arith.constant 0 : i32
    %c0_i32_1 = arith.constant 0 : i32
    return %arg0, %arg1, %c0_i32, %c0_i32_0 : i32, i32, i32, i32
  }
}

module attributes {stable_mosaic.version = 11 : i64} {
  func.func @_linear_kernel(%arg0: i32, %arg1: memref<2x512xbf16, #tpu.memory_space<vmem>>, %arg2: memref<512x128xbf16, #tpu.memory_space<vmem>>, %arg3: memref<1x128xf32, #tpu.memory_space<vmem>>, %arg4: memref<2x128xf32, #tpu.memory_space<vmem>>) attributes {dimension_semantics = [#tpu.dimension_semantics<arbitrary>], iteration_bounds = array<i64: 1>, scalar_prefetch = 0 : i64, scratch_operands = 0 : i64, tpu.core_type = #tpu.core_type<tc>, window_params = [{pipeline_mode = #tpu.pipeline_mode<synchronous>, transform_indices = @transform_0, window_bounds = array<i64: 2, 512>}, {pipeline_mode = #tpu.pipeline_mode<synchronous>, transform_indices = @transform_1, window_bounds = array<i64: 512, 128>}, {pipeline_mode = #tpu.pipeline_mode<synchronous>, transform_indices = @transform_2, window_bounds = array<i64: 1, 128>}, {pipeline_mode = #tpu.pipeline_mode<synchronous>, transform_indices = @transform_3, window_bounds = array<i64: 2, 128>}]} {
    %c0 = arith.constant 0 : index
    %c0_0 = arith.constant 0 : index
    %0 = vector.load %arg1[%c0, %c0_0] : memref<2x512xbf16, #tpu.memory_space<vmem>>, vector<2x512xbf16>
    %c0_1 = arith.constant 0 : index
    %c0_2 = arith.constant 0 : index
    %1 = vector.load %arg2[%c0_1, %c0_2] : memref<512x128xbf16, #tpu.memory_space<vmem>>, vector<512x128xbf16>
    %cst = arith.constant dense<0.000000e+00> : vector<2x128xf32>
    %2 = tpu.matmul %0, %1, %cst {dimension_numbers = #tpu.dot_dimension_numbers<[1], [0], [0], [1], [0, 0, 1, 1], [], []>} : vector<2x512xbf16>, vector<512x128xbf16>, vector<2x128xf32> -> vector<2x128xf32>
    %c0_3 = arith.constant 0 : index
    %c0_4 = arith.constant 0 : index
    %3 = vector.load %arg3[%c0_3, %c0_4] : memref<1x128xf32, #tpu.memory_space<vmem>>, vector<1x128xf32>
    %4 = vector.broadcast %3 : vector<1x128xf32> to vector<2x128xf32>
    %5 = arith.addf %2, %4 : vector<2x128xf32>
    %c0_5 = arith.constant 0 : index
    %c0_6 = arith.constant 0 : index
    %6 = vector.load %arg4[%c0_5, %c0_6] : memref<2x128xf32, #tpu.memory_space<vmem>>, vector<2x128xf32>
    tpu.vector_store %arg4[%c0_5, %c0_6], %5 {strides = array<i32>} : memref<2x128xf32, #tpu.memory_space<vmem>>, vector<2x128xf32>,
    return
  }
  func.func @transform_0(%arg0: i32) -> (i32, i32) {
    %c0_i32 = arith.constant 0 : i32
    %c0_i32_0 = arith.constant 0 : i32
    %c0_i32_1 = arith.constant 0 : i32
    return %c0_i32, %c0_i32_0 : i32, i32
  }
  func.func @transform_1(%arg0: i32) -> (i32, i32) {
    %c0_i32 = arith.constant 0 : i32
    %c0_i32_0 = arith.constant 0 : i32
    %c0_i32_1 = arith.constant 0 : i32
    return %c0_i32, %c0_i32_0 : i32, i32
  }
  func.func @transform_2(%arg0: i32) -> (i32, i32) {
    %c0_i32 = arith.constant 0 : i32
    %c0_i32_0 = arith.constant 0 : i32
    %c0_i32_1 = arith.constant 0 : i32
    return %c0_i32, %c0_i32_0 : i32, i32
  }
  func.func @transform_3(%arg0: i32) -> (i32, i32) {
    %c0_i32 = arith.constant 0 : i32
    %c0_i32_0 = arith.constant 0 : i32
    %c0_i32_1 = arith.constant 0 : i32
    return %c0_i32, %c0_i32_0 : i32, i32
  }
}

</mosaic_0001>

<llo_original>
// kernel: _lambda_.18
$region0: #{_lambda_.18}
  #allocation0 [shape = 'u32[]', space=smem, size = 0x4, offset = 0x4, fixed_abs, tag = 'smem constant byte address 0x4 - core index']
  #allocation1 [shape = 'u32[144,128]{1,0:T(1,128)}', space=vmem, size = 0x12000, scoped, tag = 'internal scratch']
  %s0 = inlined_call_operand.vmem [shape: bf16[2,6,64,128], index: 0, kind: input, shape index: {}]
  %s1 = inlined_call_operand.vmem [shape: bf16[2,3,64,128], index: 1, kind: output, shape index: {}]
  %s2 = sld [smem:[#allocation0]]
  $region37: #{_lambda_.18} parent=0
    _
  %s4 = ssub.s32 1, %s2
  %s5 = scalar_select 0, %s4, %s2
  loop: start=0, step=1, limit=8
  $region2: #{_lambda_.18} parent=0 // loop_pre_header
    _
  $region3: #{_lambda_.18} parent=0 // loop_header
    %s7 = sphi 0, %s11
    %p8 = scmp.ge.s32.totalorder %s7, 8
    %s14 = sphi 0, %s26
    %s15 = sphi 0, %s22
    %s16 = sphi 0, %s14
    %s17 = sphi 0, %s15
    %s18 = sphi 0, %s16
    %s19 = sphi 0, %s17
    %s31 = sphi 0, %s33
    %s34 = sphi 0, %s31
    %s35 = sphi 0, %s34
    %s51 = sphi 0, %s35
    %s59 = sphi 0, %s61
    %s62 = sphi 0, %s59
    %s63 = sphi 0, %s62
    %s79 = sphi 0, %s63
  $region4: #{_lambda_.18} parent=0 // loop_header_branch
    %10 = sbr.rel (%p8) target = $region8
  $region5: #{_lambda_.18} parent=0 // loop_body
    %s12 = ssub.s32 %s7, 1
    %s13 = ssub.s32 %s7, 2
    %s20 = sadd.s32 1, %s15
    %p21 = scmp.ge.s32.totalorder %s20, 3
    %s22 = scalar_select %p21, 0, %s20
    %s23 = sadd.s32 1, %s14
    %s24 = scalar_select %p21, %s23, %s14
    %p25 = scmp.ge.s32.totalorder %s24, 2
    %s26 = scalar_select %p25, 0, %s24
    %s27 = ssub.s32 %s14, %s26
    %s28 = ssub.s32 %s15, %s22
    %s29 = sor.u32 %s27, %s28
    %p30 = scmp.eq.s32.totalorder %s29, 0
    %s32 = sadd.s32 %s31, 1
    %s33 = scalar_select %p30, %s31, %s32
    %p36 = pneg %p30
    %p37 = scmp.eq.s32.totalorder %s7, 5
    %p38 = por %p36, %p37
    %p39 = scmp.ne.s32.totalorder %s31, %s34
    %p40 = scmp.eq.s32.totalorder %s7, 0
    %p41 = por %p39, %p40
    %p42 = scmp.ne.s32.totalorder %s31, %s34
    %p43 = scmp.eq.s32.totalorder %s12, 5
    %p44 = por %p42, %p43
    %p45 = scmp.ne.s32.totalorder %s34, %s35
    %p46 = scmp.eq.s32.totalorder %s12, 0
    %p47 = por %p45, %p46
    %p48 = scmp.ne.s32.totalorder %s34, %s35
    %p49 = scmp.eq.s32.totalorder %s13, 5
    %p50 = por %p48, %p49
    %p52 = scmp.ne.s32.totalorder %s35, %s51
    %p53 = scmp.eq.s32.totalorder %s13, 0
    %p54 = por %p52, %p53
    %s55 = ssub.s32 %s14, %s26
    %s56 = ssub.s32 %s15, %s22
    %s57 = sor.u32 %s55, %s56
    %p58 = scmp.eq.s32.totalorder %s57, 0
    %s60 = sadd.s32 %s59, 1
    %s61 = scalar_select %p58, %s59, %s60
    %p64 = pneg %p58
    %p65 = scmp.eq.s32.totalorder %s7, 5
    %p66 = por %p64, %p65
    %p67 = scmp.ne.s32.totalorder %s59, %s62
    %p68 = scmp.eq.s32.totalorder %s7, 0
    %p69 = por %p67, %p68
    %p70 = scmp.ne.s32.totalorder %s59, %s62
    %p71 = scmp.eq.s32.totalorder %s12, 5
    %p72 = por %p70, %p71
    %p73 = scmp.ne.s32.totalorder %s62, %s63
    %p74 = scmp.eq.s32.totalorder %s12, 0
    %p75 = por %p73, %p74
    %p76 = scmp.ne.s32.totalorder %s62, %s63
    %p77 = scmp.eq.s32.totalorder %s13, 5
    %p78 = por %p76, %p77
    %p80 = scmp.ne.s32.totalorder %s63, %s79
    %p81 = scmp.eq.s32.totalorder %s13, 0
    %p82 = por %p80, %p81
    %p83 = scmp.le.s32.totalorder 1, %s7
    %p84 = scmp.lt.s32.totalorder %s7, 7
    %p85 = pnand %p83, %p84
    %p86 = pneg %p85
    // Predicated region
    $region9: #{_lambda_.18} parent=5 // pred_check
      _
    $region10: #{_lambda_.18} parent=5 // pred_check_branch
      %88 = sbr.rel (%p85) target = $region12
    $region11: #{_lambda_.18} parent=5 // pred_region
      %s89 = ssub.s32 %s7, 1
    $region12: #{_lambda_.18} parent=5 // pred_fallthru
      _
    %p90 = scmp.lt.s32.totalorder %s7, 6
    // Predicated region
    $region13: #{_lambda_.18} parent=5 // pred_check
      %p91 = pneg %p90
    $region14: #{_lambda_.18} parent=5 // pred_check_branch
      %93 = sbr.rel (%p91) target = $region16
    $region15: #{_lambda_.18} parent=5 // pred_region
      // Predicated region
      $region17: #{_lambda_.18} parent=15 // pred_check
        %p94 = pneg %p41
      $region18: #{_lambda_.18} parent=15 // pred_check_branch
        %96 = sbr.rel (%p94) target = $region20
      $region19: #{_lambda_.18} parent=15 // pred_region
        %s97 = smul.u32 2, %s15
        %p98 = scmp.lt.s32.totalorder %s14, 1
        %s99 = scalar_select %p98, %s14, 1
        %p100 = scmp.lt.s32.totalorder %s97, 5
        %s101 = scalar_select %p100, %s97, 5
        %s102 = smul.addr %s101, 8
        %s103 = smul.addr %s99, 48
        %s104 = sadd.s32 %s102, %s103
        %s105 = smul.addr %s104, 4
        %s106 = scalar_lea.vmem %s0, %s105
        %s107 = smul.u32 2, %s15
      $region20: #{_lambda_.18} parent=15 // pred_fallthru
        _
    $region16: #{_lambda_.18} parent=5 // pred_fallthru
      _
    %p108 = scmp.le.s32.totalorder 1, %s7
    %p109 = scmp.lt.s32.totalorder %s7, 7
    %p110 = pnand %p108, %p109
    %p111 = pneg %p110
    // Predicated region
    $region21: #{_lambda_.18} parent=5 // pred_check
      _
    $region22: #{_lambda_.18} parent=5 // pred_check_branch
      %113 = sbr.rel (%p110) target = $region24
    $region23: #{_lambda_.18} parent=5 // pred_region
      %s114 = ssub.s32 %s7, 1
      %s115 = smul.u32 2, %s17
      %p116 = scmp.lt.s32.totalorder %s16, 1
      %s117 = scalar_select %p116, %s16, 1
      %p118 = scmp.lt.s32.totalorder %s115, 5
      %s119 = scalar_select %p118, %s115, 5
      %s120 = smul.addr %s119, 8
      %s121 = smul.addr %s117, 48
      %s122 = sadd.s32 %s120, %s121
      %s123 = smul.addr %s122, 4
      %s124 = scalar_lea.vmem %s0, %s123
      %p125 = pneg %p47
      %p126 = pneg %p44
      %p127 = pneg %p75
      %p128 = pneg %p72
      %p129 = scmp.lt.s32.totalorder %s16, 1
      %s130 = scalar_select %p129, %s16, 1
      %p131 = scmp.lt.s32.totalorder %s17, 2
      %s132 = scalar_select %p131, %s17, 2
      %s133 = smul.addr %s132, 8
      %s134 = smul.addr %s130, 24
      %s135 = sadd.s32 %s133, %s134
      %s136 = smul.addr %s135, 4
      %s137 = scalar_lea.vmem %s1, %s136
      %s138 = smul.u32 2, %s17
      %p139 = scmp.lt.s32.totalorder %s16, 1
      %s140 = scalar_select %p139, %s16, 1
      %p141 = scmp.lt.s32.totalorder %s138, 5
      %s142 = scalar_select %p141, %s138, 5
      %s143 = smul.addr %s142, 8
      %s144 = smul.addr %s140, 48
      %s145 = sadd.s32 %s143, %s144
      %s146 = smul.addr %s145, 4
      %s147 = scalar_lea.vmem %s0, %s146
      %s148 = smul.u32 2, %s17
      %p149 = scmp.lt.s32.totalorder %s16, 1
      %s150 = scalar_select %p149, %s16, 1
      %p151 = scmp.lt.s32.totalorder %s17, 2
      %s152 = scalar_select %p151, %s17, 2
      %s153 = smul.addr %s152, 8
      %s154 = smul.addr %s150, 24
      %s155 = sadd.s32 %s153, %s154
      %s156 = smul.addr %s155, 4
      %s157 = scalar_lea.vmem %s1, %s156
      %v158 = vld [vmem:[%s147] sm:$0xf]
      %v159 = vld [vmem:[%s147 + $0x4] sm:$0xf]
      %v160 = vld [vmem:[%s147 + $0x8] sm:$0xf]
      %v161 = vld [vmem:[%s147 + $0xc] sm:$0xf]
      %v162 = vld [vmem:[%s147 + $0x10] sm:$0xf]
      %v163 = vld [vmem:[%s147 + $0x14] sm:$0xf]
      %v164 = vld [vmem:[%s147 + $0x18] sm:$0xf]
      %v165 = vld [vmem:[%s147 + $0x1c] sm:$0xf]
      %v166 = vunpack.c.l.bf16 %v158
      %v167 = vunpack.c.l.bf16 %v159
      %v168 = vunpack.c.l.bf16 %v160
      %v169 = vunpack.c.l.bf16 %v161
      %v170 = vunpack.c.l.bf16 %v162
      %v171 = vunpack.c.l.bf16 %v163
      %v172 = vunpack.c.l.bf16 %v164
      %v173 = vunpack.c.l.bf16 %v165
      %s174 = scalar_lea.vmem %s147, 32
      %v175 = vld [vmem:[%s174] sm:$0xf]
      %v176 = vld [vmem:[%s174 + $0x4] sm:$0xf]
      %v177 = vld [vmem:[%s174 + $0x8] sm:$0xf]
      %v178 = vld [vmem:[%s174 + $0xc] sm:$0xf]
      %v179 = vld [vmem:[%s174 + $0x10] sm:$0xf]
      %v180 = vld [vmem:[%s174 + $0x14] sm:$0xf]
      %v181 = vld [vmem:[%s174 + $0x18] sm:$0xf]
      %v182 = vld [vmem:[%s174 + $0x1c] sm:$0xf]
      %v183 = vunpack.c.l.bf16 %v175
      %v184 = vunpack.c.l.bf16 %v176
      %v185 = vunpack.c.l.bf16 %v177
      %v186 = vunpack.c.l.bf16 %v178
      %v187 = vunpack.c.l.bf16 %v179
      %v188 = vunpack.c.l.bf16 %v180
      %v189 = vunpack.c.l.bf16 %v181
      %v190 = vunpack.c.l.bf16 %v182
      %v191 = vmax.f32 %v166, %v183
      %v192 = vmax.f32 %v167, %v184
      %v193 = vmax.f32 %v168, %v185
      %v194 = vmax.f32 %v169, %v186
      %v195 = vmax.f32 %v170, %v187
      %v196 = vmax.f32 %v171, %v188
      %v197 = vmax.f32 %v172, %v189
      %v198 = vmax.f32 %v173, %v190
      %v199 = vrot.slane %v191, 1
      %v200 = vrot.slane %v192, 1
      %v201 = vrot.slane %v193, 1
      %v202 = vrot.slane %v194, 1
      %v203 = vrot.slane %v195, 1
      %v204 = vrot.slane %v196, 1
      %v205 = vrot.slane %v197, 1
      %v206 = vrot.slane %v198, 1
      %v207 = vlaneseq
      %v208 = vshrl.u32 %v207, 7
      %vm209 = vcmp.lt.s32.totalorder %v208, 7
      %v210 = vsel %vm209, %v205, %v206
      %v211 = vsel %vm209, %v204, %v205
      %v212 = vsel %vm209, %v203, %v204
      %v213 = vsel %vm209, %v202, %v203
      %v214 = vsel %vm209, %v201, %v202
      %v215 = vsel %vm209, %v200, %v201
      %v216 = vsel %vm209, %v199, %v200
      %v217 = vsel %vm209, %v206, %v199
      %v218 = vmax.f32 %v191, %v216
      %v219 = vmax.f32 %v192, %v215
      %v220 = vmax.f32 %v193, %v214
      %v221 = vmax.f32 %v194, %v213
      %v222 = vmax.f32 %v195, %v212
      %v223 = vmax.f32 %v196, %v211
      %v224 = vmax.f32 %v197, %v210
      %v225 = vmax.f32 %v198, %v217
      %v226 = vmax.f32 %v218, %v219
      %v227 = vmax.f32 %v219, %v220
      %v228 = vmax.f32 %v220, %v221
      %v229 = vmax.f32 %v221, %v222
      %v230 = vmax.f32 %v222, %v223
      %v231 = vmax.f32 %v223, %v224
      %v232 = vmax.f32 %v224, %v225
      %v233 = vmax.f32 %v225, %v218
      %v234 = vpack.c.bf16 %v227, %v226
      %v235 = vpack.c.bf16 %v229, %v228
      %v236 = vpack.c.bf16 %v231, %v230
      %v237 = vpack.c.bf16 %v233, %v232
      %v242 = vunpack.c.l.b16 %v234
      %v243 = vunpack.c.h.b16 %v234
      %v244 = vunpack.c.l.b16 %v235
      %v245 = vunpack.c.h.b16 %v235
      %v246 = vunpack.c.l.b16 %v236
      %v247 = vunpack.c.h.b16 %v236
      %v248 = vunpack.c.l.b16 %v237
      %v249 = vunpack.c.h.b16 %v237
      %v250 = vpack.c.b16 %v242, %v242
      %v251 = vpack.c.b16 %v243, %v243
      %v252 = vpack.c.b16 %v244, %v244
      %v253 = vpack.c.b16 %v245, %v245
      %v254 = vpack.c.b16 %v246, %v246
      %v255 = vpack.c.b16 %v247, %v247
      %v256 = vpack.c.b16 %v248, %v248
      %v257 = vpack.c.b16 %v249, %v249
      %266 = vst [vmem:[%s157] sm:$0xf] %v250
      %267 = vst [vmem:[%s157 + $0x4] sm:$0xf] %v251
      %268 = vst [vmem:[%s157 + $0x8] sm:$0xf] %v252
      %269 = vst [vmem:[%s157 + $0xc] sm:$0xf] %v253
      %270 = vst [vmem:[%s157 + $0x10] sm:$0xf] %v254
      %271 = vst [vmem:[%s157 + $0x14] sm:$0xf] %v255
      %272 = vst [vmem:[%s157 + $0x18] sm:$0xf] %v256
      %273 = vst [vmem:[%s157 + $0x1c] sm:$0xf] %v257
      %p274 = scmp.lt.s32.totalorder %s16, 1
      %s275 = scalar_select %p274, %s16, 1
      %p276 = scmp.lt.s32.totalorder %s17, 2
      %s277 = scalar_select %p276, %s17, 2
      %s278 = smul.addr %s277, 8
      %s279 = smul.addr %s275, 24
      %s280 = sadd.s32 %s278, %s279
      %s281 = smul.addr %s280, 4
      %s282 = scalar_lea.vmem %s1, %s281
      // Predicated region
      $region25: #{_lambda_.18} parent=23 // pred_check
        %p283 = pneg %p72
      $region26: #{_lambda_.18} parent=23 // pred_check_branch
        %285 = sbr.rel (%p283) target = $region28
      $region27: #{_lambda_.18} parent=23 // pred_region
        _
      $region28: #{_lambda_.18} parent=23 // pred_fallthru
        _
    $region24: #{_lambda_.18} parent=5 // pred_fallthru
      _
    %p286 = scmp.le.s32.totalorder 2, %s7
    // Predicated region
    $region29: #{_lambda_.18} parent=5 // pred_check
      %p287 = pneg %p286
    $region30: #{_lambda_.18} parent=5 // pred_check_branch
      %289 = sbr.rel (%p287) target = $region32
    $region31: #{_lambda_.18} parent=5 // pred_region
      %s290 = ssub.s32 %s7, 2
      // Predicated region
      $region33: #{_lambda_.18} parent=31 // pred_check
        %p291 = pneg %p78
      $region34: #{_lambda_.18} parent=31 // pred_check_branch
        %293 = sbr.rel (%p291) target = $region36
      $region35: #{_lambda_.18} parent=31 // pred_region
        %p294 = scmp.lt.s32.totalorder %s18, 1
        %s295 = scalar_select %p294, %s18, 1
        %p296 = scmp.lt.s32.totalorder %s19, 2
        %s297 = scalar_select %p296, %s19, 2
        %s298 = smul.addr %s297, 8
        %s299 = smul.addr %s295, 24
        %s300 = sadd.s32 %s298, %s299
        %s301 = smul.addr %s300, 4
        %s302 = scalar_lea.vmem %s1, %s301
      $region36: #{_lambda_.18} parent=31 // pred_fallthru
        _
    $region32: #{_lambda_.18} parent=5 // pred_fallthru
      _
  $region6: #{_lambda_.18} parent=0 // loop_footer
    %s11 = sadd.s32 1, %s7
  $region7: #{_lambda_.18} parent=0 // loop_footer_branch
    %6 = sbr.rel target = $region3
  $region8: #{_lambda_.18} parent=0 // loop_exit
    _

// kernel: _lambda_.14
$region0: #{_lambda_.14}
  #allocation0 [shape = 'u32[]', space=smem, size = 0x4, offset = 0x4, fixed_abs, tag = 'smem constant byte address 0x4 - core index']
  #allocation1 [shape = 'u32[144,128]{1,0:T(1,128)}', space=vmem, size = 0x12000, scoped, tag = 'internal scratch']
  #allocation2 [shape = 'f32[64,128]{1,0:T(8,128)}', space=vmem, size = 0x8000, scoped, tag = 'scratch operand']
  %s0 = inlined_call_operand.vmem [shape: bf16[2,8,64,128], index: 0, kind: input, shape index: {}]
  %s1 = inlined_call_operand.vmem [shape: bf16[27,128,128], index: 1, kind: input, shape index: {}]
  %s2 = inlined_call_operand.vmem [shape: f32[1,128], index: 2, kind: input, shape index: {}]
  %s3 = inlined_call_operand.vmem [shape: f32[64,1], index: 3, kind: input, shape index: {}]
  %s4 = inlined_call_operand.vmem [shape: bf16[2,6,64,128], index: 4, kind: output, shape index: {}]
  %s5 = sld [smem:[#allocation0]]
  $region57: #{_lambda_.14} parent=0
    _
  %s7 = ssub.s32 1, %s5
  %s8 = scalar_select 0, %s7, %s5
  loop: start=0, step=1, limit=38
  $region2: #{_lambda_.14} parent=0 // loop_pre_header
    _
  $region3: #{_lambda_.14} parent=0 // loop_header
    %s10 = sphi 0, %s14
    %p11 = scmp.ge.s32.totalorder %s10, 38
    %s17 = sphi 0, %s36
    %s18 = sphi 0, %s32
    %s19 = sphi 0, %s28
    %s20 = sphi 0, %s17
    %s21 = sphi 0, %s18
    %s22 = sphi 0, %s19
    %s23 = sphi 0, %s20
    %s24 = sphi 0, %s21
    %s25 = sphi 0, %s22
    %s43 = sphi 0, %s45
    %s46 = sphi 0, %s43
    %s47 = sphi 0, %s46
    %s63 = sphi 0, %s47
    %s67 = sphi 0, %s67
    %s69 = sphi 0, %s67
    %s70 = sphi 0, %s69
    %s84 = sphi 0, %s70
    %s88 = sphi 0, %s88
    %s90 = sphi 0, %s88
    %s91 = sphi 0, %s90
    %s105 = sphi 0, %s91
    %s109 = sphi 0, %s109
    %s111 = sphi 0, %s109
    %s112 = sphi 0, %s111
    %s126 = sphi 0, %s112
    %s134 = sphi 0, %s136
    %s137 = sphi 0, %s134
    %s138 = sphi 0, %s137
    %s154 = sphi 0, %s138
  $region4: #{_lambda_.14} parent=0 // loop_header_branch
    %13 = sbr.rel (%p11) target = $region8
  $region5: #{_lambda_.14} parent=0 // loop_body
    %s15 = ssub.s32 %s10, 1
    %s16 = ssub.s32 %s10, 2
    %s26 = sadd.s32 1, %s19
    %p27 = scmp.ge.s32.totalorder %s26, 3
    %s28 = scalar_select %p27, 0, %s26
    %s29 = sadd.s32 1, %s18
    %s30 = scalar_select %p27, %s29, %s18
    %p31 = scmp.ge.s32.totalorder %s30, 6
    %s32 = scalar_select %p31, 0, %s30
    %s33 = sadd.s32 1, %s17
    %s34 = scalar_select %p31, %s33, %s17
    %p35 = scmp.ge.s32.totalorder %s34, 2
    %s36 = scalar_select %p35, 0, %s34
    %s37 = sadd.s32 %s18, %s19
    %s38 = sadd.s32 %s32, %s28
    %s39 = ssub.s32 %s17, %s36
    %s40 = ssub.s32 %s37, %s38
    %s41 = sor.u32 %s39, %s40
    %p42 = scmp.eq.s32.totalorder %s41, 0
    %s44 = sadd.s32 %s43, 1
    %s45 = scalar_select %p42, %s43, %s44
    %p48 = pneg %p42
    %p49 = scmp.eq.s32.totalorder %s10, 35
    %p50 = por %p48, %p49
    %p51 = scmp.ne.s32.totalorder %s43, %s46
    %p52 = scmp.eq.s32.totalorder %s10, 0
    %p53 = por %p51, %p52
    %p54 = scmp.ne.s32.totalorder %s43, %s46
    %p55 = scmp.eq.s32.totalorder %s15, 35
    %p56 = por %p54, %p55
    %p57 = scmp.ne.s32.totalorder %s46, %s47
    %p58 = scmp.eq.s32.totalorder %s15, 0
    %p59 = por %p57, %p58
    %p60 = scmp.ne.s32.totalorder %s46, %s47
    %p61 = scmp.eq.s32.totalorder %s16, 35
    %p62 = por %p60, %p61
    %p64 = scmp.ne.s32.totalorder %s47, %s63
    %p65 = scmp.eq.s32.totalorder %s16, 0
    %p66 = por %p64, %p65
    %s68 = sadd.s32 %s67, 1
    %p71 = scmp.eq.s32.totalorder %s10, 35
    %p72 = scmp.ne.s32.totalorder %s67, %s69
    %p73 = scmp.eq.s32.totalorder %s10, 0
    %p74 = por %p72, %p73
    %p75 = scmp.ne.s32.totalorder %s67, %s69
    %p76 = scmp.eq.s32.totalorder %s15, 35
    %p77 = por %p75, %p76
    %p78 = scmp.ne.s32.totalorder %s69, %s70
    %p79 = scmp.eq.s32.totalorder %s15, 0
    %p80 = por %p78, %p79
    %p81 = scmp.ne.s32.totalorder %s69, %s70
    %p82 = scmp.eq.s32.totalorder %s16, 35
    %p83 = por %p81, %p82
    %p85 = scmp.ne.s32.totalorder %s70, %s84
    %p86 = scmp.eq.s32.totalorder %s16, 0
    %p87 = por %p85, %p86
    %s89 = sadd.s32 %s88, 1
    %p92 = scmp.eq.s32.totalorder %s10, 35
    %p93 = scmp.ne.s32.totalorder %s88, %s90
    %p94 = scmp.eq.s32.totalorder %s10, 0
    %p95 = por %p93, %p94
    %p96 = scmp.ne.s32.totalorder %s88, %s90
    %p97 = scmp.eq.s32.totalorder %s15, 35
    %p98 = por %p96, %p97
    %p99 = scmp.ne.s32.totalorder %s90, %s91
    %p100 = scmp.eq.s32.totalorder %s15, 0
    %p101 = por %p99, %p100
    %p102 = scmp.ne.s32.totalorder %s90, %s91
    %p103 = scmp.eq.s32.totalorder %s16, 35
    %p104 = por %p102, %p103
    %p106 = scmp.ne.s32.totalorder %s91, %s105
    %p107 = scmp.eq.s32.totalorder %s16, 0
    %p108 = por %p106, %p107
    %s110 = sadd.s32 %s109, 1
    %p113 = scmp.eq.s32.totalorder %s10, 35
    %p114 = scmp.ne.s32.totalorder %s109, %s111
    %p115 = scmp.eq.s32.totalorder %s10, 0
    %p116 = por %p114, %p115
    %p117 = scmp.ne.s32.totalorder %s109, %s111
    %p118 = scmp.eq.s32.totalorder %s15, 35
    %p119 = por %p117, %p118
    %p120 = scmp.ne.s32.totalorder %s111, %s112
    %p121 = scmp.eq.s32.totalorder %s15, 0
    %p122 = por %p120, %p121
    %p123 = scmp.ne.s32.totalorder %s111, %s112
    %p124 = scmp.eq.s32.totalorder %s16, 35
    %p125 = por %p123, %p124
    %p127 = scmp.ne.s32.totalorder %s112, %s126
    %p128 = scmp.eq.s32.totalorder %s16, 0
    %p129 = por %p127, %p128
    %s130 = ssub.s32 %s17, %s36
    %s131 = ssub.s32 %s18, %s32
    %s132 = sor.u32 %s130, %s131
    %p133 = scmp.eq.s32.totalorder %s132, 0
    %s135 = sadd.s32 %s134, 1
    %s136 = scalar_select %p133, %s134, %s135
    %p139 = pneg %p133
    %p140 = scmp.eq.s32.totalorder %s10, 35
    %p141 = por %p139, %p140
    %p142 = scmp.ne.s32.totalorder %s134, %s137
    %p143 = scmp.eq.s32.totalorder %s10, 0
    %p144 = por %p142, %p143
    %p145 = scmp.ne.s32.totalorder %s134, %s137
    %p146 = scmp.eq.s32.totalorder %s15, 35
    %p147 = por %p145, %p146
    %p148 = scmp.ne.s32.totalorder %s137, %s138
    %p149 = scmp.eq.s32.totalorder %s15, 0
    %p150 = por %p148, %p149
    %p151 = scmp.ne.s32.totalorder %s137, %s138
    %p152 = scmp.eq.s32.totalorder %s16, 35
    %p153 = por %p151, %p152
    %p155 = scmp.ne.s32.totalorder %s138, %s154
    %p156 = scmp.eq.s32.totalorder %s16, 0
    %p157 = por %p155, %p156
    %p158 = scmp.le.s32.totalorder 1, %s10
    %p159 = scmp.lt.s32.totalorder %s10, 37
    %p160 = pnand %p158, %p159
    %p161 = pneg %p160
    // Predicated region
    $region9: #{_lambda_.14} parent=5 // pred_check
      _
    $region10: #{_lambda_.14} parent=5 // pred_check_branch
      %163 = sbr.rel (%p160) target = $region12
    $region11: #{_lambda_.14} parent=5 // pred_region
      %s164 = ssub.s32 %s10, 1
      // Predicated region
      $region13: #{_lambda_.14} parent=11 // pred_check
        %p165 = pneg %p80
      $region14: #{_lambda_.14} parent=11 // pred_check_branch
        %167 = sbr.rel (%p165) target = $region16
      $region15: #{_lambda_.14} parent=11 // pred_region
        _
      $region16: #{_lambda_.14} parent=11 // pred_fallthru
        _
      // Predicated region
      $region17: #{_lambda_.14} parent=11 // pred_check
        %p168 = pneg %p101
      $region18: #{_lambda_.14} parent=11 // pred_check_branch
        %170 = sbr.rel (%p168) target = $region20
      $region19: #{_lambda_.14} parent=11 // pred_region
        _
      $region20: #{_lambda_.14} parent=11 // pred_fallthru
        _
      // Predicated region
      $region21: #{_lambda_.14} parent=11 // pred_check
        %p171 = pneg %p122
      $region22: #{_lambda_.14} parent=11 // pred_check_branch
        %173 = sbr.rel (%p171) target = $region24
      $region23: #{_lambda_.14} parent=11 // pred_region
        _
      $region24: #{_lambda_.14} parent=11 // pred_fallthru
        _
    $region12: #{_lambda_.14} parent=5 // pred_fallthru
      _
    %p174 = scmp.lt.s32.totalorder %s10, 36
    // Predicated region
    $region25: #{_lambda_.14} parent=5 // pred_check
      %p175 = pneg %p174
    $region26: #{_lambda_.14} parent=5 // pred_check_branch
      %177 = sbr.rel (%p175) target = $region28
    $region27: #{_lambda_.14} parent=5 // pred_region
      // Predicated region
      $region29: #{_lambda_.14} parent=27 // pred_check
        %p178 = pneg %p53
      $region30: #{_lambda_.14} parent=27 // pred_check_branch
        %180 = sbr.rel (%p178) target = $region32
      $region31: #{_lambda_.14} parent=27 // pred_region
        %s181 = sadd.s32 %s18, %s19
        %p182 = scmp.lt.s32.totalorder %s17, 1
        %s183 = scalar_select %p182, %s17, 1
        %p184 = scmp.lt.s32.totalorder %s181, 7
        %s185 = scalar_select %p184, %s181, 7
        %s186 = smul.addr %s185, 8
        %s187 = smul.addr %s183, 64
        %s188 = sadd.s32 %s186, %s187
        %s189 = smul.addr %s188, 4
        %s190 = scalar_lea.vmem %s0, %s189
        %s191 = sadd.s32 %s18, %s19
      $region32: #{_lambda_.14} parent=27 // pred_fallthru
        _
    $region28: #{_lambda_.14} parent=5 // pred_fallthru
      _
    %p192 = scmp.le.s32.totalorder 1, %s10
    %p193 = scmp.lt.s32.totalorder %s10, 37
    %p194 = pnand %p192, %p193
    %p195 = pneg %p194
    // Predicated region
    $region33: #{_lambda_.14} parent=5 // pred_check
      _
    $region34: #{_lambda_.14} parent=5 // pred_check_branch
      %197 = sbr.rel (%p194) target = $region36
    $region35: #{_lambda_.14} parent=5 // pred_region
      %s198 = ssub.s32 %s10, 1
      %s199 = sadd.s32 %s21, %s22
      %p200 = scmp.lt.s32.totalorder %s20, 1
      %s201 = scalar_select %p200, %s20, 1
      %p202 = scmp.lt.s32.totalorder %s199, 7
      %s203 = scalar_select %p202, %s199, 7
      %s204 = smul.addr %s203, 8
      %s205 = smul.addr %s201, 64
      %s206 = sadd.s32 %s204, %s205
      %s207 = smul.addr %s206, 4
      %s208 = scalar_lea.vmem %s0, %s207
      %p209 = pneg %p59
      %p210 = pneg %p56
      %p211 = pneg %p80
      %p212 = pneg %p77
      %p213 = pneg %p101
      %p214 = pneg %p98
      %p215 = pneg %p122
      %p216 = pneg %p119
      %p217 = pneg %p150
      %p218 = pneg %p147
      %p219 = scmp.lt.s32.totalorder %s20, 1
      %s220 = scalar_select %p219, %s20, 1
      %p221 = scmp.lt.s32.totalorder %s21, 5
      %s222 = scalar_select %p221, %s21, 5
      %s223 = smul.addr %s222, 8
      %s224 = smul.addr %s220, 48
      %s225 = sadd.s32 %s223, %s224
      %s226 = smul.addr %s225, 4
      %s227 = scalar_lea.vmem %s4, %s226
      %s228 = sadd.s32 %s21, %s22
      %p229 = scmp.lt.s32.totalorder %s20, 1
      %s230 = scalar_select %p229, %s20, 1
      %p231 = scmp.lt.s32.totalorder %s228, 7
      %s232 = scalar_select %p231, %s228, 7
      %s233 = smul.addr %s232, 8
      %s234 = smul.addr %s230, 64
      %s235 = sadd.s32 %s233, %s234
      %s236 = smul.addr %s235, 4
      %s237 = scalar_lea.vmem %s0, %s236
      %s238 = sadd.s32 %s21, %s22
      %p239 = scmp.lt.s32.totalorder %s20, 1
      %s240 = scalar_select %p239, %s20, 1
      %p241 = scmp.lt.s32.totalorder %s21, 5
      %s242 = scalar_select %p241, %s21, 5
      %s243 = smul.addr %s242, 8
      %s244 = smul.addr %s240, 48
      %s245 = sadd.s32 %s243, %s244
      %s246 = smul.addr %s245, 4
      %s247 = scalar_lea.vmem %s4, %s246
      %p249 = scmp.eq.s32.totalorder %s22, 0
      // Predicated region
      $region37: #{_lambda_.14} parent=35 // pred_check
        %p250 = pneg %p249
      $region38: #{_lambda_.14} parent=35 // pred_check_branch
        %252 = sbr.rel (%p250) target = $region40
      $region39: #{_lambda_.14} parent=35 // pred_region
        %253 = vst [vmem:[#allocation2] sm:$0xff] 0.0
        %254 = vst [vmem:[#allocation2 + $0x8] sm:$0xff] 0.0
        %255 = vst [vmem:[#allocation2 + $0x10] sm:$0xff] 0.0
        %256 = vst [vmem:[#allocation2 + $0x18] sm:$0xff] 0.0
        %257 = vst [vmem:[#allocation2 + $0x20] sm:$0xff] 0.0
        %258 = vst [vmem:[#allocation2 + $0x28] sm:$0xff] 0.0
        %259 = vst [vmem:[#allocation2 + $0x30] sm:$0xff] 0.0
        %260 = vst [vmem:[#allocation2 + $0x38] sm:$0xff] 0.0
      $region40: #{_lambda_.14} parent=35 // pred_fallthru
        _
      %v261 = vld [vmem:[%s237] sm:$0xf]
      %v262 = vld [vmem:[%s237 + $0x4] sm:$0xf]
      %v263 = vld [vmem:[%s237 + $0x8] sm:$0xf]
      %v264 = vld [vmem:[%s237 + $0xc] sm:$0xf]
      %v265 = vld [vmem:[%s237 + $0x10] sm:$0xf]
      %v266 = vld [vmem:[%s237 + $0x14] sm:$0xf]
      %v267 = vld [vmem:[%s237 + $0x18] sm:$0xf]
      %v268 = vld [vmem:[%s237 + $0x1c] sm:$0xf]
      %v269 = vunpack.c.l.bf16 %v261
      %v270 = vunpack.c.l.bf16 %v262
      %v271 = vunpack.c.l.bf16 %v263
      %v272 = vunpack.c.l.bf16 %v264
      %v273 = vunpack.c.l.bf16 %v265
      %v274 = vunpack.c.l.bf16 %v266
      %v275 = vunpack.c.l.bf16 %v267
      %v276 = vunpack.c.l.bf16 %v268
      %v277 = vrot.slane %v269, 7
      %v278 = vrot.slane %v270, 7
      %v279 = vrot.slane %v271, 7
      %v280 = vrot.slane %v272, 7
      %v281 = vrot.slane %v273, 7
      %v282 = vrot.slane %v274, 7
      %v283 = vrot.slane %v275, 7
      %v284 = vrot.slane %v276, 7
      %v285 = vlaneseq
      %v286 = vshrl.u32 %v285, 7
      %vm287 = vcmp.lt.s32.totalorder %v286, 1
      %v288 = vsel %vm287, %v283, %v284
      %v289 = vsel %vm287, %v282, %v283
      %v290 = vsel %vm287, %v281, %v282
      %v291 = vsel %vm287, %v280, %v281
      %v292 = vsel %vm287, %v279, %v280
      %v293 = vsel %vm287, %v278, %v279
      %v294 = vsel %vm287, %v277, %v278
      %v295 = vsel %vm287, %v284, %v277
      %s296 = smul.u32 %s22, 9
      %s297 = smul.u32 %s296, 16
      %s298 = smul.addr %s297, 4
      %s299 = scalar_lea.vmem %s1, %s298
      %v300 = vld [vmem:[%s299] sm:$0xf]
      %v301 = vld [vmem:[%s299 + $0x4] sm:$0xf]
      %v302 = vld [vmem:[%s299 + $0x8] sm:$0xf]
      %v303 = vld [vmem:[%s299 + $0xc] sm:$0xf]
      %v304 = vld [vmem:[%s299 + $0x10] sm:$0xf]
      %v305 = vld [vmem:[%s299 + $0x14] sm:$0xf]
      %v306 = vld [vmem:[%s299 + $0x18] sm:$0xf]
      %v307 = vld [vmem:[%s299 + $0x1c] sm:$0xf]
      %v308 = vld [vmem:[%s299 + $0x20] sm:$0xf]
      %v309 = vld [vmem:[%s299 + $0x24] sm:$0xf]
      %v310 = vld [vmem:[%s299 + $0x28] sm:$0xf]
      %v311 = vld [vmem:[%s299 + $0x2c] sm:$0xf]
      %v312 = vld [vmem:[%s299 + $0x30] sm:$0xf]
      %v313 = vld [vmem:[%s299 + $0x34] sm:$0xf]
      %v314 = vld [vmem:[%s299 + $0x38] sm:$0xf]
      %v315 = vld [vmem:[%s299 + $0x3c] sm:$0xf]
      %v316 = vpack.c.bf16 %v295, %v288
      %v317 = vpack.c.bf16 %v293, %v294
      %v318 = vpack.c.bf16 %v291, %v292
      %v319 = vpack.c.bf16 %v289, %v290
      %s320 = sadd.s32 %s296, 1
      %s321 = smul.u32 %s320, 16
      %s322 = smul.addr %s321, 4
      %s323 = scalar_lea.vmem %s1, %s322
      %v324 = vld [vmem:[%s323] sm:$0xf]
      %v325 = vld [vmem:[%s323 + $0x4] sm:$0xf]
      %v326 = vld [vmem:[%s323 + $0x8] sm:$0xf]
      %v327 = vld [vmem:[%s323 + $0xc] sm:$0xf]
      %v328 = vld [vmem:[%s323 + $0x10] sm:$0xf]
      %v329 = vld [vmem:[%s323 + $0x14] sm:$0xf]
      %v330 = vld [vmem:[%s323 + $0x18] sm:$0xf]
      %v331 = vld [vmem:[%s323 + $0x1c] sm:$0xf]
      %v332 = vld [vmem:[%s323 + $0x20] sm:$0xf]
      %v333 = vld [vmem:[%s323 + $0x24] sm:$0xf]
      %v334 = vld [vmem:[%s323 + $0x28] sm:$0xf]
      %v335 = vld [vmem:[%s323 + $0x2c] sm:$0xf]
      %v336 = vld [vmem:[%s323 + $0x30] sm:$0xf]
      %v337 = vld [vmem:[%s323 + $0x34] sm:$0xf]
      %v338 = vld [vmem:[%s323 + $0x38] sm:$0xf]
      %v339 = vld [vmem:[%s323 + $0x3c] sm:$0xf]
      %v340 = vpack.c.bf16 %v269, %v276
      %v341 = vpack.c.bf16 %v271, %v270
      %v342 = vpack.c.bf16 %v273, %v272
      %v343 = vpack.c.bf16 %v275, %v274
      %v360 = vunpack.c.l.b16 %v324
      %v361 = vunpack.c.l.b16 %v325
      %v362 = vunpack.c.l.b16 %v326
      %v363 = vunpack.c.l.b16 %v327
      %v364 = vunpack.c.l.b16 %v328
      %v365 = vunpack.c.l.b16 %v329
      %v366 = vunpack.c.l.b16 %v330
      %v367 = vunpack.c.l.b16 %v331
      %v368 = vunpack.c.l.b16 %v332
      %v369 = vunpack.c.l.b16 %v333
      %v370 = vunpack.c.l.b16 %v334
      %v371 = vunpack.c.l.b16 %v335
      %v372 = vunpack.c.l.b16 %v336
      %v373 = vunpack.c.l.b16 %v337
      %v374 = vunpack.c.l.b16 %v338
      %v375 = vunpack.c.l.b16 %v339
      %v376 = vpack.c.b16 %v361, %v360
      %v377 = vpack.c.b16 %v363, %v362
      %v378 = vpack.c.b16 %v365, %v364
      %v379 = vpack.c.b16 %v367, %v366
      %v380 = vpack.c.b16 %v369, %v368
      %v381 = vpack.c.b16 %v371, %v370
      %v382 = vpack.c.b16 %v373, %v372
      %v383 = vpack.c.b16 %v375, %v374
      %392 = vmatprep.subr.bf16.mxu0 0
      %393 = vmatpush1.bf16.msra.mxu0 %v376
      %394 = vmatprep.subr.bf16.mxu0 0
      %395 = vmatpush1.bf16.msra.mxu0 %v377
      %396 = vmatprep.subr.bf16.mxu0 0
      %397 = vmatpush1.bf16.msra.mxu0 %v378
      %398 = vmatprep.subr.bf16.mxu0 0
      %399 = vmatpush1.bf16.msra.mxu0 %v379
      %400 = vmatprep.subr.bf16.mxu0 0
      %401 = vmatpush1.bf16.msra.mxu0 %v380
      %402 = vmatprep.subr.bf16.mxu0 0
      %403 = vmatpush1.bf16.msra.mxu0 %v381
      %404 = vmatprep.subr.bf16.mxu0 0
      %405 = vmatpush1.bf16.msra.mxu0 %v382
      %406 = vmatprep.subr.bf16.mxu0 0
      %407 = vmatpush1.bf16.msra.mxu0 %v383
      %408 = vmatprep.subr.bf16.mxu0 0
      %409 = vmatpush1.bf16.msra.mxu0 0
      %410 = vmatprep.subr.bf16.mxu0 0
      %411 = vmatpush1.bf16.msra.mxu0 0
      %412 = vmatprep.subr.bf16.mxu0 0
      %413 = vmatpush1.bf16.msra.mxu0 0
      %414 = vmatprep.subr.bf16.mxu0 0
      %415 = vmatpush1.bf16.msra.mxu0 0
      %416 = vmatprep.subr.bf16.mxu0 0
      %417 = vmatpush1.bf16.msra.mxu0 0
      %418 = vmatprep.subr.bf16.mxu0 0
      %419 = vmatpush1.bf16.msra.mxu0 0
      %420 = vmatprep.subr.bf16.mxu0 0
      %421 = vmatpush1.bf16.msra.mxu0 0
      %422 = vmatprep.subr.bf16.mxu0 0
      %423 = vmatpush1.bf16.msra.mxu0 0
      %424 = vmatprep.mubr.bf16.mxu0 0
      %425 = vmatmul.mubr.bf16.gmra.mrb[0].mxu0 %v340
      %v426 = vpop.f32.mrb[0].mxu0
      %v427 = vadd.f32 0.0, %v426
      %v428 = vpop.f32.mrb[0].mxu0
      %v429 = vpop.f32.mrb[0].mxu0
      %v430 = vadd.f32 0.0, %v429
      %v431 = vpop.f32.mrb[0].mxu0
      %432 = vmatprep.mubr.bf16.mxu0 0
      %433 = vmatmul.mubr.bf16.gmra.mrb[0].mxu0 %v341
      %v434 = vpop.f32.mrb[0].mxu0
      %v435 = vadd.f32 0.0, %v434
      %v436 = vpop.f32.mrb[0].mxu0
      %v437 = vpop.f32.mrb[0].mxu0
      %v438 = vadd.f32 0.0, %v437
      %v439 = vpop.f32.mrb[0].mxu0
      %440 = vmatprep.mubr.bf16.mxu0 0
      %441 = vmatmul.mubr.bf16.gmra.mrb[0].mxu0 %v342
      %v442 = vpop.f32.mrb[0].mxu0
      %v443 = vadd.f32 0.0, %v442
      %v444 = vpop.f32.mrb[0].mxu0
      %v445 = vpop.f32.mrb[0].mxu0
      %v446 = vadd.f32 0.0, %v445
      %v447 = vpop.f32.mrb[0].mxu0
      %448 = vmatprep.mubr.bf16.mxu0 0
      %449 = vmatmul.mubr.bf16.gmra.mrb[0].mxu0 %v343
      %v450 = vpop.f32.mrb[0].mxu0
      %v451 = vadd.f32 0.0, %v450
      %v452 = vpop.f32.mrb[0].mxu0
      %v453 = vpop.f32.mrb[0].mxu0
      %v454 = vadd.f32 0.0, %v453
      %v455 = vpop.f32.mrb[0].mxu0
      %456 = vdwg.mxu0
      %v473 = vunpack.c.l.b16 %v300
      %v474 = vunpack.c.l.b16 %v301
      %v475 = vunpack.c.l.b16 %v302
      %v476 = vunpack.c.l.b16 %v303
      %v477 = vunpack.c.l.b16 %v304
      %v478 = vunpack.c.l.b16 %v305
      %v479 = vunpack.c.l.b16 %v306
      %v480 = vunpack.c.l.b16 %v307
      %v481 = vunpack.c.l.b16 %v308
      %v482 = vunpack.c.l.b16 %v309
      %v483 = vunpack.c.l.b16 %v310
      %v484 = vunpack.c.l.b16 %v311
      %v485 = vunpack.c.l.b16 %v312
      %v486 = vunpack.c.l.b16 %v313
      %v487 = vunpack.c.l.b16 %v314
      %v488 = vunpack.c.l.b16 %v315
      %v489 = vpack.c.b16 %v474, %v473
      %v490 = vpack.c.b16 %v476, %v475
      %v491 = vpack.c.b16 %v478, %v477
      %v492 = vpack.c.b16 %v480, %v479
      %v493 = vpack.c.b16 %v482, %v481
      %v494 = vpack.c.b16 %v484, %v483
      %v495 = vpack.c.b16 %v486, %v485
      %v496 = vpack.c.b16 %v488, %v487
      %505 = vmatprep.subr.bf16.mxu0 0
      %506 = vmatpush1.bf16.msra.mxu0 %v489
      %507 = vmatprep.subr.bf16.mxu0 0
      %508 = vmatpush1.bf16.msra.mxu0 %v490
      %509 = vmatprep.subr.bf16.mxu0 0
      %510 = vmatpush1.bf16.msra.mxu0 %v491
      %511 = vmatprep.subr.bf16.mxu0 0
      %512 = vmatpush1.bf16.msra.mxu0 %v492
      %513 = vmatprep.subr.bf16.mxu0 0
      %514 = vmatpush1.bf16.msra.mxu0 %v493
      %515 = vmatprep.subr.bf16.mxu0 0
      %516 = vmatpush1.bf16.msra.mxu0 %v494
      %517 = vmatprep.subr.bf16.mxu0 0
      %518 = vmatpush1.bf16.msra.mxu0 %v495
      %519 = vmatprep.subr.bf16.mxu0 0
      %520 = vmatpush1.bf16.msra.mxu0 %v496
      %521 = vmatprep.subr.bf16.mxu0 0
      %522 = vmatpush1.bf16.msra.mxu0 0
      %523 = vmatprep.subr.bf16.mxu0 0
      %524 = vmatpush1.bf16.msra.mxu0 0
      %525 = vmatprep.subr.bf16.mxu0 0
      %526 = vmatpush1.bf16.msra.mxu0 0
      %527 = vmatprep.subr.bf16.mxu0 0
      %528 = vmatpush1.bf16.msra.mxu0 0
      %529 = vmatprep.subr.bf16.mxu0 0
      %530 = vmatpush1.bf16.msra.mxu0 0
      %531 = vmatprep.subr.bf16.mxu0 0
      %532 = vmatpush1.bf16.msra.mxu0 0
      %533 = vmatprep.subr.bf16.mxu0 0
      %534 = vmatpush1.bf16.msra.mxu0 0
      %535 = vmatprep.subr.bf16.mxu0 0
      %536 = vmatpush1.bf16.msra.mxu0 0
      %537 = vmatprep.mubr.bf16.mxu0 0
      %538 = vmatmul.mubr.bf16.gmra.mrb[0].mxu0 %v316
      %v539 = vpop.f32.mrb[0].mxu0
      %v540 = vadd.f32 %v427, %v539
      %v541 = vpop.f32.mrb[0].mxu0
      %v542 = vpop.f32.mrb[0].mxu0
      %v543 = vadd.f32 %v430, %v542
      %v544 = vpop.f32.mrb[0].mxu0
      %545 = vmatprep.mubr.bf16.mxu0 0
      %546 = vmatmul.mubr.bf16.gmra.mrb[0].mxu0 %v317
      %v547 = vpop.f32.mrb[0].mxu0
      %v548 = vadd.f32 %v435, %v547
      %v549 = vpop.f32.mrb[0].mxu0
      %v550 = vpop.f32.mrb[0].mxu0
      %v551 = vadd.f32 %v438, %v550
      %v552 = vpop.f32.mrb[0].mxu0
      %553 = vmatprep.mubr.bf16.mxu0 0
      %554 = vmatmul.mubr.bf16.gmra.mrb[0].mxu0 %v318
      %v555 = vpop.f32.mrb[0].mxu0
      %v556 = vadd.f32 %v443, %v555
      %v557 = vpop.f32.mrb[0].mxu0
      %v558 = vpop.f32.mrb[0].mxu0
      %v559 = vadd.f32 %v446, %v558
      %v560 = vpop.f32.mrb[0].mxu0
      %561 = vmatprep.mubr.bf16.mxu0 0
      %562 = vmatmul.mubr.bf16.gmra.mrb[0].mxu0 %v319
      %v563 = vpop.f32.mrb[0].mxu0
      %v564 = vadd.f32 %v451, %v563
      %v565 = vpop.f32.mrb[0].mxu0
      %v566 = vpop.f32.mrb[0].mxu0
      %v567 = vadd.f32 %v454, %v566
      %v568 = vpop.f32.mrb[0].mxu0
      %569 = vdwg.mxu0
      %v570 = vrot.slane %v269, 1
      %v571 = vrot.slane %v270, 1
      %v572 = vrot.slane %v271, 1
      %v573 = vrot.slane %v272, 1
      %v574 = vrot.slane %v273, 1
      %v575 = vrot.slane %v274, 1
      %v576 = vrot.slane %v275, 1
      %v577 = vrot.slane %v276, 1
      %vm578 = vcmp.lt.s32.totalorder %v286, 7
      %v579 = vsel %vm578, %v576, %v577
      %v580 = vsel %vm578, %v575, %v576
      %v581 = vsel %vm578, %v574, %v575
      %v582 = vsel %vm578, %v573, %v574
      %v583 = vsel %vm578, %v572, %v573
      %v584 = vsel %vm578, %v571, %v572
      %v585 = vsel %vm578, %v570, %v571
      %v586 = vsel %vm578, %v577, %v570
      %s587 = sadd.s32 %s296, 2
      %s588 = smul.u32 %s587, 16
      %s589 = smul.addr %s588, 4
      %s590 = scalar_lea.vmem %s1, %s589
      %v591 = vld [vmem:[%s590] sm:$0xf]
      %v592 = vld [vmem:[%s590 + $0x4] sm:$0xf]
      %v593 = vld [vmem:[%s590 + $0x8] sm:$0xf]
      %v594 = vld [vmem:[%s590 + $0xc] sm:$0xf]
      %v595 = vld [vmem:[%s590 + $0x10] sm:$0xf]
      %v596 = vld [vmem:[%s590 + $0x14] sm:$0xf]
      %v597 = vld [vmem:[%s590 + $0x18] sm:$0xf]
      %v598 = vld [vmem:[%s590 + $0x1c] sm:$0xf]
      %v599 = vld [vmem:[%s590 + $0x20] sm:$0xf]
      %v600 = vld [vmem:[%s590 + $0x24] sm:$0xf]
      %v601 = vld [vmem:[%s590 + $0x28] sm:$0xf]
      %v602 = vld [vmem:[%s590 + $0x2c] sm:$0xf]
      %v603 = vld [vmem:[%s590 + $0x30] sm:$0xf]
      %v604 = vld [vmem:[%s590 + $0x34] sm:$0xf]
      %v605 = vld [vmem:[%s590 + $0x38] sm:$0xf]
      %v606 = vld [vmem:[%s590 + $0x3c] sm:$0xf]
      %v607 = vpack.c.bf16 %v585, %v586
      %v608 = vpack.c.bf16 %v583, %v584
      %v609 = vpack.c.bf16 %v581, %v582
      %v610 = vpack.c.bf16 %v579, %v580
      %v627 = vunpack.c.l.b16 %v591
      %v628 = vunpack.c.l.b16 %v592
      %v629 = vunpack.c.l.b16 %v593
      %v630 = vunpack.c.l.b16 %v594
      %v631 = vunpack.c.l.b16 %v595
      %v632 = vunpack.c.l.b16 %v596
      %v633 = vunpack.c.l.b16 %v597
      %v634 = vunpack.c.l.b16 %v598
      %v635 = vunpack.c.l.b16 %v599
      %v636 = vunpack.c.l.b16 %v600
      %v637 = vunpack.c.l.b16 %v601
      %v638 = vunpack.c.l.b16 %v602
      %v639 = vunpack.c.l.b16 %v603
      %v640 = vunpack.c.l.b16 %v604
      %v641 = vunpack.c.l.b16 %v605
      %v642 = vunpack.c.l.b16 %v606
      %v643 = vpack.c.b16 %v628, %v627
      %v644 = vpack.c.b16 %v630, %v629
      %v645 = vpack.c.b16 %v632, %v631
      %v646 = vpack.c.b16 %v634, %v633
      %v647 = vpack.c.b16 %v636, %v635
      %v648 = vpack.c.b16 %v638, %v637
      %v649 = vpack.c.b16 %v640, %v639
      %v650 = vpack.c.b16 %v642, %v641
      %659 = vmatprep.subr.bf16.mxu0 0
      %660 = vmatpush1.bf16.msra.mxu0 %v643
      %661 = vmatprep.subr.bf16.mxu0 0
      %662 = vmatpush1.bf16.msra.mxu0 %v644
      %663 = vmatprep.subr.bf16.mxu0 0
      %664 = vmatpush1.bf16.msra.mxu0 %v645
      %665 = vmatprep.subr.bf16.mxu0 0
      %666 = vmatpush1.bf16.msra.mxu0 %v646
      %667 = vmatprep.subr.bf16.mxu0 0
      %668 = vmatpush1.bf16.msra.mxu0 %v647
      %669 = vmatprep.subr.bf16.mxu0 0
      %670 = vmatpush1.bf16.msra.mxu0 %v648
      %671 = vmatprep.subr.bf16.mxu0 0
      %672 = vmatpush1.bf16.msra.mxu0 %v649
      %673 = vmatprep.subr.bf16.mxu0 0
      %674 = vmatpush1.bf16.msra.mxu0 %v650
      %675 = vmatprep.subr.bf16.mxu0 0
      %676 = vmatpush1.bf16.msra.mxu0 0
      %677 = vmatprep.subr.bf16.mxu0 0
      %678 = vmatpush1.bf16.msra.mxu0 0
      %679 = vmatprep.subr.bf16.mxu0 0
      %680 = vmatpush1.bf16.msra.mxu0 0
      %681 = vmatprep.subr.bf16.mxu0 0
      %682 = vmatpush1.bf16.msra.mxu0 0
      %683 = vmatprep.subr.bf16.mxu0 0
      %684 = vmatpush1.bf16.msra.mxu0 0
      %685 = vmatprep.subr.bf16.mxu0 0
      %686 = vmatpush1.bf16.msra.mxu0 0
      %687 = vmatprep.subr.bf16.mxu0 0
      %688 = vmatpush1.bf16.msra.mxu0 0
      %689 = vmatprep.subr.bf16.mxu0 0
      %690 = vmatpush1.bf16.msra.mxu0 0
      %691 = vmatprep.mubr.bf16.mxu0 0
      %692 = vmatmul.mubr.bf16.gmra.mrb[0].mxu0 %v607
      %v693 = vpop.f32.mrb[0].mxu0
      %v694 = vadd.f32 0.0, %v693
      %v695 = vpop.f32.mrb[0].mxu0
      %v696 = vpop.f32.mrb[0].mxu0
      %v697 = vadd.f32 0.0, %v696
      %v698 = vpop.f32.mrb[0].mxu0
      %699 = vmatprep.mubr.bf16.mxu0 0
      %700 = vmatmul.mubr.bf16.gmra.mrb[0].mxu0 %v608
      %v701 = vpop.f32.mrb[0].mxu0
      %v702 = vadd.f32 0.0, %v701
      %v703 = vpop.f32.mrb[0].mxu0
      %v704 = vpop.f32.mrb[0].mxu0
      %v705 = vadd.f32 0.0, %v704
      %v706 = vpop.f32.mrb[0].mxu0
      %707 = vmatprep.mubr.bf16.mxu0 0
      %708 = vmatmul.mubr.bf16.gmra.mrb[0].mxu0 %v609
      %v709 = vpop.f32.mrb[0].mxu0
      %v710 = vadd.f32 0.0, %v709
      %v711 = vpop.f32.mrb[0].mxu0
      %v712 = vpop.f32.mrb[0].mxu0
      %v713 = vadd.f32 0.0, %v712
      %v714 = vpop.f32.mrb[0].mxu0
      %715 = vmatprep.mubr.bf16.mxu0 0
      %716 = vmatmul.mubr.bf16.gmra.mrb[0].mxu0 %v610
      %v717 = vpop.f32.mrb[0].mxu0
      %v718 = vadd.f32 0.0, %v717
      %v719 = vpop.f32.mrb[0].mxu0
      %v720 = vpop.f32.mrb[0].mxu0
      %v721 = vadd.f32 0.0, %v720
      %v722 = vpop.f32.mrb[0].mxu0
      %723 = vdwg.mxu0
      %v724 = vadd.f32 %v540, %v694
      %v725 = vadd.f32 %v543, %v697
      %v726 = vadd.f32 %v548, %v702
      %v727 = vadd.f32 %v551, %v705
      %v728 = vadd.f32 %v556, %v710
      %v729 = vadd.f32 %v559, %v713
      %v730 = vadd.f32 %v564, %v718
      %v731 = vadd.f32 %v567, %v721
      %s732 = sadd.s32 %s296, 3
      %s733 = smul.u32 %s732, 16
      %s734 = smul.addr %s733, 4
      %s735 = scalar_lea.vmem %s1, %s734
      %v736 = vld [vmem:[%s735] sm:$0xf]
      %v737 = vld [vmem:[%s735 + $0x4] sm:$0xf]
      %v738 = vld [vmem:[%s735 + $0x8] sm:$0xf]
      %v739 = vld [vmem:[%s735 + $0xc] sm:$0xf]
      %v740 = vld [vmem:[%s735 + $0x10] sm:$0xf]
      %v741 = vld [vmem:[%s735 + $0x14] sm:$0xf]
      %v742 = vld [vmem:[%s735 + $0x18] sm:$0xf]
      %v743 = vld [vmem:[%s735 + $0x1c] sm:$0xf]
      %v744 = vld [vmem:[%s735 + $0x20] sm:$0xf]
      %v745 = vld [vmem:[%s735 + $0x24] sm:$0xf]
      %v746 = vld [vmem:[%s735 + $0x28] sm:$0xf]
      %v747 = vld [vmem:[%s735 + $0x2c] sm:$0xf]
      %v748 = vld [vmem:[%s735 + $0x30] sm:$0xf]
      %v749 = vld [vmem:[%s735 + $0x34] sm:$0xf]
      %v750 = vld [vmem:[%s735 + $0x38] sm:$0xf]
      %v751 = vld [vmem:[%s735 + $0x3c] sm:$0xf]
      %v752 = vpack.c.bf16 %v294, %v295
      %v753 = vpack.c.bf16 %v292, %v293
      %v754 = vpack.c.bf16 %v290, %v291
      %v755 = vpack.c.bf16 %v288, %v289
      %v772 = vunpack.c.l.b16 %v736
      %v773 = vunpack.c.l.b16 %v737
      %v774 = vunpack.c.l.b16 %v738
      %v775 = vunpack.c.l.b16 %v739
      %v776 = vunpack.c.l.b16 %v740
      %v777 = vunpack.c.l.b16 %v741
      %v778 = vunpack.c.l.b16 %v742
      %v779 = vunpack.c.l.b16 %v743
      %v780 = vunpack.c.l.b16 %v744
      %v781 = vunpack.c.l.b16 %v745
      %v782 = vunpack.c.l.b16 %v746
      %v783 = vunpack.c.l.b16 %v747
      %v784 = vunpack.c.l.b16 %v748
      %v785 = vunpack.c.l.b16 %v749
      %v786 = vunpack.c.l.b16 %v750
      %v787 = vunpack.c.l.b16 %v751
      %v788 = vpack.c.b16 %v773, %v772
      %v789 = vpack.c.b16 %v775, %v774
      %v790 = vpack.c.b16 %v777, %v776
      %v791 = vpack.c.b16 %v779, %v778
      %v792 = vpack.c.b16 %v781, %v780
      %v793 = vpack.c.b16 %v783, %v782
      %v794 = vpack.c.b16 %v785, %v784
      %v795 = vpack.c.b16 %v787, %v786
      %804 = vmatprep.subr.bf16.mxu0 0
      %805 = vmatpush1.bf16.msra.mxu0 %v788
      %806 = vmatprep.subr.bf16.mxu0 0
      %807 = vmatpush1.bf16.msra.mxu0 %v789
      %808 = vmatprep.subr.bf16.mxu0 0
      %809 = vmatpush1.bf16.msra.mxu0 %v790
      %810 = vmatprep.subr.bf16.mxu0 0
      %811 = vmatpush1.bf16.msra.mxu0 %v791
      %812 = vmatprep.subr.bf16.mxu0 0
      %813 = vmatpush1.bf16.msra.mxu0 %v792
      %814 = vmatprep.subr.bf16.mxu0 0
      %815 = vmatpush1.bf16.msra.mxu0 %v793
      %816 = vmatprep.subr.bf16.mxu0 0
      %817 = vmatpush1.bf16.msra.mxu0 %v794
      %818 = vmatprep.subr.bf16.mxu0 0
      %819 = vmatpush1.bf16.msra.mxu0 %v795
      %820 = vmatprep.subr.bf16.mxu0 0
      %821 = vmatpush1.bf16.msra.mxu0 0
      %822 = vmatprep.subr.bf16.mxu0 0
      %823 = vmatpush1.bf16.msra.mxu0 0
      %824 = vmatprep.subr.bf16.mxu0 0
      %825 = vmatpush1.bf16.msra.mxu0 0
      %826 = vmatprep.subr.bf16.mxu0 0
      %827 = vmatpush1.bf16.msra.mxu0 0
      %828 = vmatprep.subr.bf16.mxu0 0
      %829 = vmatpush1.bf16.msra.mxu0 0
      %830 = vmatprep.subr.bf16.mxu0 0
      %831 = vmatpush1.bf16.msra.mxu0 0
      %832 = vmatprep.subr.bf16.mxu0 0
      %833 = vmatpush1.bf16.msra.mxu0 0
      %834 = vmatprep.subr.bf16.mxu0 0
      %835 = vmatpush1.bf16.msra.mxu0 0
      %836 = vmatprep.mubr.bf16.mxu0 0
      %837 = vmatmul.mubr.bf16.gmra.mrb[0].mxu0 %v752
      %v838 = vpop.f32.mrb[0].mxu0
      %v839 = vadd.f32 0.0, %v838
      %v840 = vpop.f32.mrb[0].mxu0
      %v841 = vpop.f32.mrb[0].mxu0
      %v842 = vadd.f32 0.0, %v841
      %v843 = vpop.f32.mrb[0].mxu0
      %844 = vmatprep.mubr.bf16.mxu0 0
      %845 = vmatmul.mubr.bf16.gmra.mrb[0].mxu0 %v753
      %v846 = vpop.f32.mrb[0].mxu0
      %v847 = vadd.f32 0.0, %v846
      %v848 = vpop.f32.mrb[0].mxu0
      %v849 = vpop.f32.mrb[0].mxu0
      %v850 = vadd.f32 0.0, %v849
      %v851 = vpop.f32.mrb[0].mxu0
      %852 = vmatprep.mubr.bf16.mxu0 0
      %853 = vmatmul.mubr.bf16.gmra.mrb[0].mxu0 %v754
      %v854 = vpop.f32.mrb[0].mxu0
      %v855 = vadd.f32 0.0, %v854
      %v856 = vpop.f32.mrb[0].mxu0
      %v857 = vpop.f32.mrb[0].mxu0
      %v858 = vadd.f32 0.0, %v857
      %v859 = vpop.f32.mrb[0].mxu0
      %860 = vmatprep.mubr.bf16.mxu0 0
      %861 = vmatmul.mubr.bf16.gmra.mrb[0].mxu0 %v755
      %v862 = vpop.f32.mrb[0].mxu0
      %v863 = vadd.f32 0.0, %v862
      %v864 = vpop.f32.mrb[0].mxu0
      %v865 = vpop.f32.mrb[0].mxu0
      %v866 = vadd.f32 0.0, %v865
      %v867 = vpop.f32.mrb[0].mxu0
      %868 = vdwg.mxu0
      %v869 = vadd.f32 %v724, %v839
      %v870 = vadd.f32 %v725, %v842
      %v871 = vadd.f32 %v726, %v847
      %v872 = vadd.f32 %v727, %v850
      %v873 = vadd.f32 %v728, %v855
      %v874 = vadd.f32 %v729, %v858
      %v875 = vadd.f32 %v730, %v863
      %v876 = vadd.f32 %v731, %v866
      %s877 = sadd.s32 %s296, 4
      %s878 = smul.u32 %s877, 16
      %s879 = smul.addr %s878, 4
      %s880 = scalar_lea.vmem %s1, %s879
      %v881 = vld [vmem:[%s880] sm:$0xf]
      %v882 = vld [vmem:[%s880 + $0x4] sm:$0xf]
      %v883 = vld [vmem:[%s880 + $0x8] sm:$0xf]
      %v884 = vld [vmem:[%s880 + $0xc] sm:$0xf]
      %v885 = vld [vmem:[%s880 + $0x10] sm:$0xf]
      %v886 = vld [vmem:[%s880 + $0x14] sm:$0xf]
      %v887 = vld [vmem:[%s880 + $0x18] sm:$0xf]
      %v888 = vld [vmem:[%s880 + $0x1c] sm:$0xf]
      %v889 = vld [vmem:[%s880 + $0x20] sm:$0xf]
      %v890 = vld [vmem:[%s880 + $0x24] sm:$0xf]
      %v891 = vld [vmem:[%s880 + $0x28] sm:$0xf]
      %v892 = vld [vmem:[%s880 + $0x2c] sm:$0xf]
      %v893 = vld [vmem:[%s880 + $0x30] sm:$0xf]
      %v894 = vld [vmem:[%s880 + $0x34] sm:$0xf]
      %v895 = vld [vmem:[%s880 + $0x38] sm:$0xf]
      %v896 = vld [vmem:[%s880 + $0x3c] sm:$0xf]
      %v905 = vunpack.c.l.b16 %v261
      %v906 = vunpack.c.l.b16 %v262
      %v907 = vunpack.c.l.b16 %v263
      %v908 = vunpack.c.l.b16 %v264
      %v909 = vunpack.c.l.b16 %v265
      %v910 = vunpack.c.l.b16 %v266
      %v911 = vunpack.c.l.b16 %v267
      %v912 = vunpack.c.l.b16 %v268
      %v913 = vpack.c.b16 %v906, %v905
      %v914 = vpack.c.b16 %v908, %v907
      %v915 = vpack.c.b16 %v910, %v909
      %v916 = vpack.c.b16 %v912, %v911
      %v937 = vunpack.c.l.b16 %v881
      %v938 = vunpack.c.l.b16 %v882
      %v939 = vunpack.c.l.b16 %v883
      %v940 = vunpack.c.l.b16 %v884
      %v941 = vunpack.c.l.b16 %v885
      %v942 = vunpack.c.l.b16 %v886
      %v943 = vunpack.c.l.b16 %v887
      %v944 = vunpack.c.l.b16 %v888
      %v945 = vunpack.c.l.b16 %v889
      %v946 = vunpack.c.l.b16 %v890
      %v947 = vunpack.c.l.b16 %v891
      %v948 = vunpack.c.l.b16 %v892
      %v949 = vunpack.c.l.b16 %v893
      %v950 = vunpack.c.l.b16 %v894
      %v951 = vunpack.c.l.b16 %v895
      %v952 = vunpack.c.l.b16 %v896
      %v953 = vpack.c.b16 %v938, %v937
      %v954 = vpack.c.b16 %v940, %v939
      %v955 = vpack.c.b16 %v942, %v941
      %v956 = vpack.c.b16 %v944, %v943
      %v957 = vpack.c.b16 %v946, %v945
      %v958 = vpack.c.b16 %v948, %v947
      %v959 = vpack.c.b16 %v950, %v949
      %v960 = vpack.c.b16 %v952, %v951
      %969 = vmatprep.subr.bf16.mxu0 0
      %970 = vmatpush1.bf16.msra.mxu0 %v953
      %971 = vmatprep.subr.bf16.mxu0 0
      %972 = vmatpush1.bf16.msra.mxu0 %v954
      %973 = vmatprep.subr.bf16.mxu0 0
      %974 = vmatpush1.bf16.msra.mxu0 %v955
      %975 = vmatprep.subr.bf16.mxu0 0
      %976 = vmatpush1.bf16.msra.mxu0 %v956
      %977 = vmatprep.subr.bf16.mxu0 0
      %978 = vmatpush1.bf16.msra.mxu0 %v957
      %979 = vmatprep.subr.bf16.mxu0 0
      %980 = vmatpush1.bf16.msra.mxu0 %v958
      %981 = vmatprep.subr.bf16.mxu0 0
      %982 = vmatpush1.bf16.msra.mxu0 %v959
      %983 = vmatprep.subr.bf16.mxu0 0
      %984 = vmatpush1.bf16.msra.mxu0 %v960
      %985 = vmatprep.subr.bf16.mxu0 0
      %986 = vmatpush1.bf16.msra.mxu0 0
      %987 = vmatprep.subr.bf16.mxu0 0
      %988 = vmatpush1.bf16.msra.mxu0 0
      %989 = vmatprep.subr.bf16.mxu0 0
      %990 = vmatpush1.bf16.msra.mxu0 0
      %991 = vmatprep.subr.bf16.mxu0 0
      %992 = vmatpush1.bf16.msra.mxu0 0
      %993 = vmatprep.subr.bf16.mxu0 0
      %994 = vmatpush1.bf16.msra.mxu0 0
      %995 = vmatprep.subr.bf16.mxu0 0
      %996 = vmatpush1.bf16.msra.mxu0 0
      %997 = vmatprep.subr.bf16.mxu0 0
      %998 = vmatpush1.bf16.msra.mxu0 0
      %999 = vmatprep.subr.bf16.mxu0 0
      %1000 = vmatpush1.bf16.msra.mxu0 0
      %1001 = vmatprep.mubr.bf16.mxu0 0
      %1002 = vmatmul.mubr.bf16.gmra.mrb[0].mxu0 %v913
      %v1003 = vpop.f32.mrb[0].mxu0
      %v1004 = vadd.f32 0.0, %v1003
      %v1005 = vpop.f32.mrb[0].mxu0
      %v1006 = vpop.f32.mrb[0].mxu0
      %v1007 = vadd.f32 0.0, %v1006
      %v1008 = vpop.f32.mrb[0].mxu0
      %1009 = vmatprep.mubr.bf16.mxu0 0
      %1010 = vmatmul.mubr.bf16.gmra.mrb[0].mxu0 %v914
      %v1011 = vpop.f32.mrb[0].mxu0
      %v1012 = vadd.f32 0.0, %v1011
      %v1013 = vpop.f32.mrb[0].mxu0
      %v1014 = vpop.f32.mrb[0].mxu0
      %v1015 = vadd.f32 0.0, %v1014
      %v1016 = vpop.f32.mrb[0].mxu0
      %1017 = vmatprep.mubr.bf16.mxu0 0
      %1018 = vmatmul.mubr.bf16.gmra.mrb[0].mxu0 %v915
      %v1019 = vpop.f32.mrb[0].mxu0
      %v1020 = vadd.f32 0.0, %v1019
      %v1021 = vpop.f32.mrb[0].mxu0
      %v1022 = vpop.f32.mrb[0].mxu0
      %v1023 = vadd.f32 0.0, %v1022
      %v1024 = vpop.f32.mrb[0].mxu0
      %1025 = vmatprep.mubr.bf16.mxu0 0
      %1026 = vmatmul.mubr.bf16.gmra.mrb[0].mxu0 %v916
      %v1027 = vpop.f32.mrb[0].mxu0
      %v1028 = vadd.f32 0.0, %v1027
      %v1029 = vpop.f32.mrb[0].mxu0
      %v1030 = vpop.f32.mrb[0].mxu0
      %v1031 = vadd.f32 0.0, %v1030
      %v1032 = vpop.f32.mrb[0].mxu0
      %1033 = vdwg.mxu0
      %v1034 = vadd.f32 %v869, %v1004
      %v1035 = vadd.f32 %v870, %v1007
      %v1036 = vadd.f32 %v871, %v1012
      %v1037 = vadd.f32 %v872, %v1015
      %v1038 = vadd.f32 %v873, %v1020
      %v1039 = vadd.f32 %v874, %v1023
      %v1040 = vadd.f32 %v875, %v1028
      %v1041 = vadd.f32 %v876, %v1031
      %s1042 = sadd.s32 %s296, 5
      %s1043 = smul.u32 %s1042, 16
      %s1044 = smul.addr %s1043, 4
      %s1045 = scalar_lea.vmem %s1, %s1044
      %v1046 = vld [vmem:[%s1045] sm:$0xf]
      %v1047 = vld [vmem:[%s1045 + $0x4] sm:$0xf]
      %v1048 = vld [vmem:[%s1045 + $0x8] sm:$0xf]
      %v1049 = vld [vmem:[%s1045 + $0xc] sm:$0xf]
      %v1050 = vld [vmem:[%s1045 + $0x10] sm:$0xf]
      %v1051 = vld [vmem:[%s1045 + $0x14] sm:$0xf]
      %v1052 = vld [vmem:[%s1045 + $0x18] sm:$0xf]
      %v1053 = vld [vmem:[%s1045 + $0x1c] sm:$0xf]
      %v1054 = vld [vmem:[%s1045 + $0x20] sm:$0xf]
      %v1055 = vld [vmem:[%s1045 + $0x24] sm:$0xf]
      %v1056 = vld [vmem:[%s1045 + $0x28] sm:$0xf]
      %v1057 = vld [vmem:[%s1045 + $0x2c] sm:$0xf]
      %v1058 = vld [vmem:[%s1045 + $0x30] sm:$0xf]
      %v1059 = vld [vmem:[%s1045 + $0x34] sm:$0xf]
      %v1060 = vld [vmem:[%s1045 + $0x38] sm:$0xf]
      %v1061 = vld [vmem:[%s1045 + $0x3c] sm:$0xf]
      %v1062 = vpack.c.bf16 %v584, %v585
      %v1063 = vpack.c.bf16 %v582, %v583
      %v1064 = vpack.c.bf16 %v580, %v581
      %v1065 = vpack.c.bf16 %v586, %v579
      %v1082 = vunpack.c.l.b16 %v1046
      %v1083 = vunpack.c.l.b16 %v1047
      %v1084 = vunpack.c.l.b16 %v1048
      %v1085 = vunpack.c.l.b16 %v1049
      %v1086 = vunpack.c.l.b16 %v1050
      %v1087 = vunpack.c.l.b16 %v1051
      %v1088 = vunpack.c.l.b16 %v1052
      %v1089 = vunpack.c.l.b16 %v1053
      %v1090 = vunpack.c.l.b16 %v1054
      %v1091 = vunpack.c.l.b16 %v1055
      %v1092 = vunpack.c.l.b16 %v1056
      %v1093 = vunpack.c.l.b16 %v1057
      %v1094 = vunpack.c.l.b16 %v1058
      %v1095 = vunpack.c.l.b16 %v1059
      %v1096 = vunpack.c.l.b16 %v1060
      %v1097 = vunpack.c.l.b16 %v1061
      %v1098 = vpack.c.b16 %v1083, %v1082
      %v1099 = vpack.c.b16 %v1085, %v1084
      %v1100 = vpack.c.b16 %v1087, %v1086
      %v1101 = vpack.c.b16 %v1089, %v1088
      %v1102 = vpack.c.b16 %v1091, %v1090
      %v1103 = vpack.c.b16 %v1093, %v1092
      %v1104 = vpack.c.b16 %v1095, %v1094
      %v1105 = vpack.c.b16 %v1097, %v1096
      %1114 = vmatprep.subr.bf16.mxu0 0
      %1115 = vmatpush1.bf16.msra.mxu0 %v1098
      %1116 = vmatprep.subr.bf16.mxu0 0
      %1117 = vmatpush1.bf16.msra.mxu0 %v1099
      %1118 = vmatprep.subr.bf16.mxu0 0
      %1119 = vmatpush1.bf16.msra.mxu0 %v1100
      %1120 = vmatprep.subr.bf16.mxu0 0
      %1121 = vmatpush1.bf16.msra.mxu0 %v1101
      %1122 = vmatprep.subr.bf16.mxu0 0
      %1123 = vmatpush1.bf16.msra.mxu0 %v1102
      %1124 = vmatprep.subr.bf16.mxu0 0
      %1125 = vmatpush1.bf16.msra.mxu0 %v1103
      %1126 = vmatprep.subr.bf16.mxu0 0
      %1127 = vmatpush1.bf16.msra.mxu0 %v1104
      %1128 = vmatprep.subr.bf16.mxu0 0
      %1129 = vmatpush1.bf16.msra.mxu0 %v1105
      %1130 = vmatprep.subr.bf16.mxu0 0
      %1131 = vmatpush1.bf16.msra.mxu0 0
      %1132 = vmatprep.subr.bf16.mxu0 0
      %1133 = vmatpush1.bf16.msra.mxu0 0
      %1134 = vmatprep.subr.bf16.mxu0 0
      %1135 = vmatpush1.bf16.msra.mxu0 0
      %1136 = vmatprep.subr.bf16.mxu0 0
      %1137 = vmatpush1.bf16.msra.mxu0 0
      %1138 = vmatprep.subr.bf16.mxu0 0
      %1139 = vmatpush1.bf16.msra.mxu0 0
      %1140 = vmatprep.subr.bf16.mxu0 0
      %1141 = vmatpush1.bf16.msra.mxu0 0
      %1142 = vmatprep.subr.bf16.mxu0 0
      %1143 = vmatpush1.bf16.msra.mxu0 0
      %1144 = vmatprep.subr.bf16.mxu0 0
      %1145 = vmatpush1.bf16.msra.mxu0 0
      %1146 = vmatprep.mubr.bf16.mxu0 0
      %1147 = vmatmul.mubr.bf16.gmra.mrb[0].mxu0 %v1062
      %v1148 = vpop.f32.mrb[0].mxu0
      %v1149 = vadd.f32 0.0, %v1148
      %v1150 = vpop.f32.mrb[0].mxu0
      %v1151 = vpop.f32.mrb[0].mxu0
      %v1152 = vadd.f32 0.0, %v1151
      %v1153 = vpop.f32.mrb[0].mxu0
      %1154 = vmatprep.mubr.bf16.mxu0 0
      %1155 = vmatmul.mubr.bf16.gmra.mrb[0].mxu0 %v1063
      %v1156 = vpop.f32.mrb[0].mxu0
      %v1157 = vadd.f32 0.0, %v1156
      %v1158 = vpop.f32.mrb[0].mxu0
      %v1159 = vpop.f32.mrb[0].mxu0
      %v1160 = vadd.f32 0.0, %v1159
      %v1161 = vpop.f32.mrb[0].mxu0
      %1162 = vmatprep.mubr.bf16.mxu0 0
      %1163 = vmatmul.mubr.bf16.gmra.mrb[0].mxu0 %v1064
      %v1164 = vpop.f32.mrb[0].mxu0
      %v1165 = vadd.f32 0.0, %v1164
      %v1166 = vpop.f32.mrb[0].mxu0
      %v1167 = vpop.f32.mrb[0].mxu0
      %v1168 = vadd.f32 0.0, %v1167
      %v1169 = vpop.f32.mrb[0].mxu0
      %1170 = vmatprep.mubr.bf16.mxu0 0
      %1171 = vmatmul.mubr.bf16.gmra.mrb[0].mxu0 %v1065
      %v1172 = vpop.f32.mrb[0].mxu0
      %v1173 = vadd.f32 0.0, %v1172
      %v1174 = vpop.f32.mrb[0].mxu0
      %v1175 = vpop.f32.mrb[0].mxu0
      %v1176 = vadd.f32 0.0, %v1175
      %v1177 = vpop.f32.mrb[0].mxu0
      %1178 = vdwg.mxu0
      %v1179 = vadd.f32 %v1034, %v1149
      %v1180 = vadd.f32 %v1035, %v1152
      %v1181 = vadd.f32 %v1036, %v1157
      %v1182 = vadd.f32 %v1037, %v1160
      %v1183 = vadd.f32 %v1038, %v1165
      %v1184 = vadd.f32 %v1039, %v1168
      %v1185 = vadd.f32 %v1040, %v1173
      %v1186 = vadd.f32 %v1041, %v1176
      %s1187 = sadd.s32 %s296, 6
      %s1188 = smul.u32 %s1187, 16
      %s1189 = smul.addr %s1188, 4
      %s1190 = scalar_lea.vmem %s1, %s1189
      %v1191 = vld [vmem:[%s1190] sm:$0xf]
      %v1192 = vld [vmem:[%s1190 + $0x4] sm:$0xf]
      %v1193 = vld [vmem:[%s1190 + $0x8] sm:$0xf]
      %v1194 = vld [vmem:[%s1190 + $0xc] sm:$0xf]
      %v1195 = vld [vmem:[%s1190 + $0x10] sm:$0xf]
      %v1196 = vld [vmem:[%s1190 + $0x14] sm:$0xf]
      %v1197 = vld [vmem:[%s1190 + $0x18] sm:$0xf]
      %v1198 = vld [vmem:[%s1190 + $0x1c] sm:$0xf]
      %v1199 = vld [vmem:[%s1190 + $0x20] sm:$0xf]
      %v1200 = vld [vmem:[%s1190 + $0x24] sm:$0xf]
      %v1201 = vld [vmem:[%s1190 + $0x28] sm:$0xf]
      %v1202 = vld [vmem:[%s1190 + $0x2c] sm:$0xf]
      %v1203 = vld [vmem:[%s1190 + $0x30] sm:$0xf]
      %v1204 = vld [vmem:[%s1190 + $0x34] sm:$0xf]
      %v1205 = vld [vmem:[%s1190 + $0x38] sm:$0xf]
      %v1206 = vld [vmem:[%s1190 + $0x3c] sm:$0xf]
      %v1223 = vunpack.c.l.b16 %v1191
      %v1224 = vunpack.c.l.b16 %v1192
      %v1225 = vunpack.c.l.b16 %v1193
      %v1226 = vunpack.c.l.b16 %v1194
      %v1227 = vunpack.c.l.b16 %v1195
      %v1228 = vunpack.c.l.b16 %v1196
      %v1229 = vunpack.c.l.b16 %v1197
      %v1230 = vunpack.c.l.b16 %v1198
      %v1231 = vunpack.c.l.b16 %v1199
      %v1232 = vunpack.c.l.b16 %v1200
      %v1233 = vunpack.c.l.b16 %v1201
      %v1234 = vunpack.c.l.b16 %v1202
      %v1235 = vunpack.c.l.b16 %v1203
      %v1236 = vunpack.c.l.b16 %v1204
      %v1237 = vunpack.c.l.b16 %v1205
      %v1238 = vunpack.c.l.b16 %v1206
      %v1239 = vpack.c.b16 %v1224, %v1223
      %v1240 = vpack.c.b16 %v1226, %v1225
      %v1241 = vpack.c.b16 %v1228, %v1227
      %v1242 = vpack.c.b16 %v1230, %v1229
      %v1243 = vpack.c.b16 %v1232, %v1231
      %v1244 = vpack.c.b16 %v1234, %v1233
      %v1245 = vpack.c.b16 %v1236, %v1235
      %v1246 = vpack.c.b16 %v1238, %v1237
      %1255 = vmatprep.subr.bf16.mxu0 0
      %1256 = vmatpush1.bf16.msra.mxu0 %v1239
      %1257 = vmatprep.subr.bf16.mxu0 0
      %1258 = vmatpush1.bf16.msra.mxu0 %v1240
      %1259 = vmatprep.subr.bf16.mxu0 0
      %1260 = vmatpush1.bf16.msra.mxu0 %v1241
      %1261 = vmatprep.subr.bf16.mxu0 0
      %1262 = vmatpush1.bf16.msra.mxu0 %v1242
      %1263 = vmatprep.subr.bf16.mxu0 0
      %1264 = vmatpush1.bf16.msra.mxu0 %v1243
      %1265 = vmatprep.subr.bf16.mxu0 0
      %1266 = vmatpush1.bf16.msra.mxu0 %v1244
      %1267 = vmatprep.subr.bf16.mxu0 0
      %1268 = vmatpush1.bf16.msra.mxu0 %v1245
      %1269 = vmatprep.subr.bf16.mxu0 0
      %1270 = vmatpush1.bf16.msra.mxu0 %v1246
      %1271 = vmatprep.subr.bf16.mxu0 0
      %1272 = vmatpush1.bf16.msra.mxu0 0
      %1273 = vmatprep.subr.bf16.mxu0 0
      %1274 = vmatpush1.bf16.msra.mxu0 0
      %1275 = vmatprep.subr.bf16.mxu0 0
      %1276 = vmatpush1.bf16.msra.mxu0 0
      %1277 = vmatprep.subr.bf16.mxu0 0
      %1278 = vmatpush1.bf16.msra.mxu0 0
      %1279 = vmatprep.subr.bf16.mxu0 0
      %1280 = vmatpush1.bf16.msra.mxu0 0
      %1281 = vmatprep.subr.bf16.mxu0 0
      %1282 = vmatpush1.bf16.msra.mxu0 0
      %1283 = vmatprep.subr.bf16.mxu0 0
      %1284 = vmatpush1.bf16.msra.mxu0 0
      %1285 = vmatprep.subr.bf16.mxu0 0
      %1286 = vmatpush1.bf16.msra.mxu0 0
      %1287 = vmatprep.mubr.bf16.mxu0 0
      %1288 = vmatmul.mubr.bf16.gmra.mrb[0].mxu0 %v317
      %v1289 = vpop.f32.mrb[0].mxu0
      %v1290 = vadd.f32 0.0, %v1289
      %v1291 = vpop.f32.mrb[0].mxu0
      %v1292 = vpop.f32.mrb[0].mxu0
      %v1293 = vadd.f32 0.0, %v1292
      %v1294 = vpop.f32.mrb[0].mxu0
      %1295 = vmatprep.mubr.bf16.mxu0 0
      %1296 = vmatmul.mubr.bf16.gmra.mrb[0].mxu0 %v318
      %v1297 = vpop.f32.mrb[0].mxu0
      %v1298 = vadd.f32 0.0, %v1297
      %v1299 = vpop.f32.mrb[0].mxu0
      %v1300 = vpop.f32.mrb[0].mxu0
      %v1301 = vadd.f32 0.0, %v1300
      %v1302 = vpop.f32.mrb[0].mxu0
      %1303 = vmatprep.mubr.bf16.mxu0 0
      %1304 = vmatmul.mubr.bf16.gmra.mrb[0].mxu0 %v319
      %v1305 = vpop.f32.mrb[0].mxu0
      %v1306 = vadd.f32 0.0, %v1305
      %v1307 = vpop.f32.mrb[0].mxu0
      %v1308 = vpop.f32.mrb[0].mxu0
      %v1309 = vadd.f32 0.0, %v1308
      %v1310 = vpop.f32.mrb[0].mxu0
      %1311 = vmatprep.mubr.bf16.mxu0 0
      %1312 = vmatmul.mubr.bf16.gmra.mrb[0].mxu0 %v316
      %v1313 = vpop.f32.mrb[0].mxu0
      %v1314 = vadd.f32 0.0, %v1313
      %v1315 = vpop.f32.mrb[0].mxu0
      %v1316 = vpop.f32.mrb[0].mxu0
      %v1317 = vadd.f32 0.0, %v1316
      %v1318 = vpop.f32.mrb[0].mxu0
      %1319 = vdwg.mxu0
      %v1320 = vadd.f32 %v1179, %v1290
      %v1321 = vadd.f32 %v1180, %v1293
      %v1322 = vadd.f32 %v1181, %v1298
      %v1323 = vadd.f32 %v1182, %v1301
      %v1324 = vadd.f32 %v1183, %v1306
      %v1325 = vadd.f32 %v1184, %v1309
      %v1326 = vadd.f32 %v1185, %v1314
      %v1327 = vadd.f32 %v1186, %v1317
      %s1328 = sadd.s32 %s296, 7
      %s1329 = smul.u32 %s1328, 16
      %s1330 = smul.addr %s1329, 4
      %s1331 = scalar_lea.vmem %s1, %s1330
      %v1332 = vld [vmem:[%s1331] sm:$0xf]
      %v1333 = vld [vmem:[%s1331 + $0x4] sm:$0xf]
      %v1334 = vld [vmem:[%s1331 + $0x8] sm:$0xf]
      %v1335 = vld [vmem:[%s1331 + $0xc] sm:$0xf]
      %v1336 = vld [vmem:[%s1331 + $0x10] sm:$0xf]
      %v1337 = vld [vmem:[%s1331 + $0x14] sm:$0xf]
      %v1338 = vld [vmem:[%s1331 + $0x18] sm:$0xf]
      %v1339 = vld [vmem:[%s1331 + $0x1c] sm:$0xf]
      %v1340 = vld [vmem:[%s1331 + $0x20] sm:$0xf]
      %v1341 = vld [vmem:[%s1331 + $0x24] sm:$0xf]
      %v1342 = vld [vmem:[%s1331 + $0x28] sm:$0xf]
      %v1343 = vld [vmem:[%s1331 + $0x2c] sm:$0xf]
      %v1344 = vld [vmem:[%s1331 + $0x30] sm:$0xf]
      %v1345 = vld [vmem:[%s1331 + $0x34] sm:$0xf]
      %v1346 = vld [vmem:[%s1331 + $0x38] sm:$0xf]
      %v1347 = vld [vmem:[%s1331 + $0x3c] sm:$0xf]
      %v1364 = vunpack.c.l.b16 %v1332
      %v1365 = vunpack.c.l.b16 %v1333
      %v1366 = vunpack.c.l.b16 %v1334
      %v1367 = vunpack.c.l.b16 %v1335
      %v1368 = vunpack.c.l.b16 %v1336
      %v1369 = vunpack.c.l.b16 %v1337
      %v1370 = vunpack.c.l.b16 %v1338
      %v1371 = vunpack.c.l.b16 %v1339
      %v1372 = vunpack.c.l.b16 %v1340
      %v1373 = vunpack.c.l.b16 %v1341
      %v1374 = vunpack.c.l.b16 %v1342
      %v1375 = vunpack.c.l.b16 %v1343
      %v1376 = vunpack.c.l.b16 %v1344
      %v1377 = vunpack.c.l.b16 %v1345
      %v1378 = vunpack.c.l.b16 %v1346
      %v1379 = vunpack.c.l.b16 %v1347
      %v1380 = vpack.c.b16 %v1365, %v1364
      %v1381 = vpack.c.b16 %v1367, %v1366
      %v1382 = vpack.c.b16 %v1369, %v1368
      %v1383 = vpack.c.b16 %v1371, %v1370
      %v1384 = vpack.c.b16 %v1373, %v1372
      %v1385 = vpack.c.b16 %v1375, %v1374
      %v1386 = vpack.c.b16 %v1377, %v1376
      %v1387 = vpack.c.b16 %v1379, %v1378
      %1396 = vmatprep.subr.bf16.mxu0 0
      %1397 = vmatpush1.bf16.msra.mxu0 %v1380
      %1398 = vmatprep.subr.bf16.mxu0 0
      %1399 = vmatpush1.bf16.msra.mxu0 %v1381
      %1400 = vmatprep.subr.bf16.mxu0 0
      %1401 = vmatpush1.bf16.msra.mxu0 %v1382
      %1402 = vmatprep.subr.bf16.mxu0 0
      %1403 = vmatpush1.bf16.msra.mxu0 %v1383
      %1404 = vmatprep.subr.bf16.mxu0 0
      %1405 = vmatpush1.bf16.msra.mxu0 %v1384
      %1406 = vmatprep.subr.bf16.mxu0 0
      %1407 = vmatpush1.bf16.msra.mxu0 %v1385
      %1408 = vmatprep.subr.bf16.mxu0 0
      %1409 = vmatpush1.bf16.msra.mxu0 %v1386
      %1410 = vmatprep.subr.bf16.mxu0 0
      %1411 = vmatpush1.bf16.msra.mxu0 %v1387
      %1412 = vmatprep.subr.bf16.mxu0 0
      %1413 = vmatpush1.bf16.msra.mxu0 0
      %1414 = vmatprep.subr.bf16.mxu0 0
      %1415 = vmatpush1.bf16.msra.mxu0 0
      %1416 = vmatprep.subr.bf16.mxu0 0
      %1417 = vmatpush1.bf16.msra.mxu0 0
      %1418 = vmatprep.subr.bf16.mxu0 0
      %1419 = vmatpush1.bf16.msra.mxu0 0
      %1420 = vmatprep.subr.bf16.mxu0 0
      %1421 = vmatpush1.bf16.msra.mxu0 0
      %1422 = vmatprep.subr.bf16.mxu0 0
      %1423 = vmatpush1.bf16.msra.mxu0 0
      %1424 = vmatprep.subr.bf16.mxu0 0
      %1425 = vmatpush1.bf16.msra.mxu0 0
      %1426 = vmatprep.subr.bf16.mxu0 0
      %1427 = vmatpush1.bf16.msra.mxu0 0
      %1428 = vmatprep.mubr.bf16.mxu0 0
      %1429 = vmatmul.mubr.bf16.gmra.mrb[0].mxu0 %v341
      %v1430 = vpop.f32.mrb[0].mxu0
      %v1431 = vadd.f32 0.0, %v1430
      %v1432 = vpop.f32.mrb[0].mxu0
      %v1433 = vpop.f32.mrb[0].mxu0
      %v1434 = vadd.f32 0.0, %v1433
      %v1435 = vpop.f32.mrb[0].mxu0
      %1436 = vmatprep.mubr.bf16.mxu0 0
      %1437 = vmatmul.mubr.bf16.gmra.mrb[0].mxu0 %v342
      %v1438 = vpop.f32.mrb[0].mxu0
      %v1439 = vadd.f32 0.0, %v1438
      %v1440 = vpop.f32.mrb[0].mxu0
      %v1441 = vpop.f32.mrb[0].mxu0
      %v1442 = vadd.f32 0.0, %v1441
      %v1443 = vpop.f32.mrb[0].mxu0
      %1444 = vmatprep.mubr.bf16.mxu0 0
      %1445 = vmatmul.mubr.bf16.gmra.mrb[0].mxu0 %v343
      %v1446 = vpop.f32.mrb[0].mxu0
      %v1447 = vadd.f32 0.0, %v1446
      %v1448 = vpop.f32.mrb[0].mxu0
      %v1449 = vpop.f32.mrb[0].mxu0
      %v1450 = vadd.f32 0.0, %v1449
      %v1451 = vpop.f32.mrb[0].mxu0
      %1452 = vmatprep.mubr.bf16.mxu0 0
      %1453 = vmatmul.mubr.bf16.gmra.mrb[0].mxu0 %v340
      %v1454 = vpop.f32.mrb[0].mxu0
      %v1455 = vadd.f32 0.0, %v1454
      %v1456 = vpop.f32.mrb[0].mxu0
      %v1457 = vpop.f32.mrb[0].mxu0
      %v1458 = vadd.f32 0.0, %v1457
      %v1459 = vpop.f32.mrb[0].mxu0
      %1460 = vdwg.mxu0
      %v1461 = vadd.f32 %v1320, %v1431
      %v1462 = vadd.f32 %v1321, %v1434
      %v1463 = vadd.f32 %v1322, %v1439
      %v1464 = vadd.f32 %v1323, %v1442
      %v1465 = vadd.f32 %v1324, %v1447
      %v1466 = vadd.f32 %v1325, %v1450
      %v1467 = vadd.f32 %v1326, %v1455
      %v1468 = vadd.f32 %v1327, %v1458
      %s1469 = sadd.s32 %s296, 8
      %s1470 = smul.u32 %s1469, 16
      %s1471 = smul.addr %s1470, 4
      %s1472 = scalar_lea.vmem %s1, %s1471
      %v1473 = vld [vmem:[%s1472] sm:$0xf]
      %v1474 = vld [vmem:[%s1472 + $0x4] sm:$0xf]
      %v1475 = vld [vmem:[%s1472 + $0x8] sm:$0xf]
      %v1476 = vld [vmem:[%s1472 + $0xc] sm:$0xf]
      %v1477 = vld [vmem:[%s1472 + $0x10] sm:$0xf]
      %v1478 = vld [vmem:[%s1472 + $0x14] sm:$0xf]
      %v1479 = vld [vmem:[%s1472 + $0x18] sm:$0xf]
      %v1480 = vld [vmem:[%s1472 + $0x1c] sm:$0xf]
      %v1481 = vld [vmem:[%s1472 + $0x20] sm:$0xf]
      %v1482 = vld [vmem:[%s1472 + $0x24] sm:$0xf]
      %v1483 = vld [vmem:[%s1472 + $0x28] sm:$0xf]
      %v1484 = vld [vmem:[%s1472 + $0x2c] sm:$0xf]
      %v1485 = vld [vmem:[%s1472 + $0x30] sm:$0xf]
      %v1486 = vld [vmem:[%s1472 + $0x34] sm:$0xf]
      %v1487 = vld [vmem:[%s1472 + $0x38] sm:$0xf]
      %v1488 = vld [vmem:[%s1472 + $0x3c] sm:$0xf]
      %v1505 = vunpack.c.l.b16 %v1473
      %v1506 = vunpack.c.l.b16 %v1474
      %v1507 = vunpack.c.l.b16 %v1475
      %v1508 = vunpack.c.l.b16 %v1476
      %v1509 = vunpack.c.l.b16 %v1477
      %v1510 = vunpack.c.l.b16 %v1478
      %v1511 = vunpack.c.l.b16 %v1479
      %v1512 = vunpack.c.l.b16 %v1480
      %v1513 = vunpack.c.l.b16 %v1481
      %v1514 = vunpack.c.l.b16 %v1482
      %v1515 = vunpack.c.l.b16 %v1483
      %v1516 = vunpack.c.l.b16 %v1484
      %v1517 = vunpack.c.l.b16 %v1485
      %v1518 = vunpack.c.l.b16 %v1486
      %v1519 = vunpack.c.l.b16 %v1487
      %v1520 = vunpack.c.l.b16 %v1488
      %v1521 = vpack.c.b16 %v1506, %v1505
      %v1522 = vpack.c.b16 %v1508, %v1507
      %v1523 = vpack.c.b16 %v1510, %v1509
      %v1524 = vpack.c.b16 %v1512, %v1511
      %v1525 = vpack.c.b16 %v1514, %v1513
      %v1526 = vpack.c.b16 %v1516, %v1515
      %v1527 = vpack.c.b16 %v1518, %v1517
      %v1528 = vpack.c.b16 %v1520, %v1519
      %1537 = vmatprep.subr.bf16.mxu0 0
      %1538 = vmatpush1.bf16.msra.mxu0 %v1521
      %1539 = vmatprep.subr.bf16.mxu0 0
      %1540 = vmatpush1.bf16.msra.mxu0 %v1522
      %1541 = vmatprep.subr.bf16.mxu0 0
      %1542 = vmatpush1.bf16.msra.mxu0 %v1523
      %1543 = vmatprep.subr.bf16.mxu0 0
      %1544 = vmatpush1.bf16.msra.mxu0 %v1524
      %1545 = vmatprep.subr.bf16.mxu0 0
      %1546 = vmatpush1.bf16.msra.mxu0 %v1525
      %1547 = vmatprep.subr.bf16.mxu0 0
      %1548 = vmatpush1.bf16.msra.mxu0 %v1526
      %1549 = vmatprep.subr.bf16.mxu0 0
      %1550 = vmatpush1.bf16.msra.mxu0 %v1527
      %1551 = vmatprep.subr.bf16.mxu0 0
      %1552 = vmatpush1.bf16.msra.mxu0 %v1528
      %1553 = vmatprep.subr.bf16.mxu0 0
      %1554 = vmatpush1.bf16.msra.mxu0 0
      %1555 = vmatprep.subr.bf16.mxu0 0
      %1556 = vmatpush1.bf16.msra.mxu0 0
      %1557 = vmatprep.subr.bf16.mxu0 0
      %1558 = vmatpush1.bf16.msra.mxu0 0
      %1559 = vmatprep.subr.bf16.mxu0 0
      %1560 = vmatpush1.bf16.msra.mxu0 0
      %1561 = vmatprep.subr.bf16.mxu0 0
      %1562 = vmatpush1.bf16.msra.mxu0 0
      %1563 = vmatprep.subr.bf16.mxu0 0
      %1564 = vmatpush1.bf16.msra.mxu0 0
      %1565 = vmatprep.subr.bf16.mxu0 0
      %1566 = vmatpush1.bf16.msra.mxu0 0
      %1567 = vmatprep.subr.bf16.mxu0 0
      %1568 = vmatpush1.bf16.msra.mxu0 0
      %1569 = vmatprep.mubr.bf16.mxu0 0
      %1570 = vmatmul.mubr.bf16.gmra.mrb[0].mxu0 %v608
      %v1571 = vpop.f32.mrb[0].mxu0
      %v1572 = vadd.f32 0.0, %v1571
      %v1573 = vpop.f32.mrb[0].mxu0
      %v1574 = vpop.f32.mrb[0].mxu0
      %v1575 = vadd.f32 0.0, %v1574
      %v1576 = vpop.f32.mrb[0].mxu0
      %1577 = vmatprep.mubr.bf16.mxu0 0
      %1578 = vmatmul.mubr.bf16.gmra.mrb[0].mxu0 %v609
      %v1579 = vpop.f32.mrb[0].mxu0
      %v1580 = vadd.f32 0.0, %v1579
      %v1581 = vpop.f32.mrb[0].mxu0
      %v1582 = vpop.f32.mrb[0].mxu0
      %v1583 = vadd.f32 0.0, %v1582
      %v1584 = vpop.f32.mrb[0].mxu0
      %1585 = vmatprep.mubr.bf16.mxu0 0
      %1586 = vmatmul.mubr.bf16.gmra.mrb[0].mxu0 %v610
      %v1587 = vpop.f32.mrb[0].mxu0
      %v1588 = vadd.f32 0.0, %v1587
      %v1589 = vpop.f32.mrb[0].mxu0
      %v1590 = vpop.f32.mrb[0].mxu0
      %v1591 = vadd.f32 0.0, %v1590
      %v1592 = vpop.f32.mrb[0].mxu0
      %1593 = vmatprep.mubr.bf16.mxu0 0
      %1594 = vmatmul.mubr.bf16.gmra.mrb[0].mxu0 %v607
      %v1595 = vpop.f32.mrb[0].mxu0
      %v1596 = vadd.f32 0.0, %v1595
      %v1597 = vpop.f32.mrb[0].mxu0
      %v1598 = vpop.f32.mrb[0].mxu0
      %v1599 = vadd.f32 0.0, %v1598
      %v1600 = vpop.f32.mrb[0].mxu0
      %1601 = vdwg.mxu0
      %v1602 = vadd.f32 %v1461, %v1572
      %v1603 = vadd.f32 %v1462, %v1575
      %v1604 = vadd.f32 %v1463, %v1580
      %v1605 = vadd.f32 %v1464, %v1583
      %v1606 = vadd.f32 %v1465, %v1588
      %v1607 = vadd.f32 %v1466, %v1591
      %v1608 = vadd.f32 %v1467, %v1596
      %v1609 = vadd.f32 %v1468, %v1599
      %v1610 = vld [vmem:[#allocation2] sm:$0xff]
      %v1611 = vld [vmem:[#allocation2 + $0x8] sm:$0xff]
      %v1612 = vld [vmem:[#allocation2 + $0x10] sm:$0xff]
      %v1613 = vld [vmem:[#allocation2 + $0x18] sm:$0xff]
      %v1614 = vld [vmem:[#allocation2 + $0x20] sm:$0xff]
      %v1615 = vld [vmem:[#allocation2 + $0x28] sm:$0xff]
      %v1616 = vld [vmem:[#allocation2 + $0x30] sm:$0xff]
      %v1617 = vld [vmem:[#allocation2 + $0x38] sm:$0xff]
      %v1618 = vadd.f32 %v1610, %v1602
      %v1619 = vadd.f32 %v1611, %v1603
      %v1620 = vadd.f32 %v1612, %v1604
      %v1621 = vadd.f32 %v1613, %v1605
      %v1622 = vadd.f32 %v1614, %v1606
      %v1623 = vadd.f32 %v1615, %v1607
      %v1624 = vadd.f32 %v1616, %v1608
      %v1625 = vadd.f32 %v1617, %v1609
      %1626 = vst [vmem:[#allocation2] sm:$0xff] %v1618
      %1627 = vst [vmem:[#allocation2 + $0x8] sm:$0xff] %v1619
      %1628 = vst [vmem:[#allocation2 + $0x10] sm:$0xff] %v1620
      %1629 = vst [vmem:[#allocation2 + $0x18] sm:$0xff] %v1621
      %1630 = vst [vmem:[#allocation2 + $0x20] sm:$0xff] %v1622
      %1631 = vst [vmem:[#allocation2 + $0x28] sm:$0xff] %v1623
      %1632 = vst [vmem:[#allocation2 + $0x30] sm:$0xff] %v1624
      %1633 = vst [vmem:[#allocation2 + $0x38] sm:$0xff] %v1625
      %p1634 = scmp.eq.s32.totalorder %s22, 2
      // Predicated region
      $region41: #{_lambda_.14} parent=35 // pred_check
        %p1635 = pneg %p1634
      $region42: #{_lambda_.14} parent=35 // pred_check_branch
        %1637 = sbr.rel (%p1635) target = $region44
      $region43: #{_lambda_.14} parent=35 // pred_region
        %v1638 = vld [vmem:[#allocation2] sm:$0xff]
        %v1639 = vld [vmem:[#allocation2 + $0x8] sm:$0xff]
        %v1640 = vld [vmem:[#allocation2 + $0x10] sm:$0xff]
        %v1641 = vld [vmem:[#allocation2 + $0x18] sm:$0xff]
        %v1642 = vld [vmem:[#allocation2 + $0x20] sm:$0xff]
        %v1643 = vld [vmem:[#allocation2 + $0x28] sm:$0xff]
        %v1644 = vld [vmem:[#allocation2 + $0x30] sm:$0xff]
        %v1645 = vld [vmem:[#allocation2 + $0x38] sm:$0xff]
        %v1646 = vld [vmem:[%s2] sm:$0x1]
        %v1648 = vlaneseq
        %v1649 = vshrl.u32 %v1648, 7
        %v1650 = vsub.s32 0, %v1649
        %v1651 = vrot.slane %v1646, %v1650
        %v1653 = vadd.f32 %v1638, %v1651
        %v1654 = vadd.f32 %v1639, %v1651
        %v1655 = vadd.f32 %v1640, %v1651
        %v1656 = vadd.f32 %v1641, %v1651
        %v1657 = vadd.f32 %v1642, %v1651
        %v1658 = vadd.f32 %v1643, %v1651
        %v1659 = vadd.f32 %v1644, %v1651
        %v1660 = vadd.f32 %v1645, %v1651
        %v1661 = vld [vmem:[%s3] sm:$0xff]
        %v1662 = vld [vmem:[%s3 + $0x8] sm:$0xff]
        %v1663 = vld [vmem:[%s3 + $0x10] sm:$0xff]
        %v1664 = vld [vmem:[%s3 + $0x18] sm:$0xff]
        %v1665 = vld [vmem:[%s3 + $0x20] sm:$0xff]
        %v1666 = vld [vmem:[%s3 + $0x28] sm:$0xff]
        %v1667 = vld [vmem:[%s3 + $0x30] sm:$0xff]
        %v1668 = vld [vmem:[%s3 + $0x38] sm:$0xff]
        %1670 = vset.pattern.permute.xlu0 0
        %1671 = vperm.xlu0 %1670, %v1661
        %v1672 = vpop.permute.xlu0 %1671
        %1675 = vset.pattern.permute.xlu0 0
        %1676 = vperm.xlu0 %1675, %v1662
        %v1677 = vpop.permute.xlu0 %1676
        %1680 = vset.pattern.permute.xlu0 0
        %1681 = vperm.xlu0 %1680, %v1663
        %v1682 = vpop.permute.xlu0 %1681
        %1685 = vset.pattern.permute.xlu0 0
        %1686 = vperm.xlu0 %1685, %v1664
        %v1687 = vpop.permute.xlu0 %1686
        %1690 = vset.pattern.permute.xlu0 0
        %1691 = vperm.xlu0 %1690, %v1665
        %v1692 = vpop.permute.xlu0 %1691
        %1695 = vset.pattern.permute.xlu0 0
        %1696 = vperm.xlu0 %1695, %v1666
        %v1697 = vpop.permute.xlu0 %1696
        %1700 = vset.pattern.permute.xlu0 0
        %1701 = vperm.xlu0 %1700, %v1667
        %v1702 = vpop.permute.xlu0 %1701
        %1705 = vset.pattern.permute.xlu0 0
        %1706 = vperm.xlu0 %1705, %v1668
        %v1707 = vpop.permute.xlu0 %1706
        %v1709 = vmul.f32 %v1653, %v1672
        %v1710 = vmul.f32 %v1654, %v1677
        %v1711 = vmul.f32 %v1655, %v1682
        %v1712 = vmul.f32 %v1656, %v1687
        %v1713 = vmul.f32 %v1657, %v1692
        %v1714 = vmul.f32 %v1658, %v1697
        %v1715 = vmul.f32 %v1659, %v1702
        %v1716 = vmul.f32 %v1660, %v1707
        %v1717 = vpack.c.bf16 %v1710, %v1709
        %v1718 = vpack.c.bf16 %v1712, %v1711
        %v1719 = vpack.c.bf16 %v1714, %v1713
        %v1720 = vpack.c.bf16 %v1716, %v1715
        %v1725 = vunpack.c.l.b16 %v1717
        %v1726 = vunpack.c.h.b16 %v1717
        %v1727 = vunpack.c.l.b16 %v1718
        %v1728 = vunpack.c.h.b16 %v1718
        %v1729 = vunpack.c.l.b16 %v1719
        %v1730 = vunpack.c.h.b16 %v1719
        %v1731 = vunpack.c.l.b16 %v1720
        %v1732 = vunpack.c.h.b16 %v1720
        %v1733 = vpack.c.b16 %v1725, %v1725
        %v1734 = vpack.c.b16 %v1726, %v1726
        %v1735 = vpack.c.b16 %v1727, %v1727
        %v1736 = vpack.c.b16 %v1728, %v1728
        %v1737 = vpack.c.b16 %v1729, %v1729
        %v1738 = vpack.c.b16 %v1730, %v1730
        %v1739 = vpack.c.b16 %v1731, %v1731
        %v1740 = vpack.c.b16 %v1732, %v1732
        %1749 = vst [vmem:[%s247] sm:$0xf] %v1733
        %1750 = vst [vmem:[%s247 + $0x4] sm:$0xf] %v1734
        %1751 = vst [vmem:[%s247 + $0x8] sm:$0xf] %v1735
        %1752 = vst [vmem:[%s247 + $0xc] sm:$0xf] %v1736
        %1753 = vst [vmem:[%s247 + $0x10] sm:$0xf] %v1737
        %1754 = vst [vmem:[%s247 + $0x14] sm:$0xf] %v1738
        %1755 = vst [vmem:[%s247 + $0x18] sm:$0xf] %v1739
        %1756 = vst [vmem:[%s247 + $0x1c] sm:$0xf] %v1740
      $region44: #{_lambda_.14} parent=35 // pred_fallthru
        _
      %p1757 = scmp.lt.s32.totalorder %s20, 1
      %s1758 = scalar_select %p1757, %s20, 1
      %p1759 = scmp.lt.s32.totalorder %s21, 5
      %s1760 = scalar_select %p1759, %s21, 5
      %s1761 = smul.addr %s1760, 8
      %s1762 = smul.addr %s1758, 48
      %s1763 = sadd.s32 %s1761, %s1762
      %s1764 = smul.addr %s1763, 4
      %s1765 = scalar_lea.vmem %s4, %s1764
      // Predicated region
      $region45: #{_lambda_.14} parent=35 // pred_check
        %p1766 = pneg %p147
      $region46: #{_lambda_.14} parent=35 // pred_check_branch
        %1768 = sbr.rel (%p1766) target = $region48
      $region47: #{_lambda_.14} parent=35 // pred_region
        _
      $region48: #{_lambda_.14} parent=35 // pred_fallthru
        _
    $region36: #{_lambda_.14} parent=5 // pred_fallthru
      _
    %p1769 = scmp.le.s32.totalorder 2, %s10
    // Predicated region
    $region49: #{_lambda_.14} parent=5 // pred_check
      %p1770 = pneg %p1769
    $region50: #{_lambda_.14} parent=5 // pred_check_branch
      %1772 = sbr.rel (%p1770) target = $region52
    $region51: #{_lambda_.14} parent=5 // pred_region
      %s1773 = ssub.s32 %s10, 2
      // Predicated region
      $region53: #{_lambda_.14} parent=51 // pred_check
        %p1774 = pneg %p153
      $region54: #{_lambda_.14} parent=51 // pred_check_branch
        %1776 = sbr.rel (%p1774) target = $region56
      $region55: #{_lambda_.14} parent=51 // pred_region
        %p1777 = scmp.lt.s32.totalorder %s23, 1
        %s1778 = scalar_select %p1777, %s23, 1
        %p1779 = scmp.lt.s32.totalorder %s24, 5
        %s1780 = scalar_select %p1779, %s24, 5
        %s1781 = smul.addr %s1780, 8
        %s1782 = smul.addr %s1778, 48
        %s1783 = sadd.s32 %s1781, %s1782
        %s1784 = smul.addr %s1783, 4
        %s1785 = scalar_lea.vmem %s4, %s1784
      $region56: #{_lambda_.14} parent=51 // pred_fallthru
        _
    $region52: #{_lambda_.14} parent=5 // pred_fallthru
      _
  $region6: #{_lambda_.14} parent=0 // loop_footer
    %s14 = sadd.s32 1, %s10
  $region7: #{_lambda_.14} parent=0 // loop_footer_branch
    %9 = sbr.rel target = $region3
  $region8: #{_lambda_.14} parent=0 // loop_exit
    _

// kernel: _lambda_.10
$region0: #{_lambda_.10}
  #allocation0 [shape = 'u32[]', space=smem, size = 0x4, offset = 0x4, fixed_abs, tag = 'smem constant byte address 0x4 - core index']
  #allocation1 [shape = 'u32[144,128]{1,0:T(1,128)}', space=vmem, size = 0x12000, scoped, tag = 'internal scratch']
  #allocation2 [shape = 'f32[64,128]{1,0:T(8,128)}', space=vmem, size = 0x8000, scoped, tag = 'scratch operand']
  %s0 = inlined_call_operand.vmem [shape: bf16[2,8,64,128], index: 0, kind: input, shape index: {}]
  %s1 = inlined_call_operand.vmem [shape: bf16[27,128,128], index: 1, kind: input, shape index: {}]
  %s2 = inlined_call_operand.vmem [shape: f32[1,128], index: 2, kind: input, shape index: {}]
  %s3 = inlined_call_operand.vmem [shape: f32[64,1], index: 3, kind: input, shape index: {}]
  %s4 = inlined_call_operand.vmem [shape: bf16[2,6,64,128], index: 4, kind: output, shape index: {}]
  %s5 = sld [smem:[#allocation0]]
  $region57: #{_lambda_.10} parent=0
    _
  %s7 = ssub.s32 1, %s5
  %s8 = scalar_select 0, %s7, %s5
  loop: start=0, step=1, limit=38
  $region2: #{_lambda_.10} parent=0 // loop_pre_header
    _
  $region3: #{_lambda_.10} parent=0 // loop_header
    %s10 = sphi 0, %s14
    %p11 = scmp.ge.s32.totalorder %s10, 38
    %s17 = sphi 0, %s36
    %s18 = sphi 0, %s32
    %s19 = sphi 0, %s28
    %s20 = sphi 0, %s17
    %s21 = sphi 0, %s18
    %s22 = sphi 0, %s19
    %s23 = sphi 0, %s20
    %s24 = sphi 0, %s21
    %s25 = sphi 0, %s22
    %s43 = sphi 0, %s45
    %s46 = sphi 0, %s43
    %s47 = sphi 0, %s46
    %s63 = sphi 0, %s47
    %s67 = sphi 0, %s67
    %s69 = sphi 0, %s67
    %s70 = sphi 0, %s69
    %s84 = sphi 0, %s70
    %s88 = sphi 0, %s88
    %s90 = sphi 0, %s88
    %s91 = sphi 0, %s90
    %s105 = sphi 0, %s91
    %s109 = sphi 0, %s109
    %s111 = sphi 0, %s109
    %s112 = sphi 0, %s111
    %s126 = sphi 0, %s112
    %s134 = sphi 0, %s136
    %s137 = sphi 0, %s134
    %s138 = sphi 0, %s137
    %s154 = sphi 0, %s138
  $region4: #{_lambda_.10} parent=0 // loop_header_branch
    %13 = sbr.rel (%p11) target = $region8
  $region5: #{_lambda_.10} parent=0 // loop_body
    %s15 = ssub.s32 %s10, 1
    %s16 = ssub.s32 %s10, 2
    %s26 = sadd.s32 1, %s19
    %p27 = scmp.ge.s32.totalorder %s26, 3
    %s28 = scalar_select %p27, 0, %s26
    %s29 = sadd.s32 1, %s18
    %s30 = scalar_select %p27, %s29, %s18
    %p31 = scmp.ge.s32.totalorder %s30, 6
    %s32 = scalar_select %p31, 0, %s30
    %s33 = sadd.s32 1, %s17
    %s34 = scalar_select %p31, %s33, %s17
    %p35 = scmp.ge.s32.totalorder %s34, 2
    %s36 = scalar_select %p35, 0, %s34
    %s37 = sadd.s32 %s18, %s19
    %s38 = sadd.s32 %s32, %s28
    %s39 = ssub.s32 %s17, %s36
    %s40 = ssub.s32 %s37, %s38
    %s41 = sor.u32 %s39, %s40
    %p42 = scmp.eq.s32.totalorder %s41, 0
    %s44 = sadd.s32 %s43, 1
    %s45 = scalar_select %p42, %s43, %s44
    %p48 = pneg %p42
    %p49 = scmp.eq.s32.totalorder %s10, 35
    %p50 = por %p48, %p49
    %p51 = scmp.ne.s32.totalorder %s43, %s46
    %p52 = scmp.eq.s32.totalorder %s10, 0
    %p53 = por %p51, %p52
    %p54 = scmp.ne.s32.totalorder %s43, %s46
    %p55 = scmp.eq.s32.totalorder %s15, 35
    %p56 = por %p54, %p55
    %p57 = scmp.ne.s32.totalorder %s46, %s47
    %p58 = scmp.eq.s32.totalorder %s15, 0
    %p59 = por %p57, %p58
    %p60 = scmp.ne.s32.totalorder %s46, %s47
    %p61 = scmp.eq.s32.totalorder %s16, 35
    %p62 = por %p60, %p61
    %p64 = scmp.ne.s32.totalorder %s47, %s63
    %p65 = scmp.eq.s32.totalorder %s16, 0
    %p66 = por %p64, %p65
    %s68 = sadd.s32 %s67, 1
    %p71 = scmp.eq.s32.totalorder %s10, 35
    %p72 = scmp.ne.s32.totalorder %s67, %s69
    %p73 = scmp.eq.s32.totalorder %s10, 0
    %p74 = por %p72, %p73
    %p75 = scmp.ne.s32.totalorder %s67, %s69
    %p76 = scmp.eq.s32.totalorder %s15, 35
    %p77 = por %p75, %p76
    %p78 = scmp.ne.s32.totalorder %s69, %s70
    %p79 = scmp.eq.s32.totalorder %s15, 0
    %p80 = por %p78, %p79
    %p81 = scmp.ne.s32.totalorder %s69, %s70
    %p82 = scmp.eq.s32.totalorder %s16, 35
    %p83 = por %p81, %p82
    %p85 = scmp.ne.s32.totalorder %s70, %s84
    %p86 = scmp.eq.s32.totalorder %s16, 0
    %p87 = por %p85, %p86
    %s89 = sadd.s32 %s88, 1
    %p92 = scmp.eq.s32.totalorder %s10, 35
    %p93 = scmp.ne.s32.totalorder %s88, %s90
    %p94 = scmp.eq.s32.totalorder %s10, 0
    %p95 = por %p93, %p94
    %p96 = scmp.ne.s32.totalorder %s88, %s90
    %p97 = scmp.eq.s32.totalorder %s15, 35
    %p98 = por %p96, %p97
    %p99 = scmp.ne.s32.totalorder %s90, %s91
    %p100 = scmp.eq.s32.totalorder %s15, 0
    %p101 = por %p99, %p100
    %p102 = scmp.ne.s32.totalorder %s90, %s91
    %p103 = scmp.eq.s32.totalorder %s16, 35
    %p104 = por %p102, %p103
    %p106 = scmp.ne.s32.totalorder %s91, %s105
    %p107 = scmp.eq.s32.totalorder %s16, 0
    %p108 = por %p106, %p107
    %s110 = sadd.s32 %s109, 1
    %p113 = scmp.eq.s32.totalorder %s10, 35
    %p114 = scmp.ne.s32.totalorder %s109, %s111
    %p115 = scmp.eq.s32.totalorder %s10, 0
    %p116 = por %p114, %p115
    %p117 = scmp.ne.s32.totalorder %s109, %s111
    %p118 = scmp.eq.s32.totalorder %s15, 35
    %p119 = por %p117, %p118
    %p120 = scmp.ne.s32.totalorder %s111, %s112
    %p121 = scmp.eq.s32.totalorder %s15, 0
    %p122 = por %p120, %p121
    %p123 = scmp.ne.s32.totalorder %s111, %s112
    %p124 = scmp.eq.s32.totalorder %s16, 35
    %p125 = por %p123, %p124
    %p127 = scmp.ne.s32.totalorder %s112, %s126
    %p128 = scmp.eq.s32.totalorder %s16, 0
    %p129 = por %p127, %p128
    %s130 = ssub.s32 %s17, %s36
    %s131 = ssub.s32 %s18, %s32
    %s132 = sor.u32 %s130, %s131
    %p133 = scmp.eq.s32.totalorder %s132, 0
    %s135 = sadd.s32 %s134, 1
    %s136 = scalar_select %p133, %s134, %s135
    %p139 = pneg %p133
    %p140 = scmp.eq.s32.totalorder %s10, 35
    %p141 = por %p139, %p140
    %p142 = scmp.ne.s32.totalorder %s134, %s137
    %p143 = scmp.eq.s32.totalorder %s10, 0
    %p144 = por %p142, %p143
    %p145 = scmp.ne.s32.totalorder %s134, %s137
    %p146 = scmp.eq.s32.totalorder %s15, 35
    %p147 = por %p145, %p146
    %p148 = scmp.ne.s32.totalorder %s137, %s138
    %p149 = scmp.eq.s32.totalorder %s15, 0
    %p150 = por %p148, %p149
    %p151 = scmp.ne.s32.totalorder %s137, %s138
    %p152 = scmp.eq.s32.totalorder %s16, 35
    %p153 = por %p151, %p152
    %p155 = scmp.ne.s32.totalorder %s138, %s154
    %p156 = scmp.eq.s32.totalorder %s16, 0
    %p157 = por %p155, %p156
    %p158 = scmp.le.s32.totalorder 1, %s10
    %p159 = scmp.lt.s32.totalorder %s10, 37
    %p160 = pnand %p158, %p159
    %p161 = pneg %p160
    // Predicated region
    $region9: #{_lambda_.10} parent=5 // pred_check
      _
    $region10: #{_lambda_.10} parent=5 // pred_check_branch
      %163 = sbr.rel (%p160) target = $region12
    $region11: #{_lambda_.10} parent=5 // pred_region
      %s164 = ssub.s32 %s10, 1
      // Predicated region
      $region13: #{_lambda_.10} parent=11 // pred_check
        %p165 = pneg %p80
      $region14: #{_lambda_.10} parent=11 // pred_check_branch
        %167 = sbr.rel (%p165) target = $region16
      $region15: #{_lambda_.10} parent=11 // pred_region
        _
      $region16: #{_lambda_.10} parent=11 // pred_fallthru
        _
      // Predicated region
      $region17: #{_lambda_.10} parent=11 // pred_check
        %p168 = pneg %p101
      $region18: #{_lambda_.10} parent=11 // pred_check_branch
        %170 = sbr.rel (%p168) target = $region20
      $region19: #{_lambda_.10} parent=11 // pred_region
        _
      $region20: #{_lambda_.10} parent=11 // pred_fallthru
        _
      // Predicated region
      $region21: #{_lambda_.10} parent=11 // pred_check
        %p171 = pneg %p122
      $region22: #{_lambda_.10} parent=11 // pred_check_branch
        %173 = sbr.rel (%p171) target = $region24
      $region23: #{_lambda_.10} parent=11 // pred_region
        _
      $region24: #{_lambda_.10} parent=11 // pred_fallthru
        _
    $region12: #{_lambda_.10} parent=5 // pred_fallthru
      _
    %p174 = scmp.lt.s32.totalorder %s10, 36
    // Predicated region
    $region25: #{_lambda_.10} parent=5 // pred_check
      %p175 = pneg %p174
    $region26: #{_lambda_.10} parent=5 // pred_check_branch
      %177 = sbr.rel (%p175) target = $region28
    $region27: #{_lambda_.10} parent=5 // pred_region
      // Predicated region
      $region29: #{_lambda_.10} parent=27 // pred_check
        %p178 = pneg %p53
      $region30: #{_lambda_.10} parent=27 // pred_check_branch
        %180 = sbr.rel (%p178) target = $region32
      $region31: #{_lambda_.10} parent=27 // pred_region
        %s181 = sadd.s32 %s18, %s19
        %p182 = scmp.lt.s32.totalorder %s17, 1
        %s183 = scalar_select %p182, %s17, 1
        %p184 = scmp.lt.s32.totalorder %s181, 7
        %s185 = scalar_select %p184, %s181, 7
        %s186 = smul.addr %s185, 8
        %s187 = smul.addr %s183, 64
        %s188 = sadd.s32 %s186, %s187
        %s189 = smul.addr %s188, 4
        %s190 = scalar_lea.vmem %s0, %s189
        %s191 = sadd.s32 %s18, %s19
      $region32: #{_lambda_.10} parent=27 // pred_fallthru
        _
    $region28: #{_lambda_.10} parent=5 // pred_fallthru
      _
    %p192 = scmp.le.s32.totalorder 1, %s10
    %p193 = scmp.lt.s32.totalorder %s10, 37
    %p194 = pnand %p192, %p193
    %p195 = pneg %p194
    // Predicated region
    $region33: #{_lambda_.10} parent=5 // pred_check
      _
    $region34: #{_lambda_.10} parent=5 // pred_check_branch
      %197 = sbr.rel (%p194) target = $region36
    $region35: #{_lambda_.10} parent=5 // pred_region
      %s198 = ssub.s32 %s10, 1
      %s199 = sadd.s32 %s21, %s22
      %p200 = scmp.lt.s32.totalorder %s20, 1
      %s201 = scalar_select %p200, %s20, 1
      %p202 = scmp.lt.s32.totalorder %s199, 7
      %s203 = scalar_select %p202, %s199, 7
      %s204 = smul.addr %s203, 8
      %s205 = smul.addr %s201, 64
      %s206 = sadd.s32 %s204, %s205
      %s207 = smul.addr %s206, 4
      %s208 = scalar_lea.vmem %s0, %s207
      %p209 = pneg %p59
      %p210 = pneg %p56
      %p211 = pneg %p80
      %p212 = pneg %p77
      %p213 = pneg %p101
      %p214 = pneg %p98
      %p215 = pneg %p122
      %p216 = pneg %p119
      %p217 = pneg %p150
      %p218 = pneg %p147
      %p219 = scmp.lt.s32.totalorder %s20, 1
      %s220 = scalar_select %p219, %s20, 1
      %p221 = scmp.lt.s32.totalorder %s21, 5
      %s222 = scalar_select %p221, %s21, 5
      %s223 = smul.addr %s222, 8
      %s224 = smul.addr %s220, 48
      %s225 = sadd.s32 %s223, %s224
      %s226 = smul.addr %s225, 4
      %s227 = scalar_lea.vmem %s4, %s226
      %s228 = sadd.s32 %s21, %s22
      %p229 = scmp.lt.s32.totalorder %s20, 1
      %s230 = scalar_select %p229, %s20, 1
      %p231 = scmp.lt.s32.totalorder %s228, 7
      %s232 = scalar_select %p231, %s228, 7
      %s233 = smul.addr %s232, 8
      %s234 = smul.addr %s230, 64
      %s235 = sadd.s32 %s233, %s234
      %s236 = smul.addr %s235, 4
      %s237 = scalar_lea.vmem %s0, %s236
      %s238 = sadd.s32 %s21, %s22
      %p239 = scmp.lt.s32.totalorder %s20, 1
      %s240 = scalar_select %p239, %s20, 1
      %p241 = scmp.lt.s32.totalorder %s21, 5
      %s242 = scalar_select %p241, %s21, 5
      %s243 = smul.addr %s242, 8
      %s244 = smul.addr %s240, 48
      %s245 = sadd.s32 %s243, %s244
      %s246 = smul.addr %s245, 4
      %s247 = scalar_lea.vmem %s4, %s246
      %p249 = scmp.eq.s32.totalorder %s22, 0
      // Predicated region
      $region37: #{_lambda_.10} parent=35 // pred_check
        %p250 = pneg %p249
      $region38: #{_lambda_.10} parent=35 // pred_check_branch
        %252 = sbr.rel (%p250) target = $region40
      $region39: #{_lambda_.10} parent=35 // pred_region
        %253 = vst [vmem:[#allocation2] sm:$0xff] 0.0
        %254 = vst [vmem:[#allocation2 + $0x8] sm:$0xff] 0.0
        %255 = vst [vmem:[#allocation2 + $0x10] sm:$0xff] 0.0
        %256 = vst [vmem:[#allocation2 + $0x18] sm:$0xff] 0.0
        %257 = vst [vmem:[#allocation2 + $0x20] sm:$0xff] 0.0
        %258 = vst [vmem:[#allocation2 + $0x28] sm:$0xff] 0.0
        %259 = vst [vmem:[#allocation2 + $0x30] sm:$0xff] 0.0
        %260 = vst [vmem:[#allocation2 + $0x38] sm:$0xff] 0.0
      $region40: #{_lambda_.10} parent=35 // pred_fallthru
        _
      %v261 = vld [vmem:[%s237] sm:$0xf]
      %v262 = vld [vmem:[%s237 + $0x4] sm:$0xf]
      %v263 = vld [vmem:[%s237 + $0x8] sm:$0xf]
      %v264 = vld [vmem:[%s237 + $0xc] sm:$0xf]
      %v265 = vld [vmem:[%s237 + $0x10] sm:$0xf]
      %v266 = vld [vmem:[%s237 + $0x14] sm:$0xf]
      %v267 = vld [vmem:[%s237 + $0x18] sm:$0xf]
      %v268 = vld [vmem:[%s237 + $0x1c] sm:$0xf]
      %v269 = vunpack.c.l.bf16 %v261
      %v270 = vunpack.c.l.bf16 %v262
      %v271 = vunpack.c.l.bf16 %v263
      %v272 = vunpack.c.l.bf16 %v264
      %v273 = vunpack.c.l.bf16 %v265
      %v274 = vunpack.c.l.bf16 %v266
      %v275 = vunpack.c.l.bf16 %v267
      %v276 = vunpack.c.l.bf16 %v268
      %v277 = vrot.slane %v269, 7
      %v278 = vrot.slane %v270, 7
      %v279 = vrot.slane %v271, 7
      %v280 = vrot.slane %v272, 7
      %v281 = vrot.slane %v273, 7
      %v282 = vrot.slane %v274, 7
      %v283 = vrot.slane %v275, 7
      %v284 = vrot.slane %v276, 7
      %v285 = vlaneseq
      %v286 = vshrl.u32 %v285, 7
      %vm287 = vcmp.lt.s32.totalorder %v286, 1
      %v288 = vsel %vm287, %v283, %v284
      %v289 = vsel %vm287, %v282, %v283
      %v290 = vsel %vm287, %v281, %v282
      %v291 = vsel %vm287, %v280, %v281
      %v292 = vsel %vm287, %v279, %v280
      %v293 = vsel %vm287, %v278, %v279
      %v294 = vsel %vm287, %v277, %v278
      %v295 = vsel %vm287, %v284, %v277
      %s296 = smul.u32 %s22, 9
      %s297 = smul.u32 %s296, 16
      %s298 = smul.addr %s297, 4
      %s299 = scalar_lea.vmem %s1, %s298
      %v300 = vld [vmem:[%s299] sm:$0xf]
      %v301 = vld [vmem:[%s299 + $0x4] sm:$0xf]
      %v302 = vld [vmem:[%s299 + $0x8] sm:$0xf]
      %v303 = vld [vmem:[%s299 + $0xc] sm:$0xf]
      %v304 = vld [vmem:[%s299 + $0x10] sm:$0xf]
      %v305 = vld [vmem:[%s299 + $0x14] sm:$0xf]
      %v306 = vld [vmem:[%s299 + $0x18] sm:$0xf]
      %v307 = vld [vmem:[%s299 + $0x1c] sm:$0xf]
      %v308 = vld [vmem:[%s299 + $0x20] sm:$0xf]
      %v309 = vld [vmem:[%s299 + $0x24] sm:$0xf]
      %v310 = vld [vmem:[%s299 + $0x28] sm:$0xf]
      %v311 = vld [vmem:[%s299 + $0x2c] sm:$0xf]
      %v312 = vld [vmem:[%s299 + $0x30] sm:$0xf]
      %v313 = vld [vmem:[%s299 + $0x34] sm:$0xf]
      %v314 = vld [vmem:[%s299 + $0x38] sm:$0xf]
      %v315 = vld [vmem:[%s299 + $0x3c] sm:$0xf]
      %v316 = vpack.c.bf16 %v295, %v288
      %v317 = vpack.c.bf16 %v293, %v294
      %v318 = vpack.c.bf16 %v291, %v292
      %v319 = vpack.c.bf16 %v289, %v290
      %s320 = sadd.s32 %s296, 1
      %s321 = smul.u32 %s320, 16
      %s322 = smul.addr %s321, 4
      %s323 = scalar_lea.vmem %s1, %s322
      %v324 = vld [vmem:[%s323] sm:$0xf]
      %v325 = vld [vmem:[%s323 + $0x4] sm:$0xf]
      %v326 = vld [vmem:[%s323 + $0x8] sm:$0xf]
      %v327 = vld [vmem:[%s323 + $0xc] sm:$0xf]
      %v328 = vld [vmem:[%s323 + $0x10] sm:$0xf]
      %v329 = vld [vmem:[%s323 + $0x14] sm:$0xf]
      %v330 = vld [vmem:[%s323 + $0x18] sm:$0xf]
      %v331 = vld [vmem:[%s323 + $0x1c] sm:$0xf]
      %v332 = vld [vmem:[%s323 + $0x20] sm:$0xf]
      %v333 = vld [vmem:[%s323 + $0x24] sm:$0xf]
      %v334 = vld [vmem:[%s323 + $0x28] sm:$0xf]
      %v335 = vld [vmem:[%s323 + $0x2c] sm:$0xf]
      %v336 = vld [vmem:[%s323 + $0x30] sm:$0xf]
      %v337 = vld [vmem:[%s323 + $0x34] sm:$0xf]
      %v338 = vld [vmem:[%s323 + $0x38] sm:$0xf]
      %v339 = vld [vmem:[%s323 + $0x3c] sm:$0xf]
      %v340 = vpack.c.bf16 %v269, %v276
      %v341 = vpack.c.bf16 %v271, %v270
      %v342 = vpack.c.bf16 %v273, %v272
      %v343 = vpack.c.bf16 %v275, %v274
      %v360 = vunpack.c.l.b16 %v324
      %v361 = vunpack.c.l.b16 %v325
      %v362 = vunpack.c.l.b16 %v326
      %v363 = vunpack.c.l.b16 %v327
      %v364 = vunpack.c.l.b16 %v328
      %v365 = vunpack.c.l.b16 %v329
      %v366 = vunpack.c.l.b16 %v330
      %v367 = vunpack.c.l.b16 %v331
      %v368 = vunpack.c.l.b16 %v332
      %v369 = vunpack.c.l.b16 %v333
      %v370 = vunpack.c.l.b16 %v334
      %v371 = vunpack.c.l.b16 %v335
      %v372 = vunpack.c.l.b16 %v336
      %v373 = vunpack.c.l.b16 %v337
      %v374 = vunpack.c.l.b16 %v338
      %v375 = vunpack.c.l.b16 %v339
      %v376 = vpack.c.b16 %v361, %v360
      %v377 = vpack.c.b16 %v363, %v362
      %v378 = vpack.c.b16 %v365, %v364
      %v379 = vpack.c.b16 %v367, %v366
      %v380 = vpack.c.b16 %v369, %v368
      %v381 = vpack.c.b16 %v371, %v370
      %v382 = vpack.c.b16 %v373, %v372
      %v383 = vpack.c.b16 %v375, %v374
      %392 = vmatprep.subr.bf16.mxu0 0
      %393 = vmatpush1.bf16.msra.mxu0 %v376
      %394 = vmatprep.subr.bf16.mxu0 0
      %395 = vmatpush1.bf16.msra.mxu0 %v377
      %396 = vmatprep.subr.bf16.mxu0 0
      %397 = vmatpush1.bf16.msra.mxu0 %v378
      %398 = vmatprep.subr.bf16.mxu0 0
      %399 = vmatpush1.bf16.msra.mxu0 %v379
      %400 = vmatprep.subr.bf16.mxu0 0
      %401 = vmatpush1.bf16.msra.mxu0 %v380
      %402 = vmatprep.subr.bf16.mxu0 0
      %403 = vmatpush1.bf16.msra.mxu0 %v381
      %404 = vmatprep.subr.bf16.mxu0 0
      %405 = vmatpush1.bf16.msra.mxu0 %v382
      %406 = vmatprep.subr.bf16.mxu0 0
      %407 = vmatpush1.bf16.msra.mxu0 %v383
      %408 = vmatprep.subr.bf16.mxu0 0
      %409 = vmatpush1.bf16.msra.mxu0 0
      %410 = vmatprep.subr.bf16.mxu0 0
      %411 = vmatpush1.bf16.msra.mxu0 0
      %412 = vmatprep.subr.bf16.mxu0 0
      %413 = vmatpush1.bf16.msra.mxu0 0
      %414 = vmatprep.subr.bf16.mxu0 0
      %415 = vmatpush1.bf16.msra.mxu0 0
      %416 = vmatprep.subr.bf16.mxu0 0
      %417 = vmatpush1.bf16.msra.mxu0 0
      %418 = vmatprep.subr.bf16.mxu0 0
      %419 = vmatpush1.bf16.msra.mxu0 0
      %420 = vmatprep.subr.bf16.mxu0 0
      %421 = vmatpush1.bf16.msra.mxu0 0
      %422 = vmatprep.subr.bf16.mxu0 0
      %423 = vmatpush1.bf16.msra.mxu0 0
      %424 = vmatprep.mubr.bf16.mxu0 0
      %425 = vmatmul.mubr.bf16.gmra.mrb[0].mxu0 %v340
      %v426 = vpop.f32.mrb[0].mxu0
      %v427 = vadd.f32 0.0, %v426
      %v428 = vpop.f32.mrb[0].mxu0
      %v429 = vpop.f32.mrb[0].mxu0
      %v430 = vadd.f32 0.0, %v429
      %v431 = vpop.f32.mrb[0].mxu0
      %432 = vmatprep.mubr.bf16.mxu0 0
      %433 = vmatmul.mubr.bf16.gmra.mrb[0].mxu0 %v341
      %v434 = vpop.f32.mrb[0].mxu0
      %v435 = vadd.f32 0.0, %v434
      %v436 = vpop.f32.mrb[0].mxu0
      %v437 = vpop.f32.mrb[0].mxu0
      %v438 = vadd.f32 0.0, %v437
      %v439 = vpop.f32.mrb[0].mxu0
      %440 = vmatprep.mubr.bf16.mxu0 0
      %441 = vmatmul.mubr.bf16.gmra.mrb[0].mxu0 %v342
      %v442 = vpop.f32.mrb[0].mxu0
      %v443 = vadd.f32 0.0, %v442
      %v444 = vpop.f32.mrb[0].mxu0
      %v445 = vpop.f32.mrb[0].mxu0
      %v446 = vadd.f32 0.0, %v445
      %v447 = vpop.f32.mrb[0].mxu0
      %448 = vmatprep.mubr.bf16.mxu0 0
      %449 = vmatmul.mubr.bf16.gmra.mrb[0].mxu0 %v343
      %v450 = vpop.f32.mrb[0].mxu0
      %v451 = vadd.f32 0.0, %v450
      %v452 = vpop.f32.mrb[0].mxu0
      %v453 = vpop.f32.mrb[0].mxu0
      %v454 = vadd.f32 0.0, %v453
      %v455 = vpop.f32.mrb[0].mxu0
      %456 = vdwg.mxu0
      %v473 = vunpack.c.l.b16 %v300
      %v474 = vunpack.c.l.b16 %v301
      %v475 = vunpack.c.l.b16 %v302
      %v476 = vunpack.c.l.b16 %v303
      %v477 = vunpack.c.l.b16 %v304
      %v478 = vunpack.c.l.b16 %v305
      %v479 = vunpack.c.l.b16 %v306
      %v480 = vunpack.c.l.b16 %v307
      %v481 = vunpack.c.l.b16 %v308
      %v482 = vunpack.c.l.b16 %v309
      %v483 = vunpack.c.l.b16 %v310
      %v484 = vunpack.c.l.b16 %v311
      %v485 = vunpack.c.l.b16 %v312
      %v486 = vunpack.c.l.b16 %v313
      %v487 = vunpack.c.l.b16 %v314
      %v488 = vunpack.c.l.b16 %v315
      %v489 = vpack.c.b16 %v474, %v473
      %v490 = vpack.c.b16 %v476, %v475
      %v491 = vpack.c.b16 %v478, %v477
      %v492 = vpack.c.b16 %v480, %v479
      %v493 = vpack.c.b16 %v482, %v481
      %v494 = vpack.c.b16 %v484, %v483
      %v495 = vpack.c.b16 %v486, %v485
      %v496 = vpack.c.b16 %v488, %v487
      %505 = vmatprep.subr.bf16.mxu0 0
      %506 = vmatpush1.bf16.msra.mxu0 %v489
      %507 = vmatprep.subr.bf16.mxu0 0
      %508 = vmatpush1.bf16.msra.mxu0 %v490
      %509 = vmatprep.subr.bf16.mxu0 0
      %510 = vmatpush1.bf16.msra.mxu0 %v491
      %511 = vmatprep.subr.bf16.mxu0 0
      %512 = vmatpush1.bf16.msra.mxu0 %v492
      %513 = vmatprep.subr.bf16.mxu0 0
      %514 = vmatpush1.bf16.msra.mxu0 %v493
      %515 = vmatprep.subr.bf16.mxu0 0
      %516 = vmatpush1.bf16.msra.mxu0 %v494
      %517 = vmatprep.subr.bf16.mxu0 0
      %518 = vmatpush1.bf16.msra.mxu0 %v495
      %519 = vmatprep.subr.bf16.mxu0 0
      %520 = vmatpush1.bf16.msra.mxu0 %v496
      %521 = vmatprep.subr.bf16.mxu0 0
      %522 = vmatpush1.bf16.msra.mxu0 0
      %523 = vmatprep.subr.bf16.mxu0 0
      %524 = vmatpush1.bf16.msra.mxu0 0
      %525 = vmatprep.subr.bf16.mxu0 0
      %526 = vmatpush1.bf16.msra.mxu0 0
      %527 = vmatprep.subr.bf16.mxu0 0
      %528 = vmatpush1.bf16.msra.mxu0 0
      %529 = vmatprep.subr.bf16.mxu0 0
      %530 = vmatpush1.bf16.msra.mxu0 0
      %531 = vmatprep.subr.bf16.mxu0 0
      %532 = vmatpush1.bf16.msra.mxu0 0
      %533 = vmatprep.subr.bf16.mxu0 0
      %534 = vmatpush1.bf16.msra.mxu0 0
      %535 = vmatprep.subr.bf16.mxu0 0
      %536 = vmatpush1.bf16.msra.mxu0 0
      %537 = vmatprep.mubr.bf16.mxu0 0
      %538 = vmatmul.mubr.bf16.gmra.mrb[0].mxu0 %v316
      %v539 = vpop.f32.mrb[0].mxu0
      %v540 = vadd.f32 %v427, %v539
      %v541 = vpop.f32.mrb[0].mxu0
      %v542 = vpop.f32.mrb[0].mxu0
      %v543 = vadd.f32 %v430, %v542
      %v544 = vpop.f32.mrb[0].mxu0
      %545 = vmatprep.mubr.bf16.mxu0 0
      %546 = vmatmul.mubr.bf16.gmra.mrb[0].mxu0 %v317
      %v547 = vpop.f32.mrb[0].mxu0
      %v548 = vadd.f32 %v435, %v547
      %v549 = vpop.f32.mrb[0].mxu0
      %v550 = vpop.f32.mrb[0].mxu0
      %v551 = vadd.f32 %v438, %v550
      %v552 = vpop.f32.mrb[0].mxu0
      %553 = vmatprep.mubr.bf16.mxu0 0
      %554 = vmatmul.mubr.bf16.gmra.mrb[0].mxu0 %v318
      %v555 = vpop.f32.mrb[0].mxu0
      %v556 = vadd.f32 %v443, %v555
      %v557 = vpop.f32.mrb[0].mxu0
      %v558 = vpop.f32.mrb[0].mxu0
      %v559 = vadd.f32 %v446, %v558
      %v560 = vpop.f32.mrb[0].mxu0
      %561 = vmatprep.mubr.bf16.mxu0 0
      %562 = vmatmul.mubr.bf16.gmra.mrb[0].mxu0 %v319
      %v563 = vpop.f32.mrb[0].mxu0
      %v564 = vadd.f32 %v451, %v563
      %v565 = vpop.f32.mrb[0].mxu0
      %v566 = vpop.f32.mrb[0].mxu0
      %v567 = vadd.f32 %v454, %v566
      %v568 = vpop.f32.mrb[0].mxu0
      %569 = vdwg.mxu0
      %v570 = vrot.slane %v269, 1
      %v571 = vrot.slane %v270, 1
      %v572 = vrot.slane %v271, 1
      %v573 = vrot.slane %v272, 1
      %v574 = vrot.slane %v273, 1
      %v575 = vrot.slane %v274, 1
      %v576 = vrot.slane %v275, 1
      %v577 = vrot.slane %v276, 1
      %vm578 = vcmp.lt.s32.totalorder %v286, 7
      %v579 = vsel %vm578, %v576, %v577
      %v580 = vsel %vm578, %v575, %v576
      %v581 = vsel %vm578, %v574, %v575
      %v582 = vsel %vm578, %v573, %v574
      %v583 = vsel %vm578, %v572, %v573
      %v584 = vsel %vm578, %v571, %v572
      %v585 = vsel %vm578, %v570, %v571
      %v586 = vsel %vm578, %v577, %v570
      %s587 = sadd.s32 %s296, 2
      %s588 = smul.u32 %s587, 16
      %s589 = smul.addr %s588, 4
      %s590 = scalar_lea.vmem %s1, %s589
      %v591 = vld [vmem:[%s590] sm:$0xf]
      %v592 = vld [vmem:[%s590 + $0x4] sm:$0xf]
      %v593 = vld [vmem:[%s590 + $0x8] sm:$0xf]
      %v594 = vld [vmem:[%s590 + $0xc] sm:$0xf]
      %v595 = vld [vmem:[%s590 + $0x10] sm:$0xf]
      %v596 = vld [vmem:[%s590 + $0x14] sm:$0xf]
      %v597 = vld [vmem:[%s590 + $0x18] sm:$0xf]
      %v598 = vld [vmem:[%s590 + $0x1c] sm:$0xf]
      %v599 = vld [vmem:[%s590 + $0x20] sm:$0xf]
      %v600 = vld [vmem:[%s590 + $0x24] sm:$0xf]
      %v601 = vld [vmem:[%s590 + $0x28] sm:$0xf]
      %v602 = vld [vmem:[%s590 + $0x2c] sm:$0xf]
      %v603 = vld [vmem:[%s590 + $0x30] sm:$0xf]
      %v604 = vld [vmem:[%s590 + $0x34] sm:$0xf]
      %v605 = vld [vmem:[%s590 + $0x38] sm:$0xf]
      %v606 = vld [vmem:[%s590 + $0x3c] sm:$0xf]
      %v607 = vpack.c.bf16 %v585, %v586
      %v608 = vpack.c.bf16 %v583, %v584
      %v609 = vpack.c.bf16 %v581, %v582
      %v610 = vpack.c.bf16 %v579, %v580
      %v627 = vunpack.c.l.b16 %v591
      %v628 = vunpack.c.l.b16 %v592
      %v629 = vunpack.c.l.b16 %v593
      %v630 = vunpack.c.l.b16 %v594
      %v631 = vunpack.c.l.b16 %v595
      %v632 = vunpack.c.l.b16 %v596
      %v633 = vunpack.c.l.b16 %v597
      %v634 = vunpack.c.l.b16 %v598
      %v635 = vunpack.c.l.b16 %v599
      %v636 = vunpack.c.l.b16 %v600
      %v637 = vunpack.c.l.b16 %v601
      %v638 = vunpack.c.l.b16 %v602
      %v639 = vunpack.c.l.b16 %v603
      %v640 = vunpack.c.l.b16 %v604
      %v641 = vunpack.c.l.b16 %v605
      %v642 = vunpack.c.l.b16 %v606
      %v643 = vpack.c.b16 %v628, %v627
      %v644 = vpack.c.b16 %v630, %v629
      %v645 = vpack.c.b16 %v632, %v631
      %v646 = vpack.c.b16 %v634, %v633
      %v647 = vpack.c.b16 %v636, %v635
      %v648 = vpack.c.b16 %v638, %v637
      %v649 = vpack.c.b16 %v640, %v639
      %v650 = vpack.c.b16 %v642, %v641
      %659 = vmatprep.subr.bf16.mxu0 0
      %660 = vmatpush1.bf16.msra.mxu0 %v643
      %661 = vmatprep.subr.bf16.mxu0 0
      %662 = vmatpush1.bf16.msra.mxu0 %v644
      %663 = vmatprep.subr.bf16.mxu0 0
      %664 = vmatpush1.bf16.msra.mxu0 %v645
      %665 = vmatprep.subr.bf16.mxu0 0
      %666 = vmatpush1.bf16.msra.mxu0 %v646
      %667 = vmatprep.subr.bf16.mxu0 0
      %668 = vmatpush1.bf16.msra.mxu0 %v647
      %669 = vmatprep.subr.bf16.mxu0 0
      %670 = vmatpush1.bf16.msra.mxu0 %v648
      %671 = vmatprep.subr.bf16.mxu0 0
      %672 = vmatpush1.bf16.msra.mxu0 %v649
      %673 = vmatprep.subr.bf16.mxu0 0
      %674 = vmatpush1.bf16.msra.mxu0 %v650
      %675 = vmatprep.subr.bf16.mxu0 0
      %676 = vmatpush1.bf16.msra.mxu0 0
      %677 = vmatprep.subr.bf16.mxu0 0
      %678 = vmatpush1.bf16.msra.mxu0 0
      %679 = vmatprep.subr.bf16.mxu0 0
      %680 = vmatpush1.bf16.msra.mxu0 0
      %681 = vmatprep.subr.bf16.mxu0 0
      %682 = vmatpush1.bf16.msra.mxu0 0
      %683 = vmatprep.subr.bf16.mxu0 0
      %684 = vmatpush1.bf16.msra.mxu0 0
      %685 = vmatprep.subr.bf16.mxu0 0
      %686 = vmatpush1.bf16.msra.mxu0 0
      %687 = vmatprep.subr.bf16.mxu0 0
      %688 = vmatpush1.bf16.msra.mxu0 0
      %689 = vmatprep.subr.bf16.mxu0 0
      %690 = vmatpush1.bf16.msra.mxu0 0
      %691 = vmatprep.mubr.bf16.mxu0 0
      %692 = vmatmul.mubr.bf16.gmra.mrb[0].mxu0 %v607
      %v693 = vpop.f32.mrb[0].mxu0
      %v694 = vadd.f32 0.0, %v693
      %v695 = vpop.f32.mrb[0].mxu0
      %v696 = vpop.f32.mrb[0].mxu0
      %v697 = vadd.f32 0.0, %v696
      %v698 = vpop.f32.mrb[0].mxu0
      %699 = vmatprep.mubr.bf16.mxu0 0
      %700 = vmatmul.mubr.bf16.gmra.mrb[0].mxu0 %v608
      %v701 = vpop.f32.mrb[0].mxu0
      %v702 = vadd.f32 0.0, %v701
      %v703 = vpop.f32.mrb[0].mxu0
      %v704 = vpop.f32.mrb[0].mxu0
      %v705 = vadd.f32 0.0, %v704
      %v706 = vpop.f32.mrb[0].mxu0
      %707 = vmatprep.mubr.bf16.mxu0 0
      %708 = vmatmul.mubr.bf16.gmra.mrb[0].mxu0 %v609
      %v709 = vpop.f32.mrb[0].mxu0
      %v710 = vadd.f32 0.0, %v709
      %v711 = vpop.f32.mrb[0].mxu0
      %v712 = vpop.f32.mrb[0].mxu0
      %v713 = vadd.f32 0.0, %v712
      %v714 = vpop.f32.mrb[0].mxu0
      %715 = vmatprep.mubr.bf16.mxu0 0
      %716 = vmatmul.mubr.bf16.gmra.mrb[0].mxu0 %v610
      %v717 = vpop.f32.mrb[0].mxu0
      %v718 = vadd.f32 0.0, %v717
      %v719 = vpop.f32.mrb[0].mxu0
      %v720 = vpop.f32.mrb[0].mxu0
      %v721 = vadd.f32 0.0, %v720
      %v722 = vpop.f32.mrb[0].mxu0
      %723 = vdwg.mxu0
      %v724 = vadd.f32 %v540, %v694
      %v725 = vadd.f32 %v543, %v697
      %v726 = vadd.f32 %v548, %v702
      %v727 = vadd.f32 %v551, %v705
      %v728 = vadd.f32 %v556, %v710
      %v729 = vadd.f32 %v559, %v713
      %v730 = vadd.f32 %v564, %v718
      %v731 = vadd.f32 %v567, %v721
      %s732 = sadd.s32 %s296, 3
      %s733 = smul.u32 %s732, 16
      %s734 = smul.addr %s733, 4
      %s735 = scalar_lea.vmem %s1, %s734
      %v736 = vld [vmem:[%s735] sm:$0xf]
      %v737 = vld [vmem:[%s735 + $0x4] sm:$0xf]
      %v738 = vld [vmem:[%s735 + $0x8] sm:$0xf]
      %v739 = vld [vmem:[%s735 + $0xc] sm:$0xf]
      %v740 = vld [vmem:[%s735 + $0x10] sm:$0xf]
      %v741 = vld [vmem:[%s735 + $0x14] sm:$0xf]
      %v742 = vld [vmem:[%s735 + $0x18] sm:$0xf]
      %v743 = vld [vmem:[%s735 + $0x1c] sm:$0xf]
      %v744 = vld [vmem:[%s735 + $0x20] sm:$0xf]
      %v745 = vld [vmem:[%s735 + $0x24] sm:$0xf]
      %v746 = vld [vmem:[%s735 + $0x28] sm:$0xf]
      %v747 = vld [vmem:[%s735 + $0x2c] sm:$0xf]
      %v748 = vld [vmem:[%s735 + $0x30] sm:$0xf]
      %v749 = vld [vmem:[%s735 + $0x34] sm:$0xf]
      %v750 = vld [vmem:[%s735 + $0x38] sm:$0xf]
      %v751 = vld [vmem:[%s735 + $0x3c] sm:$0xf]
      %v752 = vpack.c.bf16 %v294, %v295
      %v753 = vpack.c.bf16 %v292, %v293
      %v754 = vpack.c.bf16 %v290, %v291
      %v755 = vpack.c.bf16 %v288, %v289
      %v772 = vunpack.c.l.b16 %v736
      %v773 = vunpack.c.l.b16 %v737
      %v774 = vunpack.c.l.b16 %v738
      %v775 = vunpack.c.l.b16 %v739
      %v776 = vunpack.c.l.b16 %v740
      %v777 = vunpack.c.l.b16 %v741
      %v778 = vunpack.c.l.b16 %v742
      %v779 = vunpack.c.l.b16 %v743
      %v780 = vunpack.c.l.b16 %v744
      %v781 = vunpack.c.l.b16 %v745
      %v782 = vunpack.c.l.b16 %v746
      %v783 = vunpack.c.l.b16 %v747
      %v784 = vunpack.c.l.b16 %v748
      %v785 = vunpack.c.l.b16 %v749
      %v786 = vunpack.c.l.b16 %v750
      %v787 = vunpack.c.l.b16 %v751
      %v788 = vpack.c.b16 %v773, %v772
      %v789 = vpack.c.b16 %v775, %v774
      %v790 = vpack.c.b16 %v777, %v776
      %v791 = vpack.c.b16 %v779, %v778
      %v792 = vpack.c.b16 %v781, %v780
      %v793 = vpack.c.b16 %v783, %v782
      %v794 = vpack.c.b16 %v785, %v784
      %v795 = vpack.c.b16 %v787, %v786
      %804 = vmatprep.subr.bf16.mxu0 0
      %805 = vmatpush1.bf16.msra.mxu0 %v788
      %806 = vmatprep.subr.bf16.mxu0 0
      %807 = vmatpush1.bf16.msra.mxu0 %v789
      %808 = vmatprep.subr.bf16.mxu0 0
      %809 = vmatpush1.bf16.msra.mxu0 %v790
      %810 = vmatprep.subr.bf16.mxu0 0
      %811 = vmatpush1.bf16.msra.mxu0 %v791
      %812 = vmatprep.subr.bf16.mxu0 0
      %813 = vmatpush1.bf16.msra.mxu0 %v792
      %814 = vmatprep.subr.bf16.mxu0 0
      %815 = vmatpush1.bf16.msra.mxu0 %v793
      %816 = vmatprep.subr.bf16.mxu0 0
      %817 = vmatpush1.bf16.msra.mxu0 %v794
      %818 = vmatprep.subr.bf16.mxu0 0
      %819 = vmatpush1.bf16.msra.mxu0 %v795
      %820 = vmatprep.subr.bf16.mxu0 0
      %821 = vmatpush1.bf16.msra.mxu0 0
      %822 = vmatprep.subr.bf16.mxu0 0
      %823 = vmatpush1.bf16.msra.mxu0 0
      %824 = vmatprep.subr.bf16.mxu0 0
      %825 = vmatpush1.bf16.msra.mxu0 0
      %826 = vmatprep.subr.bf16.mxu0 0
      %827 = vmatpush1.bf16.msra.mxu0 0
      %828 = vmatprep.subr.bf16.mxu0 0
      %829 = vmatpush1.bf16.msra.mxu0 0
      %830 = vmatprep.subr.bf16.mxu0 0
      %831 = vmatpush1.bf16.msra.mxu0 0
      %832 = vmatprep.subr.bf16.mxu0 0
      %833 = vmatpush1.bf16.msra.mxu0 0
      %834 = vmatprep.subr.bf16.mxu0 0
      %835 = vmatpush1.bf16.msra.mxu0 0
      %836 = vmatprep.mubr.bf16.mxu0 0
      %837 = vmatmul.mubr.bf16.gmra.mrb[0].mxu0 %v752
      %v838 = vpop.f32.mrb[0].mxu0
      %v839 = vadd.f32 0.0, %v838
      %v840 = vpop.f32.mrb[0].mxu0
      %v841 = vpop.f32.mrb[0].mxu0
      %v842 = vadd.f32 0.0, %v841
      %v843 = vpop.f32.mrb[0].mxu0
      %844 = vmatprep.mubr.bf16.mxu0 0
      %845 = vmatmul.mubr.bf16.gmra.mrb[0].mxu0 %v753
      %v846 = vpop.f32.mrb[0].mxu0
      %v847 = vadd.f32 0.0, %v846
      %v848 = vpop.f32.mrb[0].mxu0
      %v849 = vpop.f32.mrb[0].mxu0
      %v850 = vadd.f32 0.0, %v849
      %v851 = vpop.f32.mrb[0].mxu0
      %852 = vmatprep.mubr.bf16.mxu0 0
      %853 = vmatmul.mubr.bf16.gmra.mrb[0].mxu0 %v754
      %v854 = vpop.f32.mrb[0].mxu0
      %v855 = vadd.f32 0.0, %v854
      %v856 = vpop.f32.mrb[0].mxu0
      %v857 = vpop.f32.mrb[0].mxu0
      %v858 = vadd.f32 0.0, %v857
      %v859 = vpop.f32.mrb[0].mxu0
      %860 = vmatprep.mubr.bf16.mxu0 0
      %861 = vmatmul.mubr.bf16.gmra.mrb[0].mxu0 %v755
      %v862 = vpop.f32.mrb[0].mxu0
      %v863 = vadd.f32 0.0, %v862
      %v864 = vpop.f32.mrb[0].mxu0
      %v865 = vpop.f32.mrb[0].mxu0
      %v866 = vadd.f32 0.0, %v865
      %v867 = vpop.f32.mrb[0].mxu0
      %868 = vdwg.mxu0
      %v869 = vadd.f32 %v724, %v839
      %v870 = vadd.f32 %v725, %v842
      %v871 = vadd.f32 %v726, %v847
      %v872 = vadd.f32 %v727, %v850
      %v873 = vadd.f32 %v728, %v855
      %v874 = vadd.f32 %v729, %v858
      %v875 = vadd.f32 %v730, %v863
      %v876 = vadd.f32 %v731, %v866
      %s877 = sadd.s32 %s296, 4
      %s878 = smul.u32 %s877, 16
      %s879 = smul.addr %s878, 4
      %s880 = scalar_lea.vmem %s1, %s879
      %v881 = vld [vmem:[%s880] sm:$0xf]
      %v882 = vld [vmem:[%s880 + $0x4] sm:$0xf]
      %v883 = vld [vmem:[%s880 + $0x8] sm:$0xf]
      %v884 = vld [vmem:[%s880 + $0xc] sm:$0xf]
      %v885 = vld [vmem:[%s880 + $0x10] sm:$0xf]
      %v886 = vld [vmem:[%s880 + $0x14] sm:$0xf]
      %v887 = vld [vmem:[%s880 + $0x18] sm:$0xf]
      %v888 = vld [vmem:[%s880 + $0x1c] sm:$0xf]
      %v889 = vld [vmem:[%s880 + $0x20] sm:$0xf]
      %v890 = vld [vmem:[%s880 + $0x24] sm:$0xf]
      %v891 = vld [vmem:[%s880 + $0x28] sm:$0xf]
      %v892 = vld [vmem:[%s880 + $0x2c] sm:$0xf]
      %v893 = vld [vmem:[%s880 + $0x30] sm:$0xf]
      %v894 = vld [vmem:[%s880 + $0x34] sm:$0xf]
      %v895 = vld [vmem:[%s880 + $0x38] sm:$0xf]
      %v896 = vld [vmem:[%s880 + $0x3c] sm:$0xf]
      %v905 = vunpack.c.l.b16 %v261
      %v906 = vunpack.c.l.b16 %v262
      %v907 = vunpack.c.l.b16 %v263
      %v908 = vunpack.c.l.b16 %v264
      %v909 = vunpack.c.l.b16 %v265
      %v910 = vunpack.c.l.b16 %v266
      %v911 = vunpack.c.l.b16 %v267
      %v912 = vunpack.c.l.b16 %v268
      %v913 = vpack.c.b16 %v906, %v905
      %v914 = vpack.c.b16 %v908, %v907
      %v915 = vpack.c.b16 %v910, %v909
      %v916 = vpack.c.b16 %v912, %v911
      %v937 = vunpack.c.l.b16 %v881
      %v938 = vunpack.c.l.b16 %v882
      %v939 = vunpack.c.l.b16 %v883
      %v940 = vunpack.c.l.b16 %v884
      %v941 = vunpack.c.l.b16 %v885
      %v942 = vunpack.c.l.b16 %v886
      %v943 = vunpack.c.l.b16 %v887
      %v944 = vunpack.c.l.b16 %v888
      %v945 = vunpack.c.l.b16 %v889
      %v946 = vunpack.c.l.b16 %v890
      %v947 = vunpack.c.l.b16 %v891
      %v948 = vunpack.c.l.b16 %v892
      %v949 = vunpack.c.l.b16 %v893
      %v950 = vunpack.c.l.b16 %v894
      %v951 = vunpack.c.l.b16 %v895
      %v952 = vunpack.c.l.b16 %v896
      %v953 = vpack.c.b16 %v938, %v937
      %v954 = vpack.c.b16 %v940, %v939
      %v955 = vpack.c.b16 %v942, %v941
      %v956 = vpack.c.b16 %v944, %v943
      %v957 = vpack.c.b16 %v946, %v945
      %v958 = vpack.c.b16 %v948, %v947
      %v959 = vpack.c.b16 %v950, %v949
      %v960 = vpack.c.b16 %v952, %v951
      %969 = vmatprep.subr.bf16.mxu0 0
      %970 = vmatpush1.bf16.msra.mxu0 %v953
      %971 = vmatprep.subr.bf16.mxu0 0
      %972 = vmatpush1.bf16.msra.mxu0 %v954
      %973 = vmatprep.subr.bf16.mxu0 0
      %974 = vmatpush1.bf16.msra.mxu0 %v955
      %975 = vmatprep.subr.bf16.mxu0 0
      %976 = vmatpush1.bf16.msra.mxu0 %v956
      %977 = vmatprep.subr.bf16.mxu0 0
      %978 = vmatpush1.bf16.msra.mxu0 %v957
      %979 = vmatprep.subr.bf16.mxu0 0
      %980 = vmatpush1.bf16.msra.mxu0 %v958
      %981 = vmatprep.subr.bf16.mxu0 0
      %982 = vmatpush1.bf16.msra.mxu0 %v959
      %983 = vmatprep.subr.bf16.mxu0 0
      %984 = vmatpush1.bf16.msra.mxu0 %v960
      %985 = vmatprep.subr.bf16.mxu0 0
      %986 = vmatpush1.bf16.msra.mxu0 0
      %987 = vmatprep.subr.bf16.mxu0 0
      %988 = vmatpush1.bf16.msra.mxu0 0
      %989 = vmatprep.subr.bf16.mxu0 0
      %990 = vmatpush1.bf16.msra.mxu0 0
      %991 = vmatprep.subr.bf16.mxu0 0
      %992 = vmatpush1.bf16.msra.mxu0 0
      %993 = vmatprep.subr.bf16.mxu0 0
      %994 = vmatpush1.bf16.msra.mxu0 0
      %995 = vmatprep.subr.bf16.mxu0 0
      %996 = vmatpush1.bf16.msra.mxu0 0
      %997 = vmatprep.subr.bf16.mxu0 0
      %998 = vmatpush1.bf16.msra.mxu0 0
      %999 = vmatprep.subr.bf16.mxu0 0
      %1000 = vmatpush1.bf16.msra.mxu0 0
      %1001 = vmatprep.mubr.bf16.mxu0 0
      %1002 = vmatmul.mubr.bf16.gmra.mrb[0].mxu0 %v913
      %v1003 = vpop.f32.mrb[0].mxu0
      %v1004 = vadd.f32 0.0, %v1003
      %v1005 = vpop.f32.mrb[0].mxu0
      %v1006 = vpop.f32.mrb[0].mxu0
      %v1007 = vadd.f32 0.0, %v1006
      %v1008 = vpop.f32.mrb[0].mxu0
      %1009 = vmatprep.mubr.bf16.mxu0 0
      %1010 = vmatmul.mubr.bf16.gmra.mrb[0].mxu0 %v914
      %v1011 = vpop.f32.mrb[0].mxu0
      %v1012 = vadd.f32 0.0, %v1011
      %v1013 = vpop.f32.mrb[0].mxu0
      %v1014 = vpop.f32.mrb[0].mxu0
      %v1015 = vadd.f32 0.0, %v1014
      %v1016 = vpop.f32.mrb[0].mxu0
      %1017 = vmatprep.mubr.bf16.mxu0 0
      %1018 = vmatmul.mubr.bf16.gmra.mrb[0].mxu0 %v915
      %v1019 = vpop.f32.mrb[0].mxu0
      %v1020 = vadd.f32 0.0, %v1019
      %v1021 = vpop.f32.mrb[0].mxu0
      %v1022 = vpop.f32.mrb[0].mxu0
      %v1023 = vadd.f32 0.0, %v1022
      %v1024 = vpop.f32.mrb[0].mxu0
      %1025 = vmatprep.mubr.bf16.mxu0 0
      %1026 = vmatmul.mubr.bf16.gmra.mrb[0].mxu0 %v916
      %v1027 = vpop.f32.mrb[0].mxu0
      %v1028 = vadd.f32 0.0, %v1027
      %v1029 = vpop.f32.mrb[0].mxu0
      %v1030 = vpop.f32.mrb[0].mxu0
      %v1031 = vadd.f32 0.0, %v1030
      %v1032 = vpop.f32.mrb[0].mxu0
      %1033 = vdwg.mxu0
      %v1034 = vadd.f32 %v869, %v1004
      %v1035 = vadd.f32 %v870, %v1007
      %v1036 = vadd.f32 %v871, %v1012
      %v1037 = vadd.f32 %v872, %v1015
      %v1038 = vadd.f32 %v873, %v1020
      %v1039 = vadd.f32 %v874, %v1023
      %v1040 = vadd.f32 %v875, %v1028
      %v1041 = vadd.f32 %v876, %v1031
      %s1042 = sadd.s32 %s296, 5
      %s1043 = smul.u32 %s1042, 16
      %s1044 = smul.addr %s1043, 4
      %s1045 = scalar_lea.vmem %s1, %s1044
      %v1046 = vld [vmem:[%s1045] sm:$0xf]
      %v1047 = vld [vmem:[%s1045 + $0x4] sm:$0xf]
      %v1048 = vld [vmem:[%s1045 + $0x8] sm:$0xf]
      %v1049 = vld [vmem:[%s1045 + $0xc] sm:$0xf]
      %v1050 = vld [vmem:[%s1045 + $0x10] sm:$0xf]
      %v1051 = vld [vmem:[%s1045 + $0x14] sm:$0xf]
      %v1052 = vld [vmem:[%s1045 + $0x18] sm:$0xf]
      %v1053 = vld [vmem:[%s1045 + $0x1c] sm:$0xf]
      %v1054 = vld [vmem:[%s1045 + $0x20] sm:$0xf]
      %v1055 = vld [vmem:[%s1045 + $0x24] sm:$0xf]
      %v1056 = vld [vmem:[%s1045 + $0x28] sm:$0xf]
      %v1057 = vld [vmem:[%s1045 + $0x2c] sm:$0xf]
      %v1058 = vld [vmem:[%s1045 + $0x30] sm:$0xf]
      %v1059 = vld [vmem:[%s1045 + $0x34] sm:$0xf]
      %v1060 = vld [vmem:[%s1045 + $0x38] sm:$0xf]
      %v1061 = vld [vmem:[%s1045 + $0x3c] sm:$0xf]
      %v1062 = vpack.c.bf16 %v584, %v585
      %v1063 = vpack.c.bf16 %v582, %v583
      %v1064 = vpack.c.bf16 %v580, %v581
      %v1065 = vpack.c.bf16 %v586, %v579
      %v1082 = vunpack.c.l.b16 %v1046
      %v1083 = vunpack.c.l.b16 %v1047
      %v1084 = vunpack.c.l.b16 %v1048
      %v1085 = vunpack.c.l.b16 %v1049
      %v1086 = vunpack.c.l.b16 %v1050
      %v1087 = vunpack.c.l.b16 %v1051
      %v1088 = vunpack.c.l.b16 %v1052
      %v1089 = vunpack.c.l.b16 %v1053
      %v1090 = vunpack.c.l.b16 %v1054
      %v1091 = vunpack.c.l.b16 %v1055
      %v1092 = vunpack.c.l.b16 %v1056
      %v1093 = vunpack.c.l.b16 %v1057
      %v1094 = vunpack.c.l.b16 %v1058
      %v1095 = vunpack.c.l.b16 %v1059
      %v1096 = vunpack.c.l.b16 %v1060
      %v1097 = vunpack.c.l.b16 %v1061
      %v1098 = vpack.c.b16 %v1083, %v1082
      %v1099 = vpack.c.b16 %v1085, %v1084
      %v1100 = vpack.c.b16 %v1087, %v1086
      %v1101 = vpack.c.b16 %v1089, %v1088
      %v1102 = vpack.c.b16 %v1091, %v1090
      %v1103 = vpack.c.b16 %v1093, %v1092
      %v1104 = vpack.c.b16 %v1095, %v1094
      %v1105 = vpack.c.b16 %v1097, %v1096
      %1114 = vmatprep.subr.bf16.mxu0 0
      %1115 = vmatpush1.bf16.msra.mxu0 %v1098
      %1116 = vmatprep.subr.bf16.mxu0 0
      %1117 = vmatpush1.bf16.msra.mxu0 %v1099
      %1118 = vmatprep.subr.bf16.mxu0 0
      %1119 = vmatpush1.bf16.msra.mxu0 %v1100
      %1120 = vmatprep.subr.bf16.mxu0 0
      %1121 = vmatpush1.bf16.msra.mxu0 %v1101
      %1122 = vmatprep.subr.bf16.mxu0 0
      %1123 = vmatpush1.bf16.msra.mxu0 %v1102
      %1124 = vmatprep.subr.bf16.mxu0 0
      %1125 = vmatpush1.bf16.msra.mxu0 %v1103
      %1126 = vmatprep.subr.bf16.mxu0 0
      %1127 = vmatpush1.bf16.msra.mxu0 %v1104
      %1128 = vmatprep.subr.bf16.mxu0 0
      %1129 = vmatpush1.bf16.msra.mxu0 %v1105
      %1130 = vmatprep.subr.bf16.mxu0 0
      %1131 = vmatpush1.bf16.msra.mxu0 0
      %1132 = vmatprep.subr.bf16.mxu0 0
      %1133 = vmatpush1.bf16.msra.mxu0 0
      %1134 = vmatprep.subr.bf16.mxu0 0
      %1135 = vmatpush1.bf16.msra.mxu0 0
      %1136 = vmatprep.subr.bf16.mxu0 0
      %1137 = vmatpush1.bf16.msra.mxu0 0
      %1138 = vmatprep.subr.bf16.mxu0 0
      %1139 = vmatpush1.bf16.msra.mxu0 0
      %1140 = vmatprep.subr.bf16.mxu0 0
      %1141 = vmatpush1.bf16.msra.mxu0 0
      %1142 = vmatprep.subr.bf16.mxu0 0
      %1143 = vmatpush1.bf16.msra.mxu0 0
      %1144 = vmatprep.subr.bf16.mxu0 0
      %1145 = vmatpush1.bf16.msra.mxu0 0
      %1146 = vmatprep.mubr.bf16.mxu0 0
      %1147 = vmatmul.mubr.bf16.gmra.mrb[0].mxu0 %v1062
      %v1148 = vpop.f32.mrb[0].mxu0
      %v1149 = vadd.f32 0.0, %v1148
      %v1150 = vpop.f32.mrb[0].mxu0
      %v1151 = vpop.f32.mrb[0].mxu0
      %v1152 = vadd.f32 0.0, %v1151
      %v1153 = vpop.f32.mrb[0].mxu0
      %1154 = vmatprep.mubr.bf16.mxu0 0
      %1155 = vmatmul.mubr.bf16.gmra.mrb[0].mxu0 %v1063
      %v1156 = vpop.f32.mrb[0].mxu0
      %v1157 = vadd.f32 0.0, %v1156
      %v1158 = vpop.f32.mrb[0].mxu0
      %v1159 = vpop.f32.mrb[0].mxu0
      %v1160 = vadd.f32 0.0, %v1159
      %v1161 = vpop.f32.mrb[0].mxu0
      %1162 = vmatprep.mubr.bf16.mxu0 0
      %1163 = vmatmul.mubr.bf16.gmra.mrb[0].mxu0 %v1064
      %v1164 = vpop.f32.mrb[0].mxu0
      %v1165 = vadd.f32 0.0, %v1164
      %v1166 = vpop.f32.mrb[0].mxu0
      %v1167 = vpop.f32.mrb[0].mxu0
      %v1168 = vadd.f32 0.0, %v1167
      %v1169 = vpop.f32.mrb[0].mxu0
      %1170 = vmatprep.mubr.bf16.mxu0 0
      %1171 = vmatmul.mubr.bf16.gmra.mrb[0].mxu0 %v1065
      %v1172 = vpop.f32.mrb[0].mxu0
      %v1173 = vadd.f32 0.0, %v1172
      %v1174 = vpop.f32.mrb[0].mxu0
      %v1175 = vpop.f32.mrb[0].mxu0
      %v1176 = vadd.f32 0.0, %v1175
      %v1177 = vpop.f32.mrb[0].mxu0
      %1178 = vdwg.mxu0
      %v1179 = vadd.f32 %v1034, %v1149
      %v1180 = vadd.f32 %v1035, %v1152
      %v1181 = vadd.f32 %v1036, %v1157
      %v1182 = vadd.f32 %v1037, %v1160
      %v1183 = vadd.f32 %v1038, %v1165
      %v1184 = vadd.f32 %v1039, %v1168
      %v1185 = vadd.f32 %v1040, %v1173
      %v1186 = vadd.f32 %v1041, %v1176
      %s1187 = sadd.s32 %s296, 6
      %s1188 = smul.u32 %s1187, 16
      %s1189 = smul.addr %s1188, 4
      %s1190 = scalar_lea.vmem %s1, %s1189
      %v1191 = vld [vmem:[%s1190] sm:$0xf]
      %v1192 = vld [vmem:[%s1190 + $0x4] sm:$0xf]
      %v1193 = vld [vmem:[%s1190 + $0x8] sm:$0xf]
      %v1194 = vld [vmem:[%s1190 + $0xc] sm:$0xf]
      %v1195 = vld [vmem:[%s1190 + $0x10] sm:$0xf]
      %v1196 = vld [vmem:[%s1190 + $0x14] sm:$0xf]
      %v1197 = vld [vmem:[%s1190 + $0x18] sm:$0xf]
      %v1198 = vld [vmem:[%s1190 + $0x1c] sm:$0xf]
      %v1199 = vld [vmem:[%s1190 + $0x20] sm:$0xf]
      %v1200 = vld [vmem:[%s1190 + $0x24] sm:$0xf]
      %v1201 = vld [vmem:[%s1190 + $0x28] sm:$0xf]
      %v1202 = vld [vmem:[%s1190 + $0x2c] sm:$0xf]
      %v1203 = vld [vmem:[%s1190 + $0x30] sm:$0xf]
      %v1204 = vld [vmem:[%s1190 + $0x34] sm:$0xf]
      %v1205 = vld [vmem:[%s1190 + $0x38] sm:$0xf]
      %v1206 = vld [vmem:[%s1190 + $0x3c] sm:$0xf]
      %v1223 = vunpack.c.l.b16 %v1191
      %v1224 = vunpack.c.l.b16 %v1192
      %v1225 = vunpack.c.l.b16 %v1193
      %v1226 = vunpack.c.l.b16 %v1194
      %v1227 = vunpack.c.l.b16 %v1195
      %v1228 = vunpack.c.l.b16 %v1196
      %v1229 = vunpack.c.l.b16 %v1197
      %v1230 = vunpack.c.l.b16 %v1198
      %v1231 = vunpack.c.l.b16 %v1199
      %v1232 = vunpack.c.l.b16 %v1200
      %v1233 = vunpack.c.l.b16 %v1201
      %v1234 = vunpack.c.l.b16 %v1202
      %v1235 = vunpack.c.l.b16 %v1203
      %v1236 = vunpack.c.l.b16 %v1204
      %v1237 = vunpack.c.l.b16 %v1205
      %v1238 = vunpack.c.l.b16 %v1206
      %v1239 = vpack.c.b16 %v1224, %v1223
      %v1240 = vpack.c.b16 %v1226, %v1225
      %v1241 = vpack.c.b16 %v1228, %v1227
      %v1242 = vpack.c.b16 %v1230, %v1229
      %v1243 = vpack.c.b16 %v1232, %v1231
      %v1244 = vpack.c.b16 %v1234, %v1233
      %v1245 = vpack.c.b16 %v1236, %v1235
      %v1246 = vpack.c.b16 %v1238, %v1237
      %1255 = vmatprep.subr.bf16.mxu0 0
      %1256 = vmatpush1.bf16.msra.mxu0 %v1239
      %1257 = vmatprep.subr.bf16.mxu0 0
      %1258 = vmatpush1.bf16.msra.mxu0 %v1240
      %1259 = vmatprep.subr.bf16.mxu0 0
      %1260 = vmatpush1.bf16.msra.mxu0 %v1241
      %1261 = vmatprep.subr.bf16.mxu0 0
      %1262 = vmatpush1.bf16.msra.mxu0 %v1242
      %1263 = vmatprep.subr.bf16.mxu0 0
      %1264 = vmatpush1.bf16.msra.mxu0 %v1243
      %1265 = vmatprep.subr.bf16.mxu0 0
      %1266 = vmatpush1.bf16.msra.mxu0 %v1244
      %1267 = vmatprep.subr.bf16.mxu0 0
      %1268 = vmatpush1.bf16.msra.mxu0 %v1245
      %1269 = vmatprep.subr.bf16.mxu0 0
      %1270 = vmatpush1.bf16.msra.mxu0 %v1246
      %1271 = vmatprep.subr.bf16.mxu0 0
      %1272 = vmatpush1.bf16.msra.mxu0 0
      %1273 = vmatprep.subr.bf16.mxu0 0
      %1274 = vmatpush1.bf16.msra.mxu0 0
      %1275 = vmatprep.subr.bf16.mxu0 0
      %1276 = vmatpush1.bf16.msra.mxu0 0
      %1277 = vmatprep.subr.bf16.mxu0 0
      %1278 = vmatpush1.bf16.msra.mxu0 0
      %1279 = vmatprep.subr.bf16.mxu0 0
      %1280 = vmatpush1.bf16.msra.mxu0 0
      %1281 = vmatprep.subr.bf16.mxu0 0
      %1282 = vmatpush1.bf16.msra.mxu0 0
      %1283 = vmatprep.subr.bf16.mxu0 0
      %1284 = vmatpush1.bf16.msra.mxu0 0
      %1285 = vmatprep.subr.bf16.mxu0 0
      %1286 = vmatpush1.bf16.msra.mxu0 0
      %1287 = vmatprep.mubr.bf16.mxu0 0
      %1288 = vmatmul.mubr.bf16.gmra.mrb[0].mxu0 %v317
      %v1289 = vpop.f32.mrb[0].mxu0
      %v1290 = vadd.f32 0.0, %v1289
      %v1291 = vpop.f32.mrb[0].mxu0
      %v1292 = vpop.f32.mrb[0].mxu0
      %v1293 = vadd.f32 0.0, %v1292
      %v1294 = vpop.f32.mrb[0].mxu0
      %1295 = vmatprep.mubr.bf16.mxu0 0
      %1296 = vmatmul.mubr.bf16.gmra.mrb[0].mxu0 %v318
      %v1297 = vpop.f32.mrb[0].mxu0
      %v1298 = vadd.f32 0.0, %v1297
      %v1299 = vpop.f32.mrb[0].mxu0
      %v1300 = vpop.f32.mrb[0].mxu0
      %v1301 = vadd.f32 0.0, %v1300
      %v1302 = vpop.f32.mrb[0].mxu0
      %1303 = vmatprep.mubr.bf16.mxu0 0
      %1304 = vmatmul.mubr.bf16.gmra.mrb[0].mxu0 %v319
      %v1305 = vpop.f32.mrb[0].mxu0
      %v1306 = vadd.f32 0.0, %v1305
      %v1307 = vpop.f32.mrb[0].mxu0
      %v1308 = vpop.f32.mrb[0].mxu0
      %v1309 = vadd.f32 0.0, %v1308
      %v1310 = vpop.f32.mrb[0].mxu0
      %1311 = vmatprep.mubr.bf16.mxu0 0
      %1312 = vmatmul.mubr.bf16.gmra.mrb[0].mxu0 %v316
      %v1313 = vpop.f32.mrb[0].mxu0
      %v1314 = vadd.f32 0.0, %v1313
      %v1315 = vpop.f32.mrb[0].mxu0
      %v1316 = vpop.f32.mrb[0].mxu0
      %v1317 = vadd.f32 0.0, %v1316
      %v1318 = vpop.f32.mrb[0].mxu0
      %1319 = vdwg.mxu0
      %v1320 = vadd.f32 %v1179, %v1290
      %v1321 = vadd.f32 %v1180, %v1293
      %v1322 = vadd.f32 %v1181, %v1298
      %v1323 = vadd.f32 %v1182, %v1301
      %v1324 = vadd.f32 %v1183, %v1306
      %v1325 = vadd.f32 %v1184, %v1309
      %v1326 = vadd.f32 %v1185, %v1314
      %v1327 = vadd.f32 %v1186, %v1317
      %s1328 = sadd.s32 %s296, 7
      %s1329 = smul.u32 %s1328, 16
      %s1330 = smul.addr %s1329, 4
      %s1331 = scalar_lea.vmem %s1, %s1330
      %v1332 = vld [vmem:[%s1331] sm:$0xf]
      %v1333 = vld [vmem:[%s1331 + $0x4] sm:$0xf]
      %v1334 = vld [vmem:[%s1331 + $0x8] sm:$0xf]
      %v1335 = vld [vmem:[%s1331 + $0xc] sm:$0xf]
      %v1336 = vld [vmem:[%s1331 + $0x10] sm:$0xf]
      %v1337 = vld [vmem:[%s1331 + $0x14] sm:$0xf]
      %v1338 = vld [vmem:[%s1331 + $0x18] sm:$0xf]
      %v1339 = vld [vmem:[%s1331 + $0x1c] sm:$0xf]
      %v1340 = vld [vmem:[%s1331 + $0x20] sm:$0xf]
      %v1341 = vld [vmem:[%s1331 + $0x24] sm:$0xf]
      %v1342 = vld [vmem:[%s1331 + $0x28] sm:$0xf]
      %v1343 = vld [vmem:[%s1331 + $0x2c] sm:$0xf]
      %v1344 = vld [vmem:[%s1331 + $0x30] sm:$0xf]
      %v1345 = vld [vmem:[%s1331 + $0x34] sm:$0xf]
      %v1346 = vld [vmem:[%s1331 + $0x38] sm:$0xf]
      %v1347 = vld [vmem:[%s1331 + $0x3c] sm:$0xf]
      %v1364 = vunpack.c.l.b16 %v1332
      %v1365 = vunpack.c.l.b16 %v1333
      %v1366 = vunpack.c.l.b16 %v1334
      %v1367 = vunpack.c.l.b16 %v1335
      %v1368 = vunpack.c.l.b16 %v1336
      %v1369 = vunpack.c.l.b16 %v1337
      %v1370 = vunpack.c.l.b16 %v1338
      %v1371 = vunpack.c.l.b16 %v1339
      %v1372 = vunpack.c.l.b16 %v1340
      %v1373 = vunpack.c.l.b16 %v1341
      %v1374 = vunpack.c.l.b16 %v1342
      %v1375 = vunpack.c.l.b16 %v1343
      %v1376 = vunpack.c.l.b16 %v1344
      %v1377 = vunpack.c.l.b16 %v1345
      %v1378 = vunpack.c.l.b16 %v1346
      %v1379 = vunpack.c.l.b16 %v1347
      %v1380 = vpack.c.b16 %v1365, %v1364
      %v1381 = vpack.c.b16 %v1367, %v1366
      %v1382 = vpack.c.b16 %v1369, %v1368
      %v1383 = vpack.c.b16 %v1371, %v1370
      %v1384 = vpack.c.b16 %v1373, %v1372
      %v1385 = vpack.c.b16 %v1375, %v1374
      %v1386 = vpack.c.b16 %v1377, %v1376
      %v1387 = vpack.c.b16 %v1379, %v1378
      %1396 = vmatprep.subr.bf16.mxu0 0
      %1397 = vmatpush1.bf16.msra.mxu0 %v1380
      %1398 = vmatprep.subr.bf16.mxu0 0
      %1399 = vmatpush1.bf16.msra.mxu0 %v1381
      %1400 = vmatprep.subr.bf16.mxu0 0
      %1401 = vmatpush1.bf16.msra.mxu0 %v1382
      %1402 = vmatprep.subr.bf16.mxu0 0
      %1403 = vmatpush1.bf16.msra.mxu0 %v1383
      %1404 = vmatprep.subr.bf16.mxu0 0
      %1405 = vmatpush1.bf16.msra.mxu0 %v1384
      %1406 = vmatprep.subr.bf16.mxu0 0
      %1407 = vmatpush1.bf16.msra.mxu0 %v1385
      %1408 = vmatprep.subr.bf16.mxu0 0
      %1409 = vmatpush1.bf16.msra.mxu0 %v1386
      %1410 = vmatprep.subr.bf16.mxu0 0
      %1411 = vmatpush1.bf16.msra.mxu0 %v1387
      %1412 = vmatprep.subr.bf16.mxu0 0
      %1413 = vmatpush1.bf16.msra.mxu0 0
      %1414 = vmatprep.subr.bf16.mxu0 0
      %1415 = vmatpush1.bf16.msra.mxu0 0
      %1416 = vmatprep.subr.bf16.mxu0 0
      %1417 = vmatpush1.bf16.msra.mxu0 0
      %1418 = vmatprep.subr.bf16.mxu0 0
      %1419 = vmatpush1.bf16.msra.mxu0 0
      %1420 = vmatprep.subr.bf16.mxu0 0
      %1421 = vmatpush1.bf16.msra.mxu0 0
      %1422 = vmatprep.subr.bf16.mxu0 0
      %1423 = vmatpush1.bf16.msra.mxu0 0
      %1424 = vmatprep.subr.bf16.mxu0 0
      %1425 = vmatpush1.bf16.msra.mxu0 0
      %1426 = vmatprep.subr.bf16.mxu0 0
      %1427 = vmatpush1.bf16.msra.mxu0 0
      %1428 = vmatprep.mubr.bf16.mxu0 0
      %1429 = vmatmul.mubr.bf16.gmra.mrb[0].mxu0 %v341
      %v1430 = vpop.f32.mrb[0].mxu0
      %v1431 = vadd.f32 0.0, %v1430
      %v1432 = vpop.f32.mrb[0].mxu0
      %v1433 = vpop.f32.mrb[0].mxu0
      %v1434 = vadd.f32 0.0, %v1433
      %v1435 = vpop.f32.mrb[0].mxu0
      %1436 = vmatprep.mubr.bf16.mxu0 0
      %1437 = vmatmul.mubr.bf16.gmra.mrb[0].mxu0 %v342
      %v1438 = vpop.f32.mrb[0].mxu0
      %v1439 = vadd.f32 0.0, %v1438
      %v1440 = vpop.f32.mrb[0].mxu0
      %v1441 = vpop.f32.mrb[0].mxu0
      %v1442 = vadd.f32 0.0, %v1441
      %v1443 = vpop.f32.mrb[0].mxu0
      %1444 = vmatprep.mubr.bf16.mxu0 0
      %1445 = vmatmul.mubr.bf16.gmra.mrb[0].mxu0 %v343
      %v1446 = vpop.f32.mrb[0].mxu0
      %v1447 = vadd.f32 0.0, %v1446
      %v1448 = vpop.f32.mrb[0].mxu0
      %v1449 = vpop.f32.mrb[0].mxu0
      %v1450 = vadd.f32 0.0, %v1449
      %v1451 = vpop.f32.mrb[0].mxu0
      %1452 = vmatprep.mubr.bf16.mxu0 0
      %1453 = vmatmul.mubr.bf16.gmra.mrb[0].mxu0 %v340
      %v1454 = vpop.f32.mrb[0].mxu0
      %v1455 = vadd.f32 0.0, %v1454
      %v1456 = vpop.f32.mrb[0].mxu0
      %v1457 = vpop.f32.mrb[0].mxu0
      %v1458 = vadd.f32 0.0, %v1457
      %v1459 = vpop.f32.mrb[0].mxu0
      %1460 = vdwg.mxu0
      %v1461 = vadd.f32 %v1320, %v1431
      %v1462 = vadd.f32 %v1321, %v1434
      %v1463 = vadd.f32 %v1322, %v1439
      %v1464 = vadd.f32 %v1323, %v1442
      %v1465 = vadd.f32 %v1324, %v1447
      %v1466 = vadd.f32 %v1325, %v1450
      %v1467 = vadd.f32 %v1326, %v1455
      %v1468 = vadd.f32 %v1327, %v1458
      %s1469 = sadd.s32 %s296, 8
      %s1470 = smul.u32 %s1469, 16
      %s1471 = smul.addr %s1470, 4
      %s1472 = scalar_lea.vmem %s1, %s1471
      %v1473 = vld [vmem:[%s1472] sm:$0xf]
      %v1474 = vld [vmem:[%s1472 + $0x4] sm:$0xf]
      %v1475 = vld [vmem:[%s1472 + $0x8] sm:$0xf]
      %v1476 = vld [vmem:[%s1472 + $0xc] sm:$0xf]
      %v1477 = vld [vmem:[%s1472 + $0x10] sm:$0xf]
      %v1478 = vld [vmem:[%s1472 + $0x14] sm:$0xf]
      %v1479 = vld [vmem:[%s1472 + $0x18] sm:$0xf]
      %v1480 = vld [vmem:[%s1472 + $0x1c] sm:$0xf]
      %v1481 = vld [vmem:[%s1472 + $0x20] sm:$0xf]
      %v1482 = vld [vmem:[%s1472 + $0x24] sm:$0xf]
      %v1483 = vld [vmem:[%s1472 + $0x28] sm:$0xf]
      %v1484 = vld [vmem:[%s1472 + $0x2c] sm:$0xf]
      %v1485 = vld [vmem:[%s1472 + $0x30] sm:$0xf]
      %v1486 = vld [vmem:[%s1472 + $0x34] sm:$0xf]
      %v1487 = vld [vmem:[%s1472 + $0x38] sm:$0xf]
      %v1488 = vld [vmem:[%s1472 + $0x3c] sm:$0xf]
      %v1505 = vunpack.c.l.b16 %v1473
      %v1506 = vunpack.c.l.b16 %v1474
      %v1507 = vunpack.c.l.b16 %v1475
      %v1508 = vunpack.c.l.b16 %v1476
      %v1509 = vunpack.c.l.b16 %v1477
      %v1510 = vunpack.c.l.b16 %v1478
      %v1511 = vunpack.c.l.b16 %v1479
      %v1512 = vunpack.c.l.b16 %v1480
      %v1513 = vunpack.c.l.b16 %v1481
      %v1514 = vunpack.c.l.b16 %v1482
      %v1515 = vunpack.c.l.b16 %v1483
      %v1516 = vunpack.c.l.b16 %v1484
      %v1517 = vunpack.c.l.b16 %v1485
      %v1518 = vunpack.c.l.b16 %v1486
      %v1519 = vunpack.c.l.b16 %v1487
      %v1520 = vunpack.c.l.b16 %v1488
      %v1521 = vpack.c.b16 %v1506, %v1505
      %v1522 = vpack.c.b16 %v1508, %v1507
      %v1523 = vpack.c.b16 %v1510, %v1509
      %v1524 = vpack.c.b16 %v1512, %v1511
      %v1525 = vpack.c.b16 %v1514, %v1513
      %v1526 = vpack.c.b16 %v1516, %v1515
      %v1527 = vpack.c.b16 %v1518, %v1517
      %v1528 = vpack.c.b16 %v1520, %v1519
      %1537 = vmatprep.subr.bf16.mxu0 0
      %1538 = vmatpush1.bf16.msra.mxu0 %v1521
      %1539 = vmatprep.subr.bf16.mxu0 0
      %1540 = vmatpush1.bf16.msra.mxu0 %v1522
      %1541 = vmatprep.subr.bf16.mxu0 0
      %1542 = vmatpush1.bf16.msra.mxu0 %v1523
      %1543 = vmatprep.subr.bf16.mxu0 0
      %1544 = vmatpush1.bf16.msra.mxu0 %v1524
      %1545 = vmatprep.subr.bf16.mxu0 0
      %1546 = vmatpush1.bf16.msra.mxu0 %v1525
      %1547 = vmatprep.subr.bf16.mxu0 0
      %1548 = vmatpush1.bf16.msra.mxu0 %v1526
      %1549 = vmatprep.subr.bf16.mxu0 0
      %1550 = vmatpush1.bf16.msra.mxu0 %v1527
      %1551 = vmatprep.subr.bf16.mxu0 0
      %1552 = vmatpush1.bf16.msra.mxu0 %v1528
      %1553 = vmatprep.subr.bf16.mxu0 0
      %1554 = vmatpush1.bf16.msra.mxu0 0
      %1555 = vmatprep.subr.bf16.mxu0 0
      %1556 = vmatpush1.bf16.msra.mxu0 0
      %1557 = vmatprep.subr.bf16.mxu0 0
      %1558 = vmatpush1.bf16.msra.mxu0 0
      %1559 = vmatprep.subr.bf16.mxu0 0
      %1560 = vmatpush1.bf16.msra.mxu0 0
      %1561 = vmatprep.subr.bf16.mxu0 0
      %1562 = vmatpush1.bf16.msra.mxu0 0
      %1563 = vmatprep.subr.bf16.mxu0 0
      %1564 = vmatpush1.bf16.msra.mxu0 0
      %1565 = vmatprep.subr.bf16.mxu0 0
      %1566 = vmatpush1.bf16.msra.mxu0 0
      %1567 = vmatprep.subr.bf16.mxu0 0
      %1568 = vmatpush1.bf16.msra.mxu0 0
      %1569 = vmatprep.mubr.bf16.mxu0 0
      %1570 = vmatmul.mubr.bf16.gmra.mrb[0].mxu0 %v608
      %v1571 = vpop.f32.mrb[0].mxu0
      %v1572 = vadd.f32 0.0, %v1571
      %v1573 = vpop.f32.mrb[0].mxu0
      %v1574 = vpop.f32.mrb[0].mxu0
      %v1575 = vadd.f32 0.0, %v1574
      %v1576 = vpop.f32.mrb[0].mxu0
      %1577 = vmatprep.mubr.bf16.mxu0 0
      %1578 = vmatmul.mubr.bf16.gmra.mrb[0].mxu0 %v609
      %v1579 = vpop.f32.mrb[0].mxu0
      %v1580 = vadd.f32 0.0, %v1579
      %v1581 = vpop.f32.mrb[0].mxu0
      %v1582 = vpop.f32.mrb[0].mxu0
      %v1583 = vadd.f32 0.0, %v1582
      %v1584 = vpop.f32.mrb[0].mxu0
      %1585 = vmatprep.mubr.bf16.mxu0 0
      %1586 = vmatmul.mubr.bf16.gmra.mrb[0].mxu0 %v610
      %v1587 = vpop.f32.mrb[0].mxu0
      %v1588 = vadd.f32 0.0, %v1587
      %v1589 = vpop.f32.mrb[0].mxu0
      %v1590 = vpop.f32.mrb[0].mxu0
      %v1591 = vadd.f32 0.0, %v1590
      %v1592 = vpop.f32.mrb[0].mxu0
      %1593 = vmatprep.mubr.bf16.mxu0 0
      %1594 = vmatmul.mubr.bf16.gmra.mrb[0].mxu0 %v607
      %v1595 = vpop.f32.mrb[0].mxu0
      %v1596 = vadd.f32 0.0, %v1595
      %v1597 = vpop.f32.mrb[0].mxu0
      %v1598 = vpop.f32.mrb[0].mxu0
      %v1599 = vadd.f32 0.0, %v1598
      %v1600 = vpop.f32.mrb[0].mxu0
      %1601 = vdwg.mxu0
      %v1602 = vadd.f32 %v1461, %v1572
      %v1603 = vadd.f32 %v1462, %v1575
      %v1604 = vadd.f32 %v1463, %v1580
      %v1605 = vadd.f32 %v1464, %v1583
      %v1606 = vadd.f32 %v1465, %v1588
      %v1607 = vadd.f32 %v1466, %v1591
      %v1608 = vadd.f32 %v1467, %v1596
      %v1609 = vadd.f32 %v1468, %v1599
      %v1610 = vld [vmem:[#allocation2] sm:$0xff]
      %v1611 = vld [vmem:[#allocation2 + $0x8] sm:$0xff]
      %v1612 = vld [vmem:[#allocation2 + $0x10] sm:$0xff]
      %v1613 = vld [vmem:[#allocation2 + $0x18] sm:$0xff]
      %v1614 = vld [vmem:[#allocation2 + $0x20] sm:$0xff]
      %v1615 = vld [vmem:[#allocation2 + $0x28] sm:$0xff]
      %v1616 = vld [vmem:[#allocation2 + $0x30] sm:$0xff]
      %v1617 = vld [vmem:[#allocation2 + $0x38] sm:$0xff]
      %v1618 = vadd.f32 %v1610, %v1602
      %v1619 = vadd.f32 %v1611, %v1603
      %v1620 = vadd.f32 %v1612, %v1604
      %v1621 = vadd.f32 %v1613, %v1605
      %v1622 = vadd.f32 %v1614, %v1606
      %v1623 = vadd.f32 %v1615, %v1607
      %v1624 = vadd.f32 %v1616, %v1608
      %v1625 = vadd.f32 %v1617, %v1609
      %1626 = vst [vmem:[#allocation2] sm:$0xff] %v1618
      %1627 = vst [vmem:[#allocation2 + $0x8] sm:$0xff] %v1619
      %1628 = vst [vmem:[#allocation2 + $0x10] sm:$0xff] %v1620
      %1629 = vst [vmem:[#allocation2 + $0x18] sm:$0xff] %v1621
      %1630 = vst [vmem:[#allocation2 + $0x20] sm:$0xff] %v1622
      %1631 = vst [vmem:[#allocation2 + $0x28] sm:$0xff] %v1623
      %1632 = vst [vmem:[#allocation2 + $0x30] sm:$0xff] %v1624
      %1633 = vst [vmem:[#allocation2 + $0x38] sm:$0xff] %v1625
      %p1634 = scmp.eq.s32.totalorder %s22, 2
      // Predicated region
      $region41: #{_lambda_.10} parent=35 // pred_check
        %p1635 = pneg %p1634
      $region42: #{_lambda_.10} parent=35 // pred_check_branch
        %1637 = sbr.rel (%p1635) target = $region44
      $region43: #{_lambda_.10} parent=35 // pred_region
        %v1638 = vld [vmem:[#allocation2] sm:$0xff]
        %v1639 = vld [vmem:[#allocation2 + $0x8] sm:$0xff]
        %v1640 = vld [vmem:[#allocation2 + $0x10] sm:$0xff]
        %v1641 = vld [vmem:[#allocation2 + $0x18] sm:$0xff]
        %v1642 = vld [vmem:[#allocation2 + $0x20] sm:$0xff]
        %v1643 = vld [vmem:[#allocation2 + $0x28] sm:$0xff]
        %v1644 = vld [vmem:[#allocation2 + $0x30] sm:$0xff]
        %v1645 = vld [vmem:[#allocation2 + $0x38] sm:$0xff]
        %v1646 = vld [vmem:[%s2] sm:$0x1]
        %v1648 = vlaneseq
        %v1649 = vshrl.u32 %v1648, 7
        %v1650 = vsub.s32 0, %v1649
        %v1651 = vrot.slane %v1646, %v1650
        %v1653 = vadd.f32 %v1638, %v1651
        %v1654 = vadd.f32 %v1639, %v1651
        %v1655 = vadd.f32 %v1640, %v1651
        %v1656 = vadd.f32 %v1641, %v1651
        %v1657 = vadd.f32 %v1642, %v1651
        %v1658 = vadd.f32 %v1643, %v1651
        %v1659 = vadd.f32 %v1644, %v1651
        %v1660 = vadd.f32 %v1645, %v1651
        %v1661 = vmax.f32 %v1653, 0.0
        %v1662 = vmax.f32 %v1654, 0.0
        %v1663 = vmax.f32 %v1655, 0.0
        %v1664 = vmax.f32 %v1656, 0.0
        %v1665 = vmax.f32 %v1657, 0.0
        %v1666 = vmax.f32 %v1658, 0.0
        %v1667 = vmax.f32 %v1659, 0.0
        %v1668 = vmax.f32 %v1660, 0.0
        %v1669 = vld [vmem:[%s3] sm:$0xff]
        %v1670 = vld [vmem:[%s3 + $0x8] sm:$0xff]
        %v1671 = vld [vmem:[%s3 + $0x10] sm:$0xff]
        %v1672 = vld [vmem:[%s3 + $0x18] sm:$0xff]
        %v1673 = vld [vmem:[%s3 + $0x20] sm:$0xff]
        %v1674 = vld [vmem:[%s3 + $0x28] sm:$0xff]
        %v1675 = vld [vmem:[%s3 + $0x30] sm:$0xff]
        %v1676 = vld [vmem:[%s3 + $0x38] sm:$0xff]
        %1678 = vset.pattern.permute.xlu0 0
        %1679 = vperm.xlu0 %1678, %v1669
        %v1680 = vpop.permute.xlu0 %1679
        %1683 = vset.pattern.permute.xlu0 0
        %1684 = vperm.xlu0 %1683, %v1670
        %v1685 = vpop.permute.xlu0 %1684
        %1688 = vset.pattern.permute.xlu0 0
        %1689 = vperm.xlu0 %1688, %v1671
        %v1690 = vpop.permute.xlu0 %1689
        %1693 = vset.pattern.permute.xlu0 0
        %1694 = vperm.xlu0 %1693, %v1672
        %v1695 = vpop.permute.xlu0 %1694
        %1698 = vset.pattern.permute.xlu0 0
        %1699 = vperm.xlu0 %1698, %v1673
        %v1700 = vpop.permute.xlu0 %1699
        %1703 = vset.pattern.permute.xlu0 0
        %1704 = vperm.xlu0 %1703, %v1674
        %v1705 = vpop.permute.xlu0 %1704
        %1708 = vset.pattern.permute.xlu0 0
        %1709 = vperm.xlu0 %1708, %v1675
        %v1710 = vpop.permute.xlu0 %1709
        %1713 = vset.pattern.permute.xlu0 0
        %1714 = vperm.xlu0 %1713, %v1676
        %v1715 = vpop.permute.xlu0 %1714
        %v1717 = vmul.f32 %v1661, %v1680
        %v1718 = vmul.f32 %v1662, %v1685
        %v1719 = vmul.f32 %v1663, %v1690
        %v1720 = vmul.f32 %v1664, %v1695
        %v1721 = vmul.f32 %v1665, %v1700
        %v1722 = vmul.f32 %v1666, %v1705
        %v1723 = vmul.f32 %v1667, %v1710
        %v1724 = vmul.f32 %v1668, %v1715
        %v1725 = vpack.c.bf16 %v1718, %v1717
        %v1726 = vpack.c.bf16 %v1720, %v1719
        %v1727 = vpack.c.bf16 %v1722, %v1721
        %v1728 = vpack.c.bf16 %v1724, %v1723
        %v1733 = vunpack.c.l.b16 %v1725
        %v1734 = vunpack.c.h.b16 %v1725
        %v1735 = vunpack.c.l.b16 %v1726
        %v1736 = vunpack.c.h.b16 %v1726
        %v1737 = vunpack.c.l.b16 %v1727
        %v1738 = vunpack.c.h.b16 %v1727
        %v1739 = vunpack.c.l.b16 %v1728
        %v1740 = vunpack.c.h.b16 %v1728
        %v1741 = vpack.c.b16 %v1733, %v1733
        %v1742 = vpack.c.b16 %v1734, %v1734
        %v1743 = vpack.c.b16 %v1735, %v1735
        %v1744 = vpack.c.b16 %v1736, %v1736
        %v1745 = vpack.c.b16 %v1737, %v1737
        %v1746 = vpack.c.b16 %v1738, %v1738
        %v1747 = vpack.c.b16 %v1739, %v1739
        %v1748 = vpack.c.b16 %v1740, %v1740
        %1757 = vst [vmem:[%s247] sm:$0xf] %v1741
        %1758 = vst [vmem:[%s247 + $0x4] sm:$0xf] %v1742
        %1759 = vst [vmem:[%s247 + $0x8] sm:$0xf] %v1743
        %1760 = vst [vmem:[%s247 + $0xc] sm:$0xf] %v1744
        %1761 = vst [vmem:[%s247 + $0x10] sm:$0xf] %v1745
        %1762 = vst [vmem:[%s247 + $0x14] sm:$0xf] %v1746
        %1763 = vst [vmem:[%s247 + $0x18] sm:$0xf] %v1747
        %1764 = vst [vmem:[%s247 + $0x1c] sm:$0xf] %v1748
      $region44: #{_lambda_.10} parent=35 // pred_fallthru
        _
      %p1765 = scmp.lt.s32.totalorder %s20, 1
      %s1766 = scalar_select %p1765, %s20, 1
      %p1767 = scmp.lt.s32.totalorder %s21, 5
      %s1768 = scalar_select %p1767, %s21, 5
      %s1769 = smul.addr %s1768, 8
      %s1770 = smul.addr %s1766, 48
      %s1771 = sadd.s32 %s1769, %s1770
      %s1772 = smul.addr %s1771, 4
      %s1773 = scalar_lea.vmem %s4, %s1772
      // Predicated region
      $region45: #{_lambda_.10} parent=35 // pred_check
        %p1774 = pneg %p147
      $region46: #{_lambda_.10} parent=35 // pred_check_branch
        %1776 = sbr.rel (%p1774) target = $region48
      $region47: #{_lambda_.10} parent=35 // pred_region
        _
      $region48: #{_lambda_.10} parent=35 // pred_fallthru
        _
    $region36: #{_lambda_.10} parent=5 // pred_fallthru
      _
    %p1777 = scmp.le.s32.totalorder 2, %s10
    // Predicated region
    $region49: #{_lambda_.10} parent=5 // pred_check
      %p1778 = pneg %p1777
    $region50: #{_lambda_.10} parent=5 // pred_check_branch
      %1780 = sbr.rel (%p1778) target = $region52
    $region51: #{_lambda_.10} parent=5 // pred_region
      %s1781 = ssub.s32 %s10, 2
      // Predicated region
      $region53: #{_lambda_.10} parent=51 // pred_check
        %p1782 = pneg %p153
      $region54: #{_lambda_.10} parent=51 // pred_check_branch
        %1784 = sbr.rel (%p1782) target = $region56
      $region55: #{_lambda_.10} parent=51 // pred_region
        %p1785 = scmp.lt.s32.totalorder %s23, 1
        %s1786 = scalar_select %p1785, %s23, 1
        %p1787 = scmp.lt.s32.totalorder %s24, 5
        %s1788 = scalar_select %p1787, %s24, 5
        %s1789 = smul.addr %s1788, 8
        %s1790 = smul.addr %s1786, 48
        %s1791 = sadd.s32 %s1789, %s1790
        %s1792 = smul.addr %s1791, 4
        %s1793 = scalar_lea.vmem %s4, %s1792
      $region56: #{_lambda_.10} parent=51 // pred_fallthru
        _
    $region52: #{_lambda_.10} parent=5 // pred_fallthru
      _
  $region6: #{_lambda_.10} parent=0 // loop_footer
    %s14 = sadd.s32 1, %s10
  $region7: #{_lambda_.10} parent=0 // loop_footer_branch
    %9 = sbr.rel target = $region3
  $region8: #{_lambda_.10} parent=0 // loop_exit
    _

// kernel: _lambda_.12
$region0: #{_lambda_.12}
  #allocation0 [shape = 'u32[]', space=smem, size = 0x4, offset = 0x4, fixed_abs, tag = 'smem constant byte address 0x4 - core index']
  #allocation1 [shape = 'u32[144,128]{1,0:T(1,128)}', space=vmem, size = 0x12000, scoped, tag = 'internal scratch']
  #allocation2 [shape = 'f32[64,128]{1,0:T(8,128)}', space=vmem, size = 0x8000, scoped, tag = 'scratch operand']
  %s0 = inlined_call_operand.vmem [shape: bf16[2,8,64,128], index: 0, kind: input, shape index: {}]
  %s1 = inlined_call_operand.vmem [shape: bf16[27,128,128], index: 1, kind: input, shape index: {}]
  %s2 = inlined_call_operand.vmem [shape: f32[1,128], index: 2, kind: input, shape index: {}]
  %s3 = inlined_call_operand.vmem [shape: f32[64,1], index: 3, kind: input, shape index: {}]
  %s4 = inlined_call_operand.vmem [shape: bf16[2,6,64,128], index: 4, kind: input, shape index: {}]
  %s5 = inlined_call_operand.vmem [shape: bf16[2,6,64,128], index: 5, kind: output, shape index: {}]
  %s6 = sld [smem:[#allocation0]]
  $region61: #{_lambda_.12} parent=0
    _
  %s8 = ssub.s32 1, %s6
  %s9 = scalar_select 0, %s8, %s6
  loop: start=0, step=1, limit=38
  $region2: #{_lambda_.12} parent=0 // loop_pre_header
    _
  $region3: #{_lambda_.12} parent=0 // loop_header
    %s11 = sphi 0, %s15
    %p12 = scmp.ge.s32.totalorder %s11, 38
    %s18 = sphi 0, %s37
    %s19 = sphi 0, %s33
    %s20 = sphi 0, %s29
    %s21 = sphi 0, %s18
    %s22 = sphi 0, %s19
    %s23 = sphi 0, %s20
    %s24 = sphi 0, %s21
    %s25 = sphi 0, %s22
    %s26 = sphi 0, %s23
    %s44 = sphi 0, %s46
    %s47 = sphi 0, %s44
    %s48 = sphi 0, %s47
    %s64 = sphi 0, %s48
    %s68 = sphi 0, %s68
    %s70 = sphi 0, %s68
    %s71 = sphi 0, %s70
    %s85 = sphi 0, %s71
    %s89 = sphi 0, %s89
    %s91 = sphi 0, %s89
    %s92 = sphi 0, %s91
    %s106 = sphi 0, %s92
    %s110 = sphi 0, %s110
    %s112 = sphi 0, %s110
    %s113 = sphi 0, %s112
    %s127 = sphi 0, %s113
    %s135 = sphi 0, %s137
    %s138 = sphi 0, %s135
    %s139 = sphi 0, %s138
    %s155 = sphi 0, %s139
    %s163 = sphi 0, %s165
    %s166 = sphi 0, %s163
    %s167 = sphi 0, %s166
    %s183 = sphi 0, %s167
  $region4: #{_lambda_.12} parent=0 // loop_header_branch
    %14 = sbr.rel (%p12) target = $region8
  $region5: #{_lambda_.12} parent=0 // loop_body
    %s16 = ssub.s32 %s11, 1
    %s17 = ssub.s32 %s11, 2
    %s27 = sadd.s32 1, %s20
    %p28 = scmp.ge.s32.totalorder %s27, 3
    %s29 = scalar_select %p28, 0, %s27
    %s30 = sadd.s32 1, %s19
    %s31 = scalar_select %p28, %s30, %s19
    %p32 = scmp.ge.s32.totalorder %s31, 6
    %s33 = scalar_select %p32, 0, %s31
    %s34 = sadd.s32 1, %s18
    %s35 = scalar_select %p32, %s34, %s18
    %p36 = scmp.ge.s32.totalorder %s35, 2
    %s37 = scalar_select %p36, 0, %s35
    %s38 = sadd.s32 %s19, %s20
    %s39 = sadd.s32 %s33, %s29
    %s40 = ssub.s32 %s18, %s37
    %s41 = ssub.s32 %s38, %s39
    %s42 = sor.u32 %s40, %s41
    %p43 = scmp.eq.s32.totalorder %s42, 0
    %s45 = sadd.s32 %s44, 1
    %s46 = scalar_select %p43, %s44, %s45
    %p49 = pneg %p43
    %p50 = scmp.eq.s32.totalorder %s11, 35
    %p51 = por %p49, %p50
    %p52 = scmp.ne.s32.totalorder %s44, %s47
    %p53 = scmp.eq.s32.totalorder %s11, 0
    %p54 = por %p52, %p53
    %p55 = scmp.ne.s32.totalorder %s44, %s47
    %p56 = scmp.eq.s32.totalorder %s16, 35
    %p57 = por %p55, %p56
    %p58 = scmp.ne.s32.totalorder %s47, %s48
    %p59 = scmp.eq.s32.totalorder %s16, 0
    %p60 = por %p58, %p59
    %p61 = scmp.ne.s32.totalorder %s47, %s48
    %p62 = scmp.eq.s32.totalorder %s17, 35
    %p63 = por %p61, %p62
    %p65 = scmp.ne.s32.totalorder %s48, %s64
    %p66 = scmp.eq.s32.totalorder %s17, 0
    %p67 = por %p65, %p66
    %s69 = sadd.s32 %s68, 1
    %p72 = scmp.eq.s32.totalorder %s11, 35
    %p73 = scmp.ne.s32.totalorder %s68, %s70
    %p74 = scmp.eq.s32.totalorder %s11, 0
    %p75 = por %p73, %p74
    %p76 = scmp.ne.s32.totalorder %s68, %s70
    %p77 = scmp.eq.s32.totalorder %s16, 35
    %p78 = por %p76, %p77
    %p79 = scmp.ne.s32.totalorder %s70, %s71
    %p80 = scmp.eq.s32.totalorder %s16, 0
    %p81 = por %p79, %p80
    %p82 = scmp.ne.s32.totalorder %s70, %s71
    %p83 = scmp.eq.s32.totalorder %s17, 35
    %p84 = por %p82, %p83
    %p86 = scmp.ne.s32.totalorder %s71, %s85
    %p87 = scmp.eq.s32.totalorder %s17, 0
    %p88 = por %p86, %p87
    %s90 = sadd.s32 %s89, 1
    %p93 = scmp.eq.s32.totalorder %s11, 35
    %p94 = scmp.ne.s32.totalorder %s89, %s91
    %p95 = scmp.eq.s32.totalorder %s11, 0
    %p96 = por %p94, %p95
    %p97 = scmp.ne.s32.totalorder %s89, %s91
    %p98 = scmp.eq.s32.totalorder %s16, 35
    %p99 = por %p97, %p98
    %p100 = scmp.ne.s32.totalorder %s91, %s92
    %p101 = scmp.eq.s32.totalorder %s16, 0
    %p102 = por %p100, %p101
    %p103 = scmp.ne.s32.totalorder %s91, %s92
    %p104 = scmp.eq.s32.totalorder %s17, 35
    %p105 = por %p103, %p104
    %p107 = scmp.ne.s32.totalorder %s92, %s106
    %p108 = scmp.eq.s32.totalorder %s17, 0
    %p109 = por %p107, %p108
    %s111 = sadd.s32 %s110, 1
    %p114 = scmp.eq.s32.totalorder %s11, 35
    %p115 = scmp.ne.s32.totalorder %s110, %s112
    %p116 = scmp.eq.s32.totalorder %s11, 0
    %p117 = por %p115, %p116
    %p118 = scmp.ne.s32.totalorder %s110, %s112
    %p119 = scmp.eq.s32.totalorder %s16, 35
    %p120 = por %p118, %p119
    %p121 = scmp.ne.s32.totalorder %s112, %s113
    %p122 = scmp.eq.s32.totalorder %s16, 0
    %p123 = por %p121, %p122
    %p124 = scmp.ne.s32.totalorder %s112, %s113
    %p125 = scmp.eq.s32.totalorder %s17, 35
    %p126 = por %p124, %p125
    %p128 = scmp.ne.s32.totalorder %s113, %s127
    %p129 = scmp.eq.s32.totalorder %s17, 0
    %p130 = por %p128, %p129
    %s131 = ssub.s32 %s18, %s37
    %s132 = ssub.s32 %s19, %s33
    %s133 = sor.u32 %s131, %s132
    %p134 = scmp.eq.s32.totalorder %s133, 0
    %s136 = sadd.s32 %s135, 1
    %s137 = scalar_select %p134, %s135, %s136
    %p140 = pneg %p134
    %p141 = scmp.eq.s32.totalorder %s11, 35
    %p142 = por %p140, %p141
    %p143 = scmp.ne.s32.totalorder %s135, %s138
    %p144 = scmp.eq.s32.totalorder %s11, 0
    %p145 = por %p143, %p144
    %p146 = scmp.ne.s32.totalorder %s135, %s138
    %p147 = scmp.eq.s32.totalorder %s16, 35
    %p148 = por %p146, %p147
    %p149 = scmp.ne.s32.totalorder %s138, %s139
    %p150 = scmp.eq.s32.totalorder %s16, 0
    %p151 = por %p149, %p150
    %p152 = scmp.ne.s32.totalorder %s138, %s139
    %p153 = scmp.eq.s32.totalorder %s17, 35
    %p154 = por %p152, %p153
    %p156 = scmp.ne.s32.totalorder %s139, %s155
    %p157 = scmp.eq.s32.totalorder %s17, 0
    %p158 = por %p156, %p157
    %s159 = ssub.s32 %s18, %s37
    %s160 = ssub.s32 %s19, %s33
    %s161 = sor.u32 %s159, %s160
    %p162 = scmp.eq.s32.totalorder %s161, 0
    %s164 = sadd.s32 %s163, 1
    %s165 = scalar_select %p162, %s163, %s164
    %p168 = pneg %p162
    %p169 = scmp.eq.s32.totalorder %s11, 35
    %p170 = por %p168, %p169
    %p171 = scmp.ne.s32.totalorder %s163, %s166
    %p172 = scmp.eq.s32.totalorder %s11, 0
    %p173 = por %p171, %p172
    %p174 = scmp.ne.s32.totalorder %s163, %s166
    %p175 = scmp.eq.s32.totalorder %s16, 35
    %p176 = por %p174, %p175
    %p177 = scmp.ne.s32.totalorder %s166, %s167
    %p178 = scmp.eq.s32.totalorder %s16, 0
    %p179 = por %p177, %p178
    %p180 = scmp.ne.s32.totalorder %s166, %s167
    %p181 = scmp.eq.s32.totalorder %s17, 35
    %p182 = por %p180, %p181
    %p184 = scmp.ne.s32.totalorder %s167, %s183
    %p185 = scmp.eq.s32.totalorder %s17, 0
    %p186 = por %p184, %p185
    %p187 = scmp.le.s32.totalorder 1, %s11
    %p188 = scmp.lt.s32.totalorder %s11, 37
    %p189 = pnand %p187, %p188
    %p190 = pneg %p189
    // Predicated region
    $region9: #{_lambda_.12} parent=5 // pred_check
      _
    $region10: #{_lambda_.12} parent=5 // pred_check_branch
      %192 = sbr.rel (%p189) target = $region12
    $region11: #{_lambda_.12} parent=5 // pred_region
      %s193 = ssub.s32 %s11, 1
      // Predicated region
      $region13: #{_lambda_.12} parent=11 // pred_check
        %p194 = pneg %p81
      $region14: #{_lambda_.12} parent=11 // pred_check_branch
        %196 = sbr.rel (%p194) target = $region16
      $region15: #{_lambda_.12} parent=11 // pred_region
        _
      $region16: #{_lambda_.12} parent=11 // pred_fallthru
        _
      // Predicated region
      $region17: #{_lambda_.12} parent=11 // pred_check
        %p197 = pneg %p102
      $region18: #{_lambda_.12} parent=11 // pred_check_branch
        %199 = sbr.rel (%p197) target = $region20
      $region19: #{_lambda_.12} parent=11 // pred_region
        _
      $region20: #{_lambda_.12} parent=11 // pred_fallthru
        _
      // Predicated region
      $region21: #{_lambda_.12} parent=11 // pred_check
        %p200 = pneg %p123
      $region22: #{_lambda_.12} parent=11 // pred_check_branch
        %202 = sbr.rel (%p200) target = $region24
      $region23: #{_lambda_.12} parent=11 // pred_region
        _
      $region24: #{_lambda_.12} parent=11 // pred_fallthru
        _
    $region12: #{_lambda_.12} parent=5 // pred_fallthru
      _
    %p203 = scmp.lt.s32.totalorder %s11, 36
    // Predicated region
    $region25: #{_lambda_.12} parent=5 // pred_check
      %p204 = pneg %p203
    $region26: #{_lambda_.12} parent=5 // pred_check_branch
      %206 = sbr.rel (%p204) target = $region28
    $region27: #{_lambda_.12} parent=5 // pred_region
      // Predicated region
      $region29: #{_lambda_.12} parent=27 // pred_check
        %p207 = pneg %p54
      $region30: #{_lambda_.12} parent=27 // pred_check_branch
        %209 = sbr.rel (%p207) target = $region32
      $region31: #{_lambda_.12} parent=27 // pred_region
        %s210 = sadd.s32 %s19, %s20
        %p211 = scmp.lt.s32.totalorder %s18, 1
        %s212 = scalar_select %p211, %s18, 1
        %p213 = scmp.lt.s32.totalorder %s210, 7
        %s214 = scalar_select %p213, %s210, 7
        %s215 = smul.addr %s214, 8
        %s216 = smul.addr %s212, 64
        %s217 = sadd.s32 %s215, %s216
        %s218 = smul.addr %s217, 4
        %s219 = scalar_lea.vmem %s0, %s218
        %s220 = sadd.s32 %s19, %s20
      $region32: #{_lambda_.12} parent=27 // pred_fallthru
        _
      // Predicated region
      $region33: #{_lambda_.12} parent=27 // pred_check
        %p221 = pneg %p145
      $region34: #{_lambda_.12} parent=27 // pred_check_branch
        %223 = sbr.rel (%p221) target = $region36
      $region35: #{_lambda_.12} parent=27 // pred_region
        %p224 = scmp.lt.s32.totalorder %s18, 1
        %s225 = scalar_select %p224, %s18, 1
        %p226 = scmp.lt.s32.totalorder %s19, 5
        %s227 = scalar_select %p226, %s19, 5
        %s228 = smul.addr %s227, 8
        %s229 = smul.addr %s225, 48
        %s230 = sadd.s32 %s228, %s229
        %s231 = smul.addr %s230, 4
        %s232 = scalar_lea.vmem %s4, %s231
      $region36: #{_lambda_.12} parent=27 // pred_fallthru
        _
    $region28: #{_lambda_.12} parent=5 // pred_fallthru
      _
    %p233 = scmp.le.s32.totalorder 1, %s11
    %p234 = scmp.lt.s32.totalorder %s11, 37
    %p235 = pnand %p233, %p234
    %p236 = pneg %p235
    // Predicated region
    $region37: #{_lambda_.12} parent=5 // pred_check
      _
    $region38: #{_lambda_.12} parent=5 // pred_check_branch
      %238 = sbr.rel (%p235) target = $region40
    $region39: #{_lambda_.12} parent=5 // pred_region
      %s239 = ssub.s32 %s11, 1
      %s240 = sadd.s32 %s22, %s23
      %p241 = scmp.lt.s32.totalorder %s21, 1
      %s242 = scalar_select %p241, %s21, 1
      %p243 = scmp.lt.s32.totalorder %s240, 7
      %s244 = scalar_select %p243, %s240, 7
      %s245 = smul.addr %s244, 8
      %s246 = smul.addr %s242, 64
      %s247 = sadd.s32 %s245, %s246
      %s248 = smul.addr %s247, 4
      %s249 = scalar_lea.vmem %s0, %s248
      %p250 = pneg %p60
      %p251 = pneg %p57
      %p252 = pneg %p81
      %p253 = pneg %p78
      %p254 = pneg %p102
      %p255 = pneg %p99
      %p256 = pneg %p123
      %p257 = pneg %p120
      %p258 = scmp.lt.s32.totalorder %s21, 1
      %s259 = scalar_select %p258, %s21, 1
      %p260 = scmp.lt.s32.totalorder %s22, 5
      %s261 = scalar_select %p260, %s22, 5
      %s262 = smul.addr %s261, 8
      %s263 = smul.addr %s259, 48
      %s264 = sadd.s32 %s262, %s263
      %s265 = smul.addr %s264, 4
      %s266 = scalar_lea.vmem %s4, %s265
      %p267 = pneg %p151
      %p268 = pneg %p148
      %p269 = pneg %p179
      %p270 = pneg %p176
      %p271 = scmp.lt.s32.totalorder %s21, 1
      %s272 = scalar_select %p271, %s21, 1
      %p273 = scmp.lt.s32.totalorder %s22, 5
      %s274 = scalar_select %p273, %s22, 5
      %s275 = smul.addr %s274, 8
      %s276 = smul.addr %s272, 48
      %s277 = sadd.s32 %s275, %s276
      %s278 = smul.addr %s277, 4
      %s279 = scalar_lea.vmem %s5, %s278
      %s280 = sadd.s32 %s22, %s23
      %p281 = scmp.lt.s32.totalorder %s21, 1
      %s282 = scalar_select %p281, %s21, 1
      %p283 = scmp.lt.s32.totalorder %s280, 7
      %s284 = scalar_select %p283, %s280, 7
      %s285 = smul.addr %s284, 8
      %s286 = smul.addr %s282, 64
      %s287 = sadd.s32 %s285, %s286
      %s288 = smul.addr %s287, 4
      %s289 = scalar_lea.vmem %s0, %s288
      %s290 = sadd.s32 %s22, %s23
      %p291 = scmp.lt.s32.totalorder %s21, 1
      %s292 = scalar_select %p291, %s21, 1
      %p293 = scmp.lt.s32.totalorder %s22, 5
      %s294 = scalar_select %p293, %s22, 5
      %s295 = smul.addr %s294, 8
      %s296 = smul.addr %s292, 48
      %s297 = sadd.s32 %s295, %s296
      %s298 = smul.addr %s297, 4
      %s299 = scalar_lea.vmem %s4, %s298
      %p300 = scmp.lt.s32.totalorder %s21, 1
      %s301 = scalar_select %p300, %s21, 1
      %p302 = scmp.lt.s32.totalorder %s22, 5
      %s303 = scalar_select %p302, %s22, 5
      %s304 = smul.addr %s303, 8
      %s305 = smul.addr %s301, 48
      %s306 = sadd.s32 %s304, %s305
      %s307 = smul.addr %s306, 4
      %s308 = scalar_lea.vmem %s5, %s307
      %p310 = scmp.eq.s32.totalorder %s23, 0
      // Predicated region
      $region41: #{_lambda_.12} parent=39 // pred_check
        %p311 = pneg %p310
      $region42: #{_lambda_.12} parent=39 // pred_check_branch
        %313 = sbr.rel (%p311) target = $region44
      $region43: #{_lambda_.12} parent=39 // pred_region
        %314 = vst [vmem:[#allocation2] sm:$0xff] 0.0
        %315 = vst [vmem:[#allocation2 + $0x8] sm:$0xff] 0.0
        %316 = vst [vmem:[#allocation2 + $0x10] sm:$0xff] 0.0
        %317 = vst [vmem:[#allocation2 + $0x18] sm:$0xff] 0.0
        %318 = vst [vmem:[#allocation2 + $0x20] sm:$0xff] 0.0
        %319 = vst [vmem:[#allocation2 + $0x28] sm:$0xff] 0.0
        %320 = vst [vmem:[#allocation2 + $0x30] sm:$0xff] 0.0
        %321 = vst [vmem:[#allocation2 + $0x38] sm:$0xff] 0.0
      $region44: #{_lambda_.12} parent=39 // pred_fallthru
        _
      %v322 = vld [vmem:[%s289] sm:$0xf]
      %v323 = vld [vmem:[%s289 + $0x4] sm:$0xf]
      %v324 = vld [vmem:[%s289 + $0x8] sm:$0xf]
      %v325 = vld [vmem:[%s289 + $0xc] sm:$0xf]
      %v326 = vld [vmem:[%s289 + $0x10] sm:$0xf]
      %v327 = vld [vmem:[%s289 + $0x14] sm:$0xf]
      %v328 = vld [vmem:[%s289 + $0x18] sm:$0xf]
      %v329 = vld [vmem:[%s289 + $0x1c] sm:$0xf]
      %v330 = vunpack.c.l.bf16 %v322
      %v331 = vunpack.c.l.bf16 %v323
      %v332 = vunpack.c.l.bf16 %v324
      %v333 = vunpack.c.l.bf16 %v325
      %v334 = vunpack.c.l.bf16 %v326
      %v335 = vunpack.c.l.bf16 %v327
      %v336 = vunpack.c.l.bf16 %v328
      %v337 = vunpack.c.l.bf16 %v329
      %v338 = vrot.slane %v330, 7
      %v339 = vrot.slane %v331, 7
      %v340 = vrot.slane %v332, 7
      %v341 = vrot.slane %v333, 7
      %v342 = vrot.slane %v334, 7
      %v343 = vrot.slane %v335, 7
      %v344 = vrot.slane %v336, 7
      %v345 = vrot.slane %v337, 7
      %v346 = vlaneseq
      %v347 = vshrl.u32 %v346, 7
      %vm348 = vcmp.lt.s32.totalorder %v347, 1
      %v349 = vsel %vm348, %v344, %v345
      %v350 = vsel %vm348, %v343, %v344
      %v351 = vsel %vm348, %v342, %v343
      %v352 = vsel %vm348, %v341, %v342
      %v353 = vsel %vm348, %v340, %v341
      %v354 = vsel %vm348, %v339, %v340
      %v355 = vsel %vm348, %v338, %v339
      %v356 = vsel %vm348, %v345, %v338
      %s357 = smul.u32 %s23, 9
      %s358 = smul.u32 %s357, 16
      %s359 = smul.addr %s358, 4
      %s360 = scalar_lea.vmem %s1, %s359
      %v361 = vld [vmem:[%s360] sm:$0xf]
      %v362 = vld [vmem:[%s360 + $0x4] sm:$0xf]
      %v363 = vld [vmem:[%s360 + $0x8] sm:$0xf]
      %v364 = vld [vmem:[%s360 + $0xc] sm:$0xf]
      %v365 = vld [vmem:[%s360 + $0x10] sm:$0xf]
      %v366 = vld [vmem:[%s360 + $0x14] sm:$0xf]
      %v367 = vld [vmem:[%s360 + $0x18] sm:$0xf]
      %v368 = vld [vmem:[%s360 + $0x1c] sm:$0xf]
      %v369 = vld [vmem:[%s360 + $0x20] sm:$0xf]
      %v370 = vld [vmem:[%s360 + $0x24] sm:$0xf]
      %v371 = vld [vmem:[%s360 + $0x28] sm:$0xf]
      %v372 = vld [vmem:[%s360 + $0x2c] sm:$0xf]
      %v373 = vld [vmem:[%s360 + $0x30] sm:$0xf]
      %v374 = vld [vmem:[%s360 + $0x34] sm:$0xf]
      %v375 = vld [vmem:[%s360 + $0x38] sm:$0xf]
      %v376 = vld [vmem:[%s360 + $0x3c] sm:$0xf]
      %v377 = vpack.c.bf16 %v356, %v349
      %v378 = vpack.c.bf16 %v354, %v355
      %v379 = vpack.c.bf16 %v352, %v353
      %v380 = vpack.c.bf16 %v350, %v351
      %s381 = sadd.s32 %s357, 1
      %s382 = smul.u32 %s381, 16
      %s383 = smul.addr %s382, 4
      %s384 = scalar_lea.vmem %s1, %s383
      %v385 = vld [vmem:[%s384] sm:$0xf]
      %v386 = vld [vmem:[%s384 + $0x4] sm:$0xf]
      %v387 = vld [vmem:[%s384 + $0x8] sm:$0xf]
      %v388 = vld [vmem:[%s384 + $0xc] sm:$0xf]
      %v389 = vld [vmem:[%s384 + $0x10] sm:$0xf]
      %v390 = vld [vmem:[%s384 + $0x14] sm:$0xf]
      %v391 = vld [vmem:[%s384 + $0x18] sm:$0xf]
      %v392 = vld [vmem:[%s384 + $0x1c] sm:$0xf]
      %v393 = vld [vmem:[%s384 + $0x20] sm:$0xf]
      %v394 = vld [vmem:[%s384 + $0x24] sm:$0xf]
      %v395 = vld [vmem:[%s384 + $0x28] sm:$0xf]
      %v396 = vld [vmem:[%s384 + $0x2c] sm:$0xf]
      %v397 = vld [vmem:[%s384 + $0x30] sm:$0xf]
      %v398 = vld [vmem:[%s384 + $0x34] sm:$0xf]
      %v399 = vld [vmem:[%s384 + $0x38] sm:$0xf]
      %v400 = vld [vmem:[%s384 + $0x3c] sm:$0xf]
      %v401 = vpack.c.bf16 %v330, %v337
      %v402 = vpack.c.bf16 %v332, %v331
      %v403 = vpack.c.bf16 %v334, %v333
      %v404 = vpack.c.bf16 %v336, %v335
      %v421 = vunpack.c.l.b16 %v385
      %v422 = vunpack.c.l.b16 %v386
      %v423 = vunpack.c.l.b16 %v387
      %v424 = vunpack.c.l.b16 %v388
      %v425 = vunpack.c.l.b16 %v389
      %v426 = vunpack.c.l.b16 %v390
      %v427 = vunpack.c.l.b16 %v391
      %v428 = vunpack.c.l.b16 %v392
      %v429 = vunpack.c.l.b16 %v393
      %v430 = vunpack.c.l.b16 %v394
      %v431 = vunpack.c.l.b16 %v395
      %v432 = vunpack.c.l.b16 %v396
      %v433 = vunpack.c.l.b16 %v397
      %v434 = vunpack.c.l.b16 %v398
      %v435 = vunpack.c.l.b16 %v399
      %v436 = vunpack.c.l.b16 %v400
      %v437 = vpack.c.b16 %v422, %v421
      %v438 = vpack.c.b16 %v424, %v423
      %v439 = vpack.c.b16 %v426, %v425
      %v440 = vpack.c.b16 %v428, %v427
      %v441 = vpack.c.b16 %v430, %v429
      %v442 = vpack.c.b16 %v432, %v431
      %v443 = vpack.c.b16 %v434, %v433
      %v444 = vpack.c.b16 %v436, %v435
      %453 = vmatprep.subr.bf16.mxu0 0
      %454 = vmatpush1.bf16.msra.mxu0 %v437
      %455 = vmatprep.subr.bf16.mxu0 0
      %456 = vmatpush1.bf16.msra.mxu0 %v438
      %457 = vmatprep.subr.bf16.mxu0 0
      %458 = vmatpush1.bf16.msra.mxu0 %v439
      %459 = vmatprep.subr.bf16.mxu0 0
      %460 = vmatpush1.bf16.msra.mxu0 %v440
      %461 = vmatprep.subr.bf16.mxu0 0
      %462 = vmatpush1.bf16.msra.mxu0 %v441
      %463 = vmatprep.subr.bf16.mxu0 0
      %464 = vmatpush1.bf16.msra.mxu0 %v442
      %465 = vmatprep.subr.bf16.mxu0 0
      %466 = vmatpush1.bf16.msra.mxu0 %v443
      %467 = vmatprep.subr.bf16.mxu0 0
      %468 = vmatpush1.bf16.msra.mxu0 %v444
      %469 = vmatprep.subr.bf16.mxu0 0
      %470 = vmatpush1.bf16.msra.mxu0 0
      %471 = vmatprep.subr.bf16.mxu0 0
      %472 = vmatpush1.bf16.msra.mxu0 0
      %473 = vmatprep.subr.bf16.mxu0 0
      %474 = vmatpush1.bf16.msra.mxu0 0
      %475 = vmatprep.subr.bf16.mxu0 0
      %476 = vmatpush1.bf16.msra.mxu0 0
      %477 = vmatprep.subr.bf16.mxu0 0
      %478 = vmatpush1.bf16.msra.mxu0 0
      %479 = vmatprep.subr.bf16.mxu0 0
      %480 = vmatpush1.bf16.msra.mxu0 0
      %481 = vmatprep.subr.bf16.mxu0 0
      %482 = vmatpush1.bf16.msra.mxu0 0
      %483 = vmatprep.subr.bf16.mxu0 0
      %484 = vmatpush1.bf16.msra.mxu0 0
      %485 = vmatprep.mubr.bf16.mxu0 0
      %486 = vmatmul.mubr.bf16.gmra.mrb[0].mxu0 %v401
      %v487 = vpop.f32.mrb[0].mxu0
      %v488 = vadd.f32 0.0, %v487
      %v489 = vpop.f32.mrb[0].mxu0
      %v490 = vpop.f32.mrb[0].mxu0
      %v491 = vadd.f32 0.0, %v490
      %v492 = vpop.f32.mrb[0].mxu0
      %493 = vmatprep.mubr.bf16.mxu0 0
      %494 = vmatmul.mubr.bf16.gmra.mrb[0].mxu0 %v402
      %v495 = vpop.f32.mrb[0].mxu0
      %v496 = vadd.f32 0.0, %v495
      %v497 = vpop.f32.mrb[0].mxu0
      %v498 = vpop.f32.mrb[0].mxu0
      %v499 = vadd.f32 0.0, %v498
      %v500 = vpop.f32.mrb[0].mxu0
      %501 = vmatprep.mubr.bf16.mxu0 0
      %502 = vmatmul.mubr.bf16.gmra.mrb[0].mxu0 %v403
      %v503 = vpop.f32.mrb[0].mxu0
      %v504 = vadd.f32 0.0, %v503
      %v505 = vpop.f32.mrb[0].mxu0
      %v506 = vpop.f32.mrb[0].mxu0
      %v507 = vadd.f32 0.0, %v506
      %v508 = vpop.f32.mrb[0].mxu0
      %509 = vmatprep.mubr.bf16.mxu0 0
      %510 = vmatmul.mubr.bf16.gmra.mrb[0].mxu0 %v404
      %v511 = vpop.f32.mrb[0].mxu0
      %v512 = vadd.f32 0.0, %v511
      %v513 = vpop.f32.mrb[0].mxu0
      %v514 = vpop.f32.mrb[0].mxu0
      %v515 = vadd.f32 0.0, %v514
      %v516 = vpop.f32.mrb[0].mxu0
      %517 = vdwg.mxu0
      %v534 = vunpack.c.l.b16 %v361
      %v535 = vunpack.c.l.b16 %v362
      %v536 = vunpack.c.l.b16 %v363
      %v537 = vunpack.c.l.b16 %v364
      %v538 = vunpack.c.l.b16 %v365
      %v539 = vunpack.c.l.b16 %v366
      %v540 = vunpack.c.l.b16 %v367
      %v541 = vunpack.c.l.b16 %v368
      %v542 = vunpack.c.l.b16 %v369
      %v543 = vunpack.c.l.b16 %v370
      %v544 = vunpack.c.l.b16 %v371
      %v545 = vunpack.c.l.b16 %v372
      %v546 = vunpack.c.l.b16 %v373
      %v547 = vunpack.c.l.b16 %v374
      %v548 = vunpack.c.l.b16 %v375
      %v549 = vunpack.c.l.b16 %v376
      %v550 = vpack.c.b16 %v535, %v534
      %v551 = vpack.c.b16 %v537, %v536
      %v552 = vpack.c.b16 %v539, %v538
      %v553 = vpack.c.b16 %v541, %v540
      %v554 = vpack.c.b16 %v543, %v542
      %v555 = vpack.c.b16 %v545, %v544
      %v556 = vpack.c.b16 %v547, %v546
      %v557 = vpack.c.b16 %v549, %v548
      %566 = vmatprep.subr.bf16.mxu0 0
      %567 = vmatpush1.bf16.msra.mxu0 %v550
      %568 = vmatprep.subr.bf16.mxu0 0
      %569 = vmatpush1.bf16.msra.mxu0 %v551
      %570 = vmatprep.subr.bf16.mxu0 0
      %571 = vmatpush1.bf16.msra.mxu0 %v552
      %572 = vmatprep.subr.bf16.mxu0 0
      %573 = vmatpush1.bf16.msra.mxu0 %v553
      %574 = vmatprep.subr.bf16.mxu0 0
      %575 = vmatpush1.bf16.msra.mxu0 %v554
      %576 = vmatprep.subr.bf16.mxu0 0
      %577 = vmatpush1.bf16.msra.mxu0 %v555
      %578 = vmatprep.subr.bf16.mxu0 0
      %579 = vmatpush1.bf16.msra.mxu0 %v556
      %580 = vmatprep.subr.bf16.mxu0 0
      %581 = vmatpush1.bf16.msra.mxu0 %v557
      %582 = vmatprep.subr.bf16.mxu0 0
      %583 = vmatpush1.bf16.msra.mxu0 0
      %584 = vmatprep.subr.bf16.mxu0 0
      %585 = vmatpush1.bf16.msra.mxu0 0
      %586 = vmatprep.subr.bf16.mxu0 0
      %587 = vmatpush1.bf16.msra.mxu0 0
      %588 = vmatprep.subr.bf16.mxu0 0
      %589 = vmatpush1.bf16.msra.mxu0 0
      %590 = vmatprep.subr.bf16.mxu0 0
      %591 = vmatpush1.bf16.msra.mxu0 0
      %592 = vmatprep.subr.bf16.mxu0 0
      %593 = vmatpush1.bf16.msra.mxu0 0
      %594 = vmatprep.subr.bf16.mxu0 0
      %595 = vmatpush1.bf16.msra.mxu0 0
      %596 = vmatprep.subr.bf16.mxu0 0
      %597 = vmatpush1.bf16.msra.mxu0 0
      %598 = vmatprep.mubr.bf16.mxu0 0
      %599 = vmatmul.mubr.bf16.gmra.mrb[0].mxu0 %v377
      %v600 = vpop.f32.mrb[0].mxu0
      %v601 = vadd.f32 %v488, %v600
      %v602 = vpop.f32.mrb[0].mxu0
      %v603 = vpop.f32.mrb[0].mxu0
      %v604 = vadd.f32 %v491, %v603
      %v605 = vpop.f32.mrb[0].mxu0
      %606 = vmatprep.mubr.bf16.mxu0 0
      %607 = vmatmul.mubr.bf16.gmra.mrb[0].mxu0 %v378
      %v608 = vpop.f32.mrb[0].mxu0
      %v609 = vadd.f32 %v496, %v608
      %v610 = vpop.f32.mrb[0].mxu0
      %v611 = vpop.f32.mrb[0].mxu0
      %v612 = vadd.f32 %v499, %v611
      %v613 = vpop.f32.mrb[0].mxu0
      %614 = vmatprep.mubr.bf16.mxu0 0
      %615 = vmatmul.mubr.bf16.gmra.mrb[0].mxu0 %v379
      %v616 = vpop.f32.mrb[0].mxu0
      %v617 = vadd.f32 %v504, %v616
      %v618 = vpop.f32.mrb[0].mxu0
      %v619 = vpop.f32.mrb[0].mxu0
      %v620 = vadd.f32 %v507, %v619
      %v621 = vpop.f32.mrb[0].mxu0
      %622 = vmatprep.mubr.bf16.mxu0 0
      %623 = vmatmul.mubr.bf16.gmra.mrb[0].mxu0 %v380
      %v624 = vpop.f32.mrb[0].mxu0
      %v625 = vadd.f32 %v512, %v624
      %v626 = vpop.f32.mrb[0].mxu0
      %v627 = vpop.f32.mrb[0].mxu0
      %v628 = vadd.f32 %v515, %v627
      %v629 = vpop.f32.mrb[0].mxu0
      %630 = vdwg.mxu0
      %v631 = vrot.slane %v330, 1
      %v632 = vrot.slane %v331, 1
      %v633 = vrot.slane %v332, 1
      %v634 = vrot.slane %v333, 1
      %v635 = vrot.slane %v334, 1
      %v636 = vrot.slane %v335, 1
      %v637 = vrot.slane %v336, 1
      %v638 = vrot.slane %v337, 1
      %vm639 = vcmp.lt.s32.totalorder %v347, 7
      %v640 = vsel %vm639, %v637, %v638
      %v641 = vsel %vm639, %v636, %v637
      %v642 = vsel %vm639, %v635, %v636
      %v643 = vsel %vm639, %v634, %v635
      %v644 = vsel %vm639, %v633, %v634
      %v645 = vsel %vm639, %v632, %v633
      %v646 = vsel %vm639, %v631, %v632
      %v647 = vsel %vm639, %v638, %v631
      %s648 = sadd.s32 %s357, 2
      %s649 = smul.u32 %s648, 16
      %s650 = smul.addr %s649, 4
      %s651 = scalar_lea.vmem %s1, %s650
      %v652 = vld [vmem:[%s651] sm:$0xf]
      %v653 = vld [vmem:[%s651 + $0x4] sm:$0xf]
      %v654 = vld [vmem:[%s651 + $0x8] sm:$0xf]
      %v655 = vld [vmem:[%s651 + $0xc] sm:$0xf]
      %v656 = vld [vmem:[%s651 + $0x10] sm:$0xf]
      %v657 = vld [vmem:[%s651 + $0x14] sm:$0xf]
      %v658 = vld [vmem:[%s651 + $0x18] sm:$0xf]
      %v659 = vld [vmem:[%s651 + $0x1c] sm:$0xf]
      %v660 = vld [vmem:[%s651 + $0x20] sm:$0xf]
      %v661 = vld [vmem:[%s651 + $0x24] sm:$0xf]
      %v662 = vld [vmem:[%s651 + $0x28] sm:$0xf]
      %v663 = vld [vmem:[%s651 + $0x2c] sm:$0xf]
      %v664 = vld [vmem:[%s651 + $0x30] sm:$0xf]
      %v665 = vld [vmem:[%s651 + $0x34] sm:$0xf]
      %v666 = vld [vmem:[%s651 + $0x38] sm:$0xf]
      %v667 = vld [vmem:[%s651 + $0x3c] sm:$0xf]
      %v668 = vpack.c.bf16 %v646, %v647
      %v669 = vpack.c.bf16 %v644, %v645
      %v670 = vpack.c.bf16 %v642, %v643
      %v671 = vpack.c.bf16 %v640, %v641
      %v688 = vunpack.c.l.b16 %v652
      %v689 = vunpack.c.l.b16 %v653
      %v690 = vunpack.c.l.b16 %v654
      %v691 = vunpack.c.l.b16 %v655
      %v692 = vunpack.c.l.b16 %v656
      %v693 = vunpack.c.l.b16 %v657
      %v694 = vunpack.c.l.b16 %v658
      %v695 = vunpack.c.l.b16 %v659
      %v696 = vunpack.c.l.b16 %v660
      %v697 = vunpack.c.l.b16 %v661
      %v698 = vunpack.c.l.b16 %v662
      %v699 = vunpack.c.l.b16 %v663
      %v700 = vunpack.c.l.b16 %v664
      %v701 = vunpack.c.l.b16 %v665
      %v702 = vunpack.c.l.b16 %v666
      %v703 = vunpack.c.l.b16 %v667
      %v704 = vpack.c.b16 %v689, %v688
      %v705 = vpack.c.b16 %v691, %v690
      %v706 = vpack.c.b16 %v693, %v692
      %v707 = vpack.c.b16 %v695, %v694
      %v708 = vpack.c.b16 %v697, %v696
      %v709 = vpack.c.b16 %v699, %v698
      %v710 = vpack.c.b16 %v701, %v700
      %v711 = vpack.c.b16 %v703, %v702
      %720 = vmatprep.subr.bf16.mxu0 0
      %721 = vmatpush1.bf16.msra.mxu0 %v704
      %722 = vmatprep.subr.bf16.mxu0 0
      %723 = vmatpush1.bf16.msra.mxu0 %v705
      %724 = vmatprep.subr.bf16.mxu0 0
      %725 = vmatpush1.bf16.msra.mxu0 %v706
      %726 = vmatprep.subr.bf16.mxu0 0
      %727 = vmatpush1.bf16.msra.mxu0 %v707
      %728 = vmatprep.subr.bf16.mxu0 0
      %729 = vmatpush1.bf16.msra.mxu0 %v708
      %730 = vmatprep.subr.bf16.mxu0 0
      %731 = vmatpush1.bf16.msra.mxu0 %v709
      %732 = vmatprep.subr.bf16.mxu0 0
      %733 = vmatpush1.bf16.msra.mxu0 %v710
      %734 = vmatprep.subr.bf16.mxu0 0
      %735 = vmatpush1.bf16.msra.mxu0 %v711
      %736 = vmatprep.subr.bf16.mxu0 0
      %737 = vmatpush1.bf16.msra.mxu0 0
      %738 = vmatprep.subr.bf16.mxu0 0
      %739 = vmatpush1.bf16.msra.mxu0 0
      %740 = vmatprep.subr.bf16.mxu0 0
      %741 = vmatpush1.bf16.msra.mxu0 0
      %742 = vmatprep.subr.bf16.mxu0 0
      %743 = vmatpush1.bf16.msra.mxu0 0
      %744 = vmatprep.subr.bf16.mxu0 0
      %745 = vmatpush1.bf16.msra.mxu0 0
      %746 = vmatprep.subr.bf16.mxu0 0
      %747 = vmatpush1.bf16.msra.mxu0 0
      %748 = vmatprep.subr.bf16.mxu0 0
      %749 = vmatpush1.bf16.msra.mxu0 0
      %750 = vmatprep.subr.bf16.mxu0 0
      %751 = vmatpush1.bf16.msra.mxu0 0
      %752 = vmatprep.mubr.bf16.mxu0 0
      %753 = vmatmul.mubr.bf16.gmra.mrb[0].mxu0 %v668
      %v754 = vpop.f32.mrb[0].mxu0
      %v755 = vadd.f32 0.0, %v754
      %v756 = vpop.f32.mrb[0].mxu0
      %v757 = vpop.f32.mrb[0].mxu0
      %v758 = vadd.f32 0.0, %v757
      %v759 = vpop.f32.mrb[0].mxu0
      %760 = vmatprep.mubr.bf16.mxu0 0
      %761 = vmatmul.mubr.bf16.gmra.mrb[0].mxu0 %v669
      %v762 = vpop.f32.mrb[0].mxu0
      %v763 = vadd.f32 0.0, %v762
      %v764 = vpop.f32.mrb[0].mxu0
      %v765 = vpop.f32.mrb[0].mxu0
      %v766 = vadd.f32 0.0, %v765
      %v767 = vpop.f32.mrb[0].mxu0
      %768 = vmatprep.mubr.bf16.mxu0 0
      %769 = vmatmul.mubr.bf16.gmra.mrb[0].mxu0 %v670
      %v770 = vpop.f32.mrb[0].mxu0
      %v771 = vadd.f32 0.0, %v770
      %v772 = vpop.f32.mrb[0].mxu0
      %v773 = vpop.f32.mrb[0].mxu0
      %v774 = vadd.f32 0.0, %v773
      %v775 = vpop.f32.mrb[0].mxu0
      %776 = vmatprep.mubr.bf16.mxu0 0
      %777 = vmatmul.mubr.bf16.gmra.mrb[0].mxu0 %v671
      %v778 = vpop.f32.mrb[0].mxu0
      %v779 = vadd.f32 0.0, %v778
      %v780 = vpop.f32.mrb[0].mxu0
      %v781 = vpop.f32.mrb[0].mxu0
      %v782 = vadd.f32 0.0, %v781
      %v783 = vpop.f32.mrb[0].mxu0
      %784 = vdwg.mxu0
      %v785 = vadd.f32 %v601, %v755
      %v786 = vadd.f32 %v604, %v758
      %v787 = vadd.f32 %v609, %v763
      %v788 = vadd.f32 %v612, %v766
      %v789 = vadd.f32 %v617, %v771
      %v790 = vadd.f32 %v620, %v774
      %v791 = vadd.f32 %v625, %v779
      %v792 = vadd.f32 %v628, %v782
      %s793 = sadd.s32 %s357, 3
      %s794 = smul.u32 %s793, 16
      %s795 = smul.addr %s794, 4
      %s796 = scalar_lea.vmem %s1, %s795
      %v797 = vld [vmem:[%s796] sm:$0xf]
      %v798 = vld [vmem:[%s796 + $0x4] sm:$0xf]
      %v799 = vld [vmem:[%s796 + $0x8] sm:$0xf]
      %v800 = vld [vmem:[%s796 + $0xc] sm:$0xf]
      %v801 = vld [vmem:[%s796 + $0x10] sm:$0xf]
      %v802 = vld [vmem:[%s796 + $0x14] sm:$0xf]
      %v803 = vld [vmem:[%s796 + $0x18] sm:$0xf]
      %v804 = vld [vmem:[%s796 + $0x1c] sm:$0xf]
      %v805 = vld [vmem:[%s796 + $0x20] sm:$0xf]
      %v806 = vld [vmem:[%s796 + $0x24] sm:$0xf]
      %v807 = vld [vmem:[%s796 + $0x28] sm:$0xf]
      %v808 = vld [vmem:[%s796 + $0x2c] sm:$0xf]
      %v809 = vld [vmem:[%s796 + $0x30] sm:$0xf]
      %v810 = vld [vmem:[%s796 + $0x34] sm:$0xf]
      %v811 = vld [vmem:[%s796 + $0x38] sm:$0xf]
      %v812 = vld [vmem:[%s796 + $0x3c] sm:$0xf]
      %v813 = vpack.c.bf16 %v355, %v356
      %v814 = vpack.c.bf16 %v353, %v354
      %v815 = vpack.c.bf16 %v351, %v352
      %v816 = vpack.c.bf16 %v349, %v350
      %v833 = vunpack.c.l.b16 %v797
      %v834 = vunpack.c.l.b16 %v798
      %v835 = vunpack.c.l.b16 %v799
      %v836 = vunpack.c.l.b16 %v800
      %v837 = vunpack.c.l.b16 %v801
      %v838 = vunpack.c.l.b16 %v802
      %v839 = vunpack.c.l.b16 %v803
      %v840 = vunpack.c.l.b16 %v804
      %v841 = vunpack.c.l.b16 %v805
      %v842 = vunpack.c.l.b16 %v806
      %v843 = vunpack.c.l.b16 %v807
      %v844 = vunpack.c.l.b16 %v808
      %v845 = vunpack.c.l.b16 %v809
      %v846 = vunpack.c.l.b16 %v810
      %v847 = vunpack.c.l.b16 %v811
      %v848 = vunpack.c.l.b16 %v812
      %v849 = vpack.c.b16 %v834, %v833
      %v850 = vpack.c.b16 %v836, %v835
      %v851 = vpack.c.b16 %v838, %v837
      %v852 = vpack.c.b16 %v840, %v839
      %v853 = vpack.c.b16 %v842, %v841
      %v854 = vpack.c.b16 %v844, %v843
      %v855 = vpack.c.b16 %v846, %v845
      %v856 = vpack.c.b16 %v848, %v847
      %865 = vmatprep.subr.bf16.mxu0 0
      %866 = vmatpush1.bf16.msra.mxu0 %v849
      %867 = vmatprep.subr.bf16.mxu0 0
      %868 = vmatpush1.bf16.msra.mxu0 %v850
      %869 = vmatprep.subr.bf16.mxu0 0
      %870 = vmatpush1.bf16.msra.mxu0 %v851
      %871 = vmatprep.subr.bf16.mxu0 0
      %872 = vmatpush1.bf16.msra.mxu0 %v852
      %873 = vmatprep.subr.bf16.mxu0 0
      %874 = vmatpush1.bf16.msra.mxu0 %v853
      %875 = vmatprep.subr.bf16.mxu0 0
      %876 = vmatpush1.bf16.msra.mxu0 %v854
      %877 = vmatprep.subr.bf16.mxu0 0
      %878 = vmatpush1.bf16.msra.mxu0 %v855
      %879 = vmatprep.subr.bf16.mxu0 0
      %880 = vmatpush1.bf16.msra.mxu0 %v856
      %881 = vmatprep.subr.bf16.mxu0 0
      %882 = vmatpush1.bf16.msra.mxu0 0
      %883 = vmatprep.subr.bf16.mxu0 0
      %884 = vmatpush1.bf16.msra.mxu0 0
      %885 = vmatprep.subr.bf16.mxu0 0
      %886 = vmatpush1.bf16.msra.mxu0 0
      %887 = vmatprep.subr.bf16.mxu0 0
      %888 = vmatpush1.bf16.msra.mxu0 0
      %889 = vmatprep.subr.bf16.mxu0 0
      %890 = vmatpush1.bf16.msra.mxu0 0
      %891 = vmatprep.subr.bf16.mxu0 0
      %892 = vmatpush1.bf16.msra.mxu0 0
      %893 = vmatprep.subr.bf16.mxu0 0
      %894 = vmatpush1.bf16.msra.mxu0 0
      %895 = vmatprep.subr.bf16.mxu0 0
      %896 = vmatpush1.bf16.msra.mxu0 0
      %897 = vmatprep.mubr.bf16.mxu0 0
      %898 = vmatmul.mubr.bf16.gmra.mrb[0].mxu0 %v813
      %v899 = vpop.f32.mrb[0].mxu0
      %v900 = vadd.f32 0.0, %v899
      %v901 = vpop.f32.mrb[0].mxu0
      %v902 = vpop.f32.mrb[0].mxu0
      %v903 = vadd.f32 0.0, %v902
      %v904 = vpop.f32.mrb[0].mxu0
      %905 = vmatprep.mubr.bf16.mxu0 0
      %906 = vmatmul.mubr.bf16.gmra.mrb[0].mxu0 %v814
      %v907 = vpop.f32.mrb[0].mxu0
      %v908 = vadd.f32 0.0, %v907
      %v909 = vpop.f32.mrb[0].mxu0
      %v910 = vpop.f32.mrb[0].mxu0
      %v911 = vadd.f32 0.0, %v910
      %v912 = vpop.f32.mrb[0].mxu0
      %913 = vmatprep.mubr.bf16.mxu0 0
      %914 = vmatmul.mubr.bf16.gmra.mrb[0].mxu0 %v815
      %v915 = vpop.f32.mrb[0].mxu0
      %v916 = vadd.f32 0.0, %v915
      %v917 = vpop.f32.mrb[0].mxu0
      %v918 = vpop.f32.mrb[0].mxu0
      %v919 = vadd.f32 0.0, %v918
      %v920 = vpop.f32.mrb[0].mxu0
      %921 = vmatprep.mubr.bf16.mxu0 0
      %922 = vmatmul.mubr.bf16.gmra.mrb[0].mxu0 %v816
      %v923 = vpop.f32.mrb[0].mxu0
      %v924 = vadd.f32 0.0, %v923
      %v925 = vpop.f32.mrb[0].mxu0
      %v926 = vpop.f32.mrb[0].mxu0
      %v927 = vadd.f32 0.0, %v926
      %v928 = vpop.f32.mrb[0].mxu0
      %929 = vdwg.mxu0
      %v930 = vadd.f32 %v785, %v900
      %v931 = vadd.f32 %v786, %v903
      %v932 = vadd.f32 %v787, %v908
      %v933 = vadd.f32 %v788, %v911
      %v934 = vadd.f32 %v789, %v916
      %v935 = vadd.f32 %v790, %v919
      %v936 = vadd.f32 %v791, %v924
      %v937 = vadd.f32 %v792, %v927
      %s938 = sadd.s32 %s357, 4
      %s939 = smul.u32 %s938, 16
      %s940 = smul.addr %s939, 4
      %s941 = scalar_lea.vmem %s1, %s940
      %v942 = vld [vmem:[%s941] sm:$0xf]
      %v943 = vld [vmem:[%s941 + $0x4] sm:$0xf]
      %v944 = vld [vmem:[%s941 + $0x8] sm:$0xf]
      %v945 = vld [vmem:[%s941 + $0xc] sm:$0xf]
      %v946 = vld [vmem:[%s941 + $0x10] sm:$0xf]
      %v947 = vld [vmem:[%s941 + $0x14] sm:$0xf]
      %v948 = vld [vmem:[%s941 + $0x18] sm:$0xf]
      %v949 = vld [vmem:[%s941 + $0x1c] sm:$0xf]
      %v950 = vld [vmem:[%s941 + $0x20] sm:$0xf]
      %v951 = vld [vmem:[%s941 + $0x24] sm:$0xf]
      %v952 = vld [vmem:[%s941 + $0x28] sm:$0xf]
      %v953 = vld [vmem:[%s941 + $0x2c] sm:$0xf]
      %v954 = vld [vmem:[%s941 + $0x30] sm:$0xf]
      %v955 = vld [vmem:[%s941 + $0x34] sm:$0xf]
      %v956 = vld [vmem:[%s941 + $0x38] sm:$0xf]
      %v957 = vld [vmem:[%s941 + $0x3c] sm:$0xf]
      %v966 = vunpack.c.l.b16 %v322
      %v967 = vunpack.c.l.b16 %v323
      %v968 = vunpack.c.l.b16 %v324
      %v969 = vunpack.c.l.b16 %v325
      %v970 = vunpack.c.l.b16 %v326
      %v971 = vunpack.c.l.b16 %v327
      %v972 = vunpack.c.l.b16 %v328
      %v973 = vunpack.c.l.b16 %v329
      %v974 = vpack.c.b16 %v967, %v966
      %v975 = vpack.c.b16 %v969, %v968
      %v976 = vpack.c.b16 %v971, %v970
      %v977 = vpack.c.b16 %v973, %v972
      %v998 = vunpack.c.l.b16 %v942
      %v999 = vunpack.c.l.b16 %v943
      %v1000 = vunpack.c.l.b16 %v944
      %v1001 = vunpack.c.l.b16 %v945
      %v1002 = vunpack.c.l.b16 %v946
      %v1003 = vunpack.c.l.b16 %v947
      %v1004 = vunpack.c.l.b16 %v948
      %v1005 = vunpack.c.l.b16 %v949
      %v1006 = vunpack.c.l.b16 %v950
      %v1007 = vunpack.c.l.b16 %v951
      %v1008 = vunpack.c.l.b16 %v952
      %v1009 = vunpack.c.l.b16 %v953
      %v1010 = vunpack.c.l.b16 %v954
      %v1011 = vunpack.c.l.b16 %v955
      %v1012 = vunpack.c.l.b16 %v956
      %v1013 = vunpack.c.l.b16 %v957
      %v1014 = vpack.c.b16 %v999, %v998
      %v1015 = vpack.c.b16 %v1001, %v1000
      %v1016 = vpack.c.b16 %v1003, %v1002
      %v1017 = vpack.c.b16 %v1005, %v1004
      %v1018 = vpack.c.b16 %v1007, %v1006
      %v1019 = vpack.c.b16 %v1009, %v1008
      %v1020 = vpack.c.b16 %v1011, %v1010
      %v1021 = vpack.c.b16 %v1013, %v1012
      %1030 = vmatprep.subr.bf16.mxu0 0
      %1031 = vmatpush1.bf16.msra.mxu0 %v1014
      %1032 = vmatprep.subr.bf16.mxu0 0
      %1033 = vmatpush1.bf16.msra.mxu0 %v1015
      %1034 = vmatprep.subr.bf16.mxu0 0
      %1035 = vmatpush1.bf16.msra.mxu0 %v1016
      %1036 = vmatprep.subr.bf16.mxu0 0
      %1037 = vmatpush1.bf16.msra.mxu0 %v1017
      %1038 = vmatprep.subr.bf16.mxu0 0
      %1039 = vmatpush1.bf16.msra.mxu0 %v1018
      %1040 = vmatprep.subr.bf16.mxu0 0
      %1041 = vmatpush1.bf16.msra.mxu0 %v1019
      %1042 = vmatprep.subr.bf16.mxu0 0
      %1043 = vmatpush1.bf16.msra.mxu0 %v1020
      %1044 = vmatprep.subr.bf16.mxu0 0
      %1045 = vmatpush1.bf16.msra.mxu0 %v1021
      %1046 = vmatprep.subr.bf16.mxu0 0
      %1047 = vmatpush1.bf16.msra.mxu0 0
      %1048 = vmatprep.subr.bf16.mxu0 0
      %1049 = vmatpush1.bf16.msra.mxu0 0
      %1050 = vmatprep.subr.bf16.mxu0 0
      %1051 = vmatpush1.bf16.msra.mxu0 0
      %1052 = vmatprep.subr.bf16.mxu0 0
      %1053 = vmatpush1.bf16.msra.mxu0 0
      %1054 = vmatprep.subr.bf16.mxu0 0
      %1055 = vmatpush1.bf16.msra.mxu0 0
      %1056 = vmatprep.subr.bf16.mxu0 0
      %1057 = vmatpush1.bf16.msra.mxu0 0
      %1058 = vmatprep.subr.bf16.mxu0 0
      %1059 = vmatpush1.bf16.msra.mxu0 0
      %1060 = vmatprep.subr.bf16.mxu0 0
      %1061 = vmatpush1.bf16.msra.mxu0 0
      %1062 = vmatprep.mubr.bf16.mxu0 0
      %1063 = vmatmul.mubr.bf16.gmra.mrb[0].mxu0 %v974
      %v1064 = vpop.f32.mrb[0].mxu0
      %v1065 = vadd.f32 0.0, %v1064
      %v1066 = vpop.f32.mrb[0].mxu0
      %v1067 = vpop.f32.mrb[0].mxu0
      %v1068 = vadd.f32 0.0, %v1067
      %v1069 = vpop.f32.mrb[0].mxu0
      %1070 = vmatprep.mubr.bf16.mxu0 0
      %1071 = vmatmul.mubr.bf16.gmra.mrb[0].mxu0 %v975
      %v1072 = vpop.f32.mrb[0].mxu0
      %v1073 = vadd.f32 0.0, %v1072
      %v1074 = vpop.f32.mrb[0].mxu0
      %v1075 = vpop.f32.mrb[0].mxu0
      %v1076 = vadd.f32 0.0, %v1075
      %v1077 = vpop.f32.mrb[0].mxu0
      %1078 = vmatprep.mubr.bf16.mxu0 0
      %1079 = vmatmul.mubr.bf16.gmra.mrb[0].mxu0 %v976
      %v1080 = vpop.f32.mrb[0].mxu0
      %v1081 = vadd.f32 0.0, %v1080
      %v1082 = vpop.f32.mrb[0].mxu0
      %v1083 = vpop.f32.mrb[0].mxu0
      %v1084 = vadd.f32 0.0, %v1083
      %v1085 = vpop.f32.mrb[0].mxu0
      %1086 = vmatprep.mubr.bf16.mxu0 0
      %1087 = vmatmul.mubr.bf16.gmra.mrb[0].mxu0 %v977
      %v1088 = vpop.f32.mrb[0].mxu0
      %v1089 = vadd.f32 0.0, %v1088
      %v1090 = vpop.f32.mrb[0].mxu0
      %v1091 = vpop.f32.mrb[0].mxu0
      %v1092 = vadd.f32 0.0, %v1091
      %v1093 = vpop.f32.mrb[0].mxu0
      %1094 = vdwg.mxu0
      %v1095 = vadd.f32 %v930, %v1065
      %v1096 = vadd.f32 %v931, %v1068
      %v1097 = vadd.f32 %v932, %v1073
      %v1098 = vadd.f32 %v933, %v1076
      %v1099 = vadd.f32 %v934, %v1081
      %v1100 = vadd.f32 %v935, %v1084
      %v1101 = vadd.f32 %v936, %v1089
      %v1102 = vadd.f32 %v937, %v1092
      %s1103 = sadd.s32 %s357, 5
      %s1104 = smul.u32 %s1103, 16
      %s1105 = smul.addr %s1104, 4
      %s1106 = scalar_lea.vmem %s1, %s1105
      %v1107 = vld [vmem:[%s1106] sm:$0xf]
      %v1108 = vld [vmem:[%s1106 + $0x4] sm:$0xf]
      %v1109 = vld [vmem:[%s1106 + $0x8] sm:$0xf]
      %v1110 = vld [vmem:[%s1106 + $0xc] sm:$0xf]
      %v1111 = vld [vmem:[%s1106 + $0x10] sm:$0xf]
      %v1112 = vld [vmem:[%s1106 + $0x14] sm:$0xf]
      %v1113 = vld [vmem:[%s1106 + $0x18] sm:$0xf]
      %v1114 = vld [vmem:[%s1106 + $0x1c] sm:$0xf]
      %v1115 = vld [vmem:[%s1106 + $0x20] sm:$0xf]
      %v1116 = vld [vmem:[%s1106 + $0x24] sm:$0xf]
      %v1117 = vld [vmem:[%s1106 + $0x28] sm:$0xf]
      %v1118 = vld [vmem:[%s1106 + $0x2c] sm:$0xf]
      %v1119 = vld [vmem:[%s1106 + $0x30] sm:$0xf]
      %v1120 = vld [vmem:[%s1106 + $0x34] sm:$0xf]
      %v1121 = vld [vmem:[%s1106 + $0x38] sm:$0xf]
      %v1122 = vld [vmem:[%s1106 + $0x3c] sm:$0xf]
      %v1123 = vpack.c.bf16 %v645, %v646
      %v1124 = vpack.c.bf16 %v643, %v644
      %v1125 = vpack.c.bf16 %v641, %v642
      %v1126 = vpack.c.bf16 %v647, %v640
      %v1143 = vunpack.c.l.b16 %v1107
      %v1144 = vunpack.c.l.b16 %v1108
      %v1145 = vunpack.c.l.b16 %v1109
      %v1146 = vunpack.c.l.b16 %v1110
      %v1147 = vunpack.c.l.b16 %v1111
      %v1148 = vunpack.c.l.b16 %v1112
      %v1149 = vunpack.c.l.b16 %v1113
      %v1150 = vunpack.c.l.b16 %v1114
      %v1151 = vunpack.c.l.b16 %v1115
      %v1152 = vunpack.c.l.b16 %v1116
      %v1153 = vunpack.c.l.b16 %v1117
      %v1154 = vunpack.c.l.b16 %v1118
      %v1155 = vunpack.c.l.b16 %v1119
      %v1156 = vunpack.c.l.b16 %v1120
      %v1157 = vunpack.c.l.b16 %v1121
      %v1158 = vunpack.c.l.b16 %v1122
      %v1159 = vpack.c.b16 %v1144, %v1143
      %v1160 = vpack.c.b16 %v1146, %v1145
      %v1161 = vpack.c.b16 %v1148, %v1147
      %v1162 = vpack.c.b16 %v1150, %v1149
      %v1163 = vpack.c.b16 %v1152, %v1151
      %v1164 = vpack.c.b16 %v1154, %v1153
      %v1165 = vpack.c.b16 %v1156, %v1155
      %v1166 = vpack.c.b16 %v1158, %v1157
      %1175 = vmatprep.subr.bf16.mxu0 0
      %1176 = vmatpush1.bf16.msra.mxu0 %v1159
      %1177 = vmatprep.subr.bf16.mxu0 0
      %1178 = vmatpush1.bf16.msra.mxu0 %v1160
      %1179 = vmatprep.subr.bf16.mxu0 0
      %1180 = vmatpush1.bf16.msra.mxu0 %v1161
      %1181 = vmatprep.subr.bf16.mxu0 0
      %1182 = vmatpush1.bf16.msra.mxu0 %v1162
      %1183 = vmatprep.subr.bf16.mxu0 0
      %1184 = vmatpush1.bf16.msra.mxu0 %v1163
      %1185 = vmatprep.subr.bf16.mxu0 0
      %1186 = vmatpush1.bf16.msra.mxu0 %v1164
      %1187 = vmatprep.subr.bf16.mxu0 0
      %1188 = vmatpush1.bf16.msra.mxu0 %v1165
      %1189 = vmatprep.subr.bf16.mxu0 0
      %1190 = vmatpush1.bf16.msra.mxu0 %v1166
      %1191 = vmatprep.subr.bf16.mxu0 0
      %1192 = vmatpush1.bf16.msra.mxu0 0
      %1193 = vmatprep.subr.bf16.mxu0 0
      %1194 = vmatpush1.bf16.msra.mxu0 0
      %1195 = vmatprep.subr.bf16.mxu0 0
      %1196 = vmatpush1.bf16.msra.mxu0 0
      %1197 = vmatprep.subr.bf16.mxu0 0
      %1198 = vmatpush1.bf16.msra.mxu0 0
      %1199 = vmatprep.subr.bf16.mxu0 0
      %1200 = vmatpush1.bf16.msra.mxu0 0
      %1201 = vmatprep.subr.bf16.mxu0 0
      %1202 = vmatpush1.bf16.msra.mxu0 0
      %1203 = vmatprep.subr.bf16.mxu0 0
      %1204 = vmatpush1.bf16.msra.mxu0 0
      %1205 = vmatprep.subr.bf16.mxu0 0
      %1206 = vmatpush1.bf16.msra.mxu0 0
      %1207 = vmatprep.mubr.bf16.mxu0 0
      %1208 = vmatmul.mubr.bf16.gmra.mrb[0].mxu0 %v1123
      %v1209 = vpop.f32.mrb[0].mxu0
      %v1210 = vadd.f32 0.0, %v1209
      %v1211 = vpop.f32.mrb[0].mxu0
      %v1212 = vpop.f32.mrb[0].mxu0
      %v1213 = vadd.f32 0.0, %v1212
      %v1214 = vpop.f32.mrb[0].mxu0
      %1215 = vmatprep.mubr.bf16.mxu0 0
      %1216 = vmatmul.mubr.bf16.gmra.mrb[0].mxu0 %v1124
      %v1217 = vpop.f32.mrb[0].mxu0
      %v1218 = vadd.f32 0.0, %v1217
      %v1219 = vpop.f32.mrb[0].mxu0
      %v1220 = vpop.f32.mrb[0].mxu0
      %v1221 = vadd.f32 0.0, %v1220
      %v1222 = vpop.f32.mrb[0].mxu0
      %1223 = vmatprep.mubr.bf16.mxu0 0
      %1224 = vmatmul.mubr.bf16.gmra.mrb[0].mxu0 %v1125
      %v1225 = vpop.f32.mrb[0].mxu0
      %v1226 = vadd.f32 0.0, %v1225
      %v1227 = vpop.f32.mrb[0].mxu0
      %v1228 = vpop.f32.mrb[0].mxu0
      %v1229 = vadd.f32 0.0, %v1228
      %v1230 = vpop.f32.mrb[0].mxu0
      %1231 = vmatprep.mubr.bf16.mxu0 0
      %1232 = vmatmul.mubr.bf16.gmra.mrb[0].mxu0 %v1126
      %v1233 = vpop.f32.mrb[0].mxu0
      %v1234 = vadd.f32 0.0, %v1233
      %v1235 = vpop.f32.mrb[0].mxu0
      %v1236 = vpop.f32.mrb[0].mxu0
      %v1237 = vadd.f32 0.0, %v1236
      %v1238 = vpop.f32.mrb[0].mxu0
      %1239 = vdwg.mxu0
      %v1240 = vadd.f32 %v1095, %v1210
      %v1241 = vadd.f32 %v1096, %v1213
      %v1242 = vadd.f32 %v1097, %v1218
      %v1243 = vadd.f32 %v1098, %v1221
      %v1244 = vadd.f32 %v1099, %v1226
      %v1245 = vadd.f32 %v1100, %v1229
      %v1246 = vadd.f32 %v1101, %v1234
      %v1247 = vadd.f32 %v1102, %v1237
      %s1248 = sadd.s32 %s357, 6
      %s1249 = smul.u32 %s1248, 16
      %s1250 = smul.addr %s1249, 4
      %s1251 = scalar_lea.vmem %s1, %s1250
      %v1252 = vld [vmem:[%s1251] sm:$0xf]
      %v1253 = vld [vmem:[%s1251 + $0x4] sm:$0xf]
      %v1254 = vld [vmem:[%s1251 + $0x8] sm:$0xf]
      %v1255 = vld [vmem:[%s1251 + $0xc] sm:$0xf]
      %v1256 = vld [vmem:[%s1251 + $0x10] sm:$0xf]
      %v1257 = vld [vmem:[%s1251 + $0x14] sm:$0xf]
      %v1258 = vld [vmem:[%s1251 + $0x18] sm:$0xf]
      %v1259 = vld [vmem:[%s1251 + $0x1c] sm:$0xf]
      %v1260 = vld [vmem:[%s1251 + $0x20] sm:$0xf]
      %v1261 = vld [vmem:[%s1251 + $0x24] sm:$0xf]
      %v1262 = vld [vmem:[%s1251 + $0x28] sm:$0xf]
      %v1263 = vld [vmem:[%s1251 + $0x2c] sm:$0xf]
      %v1264 = vld [vmem:[%s1251 + $0x30] sm:$0xf]
      %v1265 = vld [vmem:[%s1251 + $0x34] sm:$0xf]
      %v1266 = vld [vmem:[%s1251 + $0x38] sm:$0xf]
      %v1267 = vld [vmem:[%s1251 + $0x3c] sm:$0xf]
      %v1284 = vunpack.c.l.b16 %v1252
      %v1285 = vunpack.c.l.b16 %v1253
      %v1286 = vunpack.c.l.b16 %v1254
      %v1287 = vunpack.c.l.b16 %v1255
      %v1288 = vunpack.c.l.b16 %v1256
      %v1289 = vunpack.c.l.b16 %v1257
      %v1290 = vunpack.c.l.b16 %v1258
      %v1291 = vunpack.c.l.b16 %v1259
      %v1292 = vunpack.c.l.b16 %v1260
      %v1293 = vunpack.c.l.b16 %v1261
      %v1294 = vunpack.c.l.b16 %v1262
      %v1295 = vunpack.c.l.b16 %v1263
      %v1296 = vunpack.c.l.b16 %v1264
      %v1297 = vunpack.c.l.b16 %v1265
      %v1298 = vunpack.c.l.b16 %v1266
      %v1299 = vunpack.c.l.b16 %v1267
      %v1300 = vpack.c.b16 %v1285, %v1284
      %v1301 = vpack.c.b16 %v1287, %v1286
      %v1302 = vpack.c.b16 %v1289, %v1288
      %v1303 = vpack.c.b16 %v1291, %v1290
      %v1304 = vpack.c.b16 %v1293, %v1292
      %v1305 = vpack.c.b16 %v1295, %v1294
      %v1306 = vpack.c.b16 %v1297, %v1296
      %v1307 = vpack.c.b16 %v1299, %v1298
      %1316 = vmatprep.subr.bf16.mxu0 0
      %1317 = vmatpush1.bf16.msra.mxu0 %v1300
      %1318 = vmatprep.subr.bf16.mxu0 0
      %1319 = vmatpush1.bf16.msra.mxu0 %v1301
      %1320 = vmatprep.subr.bf16.mxu0 0
      %1321 = vmatpush1.bf16.msra.mxu0 %v1302
      %1322 = vmatprep.subr.bf16.mxu0 0
      %1323 = vmatpush1.bf16.msra.mxu0 %v1303
      %1324 = vmatprep.subr.bf16.mxu0 0
      %1325 = vmatpush1.bf16.msra.mxu0 %v1304
      %1326 = vmatprep.subr.bf16.mxu0 0
      %1327 = vmatpush1.bf16.msra.mxu0 %v1305
      %1328 = vmatprep.subr.bf16.mxu0 0
      %1329 = vmatpush1.bf16.msra.mxu0 %v1306
      %1330 = vmatprep.subr.bf16.mxu0 0
      %1331 = vmatpush1.bf16.msra.mxu0 %v1307
      %1332 = vmatprep.subr.bf16.mxu0 0
      %1333 = vmatpush1.bf16.msra.mxu0 0
      %1334 = vmatprep.subr.bf16.mxu0 0
      %1335 = vmatpush1.bf16.msra.mxu0 0
      %1336 = vmatprep.subr.bf16.mxu0 0
      %1337 = vmatpush1.bf16.msra.mxu0 0
      %1338 = vmatprep.subr.bf16.mxu0 0
      %1339 = vmatpush1.bf16.msra.mxu0 0
      %1340 = vmatprep.subr.bf16.mxu0 0
      %1341 = vmatpush1.bf16.msra.mxu0 0
      %1342 = vmatprep.subr.bf16.mxu0 0
      %1343 = vmatpush1.bf16.msra.mxu0 0
      %1344 = vmatprep.subr.bf16.mxu0 0
      %1345 = vmatpush1.bf16.msra.mxu0 0
      %1346 = vmatprep.subr.bf16.mxu0 0
      %1347 = vmatpush1.bf16.msra.mxu0 0
      %1348 = vmatprep.mubr.bf16.mxu0 0
      %1349 = vmatmul.mubr.bf16.gmra.mrb[0].mxu0 %v378
      %v1350 = vpop.f32.mrb[0].mxu0
      %v1351 = vadd.f32 0.0, %v1350
      %v1352 = vpop.f32.mrb[0].mxu0
      %v1353 = vpop.f32.mrb[0].mxu0
      %v1354 = vadd.f32 0.0, %v1353
      %v1355 = vpop.f32.mrb[0].mxu0
      %1356 = vmatprep.mubr.bf16.mxu0 0
      %1357 = vmatmul.mubr.bf16.gmra.mrb[0].mxu0 %v379
      %v1358 = vpop.f32.mrb[0].mxu0
      %v1359 = vadd.f32 0.0, %v1358
      %v1360 = vpop.f32.mrb[0].mxu0
      %v1361 = vpop.f32.mrb[0].mxu0
      %v1362 = vadd.f32 0.0, %v1361
      %v1363 = vpop.f32.mrb[0].mxu0
      %1364 = vmatprep.mubr.bf16.mxu0 0
      %1365 = vmatmul.mubr.bf16.gmra.mrb[0].mxu0 %v380
      %v1366 = vpop.f32.mrb[0].mxu0
      %v1367 = vadd.f32 0.0, %v1366
      %v1368 = vpop.f32.mrb[0].mxu0
      %v1369 = vpop.f32.mrb[0].mxu0
      %v1370 = vadd.f32 0.0, %v1369
      %v1371 = vpop.f32.mrb[0].mxu0
      %1372 = vmatprep.mubr.bf16.mxu0 0
      %1373 = vmatmul.mubr.bf16.gmra.mrb[0].mxu0 %v377
      %v1374 = vpop.f32.mrb[0].mxu0
      %v1375 = vadd.f32 0.0, %v1374
      %v1376 = vpop.f32.mrb[0].mxu0
      %v1377 = vpop.f32.mrb[0].mxu0
      %v1378 = vadd.f32 0.0, %v1377
      %v1379 = vpop.f32.mrb[0].mxu0
      %1380 = vdwg.mxu0
      %v1381 = vadd.f32 %v1240, %v1351
      %v1382 = vadd.f32 %v1241, %v1354
      %v1383 = vadd.f32 %v1242, %v1359
      %v1384 = vadd.f32 %v1243, %v1362
      %v1385 = vadd.f32 %v1244, %v1367
      %v1386 = vadd.f32 %v1245, %v1370
      %v1387 = vadd.f32 %v1246, %v1375
      %v1388 = vadd.f32 %v1247, %v1378
      %s1389 = sadd.s32 %s357, 7
      %s1390 = smul.u32 %s1389, 16
      %s1391 = smul.addr %s1390, 4
      %s1392 = scalar_lea.vmem %s1, %s1391
      %v1393 = vld [vmem:[%s1392] sm:$0xf]
      %v1394 = vld [vmem:[%s1392 + $0x4] sm:$0xf]
      %v1395 = vld [vmem:[%s1392 + $0x8] sm:$0xf]
      %v1396 = vld [vmem:[%s1392 + $0xc] sm:$0xf]
      %v1397 = vld [vmem:[%s1392 + $0x10] sm:$0xf]
      %v1398 = vld [vmem:[%s1392 + $0x14] sm:$0xf]
      %v1399 = vld [vmem:[%s1392 + $0x18] sm:$0xf]
      %v1400 = vld [vmem:[%s1392 + $0x1c] sm:$0xf]
      %v1401 = vld [vmem:[%s1392 + $0x20] sm:$0xf]
      %v1402 = vld [vmem:[%s1392 + $0x24] sm:$0xf]
      %v1403 = vld [vmem:[%s1392 + $0x28] sm:$0xf]
      %v1404 = vld [vmem:[%s1392 + $0x2c] sm:$0xf]
      %v1405 = vld [vmem:[%s1392 + $0x30] sm:$0xf]
      %v1406 = vld [vmem:[%s1392 + $0x34] sm:$0xf]
      %v1407 = vld [vmem:[%s1392 + $0x38] sm:$0xf]
      %v1408 = vld [vmem:[%s1392 + $0x3c] sm:$0xf]
      %v1425 = vunpack.c.l.b16 %v1393
      %v1426 = vunpack.c.l.b16 %v1394
      %v1427 = vunpack.c.l.b16 %v1395
      %v1428 = vunpack.c.l.b16 %v1396
      %v1429 = vunpack.c.l.b16 %v1397
      %v1430 = vunpack.c.l.b16 %v1398
      %v1431 = vunpack.c.l.b16 %v1399
      %v1432 = vunpack.c.l.b16 %v1400
      %v1433 = vunpack.c.l.b16 %v1401
      %v1434 = vunpack.c.l.b16 %v1402
      %v1435 = vunpack.c.l.b16 %v1403
      %v1436 = vunpack.c.l.b16 %v1404
      %v1437 = vunpack.c.l.b16 %v1405
      %v1438 = vunpack.c.l.b16 %v1406
      %v1439 = vunpack.c.l.b16 %v1407
      %v1440 = vunpack.c.l.b16 %v1408
      %v1441 = vpack.c.b16 %v1426, %v1425
      %v1442 = vpack.c.b16 %v1428, %v1427
      %v1443 = vpack.c.b16 %v1430, %v1429
      %v1444 = vpack.c.b16 %v1432, %v1431
      %v1445 = vpack.c.b16 %v1434, %v1433
      %v1446 = vpack.c.b16 %v1436, %v1435
      %v1447 = vpack.c.b16 %v1438, %v1437
      %v1448 = vpack.c.b16 %v1440, %v1439
      %1457 = vmatprep.subr.bf16.mxu0 0
      %1458 = vmatpush1.bf16.msra.mxu0 %v1441
      %1459 = vmatprep.subr.bf16.mxu0 0
      %1460 = vmatpush1.bf16.msra.mxu0 %v1442
      %1461 = vmatprep.subr.bf16.mxu0 0
      %1462 = vmatpush1.bf16.msra.mxu0 %v1443
      %1463 = vmatprep.subr.bf16.mxu0 0
      %1464 = vmatpush1.bf16.msra.mxu0 %v1444
      %1465 = vmatprep.subr.bf16.mxu0 0
      %1466 = vmatpush1.bf16.msra.mxu0 %v1445
      %1467 = vmatprep.subr.bf16.mxu0 0
      %1468 = vmatpush1.bf16.msra.mxu0 %v1446
      %1469 = vmatprep.subr.bf16.mxu0 0
      %1470 = vmatpush1.bf16.msra.mxu0 %v1447
      %1471 = vmatprep.subr.bf16.mxu0 0
      %1472 = vmatpush1.bf16.msra.mxu0 %v1448
      %1473 = vmatprep.subr.bf16.mxu0 0
      %1474 = vmatpush1.bf16.msra.mxu0 0
      %1475 = vmatprep.subr.bf16.mxu0 0
      %1476 = vmatpush1.bf16.msra.mxu0 0
      %1477 = vmatprep.subr.bf16.mxu0 0
      %1478 = vmatpush1.bf16.msra.mxu0 0
      %1479 = vmatprep.subr.bf16.mxu0 0
      %1480 = vmatpush1.bf16.msra.mxu0 0
      %1481 = vmatprep.subr.bf16.mxu0 0
      %1482 = vmatpush1.bf16.msra.mxu0 0
      %1483 = vmatprep.subr.bf16.mxu0 0
      %1484 = vmatpush1.bf16.msra.mxu0 0
      %1485 = vmatprep.subr.bf16.mxu0 0
      %1486 = vmatpush1.bf16.msra.mxu0 0
      %1487 = vmatprep.subr.bf16.mxu0 0
      %1488 = vmatpush1.bf16.msra.mxu0 0
      %1489 = vmatprep.mubr.bf16.mxu0 0
      %1490 = vmatmul.mubr.bf16.gmra.mrb[0].mxu0 %v402
      %v1491 = vpop.f32.mrb[0].mxu0
      %v1492 = vadd.f32 0.0, %v1491
      %v1493 = vpop.f32.mrb[0].mxu0
      %v1494 = vpop.f32.mrb[0].mxu0
      %v1495 = vadd.f32 0.0, %v1494
      %v1496 = vpop.f32.mrb[0].mxu0
      %1497 = vmatprep.mubr.bf16.mxu0 0
      %1498 = vmatmul.mubr.bf16.gmra.mrb[0].mxu0 %v403
      %v1499 = vpop.f32.mrb[0].mxu0
      %v1500 = vadd.f32 0.0, %v1499
      %v1501 = vpop.f32.mrb[0].mxu0
      %v1502 = vpop.f32.mrb[0].mxu0
      %v1503 = vadd.f32 0.0, %v1502
      %v1504 = vpop.f32.mrb[0].mxu0
      %1505 = vmatprep.mubr.bf16.mxu0 0
      %1506 = vmatmul.mubr.bf16.gmra.mrb[0].mxu0 %v404
      %v1507 = vpop.f32.mrb[0].mxu0
      %v1508 = vadd.f32 0.0, %v1507
      %v1509 = vpop.f32.mrb[0].mxu0
      %v1510 = vpop.f32.mrb[0].mxu0
      %v1511 = vadd.f32 0.0, %v1510
      %v1512 = vpop.f32.mrb[0].mxu0
      %1513 = vmatprep.mubr.bf16.mxu0 0
      %1514 = vmatmul.mubr.bf16.gmra.mrb[0].mxu0 %v401
      %v1515 = vpop.f32.mrb[0].mxu0
      %v1516 = vadd.f32 0.0, %v1515
      %v1517 = vpop.f32.mrb[0].mxu0
      %v1518 = vpop.f32.mrb[0].mxu0
      %v1519 = vadd.f32 0.0, %v1518
      %v1520 = vpop.f32.mrb[0].mxu0
      %1521 = vdwg.mxu0
      %v1522 = vadd.f32 %v1381, %v1492
      %v1523 = vadd.f32 %v1382, %v1495
      %v1524 = vadd.f32 %v1383, %v1500
      %v1525 = vadd.f32 %v1384, %v1503
      %v1526 = vadd.f32 %v1385, %v1508
      %v1527 = vadd.f32 %v1386, %v1511
      %v1528 = vadd.f32 %v1387, %v1516
      %v1529 = vadd.f32 %v1388, %v1519
      %s1530 = sadd.s32 %s357, 8
      %s1531 = smul.u32 %s1530, 16
      %s1532 = smul.addr %s1531, 4
      %s1533 = scalar_lea.vmem %s1, %s1532
      %v1534 = vld [vmem:[%s1533] sm:$0xf]
      %v1535 = vld [vmem:[%s1533 + $0x4] sm:$0xf]
      %v1536 = vld [vmem:[%s1533 + $0x8] sm:$0xf]
      %v1537 = vld [vmem:[%s1533 + $0xc] sm:$0xf]
      %v1538 = vld [vmem:[%s1533 + $0x10] sm:$0xf]
      %v1539 = vld [vmem:[%s1533 + $0x14] sm:$0xf]
      %v1540 = vld [vmem:[%s1533 + $0x18] sm:$0xf]
      %v1541 = vld [vmem:[%s1533 + $0x1c] sm:$0xf]
      %v1542 = vld [vmem:[%s1533 + $0x20] sm:$0xf]
      %v1543 = vld [vmem:[%s1533 + $0x24] sm:$0xf]
      %v1544 = vld [vmem:[%s1533 + $0x28] sm:$0xf]
      %v1545 = vld [vmem:[%s1533 + $0x2c] sm:$0xf]
      %v1546 = vld [vmem:[%s1533 + $0x30] sm:$0xf]
      %v1547 = vld [vmem:[%s1533 + $0x34] sm:$0xf]
      %v1548 = vld [vmem:[%s1533 + $0x38] sm:$0xf]
      %v1549 = vld [vmem:[%s1533 + $0x3c] sm:$0xf]
      %v1566 = vunpack.c.l.b16 %v1534
      %v1567 = vunpack.c.l.b16 %v1535
      %v1568 = vunpack.c.l.b16 %v1536
      %v1569 = vunpack.c.l.b16 %v1537
      %v1570 = vunpack.c.l.b16 %v1538
      %v1571 = vunpack.c.l.b16 %v1539
      %v1572 = vunpack.c.l.b16 %v1540
      %v1573 = vunpack.c.l.b16 %v1541
      %v1574 = vunpack.c.l.b16 %v1542
      %v1575 = vunpack.c.l.b16 %v1543
      %v1576 = vunpack.c.l.b16 %v1544
      %v1577 = vunpack.c.l.b16 %v1545
      %v1578 = vunpack.c.l.b16 %v1546
      %v1579 = vunpack.c.l.b16 %v1547
      %v1580 = vunpack.c.l.b16 %v1548
      %v1581 = vunpack.c.l.b16 %v1549
      %v1582 = vpack.c.b16 %v1567, %v1566
      %v1583 = vpack.c.b16 %v1569, %v1568
      %v1584 = vpack.c.b16 %v1571, %v1570
      %v1585 = vpack.c.b16 %v1573, %v1572
      %v1586 = vpack.c.b16 %v1575, %v1574
      %v1587 = vpack.c.b16 %v1577, %v1576
      %v1588 = vpack.c.b16 %v1579, %v1578
      %v1589 = vpack.c.b16 %v1581, %v1580
      %1598 = vmatprep.subr.bf16.mxu0 0
      %1599 = vmatpush1.bf16.msra.mxu0 %v1582
      %1600 = vmatprep.subr.bf16.mxu0 0
      %1601 = vmatpush1.bf16.msra.mxu0 %v1583
      %1602 = vmatprep.subr.bf16.mxu0 0
      %1603 = vmatpush1.bf16.msra.mxu0 %v1584
      %1604 = vmatprep.subr.bf16.mxu0 0
      %1605 = vmatpush1.bf16.msra.mxu0 %v1585
      %1606 = vmatprep.subr.bf16.mxu0 0
      %1607 = vmatpush1.bf16.msra.mxu0 %v1586
      %1608 = vmatprep.subr.bf16.mxu0 0
      %1609 = vmatpush1.bf16.msra.mxu0 %v1587
      %1610 = vmatprep.subr.bf16.mxu0 0
      %1611 = vmatpush1.bf16.msra.mxu0 %v1588
      %1612 = vmatprep.subr.bf16.mxu0 0
      %1613 = vmatpush1.bf16.msra.mxu0 %v1589
      %1614 = vmatprep.subr.bf16.mxu0 0
      %1615 = vmatpush1.bf16.msra.mxu0 0
      %1616 = vmatprep.subr.bf16.mxu0 0
      %1617 = vmatpush1.bf16.msra.mxu0 0
      %1618 = vmatprep.subr.bf16.mxu0 0
      %1619 = vmatpush1.bf16.msra.mxu0 0
      %1620 = vmatprep.subr.bf16.mxu0 0
      %1621 = vmatpush1.bf16.msra.mxu0 0
      %1622 = vmatprep.subr.bf16.mxu0 0
      %1623 = vmatpush1.bf16.msra.mxu0 0
      %1624 = vmatprep.subr.bf16.mxu0 0
      %1625 = vmatpush1.bf16.msra.mxu0 0
      %1626 = vmatprep.subr.bf16.mxu0 0
      %1627 = vmatpush1.bf16.msra.mxu0 0
      %1628 = vmatprep.subr.bf16.mxu0 0
      %1629 = vmatpush1.bf16.msra.mxu0 0
      %1630 = vmatprep.mubr.bf16.mxu0 0
      %1631 = vmatmul.mubr.bf16.gmra.mrb[0].mxu0 %v669
      %v1632 = vpop.f32.mrb[0].mxu0
      %v1633 = vadd.f32 0.0, %v1632
      %v1634 = vpop.f32.mrb[0].mxu0
      %v1635 = vpop.f32.mrb[0].mxu0
      %v1636 = vadd.f32 0.0, %v1635
      %v1637 = vpop.f32.mrb[0].mxu0
      %1638 = vmatprep.mubr.bf16.mxu0 0
      %1639 = vmatmul.mubr.bf16.gmra.mrb[0].mxu0 %v670
      %v1640 = vpop.f32.mrb[0].mxu0
      %v1641 = vadd.f32 0.0, %v1640
      %v1642 = vpop.f32.mrb[0].mxu0
      %v1643 = vpop.f32.mrb[0].mxu0
      %v1644 = vadd.f32 0.0, %v1643
      %v1645 = vpop.f32.mrb[0].mxu0
      %1646 = vmatprep.mubr.bf16.mxu0 0
      %1647 = vmatmul.mubr.bf16.gmra.mrb[0].mxu0 %v671
      %v1648 = vpop.f32.mrb[0].mxu0
      %v1649 = vadd.f32 0.0, %v1648
      %v1650 = vpop.f32.mrb[0].mxu0
      %v1651 = vpop.f32.mrb[0].mxu0
      %v1652 = vadd.f32 0.0, %v1651
      %v1653 = vpop.f32.mrb[0].mxu0
      %1654 = vmatprep.mubr.bf16.mxu0 0
      %1655 = vmatmul.mubr.bf16.gmra.mrb[0].mxu0 %v668
      %v1656 = vpop.f32.mrb[0].mxu0
      %v1657 = vadd.f32 0.0, %v1656
      %v1658 = vpop.f32.mrb[0].mxu0
      %v1659 = vpop.f32.mrb[0].mxu0
      %v1660 = vadd.f32 0.0, %v1659
      %v1661 = vpop.f32.mrb[0].mxu0
      %1662 = vdwg.mxu0
      %v1663 = vadd.f32 %v1522, %v1633
      %v1664 = vadd.f32 %v1523, %v1636
      %v1665 = vadd.f32 %v1524, %v1641
      %v1666 = vadd.f32 %v1525, %v1644
      %v1667 = vadd.f32 %v1526, %v1649
      %v1668 = vadd.f32 %v1527, %v1652
      %v1669 = vadd.f32 %v1528, %v1657
      %v1670 = vadd.f32 %v1529, %v1660
      %v1671 = vld [vmem:[#allocation2] sm:$0xff]
      %v1672 = vld [vmem:[#allocation2 + $0x8] sm:$0xff]
      %v1673 = vld [vmem:[#allocation2 + $0x10] sm:$0xff]
      %v1674 = vld [vmem:[#allocation2 + $0x18] sm:$0xff]
      %v1675 = vld [vmem:[#allocation2 + $0x20] sm:$0xff]
      %v1676 = vld [vmem:[#allocation2 + $0x28] sm:$0xff]
      %v1677 = vld [vmem:[#allocation2 + $0x30] sm:$0xff]
      %v1678 = vld [vmem:[#allocation2 + $0x38] sm:$0xff]
      %v1679 = vadd.f32 %v1671, %v1663
      %v1680 = vadd.f32 %v1672, %v1664
      %v1681 = vadd.f32 %v1673, %v1665
      %v1682 = vadd.f32 %v1674, %v1666
      %v1683 = vadd.f32 %v1675, %v1667
      %v1684 = vadd.f32 %v1676, %v1668
      %v1685 = vadd.f32 %v1677, %v1669
      %v1686 = vadd.f32 %v1678, %v1670
      %1687 = vst [vmem:[#allocation2] sm:$0xff] %v1679
      %1688 = vst [vmem:[#allocation2 + $0x8] sm:$0xff] %v1680
      %1689 = vst [vmem:[#allocation2 + $0x10] sm:$0xff] %v1681
      %1690 = vst [vmem:[#allocation2 + $0x18] sm:$0xff] %v1682
      %1691 = vst [vmem:[#allocation2 + $0x20] sm:$0xff] %v1683
      %1692 = vst [vmem:[#allocation2 + $0x28] sm:$0xff] %v1684
      %1693 = vst [vmem:[#allocation2 + $0x30] sm:$0xff] %v1685
      %1694 = vst [vmem:[#allocation2 + $0x38] sm:$0xff] %v1686
      %p1695 = scmp.eq.s32.totalorder %s23, 2
      // Predicated region
      $region45: #{_lambda_.12} parent=39 // pred_check
        %p1696 = pneg %p1695
      $region46: #{_lambda_.12} parent=39 // pred_check_branch
        %1698 = sbr.rel (%p1696) target = $region48
      $region47: #{_lambda_.12} parent=39 // pred_region
        %v1699 = vld [vmem:[#allocation2] sm:$0xff]
        %v1700 = vld [vmem:[#allocation2 + $0x8] sm:$0xff]
        %v1701 = vld [vmem:[#allocation2 + $0x10] sm:$0xff]
        %v1702 = vld [vmem:[#allocation2 + $0x18] sm:$0xff]
        %v1703 = vld [vmem:[#allocation2 + $0x20] sm:$0xff]
        %v1704 = vld [vmem:[#allocation2 + $0x28] sm:$0xff]
        %v1705 = vld [vmem:[#allocation2 + $0x30] sm:$0xff]
        %v1706 = vld [vmem:[#allocation2 + $0x38] sm:$0xff]
        %v1707 = vld [vmem:[%s2] sm:$0x1]
        %v1709 = vlaneseq
        %v1710 = vshrl.u32 %v1709, 7
        %v1711 = vsub.s32 0, %v1710
        %v1712 = vrot.slane %v1707, %v1711
        %v1714 = vadd.f32 %v1699, %v1712
        %v1715 = vadd.f32 %v1700, %v1712
        %v1716 = vadd.f32 %v1701, %v1712
        %v1717 = vadd.f32 %v1702, %v1712
        %v1718 = vadd.f32 %v1703, %v1712
        %v1719 = vadd.f32 %v1704, %v1712
        %v1720 = vadd.f32 %v1705, %v1712
        %v1721 = vadd.f32 %v1706, %v1712
        %v1722 = vld [vmem:[%s299] sm:$0xf]
        %v1723 = vld [vmem:[%s299 + $0x4] sm:$0xf]
        %v1724 = vld [vmem:[%s299 + $0x8] sm:$0xf]
        %v1725 = vld [vmem:[%s299 + $0xc] sm:$0xf]
        %v1726 = vld [vmem:[%s299 + $0x10] sm:$0xf]
        %v1727 = vld [vmem:[%s299 + $0x14] sm:$0xf]
        %v1728 = vld [vmem:[%s299 + $0x18] sm:$0xf]
        %v1729 = vld [vmem:[%s299 + $0x1c] sm:$0xf]
        %v1730 = vunpack.c.l.bf16 %v1722
        %v1731 = vunpack.c.l.bf16 %v1723
        %v1732 = vunpack.c.l.bf16 %v1724
        %v1733 = vunpack.c.l.bf16 %v1725
        %v1734 = vunpack.c.l.bf16 %v1726
        %v1735 = vunpack.c.l.bf16 %v1727
        %v1736 = vunpack.c.l.bf16 %v1728
        %v1737 = vunpack.c.l.bf16 %v1729
        %v1738 = vadd.f32 %v1714, %v1730
        %v1739 = vadd.f32 %v1715, %v1731
        %v1740 = vadd.f32 %v1716, %v1732
        %v1741 = vadd.f32 %v1717, %v1733
        %v1742 = vadd.f32 %v1718, %v1734
        %v1743 = vadd.f32 %v1719, %v1735
        %v1744 = vadd.f32 %v1720, %v1736
        %v1745 = vadd.f32 %v1721, %v1737
        %v1746 = vmax.f32 %v1738, 0.0
        %v1747 = vmax.f32 %v1739, 0.0
        %v1748 = vmax.f32 %v1740, 0.0
        %v1749 = vmax.f32 %v1741, 0.0
        %v1750 = vmax.f32 %v1742, 0.0
        %v1751 = vmax.f32 %v1743, 0.0
        %v1752 = vmax.f32 %v1744, 0.0
        %v1753 = vmax.f32 %v1745, 0.0
        %v1754 = vld [vmem:[%s3] sm:$0xff]
        %v1755 = vld [vmem:[%s3 + $0x8] sm:$0xff]
        %v1756 = vld [vmem:[%s3 + $0x10] sm:$0xff]
        %v1757 = vld [vmem:[%s3 + $0x18] sm:$0xff]
        %v1758 = vld [vmem:[%s3 + $0x20] sm:$0xff]
        %v1759 = vld [vmem:[%s3 + $0x28] sm:$0xff]
        %v1760 = vld [vmem:[%s3 + $0x30] sm:$0xff]
        %v1761 = vld [vmem:[%s3 + $0x38] sm:$0xff]
        %1763 = vset.pattern.permute.xlu0 0
        %1764 = vperm.xlu0 %1763, %v1754
        %v1765 = vpop.permute.xlu0 %1764
        %1768 = vset.pattern.permute.xlu0 0
        %1769 = vperm.xlu0 %1768, %v1755
        %v1770 = vpop.permute.xlu0 %1769
        %1773 = vset.pattern.permute.xlu0 0
        %1774 = vperm.xlu0 %1773, %v1756
        %v1775 = vpop.permute.xlu0 %1774
        %1778 = vset.pattern.permute.xlu0 0
        %1779 = vperm.xlu0 %1778, %v1757
        %v1780 = vpop.permute.xlu0 %1779
        %1783 = vset.pattern.permute.xlu0 0
        %1784 = vperm.xlu0 %1783, %v1758
        %v1785 = vpop.permute.xlu0 %1784
        %1788 = vset.pattern.permute.xlu0 0
        %1789 = vperm.xlu0 %1788, %v1759
        %v1790 = vpop.permute.xlu0 %1789
        %1793 = vset.pattern.permute.xlu0 0
        %1794 = vperm.xlu0 %1793, %v1760
        %v1795 = vpop.permute.xlu0 %1794
        %1798 = vset.pattern.permute.xlu0 0
        %1799 = vperm.xlu0 %1798, %v1761
        %v1800 = vpop.permute.xlu0 %1799
        %v1802 = vmul.f32 %v1746, %v1765
        %v1803 = vmul.f32 %v1747, %v1770
        %v1804 = vmul.f32 %v1748, %v1775
        %v1805 = vmul.f32 %v1749, %v1780
        %v1806 = vmul.f32 %v1750, %v1785
        %v1807 = vmul.f32 %v1751, %v1790
        %v1808 = vmul.f32 %v1752, %v1795
        %v1809 = vmul.f32 %v1753, %v1800
        %v1810 = vpack.c.bf16 %v1803, %v1802
        %v1811 = vpack.c.bf16 %v1805, %v1804
        %v1812 = vpack.c.bf16 %v1807, %v1806
        %v1813 = vpack.c.bf16 %v1809, %v1808
        %v1818 = vunpack.c.l.b16 %v1810
        %v1819 = vunpack.c.h.b16 %v1810
        %v1820 = vunpack.c.l.b16 %v1811
        %v1821 = vunpack.c.h.b16 %v1811
        %v1822 = vunpack.c.l.b16 %v1812
        %v1823 = vunpack.c.h.b16 %v1812
        %v1824 = vunpack.c.l.b16 %v1813
        %v1825 = vunpack.c.h.b16 %v1813
        %v1826 = vpack.c.b16 %v1818, %v1818
        %v1827 = vpack.c.b16 %v1819, %v1819
        %v1828 = vpack.c.b16 %v1820, %v1820
        %v1829 = vpack.c.b16 %v1821, %v1821
        %v1830 = vpack.c.b16 %v1822, %v1822
        %v1831 = vpack.c.b16 %v1823, %v1823
        %v1832 = vpack.c.b16 %v1824, %v1824
        %v1833 = vpack.c.b16 %v1825, %v1825
        %1842 = vst [vmem:[%s308] sm:$0xf] %v1826
        %1843 = vst [vmem:[%s308 + $0x4] sm:$0xf] %v1827
        %1844 = vst [vmem:[%s308 + $0x8] sm:$0xf] %v1828
        %1845 = vst [vmem:[%s308 + $0xc] sm:$0xf] %v1829
        %1846 = vst [vmem:[%s308 + $0x10] sm:$0xf] %v1830
        %1847 = vst [vmem:[%s308 + $0x14] sm:$0xf] %v1831
        %1848 = vst [vmem:[%s308 + $0x18] sm:$0xf] %v1832
        %1849 = vst [vmem:[%s308 + $0x1c] sm:$0xf] %v1833
      $region48: #{_lambda_.12} parent=39 // pred_fallthru
        _
      %p1850 = scmp.lt.s32.totalorder %s21, 1
      %s1851 = scalar_select %p1850, %s21, 1
      %p1852 = scmp.lt.s32.totalorder %s22, 5
      %s1853 = scalar_select %p1852, %s22, 5
      %s1854 = smul.addr %s1853, 8
      %s1855 = smul.addr %s1851, 48
      %s1856 = sadd.s32 %s1854, %s1855
      %s1857 = smul.addr %s1856, 4
      %s1858 = scalar_lea.vmem %s5, %s1857
      // Predicated region
      $region49: #{_lambda_.12} parent=39 // pred_check
        %p1859 = pneg %p176
      $region50: #{_lambda_.12} parent=39 // pred_check_branch
        %1861 = sbr.rel (%p1859) target = $region52
      $region51: #{_lambda_.12} parent=39 // pred_region
        _
      $region52: #{_lambda_.12} parent=39 // pred_fallthru
        _
    $region40: #{_lambda_.12} parent=5 // pred_fallthru
      _
    %p1862 = scmp.le.s32.totalorder 2, %s11
    // Predicated region
    $region53: #{_lambda_.12} parent=5 // pred_check
      %p1863 = pneg %p1862
    $region54: #{_lambda_.12} parent=5 // pred_check_branch
      %1865 = sbr.rel (%p1863) target = $region56
    $region55: #{_lambda_.12} parent=5 // pred_region
      %s1866 = ssub.s32 %s11, 2
      // Predicated region
      $region57: #{_lambda_.12} parent=55 // pred_check
        %p1867 = pneg %p182
      $region58: #{_lambda_.12} parent=55 // pred_check_branch
        %1869 = sbr.rel (%p1867) target = $region60
      $region59: #{_lambda_.12} parent=55 // pred_region
        %p1870 = scmp.lt.s32.totalorder %s24, 1
        %s1871 = scalar_select %p1870, %s24, 1
        %p1872 = scmp.lt.s32.totalorder %s25, 5
        %s1873 = scalar_select %p1872, %s25, 5
        %s1874 = smul.addr %s1873, 8
        %s1875 = smul.addr %s1871, 48
        %s1876 = sadd.s32 %s1874, %s1875
        %s1877 = smul.addr %s1876, 4
        %s1878 = scalar_lea.vmem %s5, %s1877
      $region60: #{_lambda_.12} parent=55 // pred_fallthru
        _
    $region56: #{_lambda_.12} parent=5 // pred_fallthru
      _
  $region6: #{_lambda_.12} parent=0 // loop_footer
    %s15 = sadd.s32 1, %s11
  $region7: #{_lambda_.12} parent=0 // loop_footer_branch
    %10 = sbr.rel target = $region3
  $region8: #{_lambda_.12} parent=0 // loop_exit
    _

// kernel: _lambda_.19
$region0: #{_lambda_.19}
  #allocation0 [shape = 'u32[]', space=smem, size = 0x4, offset = 0x4, fixed_abs, tag = 'smem constant byte address 0x4 - core index']
  #allocation1 [shape = 'u32[144,128]{1,0:T(1,128)}', space=vmem, size = 0x12000, scoped, tag = 'internal scratch']
  %s0 = inlined_call_operand.vmem [shape: bf16[2,512], index: 0, kind: input, shape index: {}]
  %s1 = inlined_call_operand.vmem [shape: bf16[512,128], index: 1, kind: input, shape index: {}]
  %s2 = inlined_call_operand.vmem [shape: f32[1,128], index: 2, kind: input, shape index: {}]
  %s3 = inlined_call_operand.hbm [shape: f32[2,128], index: 3, kind: output, shape index: {}]
  %s4 = sld [smem:[#allocation0]]
  $region22: #{_lambda_.19} parent=0
    _
  %s6 = ssub.s32 1, %s4
  %s7 = scalar_select 0, %s6, %s4
  $region1: #{_lambda_.19} parent=0
    #allocation2 [shape = 'u8[1024]{0}', space=vmem, size = 0x400, scoped, tag = 'output window, operand 0, single buffered']
    #allocation3 [shape = 's32[1]{0}', space=sflag, size = 0x4, scoped, tag = 'scoped memory for _lambda_.19']
    %8 = vsyncpa [#allocation3], 0
    // Predicated region
    $region2: #{_lambda_.19} parent=1 // pred_check
      _
    $region3: #{_lambda_.19} parent=1 // pred_check_branch
      %10 = sbr.rel (0) target = $region5
    $region4: #{_lambda_.19} parent=1 // pred_region
      _
    $region5: #{_lambda_.19} parent=1 // pred_fallthru
      _
    // Predicated region
    $region6: #{_lambda_.19} parent=1 // pred_check
      _
    $region7: #{_lambda_.19} parent=1 // pred_check_branch
      %12 = sbr.rel (0) target = $region9
    $region8: #{_lambda_.19} parent=1 // pred_region
      _
    $region9: #{_lambda_.19} parent=1 // pred_fallthru
      _
    // Predicated region
    $region10: #{_lambda_.19} parent=1 // pred_check
      _
    $region11: #{_lambda_.19} parent=1 // pred_check_branch
      %14 = sbr.rel (0) target = $region13
    $region12: #{_lambda_.19} parent=1 // pred_region
      _
    $region13: #{_lambda_.19} parent=1 // pred_fallthru
      _
    %v16 = vld [vmem:[%s0] sm:$0xf]
    %v17 = vld [vmem:[%s1] sm:$0xf]
    %v18 = vld [vmem:[%s1 + $0x4] sm:$0xf]
    %v19 = vld [vmem:[%s1 + $0x8] sm:$0xf]
    %v20 = vld [vmem:[%s1 + $0xc] sm:$0xf]
    %v21 = vld [vmem:[%s1 + $0x10] sm:$0xf]
    %v22 = vld [vmem:[%s1 + $0x14] sm:$0xf]
    %v23 = vld [vmem:[%s1 + $0x18] sm:$0xf]
    %v24 = vld [vmem:[%s1 + $0x1c] sm:$0xf]
    %v25 = vld [vmem:[%s1 + $0x20] sm:$0xf]
    %v26 = vld [vmem:[%s1 + $0x24] sm:$0xf]
    %v27 = vld [vmem:[%s1 + $0x28] sm:$0xf]
    %v28 = vld [vmem:[%s1 + $0x2c] sm:$0xf]
    %v29 = vld [vmem:[%s1 + $0x30] sm:$0xf]
    %v30 = vld [vmem:[%s1 + $0x34] sm:$0xf]
    %v31 = vld [vmem:[%s1 + $0x38] sm:$0xf]
    %v32 = vld [vmem:[%s1 + $0x3c] sm:$0xf]
    %v33 = vld [vmem:[%s1 + $0x40] sm:$0xf]
    %v34 = vld [vmem:[%s1 + $0x44] sm:$0xf]
    %v35 = vld [vmem:[%s1 + $0x48] sm:$0xf]
    %v36 = vld [vmem:[%s1 + $0x4c] sm:$0xf]
    %v37 = vld [vmem:[%s1 + $0x50] sm:$0xf]
    %v38 = vld [vmem:[%s1 + $0x54] sm:$0xf]
    %v39 = vld [vmem:[%s1 + $0x58] sm:$0xf]
    %v40 = vld [vmem:[%s1 + $0x5c] sm:$0xf]
    %v41 = vld [vmem:[%s1 + $0x60] sm:$0xf]
    %v42 = vld [vmem:[%s1 + $0x64] sm:$0xf]
    %v43 = vld [vmem:[%s1 + $0x68] sm:$0xf]
    %v44 = vld [vmem:[%s1 + $0x6c] sm:$0xf]
    %v45 = vld [vmem:[%s1 + $0x70] sm:$0xf]
    %v46 = vld [vmem:[%s1 + $0x74] sm:$0xf]
    %v47 = vld [vmem:[%s1 + $0x78] sm:$0xf]
    %v48 = vld [vmem:[%s1 + $0x7c] sm:$0xf]
    %v49 = vld [vmem:[%s1 + $0x80] sm:$0xf]
    %v50 = vld [vmem:[%s1 + $0x84] sm:$0xf]
    %v51 = vld [vmem:[%s1 + $0x88] sm:$0xf]
    %v52 = vld [vmem:[%s1 + $0x8c] sm:$0xf]
    %v53 = vld [vmem:[%s1 + $0x90] sm:$0xf]
    %v54 = vld [vmem:[%s1 + $0x94] sm:$0xf]
    %v55 = vld [vmem:[%s1 + $0x98] sm:$0xf]
    %v56 = vld [vmem:[%s1 + $0x9c] sm:$0xf]
    %v57 = vld [vmem:[%s1 + $0xa0] sm:$0xf]
    %v58 = vld [vmem:[%s1 + $0xa4] sm:$0xf]
    %v59 = vld [vmem:[%s1 + $0xa8] sm:$0xf]
    %v60 = vld [vmem:[%s1 + $0xac] sm:$0xf]
    %v61 = vld [vmem:[%s1 + $0xb0] sm:$0xf]
    %v62 = vld [vmem:[%s1 + $0xb4] sm:$0xf]
    %v63 = vld [vmem:[%s1 + $0xb8] sm:$0xf]
    %v64 = vld [vmem:[%s1 + $0xbc] sm:$0xf]
    %v65 = vld [vmem:[%s1 + $0xc0] sm:$0xf]
    %v66 = vld [vmem:[%s1 + $0xc4] sm:$0xf]
    %v67 = vld [vmem:[%s1 + $0xc8] sm:$0xf]
    %v68 = vld [vmem:[%s1 + $0xcc] sm:$0xf]
    %v69 = vld [vmem:[%s1 + $0xd0] sm:$0xf]
    %v70 = vld [vmem:[%s1 + $0xd4] sm:$0xf]
    %v71 = vld [vmem:[%s1 + $0xd8] sm:$0xf]
    %v72 = vld [vmem:[%s1 + $0xdc] sm:$0xf]
    %v73 = vld [vmem:[%s1 + $0xe0] sm:$0xf]
    %v74 = vld [vmem:[%s1 + $0xe4] sm:$0xf]
    %v75 = vld [vmem:[%s1 + $0xe8] sm:$0xf]
    %v76 = vld [vmem:[%s1 + $0xec] sm:$0xf]
    %v77 = vld [vmem:[%s1 + $0xf0] sm:$0xf]
    %v78 = vld [vmem:[%s1 + $0xf4] sm:$0xf]
    %v79 = vld [vmem:[%s1 + $0xf8] sm:$0xf]
    %v80 = vld [vmem:[%s1 + $0xfc] sm:$0xf]
    %v81 = vld [vmem:[%s2] sm:$0x1]
    %v83 = vlaneseq
    %v84 = vshrl.u32 %v83, 7
    %v85 = vsub.s32 0, %v84
    %v86 = vrot.slane %v81, %v85
    %v90 = vunpack.c.l.s4 1966171168
    %v91 = vunpack.c.0.s8 %v90
    %v92 = vlaneseq
    %v93 = vshrl.u32 %v92, 7
    %v94 = vsub.s32 %v91, %v93
    %v95 = vrot.slane %v16, %v94
    %v96 = vcombine.high %v95, %v95
    %v98 = vunpack.c.l.s4 1966171168
    %v99 = vunpack.c.0.s8 %v98
    %v100 = vlaneseq
    %v101 = vshrl.u32 %v100, 7
    %v102 = vsub.s32 %v99, %v101
    %v103 = vrot.slane %v95, %v102
    %v105 = vunpack.c.l.s4 1966171168
    %v106 = vunpack.c.0.s8 %v105
    %v107 = vlaneseq
    %v108 = vshrl.u32 %v107, 7
    %v109 = vsub.s32 %v106, %v108
    %v110 = vrot.slane %v96, %v109
    %v111 = vcombine.high %v103, %v103
    %v112 = vcombine.high %v110, %v110
    %v181 = vunpack.c.l.b16 %v17
    %v182 = vunpack.c.l.b16 %v18
    %v183 = vunpack.c.l.b16 %v19
    %v184 = vunpack.c.l.b16 %v20
    %v185 = vunpack.c.l.b16 %v21
    %v186 = vunpack.c.l.b16 %v22
    %v187 = vunpack.c.l.b16 %v23
    %v188 = vunpack.c.l.b16 %v24
    %v189 = vunpack.c.l.b16 %v25
    %v190 = vunpack.c.l.b16 %v26
    %v191 = vunpack.c.l.b16 %v27
    %v192 = vunpack.c.l.b16 %v28
    %v193 = vunpack.c.l.b16 %v29
    %v194 = vunpack.c.l.b16 %v30
    %v195 = vunpack.c.l.b16 %v31
    %v196 = vunpack.c.l.b16 %v32
    %v197 = vunpack.c.l.b16 %v33
    %v198 = vunpack.c.l.b16 %v34
    %v199 = vunpack.c.l.b16 %v35
    %v200 = vunpack.c.l.b16 %v36
    %v201 = vunpack.c.l.b16 %v37
    %v202 = vunpack.c.l.b16 %v38
    %v203 = vunpack.c.l.b16 %v39
    %v204 = vunpack.c.l.b16 %v40
    %v205 = vunpack.c.l.b16 %v41
    %v206 = vunpack.c.l.b16 %v42
    %v207 = vunpack.c.l.b16 %v43
    %v208 = vunpack.c.l.b16 %v44
    %v209 = vunpack.c.l.b16 %v45
    %v210 = vunpack.c.l.b16 %v46
    %v211 = vunpack.c.l.b16 %v47
    %v212 = vunpack.c.l.b16 %v48
    %v213 = vunpack.c.l.b16 %v49
    %v214 = vunpack.c.l.b16 %v50
    %v215 = vunpack.c.l.b16 %v51
    %v216 = vunpack.c.l.b16 %v52
    %v217 = vunpack.c.l.b16 %v53
    %v218 = vunpack.c.l.b16 %v54
    %v219 = vunpack.c.l.b16 %v55
    %v220 = vunpack.c.l.b16 %v56
    %v221 = vunpack.c.l.b16 %v57
    %v222 = vunpack.c.l.b16 %v58
    %v223 = vunpack.c.l.b16 %v59
    %v224 = vunpack.c.l.b16 %v60
    %v225 = vunpack.c.l.b16 %v61
    %v226 = vunpack.c.l.b16 %v62
    %v227 = vunpack.c.l.b16 %v63
    %v228 = vunpack.c.l.b16 %v64
    %v229 = vunpack.c.l.b16 %v65
    %v230 = vunpack.c.l.b16 %v66
    %v231 = vunpack.c.l.b16 %v67
    %v232 = vunpack.c.l.b16 %v68
    %v233 = vunpack.c.l.b16 %v69
    %v234 = vunpack.c.l.b16 %v70
    %v235 = vunpack.c.l.b16 %v71
    %v236 = vunpack.c.l.b16 %v72
    %v237 = vunpack.c.l.b16 %v73
    %v238 = vunpack.c.l.b16 %v74
    %v239 = vunpack.c.l.b16 %v75
    %v240 = vunpack.c.l.b16 %v76
    %v241 = vunpack.c.l.b16 %v77
    %v242 = vunpack.c.l.b16 %v78
    %v243 = vunpack.c.l.b16 %v79
    %v244 = vunpack.c.l.b16 %v80
    %v245 = vpack.c.b16 %v182, %v181
    %v246 = vpack.c.b16 %v184, %v183
    %v247 = vpack.c.b16 %v186, %v185
    %v248 = vpack.c.b16 %v188, %v187
    %v249 = vpack.c.b16 %v190, %v189
    %v250 = vpack.c.b16 %v192, %v191
    %v251 = vpack.c.b16 %v194, %v193
    %v252 = vpack.c.b16 %v196, %v195
    %v253 = vpack.c.b16 %v198, %v197
    %v254 = vpack.c.b16 %v200, %v199
    %v255 = vpack.c.b16 %v202, %v201
    %v256 = vpack.c.b16 %v204, %v203
    %v257 = vpack.c.b16 %v206, %v205
    %v258 = vpack.c.b16 %v208, %v207
    %v259 = vpack.c.b16 %v210, %v209
    %v260 = vpack.c.b16 %v212, %v211
    %v261 = vpack.c.b16 %v214, %v213
    %v262 = vpack.c.b16 %v216, %v215
    %v263 = vpack.c.b16 %v218, %v217
    %v264 = vpack.c.b16 %v220, %v219
    %v265 = vpack.c.b16 %v222, %v221
    %v266 = vpack.c.b16 %v224, %v223
    %v267 = vpack.c.b16 %v226, %v225
    %v268 = vpack.c.b16 %v228, %v227
    %v269 = vpack.c.b16 %v230, %v229
    %v270 = vpack.c.b16 %v232, %v231
    %v271 = vpack.c.b16 %v234, %v233
    %v272 = vpack.c.b16 %v236, %v235
    %v273 = vpack.c.b16 %v238, %v237
    %v274 = vpack.c.b16 %v240, %v239
    %v275 = vpack.c.b16 %v242, %v241
    %v276 = vpack.c.b16 %v244, %v243
    %309 = vmatprep.subr.bf16.mxu0 0
    %310 = vmatpush1.bf16.msra.mxu0 %v245
    %311 = vmatprep.subr.bf16.mxu0 0
    %312 = vmatpush1.bf16.msra.mxu0 %v246
    %313 = vmatprep.subr.bf16.mxu0 0
    %314 = vmatpush1.bf16.msra.mxu0 %v247
    %315 = vmatprep.subr.bf16.mxu0 0
    %316 = vmatpush1.bf16.msra.mxu0 %v248
    %317 = vmatprep.subr.bf16.mxu0 0
    %318 = vmatpush1.bf16.msra.mxu0 %v249
    %319 = vmatprep.subr.bf16.mxu0 0
    %320 = vmatpush1.bf16.msra.mxu0 %v250
    %321 = vmatprep.subr.bf16.mxu0 0
    %322 = vmatpush1.bf16.msra.mxu0 %v251
    %323 = vmatprep.subr.bf16.mxu0 0
    %324 = vmatpush1.bf16.msra.mxu0 %v252
    %325 = vmatprep.subr.bf16.mxu0 0
    %326 = vmatpush1.bf16.msra.mxu0 %v253
    %327 = vmatprep.subr.bf16.mxu0 0
    %328 = vmatpush1.bf16.msra.mxu0 %v254
    %329 = vmatprep.subr.bf16.mxu0 0
    %330 = vmatpush1.bf16.msra.mxu0 %v255
    %331 = vmatprep.subr.bf16.mxu0 0
    %332 = vmatpush1.bf16.msra.mxu0 %v256
    %333 = vmatprep.subr.bf16.mxu0 0
    %334 = vmatpush1.bf16.msra.mxu0 %v257
    %335 = vmatprep.subr.bf16.mxu0 0
    %336 = vmatpush1.bf16.msra.mxu0 %v258
    %337 = vmatprep.subr.bf16.mxu0 0
    %338 = vmatpush1.bf16.msra.mxu0 %v259
    %339 = vmatprep.subr.bf16.mxu0 0
    %340 = vmatpush1.bf16.msra.mxu0 %v260
    %341 = vmatprep.mubr.bf16.mxu0 %v110
    %342 = vmatmul.mubr.bf16.gmra.mrb[0].mxu0 %v103
    %v343 = vpop.f32.mrb[0].mxu0
    %v344 = vadd.f32 %v86, %v343
    %v345 = vpop.f32.mrb[0].mxu0
    %v346 = vpop.f32.mrb[0].mxu0
    %v347 = vpop.f32.mrb[0].mxu0
    %348 = vdwg.mxu0
    %349 = vmatprep.subr.bf16.mxu0 0
    %350 = vmatpush1.bf16.msra.mxu0 %v261
    %351 = vmatprep.subr.bf16.mxu0 0
    %352 = vmatpush1.bf16.msra.mxu0 %v262
    %353 = vmatprep.subr.bf16.mxu0 0
    %354 = vmatpush1.bf16.msra.mxu0 %v263
    %355 = vmatprep.subr.bf16.mxu0 0
    %356 = vmatpush1.bf16.msra.mxu0 %v264
    %357 = vmatprep.subr.bf16.mxu0 0
    %358 = vmatpush1.bf16.msra.mxu0 %v265
    %359 = vmatprep.subr.bf16.mxu0 0
    %360 = vmatpush1.bf16.msra.mxu0 %v266
    %361 = vmatprep.subr.bf16.mxu0 0
    %362 = vmatpush1.bf16.msra.mxu0 %v267
    %363 = vmatprep.subr.bf16.mxu0 0
    %364 = vmatpush1.bf16.msra.mxu0 %v268
    %365 = vmatprep.subr.bf16.mxu0 0
    %366 = vmatpush1.bf16.msra.mxu0 %v269
    %367 = vmatprep.subr.bf16.mxu0 0
    %368 = vmatpush1.bf16.msra.mxu0 %v270
    %369 = vmatprep.subr.bf16.mxu0 0
    %370 = vmatpush1.bf16.msra.mxu0 %v271
    %371 = vmatprep.subr.bf16.mxu0 0
    %372 = vmatpush1.bf16.msra.mxu0 %v272
    %373 = vmatprep.subr.bf16.mxu0 0
    %374 = vmatpush1.bf16.msra.mxu0 %v273
    %375 = vmatprep.subr.bf16.mxu0 0
    %376 = vmatpush1.bf16.msra.mxu0 %v274
    %377 = vmatprep.subr.bf16.mxu0 0
    %378 = vmatpush1.bf16.msra.mxu0 %v275
    %379 = vmatprep.subr.bf16.mxu0 0
    %380 = vmatpush1.bf16.msra.mxu0 %v276
    %381 = vmatprep.mubr.bf16.mxu0 %v112
    %382 = vmatmul.mubr.bf16.gmra.mrb[0].mxu0 %v111
    %v383 = vpop.f32.mrb[0].mxu0
    %v384 = vadd.f32 %v344, %v383
    %v385 = vpop.f32.mrb[0].mxu0
    %v386 = vpop.f32.mrb[0].mxu0
    %v387 = vpop.f32.mrb[0].mxu0
    %388 = vdwg.mxu0
    %389 = vst [vmem:[#allocation2] sm:$0x3] %v384
    // Predicated region
    $region14: #{_lambda_.19} parent=1 // pred_check
      _
    $region15: #{_lambda_.19} parent=1 // pred_check_branch
      %391 = sbr.rel (0) target = $region17
    $region16: #{_lambda_.19} parent=1 // pred_region
      %s393 = ssub.s32 32, 32
      %394 = vsyncadd [#allocation3], %s393
      %s396 = sshll.u32 [#allocation2], 4
      %s397 = int_to_ptr.vmem [resolvable:$true] %s396
      %399 = dma.vmem_to_hbm [thread:$0]  %s397, 32, %s3, [#allocation3]
    $region17: #{_lambda_.19} parent=1 // pred_fallthru
      _
    // Predicated region
    $region18: #{_lambda_.19} parent=1 // pred_check
      _
    $region19: #{_lambda_.19} parent=1 // pred_check_branch
      %401 = sbr.rel (0) target = $region21
    $region20: #{_lambda_.19} parent=1 // pred_region
      %402 = dma.done [#allocation3], 32
    $region21: #{_lambda_.19} parent=1 // pred_fallthru
      _
    %403 = vsyncpa [#allocation3], 1

</llo_original>
